<compile_context>
chip_gen: v5e
topology: v5e:2x2
jax: 0.10.0
libtpu: 0.0.40
codegen_flags: <defaults>
</compile_context>

<pallas_src>
import math

import jax
import jax.numpy as jnp
from jax.experimental import pallas as pl
from jax.experimental.pallas import tpu as pltpu

# ----------------------------- configuration --------------------------------
CFG = dict(
    c_in=4, c_out=4, c_date=4, dropout=0.3, n_nodes=3,
    inp_len=8, pred_len=8, adj_heads=2, move_step=3,
    poly_order=2, res_layers=2,
    embed_period=[24, 12, 8, 6, 4, 3, 2, 1], period_heads=8,
    channels_emb_dim=5, device="tpu",
)
FD_HEADS = 8      # FDEmbedding default heads
BN_EPS = 1e-5


# ============================ fused Pallas kernel ============================

def fused_forward_kernel(
    x_ref, xm_ref, ym_ref,
    w0_ref, w1_ref, b0_ref, b1_ref, fsf_ref, fcf_ref,
    qin_ref, qout_ref,
    mar_ref,
    mshare_ref, bshare_ref, mpgate_ref, bpgate_ref, mpoly_ref, cpoly_ref,
    mup_ref, bup_ref, mgt_ref, bgt_ref,
    mgcn_ref, bgcn_ref, mggate_ref, bggate_ref,
    o_ref,
    accx_ref, accy_ref):
  """Whole DUALSTPTN forward in one VMEM-resident kernel.

  Layout: activations are (B, C*N*T) with time fastest; all per-(c,n) linear
  operators have been folded into block-(diagonal) matrices at init time.
  """
  B, L = x_ref.shape
  Lo = o_ref.shape[1]
  D = xm_ref.shape[2]
  order = mpoly_ref.shape[0]
  n_layers = mup_ref.shape[0]

  w0 = w0_ref[...]          # (1, K)   K = C*N*heads
  w1 = w1_ref[...]
  b0 = b0_ref[...]
  b1 = b1_ref[...]
  fsf = fsf_ref[...]        # (D, K)  (fusion sin weights, mean pre-folded)
  fcf = fcf_ref[...]        # (D, K)

  def fd_season(mark, q_ref, acc_ref, lanes):
    # mark: (B, S, D) date features.  Returns (B, lanes) season in the
    # canonical (c, n, s) lane order via precomputed placement matrices.
    S = mark.shape[1]
    K = w0.shape[1]
    acc = jnp.zeros((B, S, K), jnp.float32)
    for d in range(D):
      xd = mark[:, :, d:d + 1]                       # (B, S, 1)
      fs_d = fsf[d:d + 1, :]                         # (1, K)
      fc_d = fcf[d:d + 1, :]
      acc = acc + jnp.sin(xd * w0 + b0) * fs_d
      acc = acc + jnp.cos(xd * w1 + b1) * fc_d
    acc_ref[...] = acc                               # stage in VMEM scratch
    season = jnp.zeros((B, lanes), jnp.float32)
    for s in range(S):
      season = season + jnp.dot(acc_ref[:, s, :], q_ref[s],
                                preferred_element_type=jnp.float32)
    return season

  x_season = fd_season(xm_ref[...], qin_ref, accx_ref, L)
  y_season = fd_season(ym_ref[...], qout_ref, accy_ref, Lo)

  # --- de-season + AR trend/residual decomposition (MA folded into matrix) ---
  x_des = x_ref[...] - x_season
  x_trend = jnp.dot(x_des, mar_ref[...], preferred_element_type=jnp.float32)
  x_res = x_des - x_trend

  # --- Multi_Linear (poly_mlp) on the trend ---
  x_share = jnp.dot(x_trend, mshare_ref[...],
                    preferred_element_type=jnp.float32) + bshare_ref[...]
  pgate = jax.nn.sigmoid(
      jnp.dot(x_trend, mpgate_ref[...],
              preferred_element_type=jnp.float32) + bpgate_ref[...])
  pw = x_trend
  z = jnp.dot(pw, mpoly_ref[0], preferred_element_type=jnp.float32)
  for d in range(1, order):
    pw = pw * x_trend                                # x_trend ** (d + 1)
    z = z + jnp.dot(pw, mpoly_ref[d], preferred_element_type=jnp.float32)
  z = z + cpoly_ref[...]                             # (order_mlp bias + res_bias)
  y_trend = pgate * z + (1.0 - pgate) * x_share + x_trend

  # --- res_projection: gated_mlp -> gated_gcn -> residual + tanh, per layer ---
  xr = x_res
  for i in range(n_layers):
    res = xr
    v = jnp.tanh(jnp.dot(xr, mup_ref[i],
                         preferred_element_type=jnp.float32) + bup_ref[i])
    g = jax.nn.sigmoid(jnp.dot(xr, mgt_ref[i],
                               preferred_element_type=jnp.float32) + bgt_ref[i])
    xr = g * v + (1.0 - g) * xr
    gg = jnp.tanh(jnp.dot(xr, mgcn_ref[i],
                          preferred_element_type=jnp.float32) + bgcn_ref[i])
    gt = jax.nn.sigmoid(jnp.dot(xr, mggate_ref[i],
                                preferred_element_type=jnp.float32) + bggate_ref[i])
    xr = gt * gg + (1.0 - gt) * xr
    xr = res + jnp.tanh(xr)

  o_ref[...] = y_trend + y_season + xr


# ============================ wrapper (single call) ==========================

def model_forward(x, x_mark, y_mark, params):
  B, C, N, Tin = x.shape
  Tout = y_mark.shape[1]
  CN = C * N
  L, Lo = CN * Tin, CN * Tout
  K = params["w0f"].shape[1]

  x_flat = x.reshape(B, L)                           # contiguous (free) reshape
  out = pl.pallas_call(
      fused_forward_kernel,
      out_shape=jax.ShapeDtypeStruct((B, Lo), jnp.float32),
      scratch_shapes=[
          pltpu.VMEM((B, Tin, K), jnp.float32),
          pltpu.VMEM((B, Tout, K), jnp.float32),
      ],
  )(x_flat, x_mark, y_mark,
    params["w0f"], params["w1f"], params["b0f"], params["b1f"],
    params["fsf"], params["fcf"], params["q_in"], params["q_out"],
    params["m_ar"],
    params["m_share"], params["b_share"], params["m_pgate"], params["b_pgate"],
    params["m_poly"], params["c_poly"],
    params["m_up"], params["b_up"], params["m_gt"], params["b_gt"],
    params["m_gcn"], params["b_gcn"], params["m_ggate"], params["b_ggate"])
  return out.reshape(B, C, N, Tout)


# ============================ parameter construction =========================

def init_params(key):
  C, N, D = CFG["c_in"], CFG["n_nodes"], CFG["c_date"]
  Tin, Tout = CFG["inp_len"], CFG["pred_len"]
  H_fd, H_adj, hid = FD_HEADS, CFG["adj_heads"], CFG["channels_emb_dim"]
  order, Kma, Lyr = CFG["poly_order"], CFG["move_step"], CFG["res_layers"]
  CN = C * N
  L, Lo = CN * Tin, CN * Tout
  K = CN * H_fd
  bn_scale = 1.0 / math.sqrt(1.0 + BN_EPS)           # BatchNorm2d (eval, fresh stats)

  keys = jax.random.split(key, 64)
  ki = iter(keys)

  def nrm(shape, s=0.1):
    return s * jax.random.normal(next(ki), shape, jnp.float32)

  # --- FDEmbedding (shared for x_mark and y_mark) ---
  period = CFG["embed_period"][:H_fd]
  period = period + [1] * (H_fd - len(period))
  periods = jnp.asarray(period, jnp.float32)
  fd_W = 2.0 * jnp.pi * periods[None, None, :, None] + 0.1 * jax.random.normal(
      next(ki), (C, N, H_fd, 2), jnp.float32)
  fd_b = 2.0 * jnp.pi * jax.random.uniform(next(ki), (C, N, H_fd, 2), jnp.float32)
  fd_fusion = jax.random.normal(next(ki), (D, 2 * H_fd), jnp.float32)

  inv = 1.0 / float(D * 2 * H_fd)                    # mean over (date, 2*heads)
  w0f = fd_W[..., 0].reshape(1, K)
  w1f = fd_W[..., 1].reshape(1, K)
  b0f = fd_b[..., 0].reshape(1, K)
  b1f = fd_b[..., 1].reshape(1, K)
  fsf = jnp.tile(fd_fusion[:, :H_fd], (1, CN)) * inv     # (D, K)
  fcf = jnp.tile(fd_fusion[:, H_fd:], (1, CN)) * inv     # (D, K)

  def make_q(S):
    # Q[s, cn*H + h, cn*S + s] = 1 : sums over heads and scatters (cn, s)
    # into the canonical lane order.
    eS = jnp.eye(S, dtype=jnp.float32)
    eC = jnp.eye(CN, dtype=jnp.float32)
    q = (eS[:, None, None, None, :] * eC[None, :, None, :, None]
         * jnp.ones((H_fd,), jnp.float32)[None, None, :, None, None])
    return q.reshape(S, CN * H_fd, CN * S)

  q_in = make_q(Tin)
  q_out = make_q(Tout)

  # --- AR_Conv_share folded into an (L, L) linear operator ---
  ar_w = jax.random.normal(next(ki), (Kma,), jnp.float32)
  w_ma = jax.nn.softmax(ar_w)
  pad_l = (Kma - 1) // 2
  A = jnp.zeros((Tin, Tin), jnp.float32)
  for t in range(Tin):
    for k in range(Kma):
      j = min(max(t + k - pad_l, 0), Tin - 1)        # replicate padding
      A = A.at[j, t].add(w_ma[k])
  eye_cn = jnp.eye(CN, dtype=jnp.float32)
  m_ar = jnp.kron(eye_cn, A)                         # (L, L)

  # --- Multi_Linear (poly_mlp) ---
  res_w = nrm((C, N, Tin, Tout, order))
  res_b = nrm((C, N))
  wm = nrm((Tin, Tout)); bm = nrm((Tout,))
  wg = nrm((Tin, Tout)); bg = nrm((Tout,))
  wo = nrm((order,), 0.5); bo = nrm((), 0.5)
  scale = float(Tout) / (order * Tin)

  blocks = res_w.reshape(CN, Tin, Tout, order)
  m_poly = []
  for d in range(order):
    fac = wo[d] * (scale / 4.0) * (bn_scale if d >= 1 else 1.0)
    blk = blocks[..., d] * fac                       # (CN, Tin, Tout)
    m_poly.append(jnp.einsum("gio,gk->giko", blk, eye_cn).reshape(L, Lo))
  m_poly = jnp.stack(m_poly)                         # (order, L, Lo)
  c_poly = (res_b.reshape(CN) * jnp.sum(wo) + bo) * (scale / 4.0)
  c_poly = jnp.repeat(c_poly, Tout).reshape(1, Lo)
  m_share = jnp.kron(eye_cn, wm)
  b_share = jnp.tile(bm, CN).reshape(1, Lo)
  m_pgate = jnp.kron(eye_cn, wg)
  b_pgate = jnp.tile(bg, CN).reshape(1, Lo)

  # --- res_projection layers (gated_mlp + gated_gcn) ---
  eye_c = jnp.eye(C, dtype=jnp.float32)
  eye_n = jnp.eye(N, dtype=jnp.float32)
  m_up, b_up, m_gt, b_gt = [], [], [], []
  m_gcn, b_gcn, m_ggate, b_ggate = [], [], [], []
  for _ in range(Lyr):
    # gated_mlp (time projection, shared weights across (b, c, n))
    wu_t = nrm((Tin, Tout)); bu_t = nrm((Tout,))
    wg_t = nrm((Tin, Tout)); bg_t = nrm((Tout,))
    m_up.append(jnp.kron(eye_cn, wu_t))
    b_up.append(jnp.tile(bu_t, CN).reshape(1, Lo))
    m_gt.append(jnp.kron(eye_cn, wg_t))
    b_gt.append(jnp.tile(bg_t, CN).reshape(1, Lo))
    # gated_gcn: adjacency (softmax, zero diagonal) + update/gate projections
    n1 = jax.random.normal(next(ki), (H_adj, C, hid), jnp.float32)
    n2 = jax.random.normal(next(ki), (H_adj, C, hid), jnp.float32)
    logits = jnp.einsum("hck,hdk->hcd", n1, n2) - 1.0e9 * eye_c[None]
    adj = jax.nn.softmax(logits, axis=-1)            # (H_adj, C, C)
    wu_g = nrm((H_adj * Tin, Tout)); bu_g = nrm((Tout,))
    wgate_g = nrm((Tin, Tout)); bgate_g = nrm((Tout,))
    # M[(c',n',s),(c,n,t)] = delta_{n'n} * sum_h adj[h,c,c'] * Wu[h*Tin+s, t]
    k_cc = jnp.einsum("hcp,hst->psct", adj, wu_g.reshape(H_adj, Tin, Tout))
    m6 = (k_cc[:, None, :, :, None, :] *
          eye_n[None, :, None, None, :, None])       # (C,N,Tin,C,N,Tout)
    m_gcn.append(m6.reshape(L, Lo))
    b_gcn.append(jnp.tile(bu_g, CN).reshape(1, Lo))
    m_ggate.append(jnp.kron(eye_cn, wgate_g))
    b_ggate.append(jnp.tile(bgate_g, CN).reshape(1, Lo))

  return dict(
      w0f=w0f, w1f=w1f, b0f=b0f, b1f=b1f, fsf=fsf, fcf=fcf,
      q_in=q_in, q_out=q_out, m_ar=m_ar,
      m_share=m_share, b_share=b_share, m_pgate=m_pgate, b_pgate=b_pgate,
      m_poly=m_poly, c_poly=c_poly,
      m_up=jnp.stack(m_up), b_up=jnp.stack(b_up),
      m_gt=jnp.stack(m_gt), b_gt=jnp.stack(b_gt),
      m_gcn=jnp.stack(m_gcn), b_gcn=jnp.stack(b_gcn),
      m_ggate=jnp.stack(m_ggate), b_ggate=jnp.stack(b_ggate),
  )


# ================================ main =======================================

if __name__ == "__main__":
  key = jax.random.PRNGKey(0)
  k_p, k_x, k_xm, k_ym = jax.random.split(key, 4)

  B = 2
  C, N = CFG["c_in"], CFG["n_nodes"]
  Tin, Tout, D = CFG["inp_len"], CFG["pred_len"], CFG["c_date"]

  params = init_params(k_p)
  x = jax.random.normal(k_x, (B, C, N, Tin), jnp.float32)
  x_mark = jax.random.normal(k_xm, (B, Tin, D), jnp.float32)
  y_mark = jax.random.normal(k_ym, (B, Tout, D), jnp.float32)

  fwd = jax.jit(lambda a, b, c: model_forward(a, b, c, params))
  y = fwd(x, x_mark, y_mark)
  y = jax.block_until_ready(y)

  assert y.shape == (B, C, N, Tout)
  assert bool(jnp.all(jnp.isfinite(y)))
  print("KERNEL_OK")
</pallas_src>

<mosaic_0001>
module attributes {stable_mosaic.version = 11 : i64} {
  func.func @fused_forward_kernel(%arg0: memref<2x96xf32, #tpu.memory_space<vmem>>, %arg1: memref<2x8x4xf32, #tpu.memory_space<vmem>>, %arg2: memref<2x8x4xf32, #tpu.memory_space<vmem>>, %arg3: memref<1x96xf32, #tpu.memory_space<vmem>>, %arg4: memref<1x96xf32, #tpu.memory_space<vmem>>, %arg5: memref<1x96xf32, #tpu.memory_space<vmem>>, %arg6: memref<1x96xf32, #tpu.memory_space<vmem>>, %arg7: memref<4x96xf32, #tpu.memory_space<vmem>>, %arg8: memref<4x96xf32, #tpu.memory_space<vmem>>, %arg9: memref<8x96x96xf32, #tpu.memory_space<vmem>>, %arg10: memref<8x96x96xf32, #tpu.memory_space<vmem>>, %arg11: memref<96x96xf32, #tpu.memory_space<vmem>>, %arg12: memref<96x96xf32, #tpu.memory_space<vmem>>, %arg13: memref<1x96xf32, #tpu.memory_space<vmem>>, %arg14: memref<96x96xf32, #tpu.memory_space<vmem>>, %arg15: memref<1x96xf32, #tpu.memory_space<vmem>>, %arg16: memref<2x96x96xf32, #tpu.memory_space<vmem>>, %arg17: memref<1x96xf32, #tpu.memory_space<vmem>>, %arg18: memref<2x96x96xf32, #tpu.memory_space<vmem>>, %arg19: memref<2x1x96xf32, #tpu.memory_space<vmem>>, %arg20: memref<2x96x96xf32, #tpu.memory_space<vmem>>, %arg21: memref<2x1x96xf32, #tpu.memory_space<vmem>>, %arg22: memref<2x96x96xf32, #tpu.memory_space<vmem>>, %arg23: memref<2x1x96xf32, #tpu.memory_space<vmem>>, %arg24: memref<2x96x96xf32, #tpu.memory_space<vmem>>, %arg25: memref<2x1x96xf32, #tpu.memory_space<vmem>>, %arg26: memref<2x96xf32, #tpu.memory_space<vmem>>, %arg27: memref<2x8x96xf32, #tpu.memory_space<vmem>>, %arg28: memref<2x8x96xf32, #tpu.memory_space<vmem>>) attributes {dimension_semantics = [], scalar_prefetch = 0 : i64, scratch_operands = 2 : i64, tpu.core_type = #tpu.core_type<tc>} {
    %c0 = arith.constant 0 : index
    %c0_0 = arith.constant 0 : index
    %0 = vector.load %arg3[%c0, %c0_0] : memref<1x96xf32, #tpu.memory_space<vmem>>, vector<1x96xf32>
    %c0_1 = arith.constant 0 : index
    %c0_2 = arith.constant 0 : index
    %1 = vector.load %arg4[%c0_1, %c0_2] : memref<1x96xf32, #tpu.memory_space<vmem>>, vector<1x96xf32>
    %c0_3 = arith.constant 0 : index
    %c0_4 = arith.constant 0 : index
    %2 = vector.load %arg5[%c0_3, %c0_4] : memref<1x96xf32, #tpu.memory_space<vmem>>, vector<1x96xf32>
    %c0_5 = arith.constant 0 : index
    %c0_6 = arith.constant 0 : index
    %3 = vector.load %arg6[%c0_5, %c0_6] : memref<1x96xf32, #tpu.memory_space<vmem>>, vector<1x96xf32>
    %c0_7 = arith.constant 0 : index
    %c0_8 = arith.constant 0 : index
    %4 = vector.load %arg7[%c0_7, %c0_8] : memref<4x96xf32, #tpu.memory_space<vmem>>, vector<4x96xf32>
    %c0_9 = arith.constant 0 : index
    %c0_10 = arith.constant 0 : index
    %5 = vector.load %arg8[%c0_9, %c0_10] : memref<4x96xf32, #tpu.memory_space<vmem>>, vector<4x96xf32>
    %c0_11 = arith.constant 0 : index
    %c0_12 = arith.constant 0 : index
    %c0_13 = arith.constant 0 : index
    %6 = vector.load %arg1[%c0_11, %c0_12, %c0_13] : memref<2x8x4xf32, #tpu.memory_space<vmem>>, vector<2x8x4xf32>
    %cst = arith.constant 0.000000e+00 : f32
    %7 = vector.broadcast %cst : f32 to vector<2x8x96xf32>
    %8 = vector.extract_strided_slice %6 {offsets = [0, 0, 0], sizes = [2, 8, 1], strides = [1, 1, 1]} : vector<2x8x4xf32> to vector<2x8x1xf32>
    %9 = vector.extract_strided_slice %4 {offsets = [0, 0], sizes = [1, 96], strides = [1, 1]} : vector<4x96xf32> to vector<1x96xf32>
    %10 = vector.extract_strided_slice %5 {offsets = [0, 0], sizes = [1, 96], strides = [1, 1]} : vector<4x96xf32> to vector<1x96xf32>
    %11 = vector.shape_cast %0 : vector<1x96xf32> to vector<1x1x96xf32>
    %12 = vector.broadcast %8 : vector<2x8x1xf32> to vector<2x8x96xf32>
    %13 = vector.broadcast %11 : vector<1x1x96xf32> to vector<2x8x96xf32>
    %14 = arith.mulf %12, %13 : vector<2x8x96xf32>
    %15 = vector.shape_cast %2 : vector<1x96xf32> to vector<1x1x96xf32>
    %16 = vector.broadcast %15 : vector<1x1x96xf32> to vector<2x8x96xf32>
    %17 = arith.addf %14, %16 : vector<2x8x96xf32>
    %18 = math.sin %17 : vector<2x8x96xf32>
    %19 = vector.shape_cast %9 : vector<1x96xf32> to vector<1x1x96xf32>
    %20 = vector.broadcast %19 : vector<1x1x96xf32> to vector<2x8x96xf32>
    %21 = arith.mulf %18, %20 : vector<2x8x96xf32>
    %22 = arith.addf %7, %21 : vector<2x8x96xf32>
    %23 = vector.shape_cast %1 : vector<1x96xf32> to vector<1x1x96xf32>
    %24 = vector.broadcast %8 : vector<2x8x1xf32> to vector<2x8x96xf32>
    %25 = vector.broadcast %23 : vector<1x1x96xf32> to vector<2x8x96xf32>
    %26 = arith.mulf %24, %25 : vector<2x8x96xf32>
    %27 = vector.shape_cast %3 : vector<1x96xf32> to vector<1x1x96xf32>
    %28 = vector.broadcast %27 : vector<1x1x96xf32> to vector<2x8x96xf32>
    %29 = arith.addf %26, %28 : vector<2x8x96xf32>
    %30 = math.cos %29 : vector<2x8x96xf32>
    %31 = vector.shape_cast %10 : vector<1x96xf32> to vector<1x1x96xf32>
    %32 = vector.broadcast %31 : vector<1x1x96xf32> to vector<2x8x96xf32>
    %33 = arith.mulf %30, %32 : vector<2x8x96xf32>
    %34 = arith.addf %22, %33 : vector<2x8x96xf32>
    %35 = vector.extract_strided_slice %6 {offsets = [0, 0, 1], sizes = [2, 8, 1], strides = [1, 1, 1]} : vector<2x8x4xf32> to vector<2x8x1xf32>
    %36 = vector.extract_strided_slice %4 {offsets = [1, 0], sizes = [1, 96], strides = [1, 1]} : vector<4x96xf32> to vector<1x96xf32>
    %37 = vector.extract_strided_slice %5 {offsets = [1, 0], sizes = [1, 96], strides = [1, 1]} : vector<4x96xf32> to vector<1x96xf32>
    %38 = vector.shape_cast %0 : vector<1x96xf32> to vector<1x1x96xf32>
    %39 = vector.broadcast %35 : vector<2x8x1xf32> to vector<2x8x96xf32>
    %40 = vector.broadcast %38 : vector<1x1x96xf32> to vector<2x8x96xf32>
    %41 = arith.mulf %39, %40 : vector<2x8x96xf32>
    %42 = vector.shape_cast %2 : vector<1x96xf32> to vector<1x1x96xf32>
    %43 = vector.broadcast %42 : vector<1x1x96xf32> to vector<2x8x96xf32>
    %44 = arith.addf %41, %43 : vector<2x8x96xf32>
    %45 = math.sin %44 : vector<2x8x96xf32>
    %46 = vector.shape_cast %36 : vector<1x96xf32> to vector<1x1x96xf32>
    %47 = vector.broadcast %46 : vector<1x1x96xf32> to vector<2x8x96xf32>
    %48 = arith.mulf %45, %47 : vector<2x8x96xf32>
    %49 = arith.addf %34, %48 : vector<2x8x96xf32>
    %50 = vector.shape_cast %1 : vector<1x96xf32> to vector<1x1x96xf32>
    %51 = vector.broadcast %35 : vector<2x8x1xf32> to vector<2x8x96xf32>
    %52 = vector.broadcast %50 : vector<1x1x96xf32> to vector<2x8x96xf32>
    %53 = arith.mulf %51, %52 : vector<2x8x96xf32>
    %54 = vector.shape_cast %3 : vector<1x96xf32> to vector<1x1x96xf32>
    %55 = vector.broadcast %54 : vector<1x1x96xf32> to vector<2x8x96xf32>
    %56 = arith.addf %53, %55 : vector<2x8x96xf32>
    %57 = math.cos %56 : vector<2x8x96xf32>
    %58 = vector.shape_cast %37 : vector<1x96xf32> to vector<1x1x96xf32>
    %59 = vector.broadcast %58 : vector<1x1x96xf32> to vector<2x8x96xf32>
    %60 = arith.mulf %57, %59 : vector<2x8x96xf32>
    %61 = arith.addf %49, %60 : vector<2x8x96xf32>
    %62 = vector.extract_strided_slice %6 {offsets = [0, 0, 2], sizes = [2, 8, 1], strides = [1, 1, 1]} : vector<2x8x4xf32> to vector<2x8x1xf32>
    %63 = vector.extract_strided_slice %4 {offsets = [2, 0], sizes = [1, 96], strides = [1, 1]} : vector<4x96xf32> to vector<1x96xf32>
    %64 = vector.extract_strided_slice %5 {offsets = [2, 0], sizes = [1, 96], strides = [1, 1]} : vector<4x96xf32> to vector<1x96xf32>
    %65 = vector.shape_cast %0 : vector<1x96xf32> to vector<1x1x96xf32>
    %66 = vector.broadcast %62 : vector<2x8x1xf32> to vector<2x8x96xf32>
    %67 = vector.broadcast %65 : vector<1x1x96xf32> to vector<2x8x96xf32>
    %68 = arith.mulf %66, %67 : vector<2x8x96xf32>
    %69 = vector.shape_cast %2 : vector<1x96xf32> to vector<1x1x96xf32>
    %70 = vector.broadcast %69 : vector<1x1x96xf32> to vector<2x8x96xf32>
    %71 = arith.addf %68, %70 : vector<2x8x96xf32>
    %72 = math.sin %71 : vector<2x8x96xf32>
    %73 = vector.shape_cast %63 : vector<1x96xf32> to vector<1x1x96xf32>
    %74 = vector.broadcast %73 : vector<1x1x96xf32> to vector<2x8x96xf32>
    %75 = arith.mulf %72, %74 : vector<2x8x96xf32>
    %76 = arith.addf %61, %75 : vector<2x8x96xf32>
    %77 = vector.shape_cast %1 : vector<1x96xf32> to vector<1x1x96xf32>
    %78 = vector.broadcast %62 : vector<2x8x1xf32> to vector<2x8x96xf32>
    %79 = vector.broadcast %77 : vector<1x1x96xf32> to vector<2x8x96xf32>
    %80 = arith.mulf %78, %79 : vector<2x8x96xf32>
    %81 = vector.shape_cast %3 : vector<1x96xf32> to vector<1x1x96xf32>
    %82 = vector.broadcast %81 : vector<1x1x96xf32> to vector<2x8x96xf32>
    %83 = arith.addf %80, %82 : vector<2x8x96xf32>
    %84 = math.cos %83 : vector<2x8x96xf32>
    %85 = vector.shape_cast %64 : vector<1x96xf32> to vector<1x1x96xf32>
    %86 = vector.broadcast %85 : vector<1x1x96xf32> to vector<2x8x96xf32>
    %87 = arith.mulf %84, %86 : vector<2x8x96xf32>
    %88 = arith.addf %76, %87 : vector<2x8x96xf32>
    %89 = vector.extract_strided_slice %6 {offsets = [0, 0, 3], sizes = [2, 8, 1], strides = [1, 1, 1]} : vector<2x8x4xf32> to vector<2x8x1xf32>
    %90 = vector.extract_strided_slice %4 {offsets = [3, 0], sizes = [1, 96], strides = [1, 1]} : vector<4x96xf32> to vector<1x96xf32>
    %91 = vector.extract_strided_slice %5 {offsets = [3, 0], sizes = [1, 96], strides = [1, 1]} : vector<4x96xf32> to vector<1x96xf32>
    %92 = vector.shape_cast %0 : vector<1x96xf32> to vector<1x1x96xf32>
    %93 = vector.broadcast %89 : vector<2x8x1xf32> to vector<2x8x96xf32>
    %94 = vector.broadcast %92 : vector<1x1x96xf32> to vector<2x8x96xf32>
    %95 = arith.mulf %93, %94 : vector<2x8x96xf32>
    %96 = vector.shape_cast %2 : vector<1x96xf32> to vector<1x1x96xf32>
    %97 = vector.broadcast %96 : vector<1x1x96xf32> to vector<2x8x96xf32>
    %98 = arith.addf %95, %97 : vector<2x8x96xf32>
    %99 = math.sin %98 : vector<2x8x96xf32>
    %100 = vector.shape_cast %90 : vector<1x96xf32> to vector<1x1x96xf32>
    %101 = vector.broadcast %100 : vector<1x1x96xf32> to vector<2x8x96xf32>
    %102 = arith.mulf %99, %101 : vector<2x8x96xf32>
    %103 = arith.addf %88, %102 : vector<2x8x96xf32>
    %104 = vector.shape_cast %1 : vector<1x96xf32> to vector<1x1x96xf32>
    %105 = vector.broadcast %89 : vector<2x8x1xf32> to vector<2x8x96xf32>
    %106 = vector.broadcast %104 : vector<1x1x96xf32> to vector<2x8x96xf32>
    %107 = arith.mulf %105, %106 : vector<2x8x96xf32>
    %108 = vector.shape_cast %3 : vector<1x96xf32> to vector<1x1x96xf32>
    %109 = vector.broadcast %108 : vector<1x1x96xf32> to vector<2x8x96xf32>
    %110 = arith.addf %107, %109 : vector<2x8x96xf32>
    %111 = math.cos %110 : vector<2x8x96xf32>
    %112 = vector.shape_cast %91 : vector<1x96xf32> to vector<1x1x96xf32>
    %113 = vector.broadcast %112 : vector<1x1x96xf32> to vector<2x8x96xf32>
    %114 = arith.mulf %111, %113 : vector<2x8x96xf32>
    %115 = arith.addf %103, %114 : vector<2x8x96xf32>
    %c0_14 = arith.constant 0 : index
    %c0_15 = arith.constant 0 : index
    %c0_16 = arith.constant 0 : index
    %116 = vector.load %arg27[%c0_14, %c0_15, %c0_16] : memref<2x8x96xf32, #tpu.memory_space<vmem>>, vector<2x8x96xf32>
    tpu.vector_store %arg27[%c0_14, %c0_15, %c0_16], %115 {strides = array<i32>} : memref<2x8x96xf32, #tpu.memory_space<vmem>>, vector<2x8x96xf32>,
    %cst_17 = arith.constant 0.000000e+00 : f32
    %117 = vector.broadcast %cst_17 : f32 to vector<2x96xf32>
    %c0_18 = arith.constant 0 : index
    %c0_19 = arith.constant 0 : index
    %c0_20 = arith.constant 0 : index
    %118 = vector.load %arg27[%c0_18, %c0_19, %c0_20] : memref<2x8x96xf32, #tpu.memory_space<vmem>>, vector<2x1x96xf32>
    %119 = vector.shape_cast %118 : vector<2x1x96xf32> to vector<2x96xf32>
    %c0_21 = arith.constant 0 : index
    %c0_22 = arith.constant 0 : index
    %c0_23 = arith.constant 0 : index
    %120 = vector.load %arg9[%c0_21, %c0_22, %c0_23] : memref<8x96x96xf32, #tpu.memory_space<vmem>>, vector<1x96x96xf32>
    %121 = vector.shape_cast %120 : vector<1x96x96xf32> to vector<96x96xf32>
    %cst_24 = arith.constant dense<0.000000e+00> : vector<2x96xf32>
    %122 = tpu.matmul %119, %121, %cst_24 {dimension_numbers = #tpu.dot_dimension_numbers<[1], [0], [0], [1], [0, 0, 1, 1], [], []>} : vector<2x96xf32>, vector<96x96xf32>, vector<2x96xf32> -> vector<2x96xf32>
    %123 = arith.addf %117, %122 : vector<2x96xf32>
    %c0_25 = arith.constant 0 : index
    %c1 = arith.constant 1 : index
    %c0_26 = arith.constant 0 : index
    %124 = vector.load %arg27[%c0_25, %c1, %c0_26] : memref<2x8x96xf32, #tpu.memory_space<vmem>>, vector<2x1x96xf32>
    %125 = vector.shape_cast %124 : vector<2x1x96xf32> to vector<2x96xf32>
    %c1_27 = arith.constant 1 : index
    %c0_28 = arith.constant 0 : index
    %c0_29 = arith.constant 0 : index
    %126 = vector.load %arg9[%c1_27, %c0_28, %c0_29] : memref<8x96x96xf32, #tpu.memory_space<vmem>>, vector<1x96x96xf32>
    %127 = vector.shape_cast %126 : vector<1x96x96xf32> to vector<96x96xf32>
    %cst_30 = arith.constant dense<0.000000e+00> : vector<2x96xf32>
    %128 = tpu.matmul %125, %127, %cst_30 {dimension_numbers = #tpu.dot_dimension_numbers<[1], [0], [0], [1], [0, 0, 1, 1], [], []>} : vector<2x96xf32>, vector<96x96xf32>, vector<2x96xf32> -> vector<2x96xf32>
    %129 = arith.addf %123, %128 : vector<2x96xf32>
    %c0_31 = arith.constant 0 : index
    %c2 = arith.constant 2 : index
    %c0_32 = arith.constant 0 : index
    %130 = vector.load %arg27[%c0_31, %c2, %c0_32] : memref<2x8x96xf32, #tpu.memory_space<vmem>>, vector<2x1x96xf32>
    %131 = vector.shape_cast %130 : vector<2x1x96xf32> to vector<2x96xf32>
    %c2_33 = arith.constant 2 : index
    %c0_34 = arith.constant 0 : index
    %c0_35 = arith.constant 0 : index
    %132 = vector.load %arg9[%c2_33, %c0_34, %c0_35] : memref<8x96x96xf32, #tpu.memory_space<vmem>>, vector<1x96x96xf32>
    %133 = vector.shape_cast %132 : vector<1x96x96xf32> to vector<96x96xf32>
    %cst_36 = arith.constant dense<0.000000e+00> : vector<2x96xf32>
    %134 = tpu.matmul %131, %133, %cst_36 {dimension_numbers = #tpu.dot_dimension_numbers<[1], [0], [0], [1], [0, 0, 1, 1], [], []>} : vector<2x96xf32>, vector<96x96xf32>, vector<2x96xf32> -> vector<2x96xf32>
    %135 = arith.addf %129, %134 : vector<2x96xf32>
    %c0_37 = arith.constant 0 : index
    %c3 = arith.constant 3 : index
    %c0_38 = arith.constant 0 : index
    %136 = vector.load %arg27[%c0_37, %c3, %c0_38] : memref<2x8x96xf32, #tpu.memory_space<vmem>>, vector<2x1x96xf32>
    %137 = vector.shape_cast %136 : vector<2x1x96xf32> to vector<2x96xf32>
    %c3_39 = arith.constant 3 : index
    %c0_40 = arith.constant 0 : index
    %c0_41 = arith.constant 0 : index
    %138 = vector.load %arg9[%c3_39, %c0_40, %c0_41] : memref<8x96x96xf32, #tpu.memory_space<vmem>>, vector<1x96x96xf32>
    %139 = vector.shape_cast %138 : vector<1x96x96xf32> to vector<96x96xf32>
    %cst_42 = arith.constant dense<0.000000e+00> : vector<2x96xf32>
    %140 = tpu.matmul %137, %139, %cst_42 {dimension_numbers = #tpu.dot_dimension_numbers<[1], [0], [0], [1], [0, 0, 1, 1], [], []>} : vector<2x96xf32>, vector<96x96xf32>, vector<2x96xf32> -> vector<2x96xf32>
    %141 = arith.addf %135, %140 : vector<2x96xf32>
    %c0_43 = arith.constant 0 : index
    %c4 = arith.constant 4 : index
    %c0_44 = arith.constant 0 : index
    %142 = vector.load %arg27[%c0_43, %c4, %c0_44] : memref<2x8x96xf32, #tpu.memory_space<vmem>>, vector<2x1x96xf32>
    %143 = vector.shape_cast %142 : vector<2x1x96xf32> to vector<2x96xf32>
    %c4_45 = arith.constant 4 : index
    %c0_46 = arith.constant 0 : index
    %c0_47 = arith.constant 0 : index
    %144 = vector.load %arg9[%c4_45, %c0_46, %c0_47] : memref<8x96x96xf32, #tpu.memory_space<vmem>>, vector<1x96x96xf32>
    %145 = vector.shape_cast %144 : vector<1x96x96xf32> to vector<96x96xf32>
    %cst_48 = arith.constant dense<0.000000e+00> : vector<2x96xf32>
    %146 = tpu.matmul %143, %145, %cst_48 {dimension_numbers = #tpu.dot_dimension_numbers<[1], [0], [0], [1], [0, 0, 1, 1], [], []>} : vector<2x96xf32>, vector<96x96xf32>, vector<2x96xf32> -> vector<2x96xf32>
    %147 = arith.addf %141, %146 : vector<2x96xf32>
    %c0_49 = arith.constant 0 : index
    %c5 = arith.constant 5 : index
    %c0_50 = arith.constant 0 : index
    %148 = vector.load %arg27[%c0_49, %c5, %c0_50] : memref<2x8x96xf32, #tpu.memory_space<vmem>>, vector<2x1x96xf32>
    %149 = vector.shape_cast %148 : vector<2x1x96xf32> to vector<2x96xf32>
    %c5_51 = arith.constant 5 : index
    %c0_52 = arith.constant 0 : index
    %c0_53 = arith.constant 0 : index
    %150 = vector.load %arg9[%c5_51, %c0_52, %c0_53] : memref<8x96x96xf32, #tpu.memory_space<vmem>>, vector<1x96x96xf32>
    %151 = vector.shape_cast %150 : vector<1x96x96xf32> to vector<96x96xf32>
    %cst_54 = arith.constant dense<0.000000e+00> : vector<2x96xf32>
    %152 = tpu.matmul %149, %151, %cst_54 {dimension_numbers = #tpu.dot_dimension_numbers<[1], [0], [0], [1], [0, 0, 1, 1], [], []>} : vector<2x96xf32>, vector<96x96xf32>, vector<2x96xf32> -> vector<2x96xf32>
    %153 = arith.addf %147, %152 : vector<2x96xf32>
    %c0_55 = arith.constant 0 : index
    %c6 = arith.constant 6 : index
    %c0_56 = arith.constant 0 : index
    %154 = vector.load %arg27[%c0_55, %c6, %c0_56] : memref<2x8x96xf32, #tpu.memory_space<vmem>>, vector<2x1x96xf32>
    %155 = vector.shape_cast %154 : vector<2x1x96xf32> to vector<2x96xf32>
    %c6_57 = arith.constant 6 : index
    %c0_58 = arith.constant 0 : index
    %c0_59 = arith.constant 0 : index
    %156 = vector.load %arg9[%c6_57, %c0_58, %c0_59] : memref<8x96x96xf32, #tpu.memory_space<vmem>>, vector<1x96x96xf32>
    %157 = vector.shape_cast %156 : vector<1x96x96xf32> to vector<96x96xf32>
    %cst_60 = arith.constant dense<0.000000e+00> : vector<2x96xf32>
    %158 = tpu.matmul %155, %157, %cst_60 {dimension_numbers = #tpu.dot_dimension_numbers<[1], [0], [0], [1], [0, 0, 1, 1], [], []>} : vector<2x96xf32>, vector<96x96xf32>, vector<2x96xf32> -> vector<2x96xf32>
    %159 = arith.addf %153, %158 : vector<2x96xf32>
    %c0_61 = arith.constant 0 : index
    %c7 = arith.constant 7 : index
    %c0_62 = arith.constant 0 : index
    %160 = vector.load %arg27[%c0_61, %c7, %c0_62] : memref<2x8x96xf32, #tpu.memory_space<vmem>>, vector<2x1x96xf32>
    %161 = vector.shape_cast %160 : vector<2x1x96xf32> to vector<2x96xf32>
    %c7_63 = arith.constant 7 : index
    %c0_64 = arith.constant 0 : index
    %c0_65 = arith.constant 0 : index
    %162 = vector.load %arg9[%c7_63, %c0_64, %c0_65] : memref<8x96x96xf32, #tpu.memory_space<vmem>>, vector<1x96x96xf32>
    %163 = vector.shape_cast %162 : vector<1x96x96xf32> to vector<96x96xf32>
    %cst_66 = arith.constant dense<0.000000e+00> : vector<2x96xf32>
    %164 = tpu.matmul %161, %163, %cst_66 {dimension_numbers = #tpu.dot_dimension_numbers<[1], [0], [0], [1], [0, 0, 1, 1], [], []>} : vector<2x96xf32>, vector<96x96xf32>, vector<2x96xf32> -> vector<2x96xf32>
    %165 = arith.addf %159, %164 : vector<2x96xf32>
    %c0_67 = arith.constant 0 : index
    %c0_68 = arith.constant 0 : index
    %c0_69 = arith.constant 0 : index
    %166 = vector.load %arg2[%c0_67, %c0_68, %c0_69] : memref<2x8x4xf32, #tpu.memory_space<vmem>>, vector<2x8x4xf32>
    %cst_70 = arith.constant 0.000000e+00 : f32
    %167 = vector.broadcast %cst_70 : f32 to vector<2x8x96xf32>
    %168 = vector.extract_strided_slice %166 {offsets = [0, 0, 0], sizes = [2, 8, 1], strides = [1, 1, 1]} : vector<2x8x4xf32> to vector<2x8x1xf32>
    %169 = vector.extract_strided_slice %4 {offsets = [0, 0], sizes = [1, 96], strides = [1, 1]} : vector<4x96xf32> to vector<1x96xf32>
    %170 = vector.extract_strided_slice %5 {offsets = [0, 0], sizes = [1, 96], strides = [1, 1]} : vector<4x96xf32> to vector<1x96xf32>
    %171 = vector.shape_cast %0 : vector<1x96xf32> to vector<1x1x96xf32>
    %172 = vector.broadcast %168 : vector<2x8x1xf32> to vector<2x8x96xf32>
    %173 = vector.broadcast %171 : vector<1x1x96xf32> to vector<2x8x96xf32>
    %174 = arith.mulf %172, %173 : vector<2x8x96xf32>
    %175 = vector.shape_cast %2 : vector<1x96xf32> to vector<1x1x96xf32>
    %176 = vector.broadcast %175 : vector<1x1x96xf32> to vector<2x8x96xf32>
    %177 = arith.addf %174, %176 : vector<2x8x96xf32>
    %178 = math.sin %177 : vector<2x8x96xf32>
    %179 = vector.shape_cast %169 : vector<1x96xf32> to vector<1x1x96xf32>
    %180 = vector.broadcast %179 : vector<1x1x96xf32> to vector<2x8x96xf32>
    %181 = arith.mulf %178, %180 : vector<2x8x96xf32>
    %182 = arith.addf %167, %181 : vector<2x8x96xf32>
    %183 = vector.shape_cast %1 : vector<1x96xf32> to vector<1x1x96xf32>
    %184 = vector.broadcast %168 : vector<2x8x1xf32> to vector<2x8x96xf32>
    %185 = vector.broadcast %183 : vector<1x1x96xf32> to vector<2x8x96xf32>
    %186 = arith.mulf %184, %185 : vector<2x8x96xf32>
    %187 = vector.shape_cast %3 : vector<1x96xf32> to vector<1x1x96xf32>
    %188 = vector.broadcast %187 : vector<1x1x96xf32> to vector<2x8x96xf32>
    %189 = arith.addf %186, %188 : vector<2x8x96xf32>
    %190 = math.cos %189 : vector<2x8x96xf32>
    %191 = vector.shape_cast %170 : vector<1x96xf32> to vector<1x1x96xf32>
    %192 = vector.broadcast %191 : vector<1x1x96xf32> to vector<2x8x96xf32>
    %193 = arith.mulf %190, %192 : vector<2x8x96xf32>
    %194 = arith.addf %182, %193 : vector<2x8x96xf32>
    %195 = vector.extract_strided_slice %166 {offsets = [0, 0, 1], sizes = [2, 8, 1], strides = [1, 1, 1]} : vector<2x8x4xf32> to vector<2x8x1xf32>
    %196 = vector.extract_strided_slice %4 {offsets = [1, 0], sizes = [1, 96], strides = [1, 1]} : vector<4x96xf32> to vector<1x96xf32>
    %197 = vector.extract_strided_slice %5 {offsets = [1, 0], sizes = [1, 96], strides = [1, 1]} : vector<4x96xf32> to vector<1x96xf32>
    %198 = vector.shape_cast %0 : vector<1x96xf32> to vector<1x1x96xf32>
    %199 = vector.broadcast %195 : vector<2x8x1xf32> to vector<2x8x96xf32>
    %200 = vector.broadcast %198 : vector<1x1x96xf32> to vector<2x8x96xf32>
    %201 = arith.mulf %199, %200 : vector<2x8x96xf32>
    %202 = vector.shape_cast %2 : vector<1x96xf32> to vector<1x1x96xf32>
    %203 = vector.broadcast %202 : vector<1x1x96xf32> to vector<2x8x96xf32>
    %204 = arith.addf %201, %203 : vector<2x8x96xf32>
    %205 = math.sin %204 : vector<2x8x96xf32>
    %206 = vector.shape_cast %196 : vector<1x96xf32> to vector<1x1x96xf32>
    %207 = vector.broadcast %206 : vector<1x1x96xf32> to vector<2x8x96xf32>
    %208 = arith.mulf %205, %207 : vector<2x8x96xf32>
    %209 = arith.addf %194, %208 : vector<2x8x96xf32>
    %210 = vector.shape_cast %1 : vector<1x96xf32> to vector<1x1x96xf32>
    %211 = vector.broadcast %195 : vector<2x8x1xf32> to vector<2x8x96xf32>
    %212 = vector.broadcast %210 : vector<1x1x96xf32> to vector<2x8x96xf32>
    %213 = arith.mulf %211, %212 : vector<2x8x96xf32>
    %214 = vector.shape_cast %3 : vector<1x96xf32> to vector<1x1x96xf32>
    %215 = vector.broadcast %214 : vector<1x1x96xf32> to vector<2x8x96xf32>
    %216 = arith.addf %213, %215 : vector<2x8x96xf32>
    %217 = math.cos %216 : vector<2x8x96xf32>
    %218 = vector.shape_cast %197 : vector<1x96xf32> to vector<1x1x96xf32>
    %219 = vector.broadcast %218 : vector<1x1x96xf32> to vector<2x8x96xf32>
    %220 = arith.mulf %217, %219 : vector<2x8x96xf32>
    %221 = arith.addf %209, %220 : vector<2x8x96xf32>
    %222 = vector.extract_strided_slice %166 {offsets = [0, 0, 2], sizes = [2, 8, 1], strides = [1, 1, 1]} : vector<2x8x4xf32> to vector<2x8x1xf32>
    %223 = vector.extract_strided_slice %4 {offsets = [2, 0], sizes = [1, 96], strides = [1, 1]} : vector<4x96xf32> to vector<1x96xf32>
    %224 = vector.extract_strided_slice %5 {offsets = [2, 0], sizes = [1, 96], strides = [1, 1]} : vector<4x96xf32> to vector<1x96xf32>
    %225 = vector.shape_cast %0 : vector<1x96xf32> to vector<1x1x96xf32>
    %226 = vector.broadcast %222 : vector<2x8x1xf32> to vector<2x8x96xf32>
    %227 = vector.broadcast %225 : vector<1x1x96xf32> to vector<2x8x96xf32>
    %228 = arith.mulf %226, %227 : vector<2x8x96xf32>
    %229 = vector.shape_cast %2 : vector<1x96xf32> to vector<1x1x96xf32>
    %230 = vector.broadcast %229 : vector<1x1x96xf32> to vector<2x8x96xf32>
    %231 = arith.addf %228, %230 : vector<2x8x96xf32>
    %232 = math.sin %231 : vector<2x8x96xf32>
    %233 = vector.shape_cast %223 : vector<1x96xf32> to vector<1x1x96xf32>
    %234 = vector.broadcast %233 : vector<1x1x96xf32> to vector<2x8x96xf32>
    %235 = arith.mulf %232, %234 : vector<2x8x96xf32>
    %236 = arith.addf %221, %235 : vector<2x8x96xf32>
    %237 = vector.shape_cast %1 : vector<1x96xf32> to vector<1x1x96xf32>
    %238 = vector.broadcast %222 : vector<2x8x1xf32> to vector<2x8x96xf32>
    %239 = vector.broadcast %237 : vector<1x1x96xf32> to vector<2x8x96xf32>
    %240 = arith.mulf %238, %239 : vector<2x8x96xf32>
    %241 = vector.shape_cast %3 : vector<1x96xf32> to vector<1x1x96xf32>
    %242 = vector.broadcast %241 : vector<1x1x96xf32> to vector<2x8x96xf32>
    %243 = arith.addf %240, %242 : vector<2x8x96xf32>
    %244 = math.cos %243 : vector<2x8x96xf32>
    %245 = vector.shape_cast %224 : vector<1x96xf32> to vector<1x1x96xf32>
    %246 = vector.broadcast %245 : vector<1x1x96xf32> to vector<2x8x96xf32>
    %247 = arith.mulf %244, %246 : vector<2x8x96xf32>
    %248 = arith.addf %236, %247 : vector<2x8x96xf32>
    %249 = vector.extract_strided_slice %166 {offsets = [0, 0, 3], sizes = [2, 8, 1], strides = [1, 1, 1]} : vector<2x8x4xf32> to vector<2x8x1xf32>
    %250 = vector.extract_strided_slice %4 {offsets = [3, 0], sizes = [1, 96], strides = [1, 1]} : vector<4x96xf32> to vector<1x96xf32>
    %251 = vector.extract_strided_slice %5 {offsets = [3, 0], sizes = [1, 96], strides = [1, 1]} : vector<4x96xf32> to vector<1x96xf32>
    %252 = vector.shape_cast %0 : vector<1x96xf32> to vector<1x1x96xf32>
    %253 = vector.broadcast %249 : vector<2x8x1xf32> to vector<2x8x96xf32>
    %254 = vector.broadcast %252 : vector<1x1x96xf32> to vector<2x8x96xf32>
    %255 = arith.mulf %253, %254 : vector<2x8x96xf32>
    %256 = vector.shape_cast %2 : vector<1x96xf32> to vector<1x1x96xf32>
    %257 = vector.broadcast %256 : vector<1x1x96xf32> to vector<2x8x96xf32>
    %258 = arith.addf %255, %257 : vector<2x8x96xf32>
    %259 = math.sin %258 : vector<2x8x96xf32>
    %260 = vector.shape_cast %250 : vector<1x96xf32> to vector<1x1x96xf32>
    %261 = vector.broadcast %260 : vector<1x1x96xf32> to vector<2x8x96xf32>
    %262 = arith.mulf %259, %261 : vector<2x8x96xf32>
    %263 = arith.addf %248, %262 : vector<2x8x96xf32>
    %264 = vector.shape_cast %1 : vector<1x96xf32> to vector<1x1x96xf32>
    %265 = vector.broadcast %249 : vector<2x8x1xf32> to vector<2x8x96xf32>
    %266 = vector.broadcast %264 : vector<1x1x96xf32> to vector<2x8x96xf32>
    %267 = arith.mulf %265, %266 : vector<2x8x96xf32>
    %268 = vector.shape_cast %3 : vector<1x96xf32> to vector<1x1x96xf32>
    %269 = vector.broadcast %268 : vector<1x1x96xf32> to vector<2x8x96xf32>
    %270 = arith.addf %267, %269 : vector<2x8x96xf32>
    %271 = math.cos %270 : vector<2x8x96xf32>
    %272 = vector.shape_cast %251 : vector<1x96xf32> to vector<1x1x96xf32>
    %273 = vector.broadcast %272 : vector<1x1x96xf32> to vector<2x8x96xf32>
    %274 = arith.mulf %271, %273 : vector<2x8x96xf32>
    %275 = arith.addf %263, %274 : vector<2x8x96xf32>
    %c0_71 = arith.constant 0 : index
    %c0_72 = arith.constant 0 : index
    %c0_73 = arith.constant 0 : index
    %276 = vector.load %arg28[%c0_71, %c0_72, %c0_73] : memref<2x8x96xf32, #tpu.memory_space<vmem>>, vector<2x8x96xf32>
    tpu.vector_store %arg28[%c0_71, %c0_72, %c0_73], %275 {strides = array<i32>} : memref<2x8x96xf32, #tpu.memory_space<vmem>>, vector<2x8x96xf32>,
    %cst_74 = arith.constant 0.000000e+00 : f32
    %277 = vector.broadcast %cst_74 : f32 to vector<2x96xf32>
    %c0_75 = arith.constant 0 : index
    %c0_76 = arith.constant 0 : index
    %c0_77 = arith.constant 0 : index
    %278 = vector.load %arg28[%c0_75, %c0_76, %c0_77] : memref<2x8x96xf32, #tpu.memory_space<vmem>>, vector<2x1x96xf32>
    %279 = vector.shape_cast %278 : vector<2x1x96xf32> to vector<2x96xf32>
    %c0_78 = arith.constant 0 : index
    %c0_79 = arith.constant 0 : index
    %c0_80 = arith.constant 0 : index
    %280 = vector.load %arg10[%c0_78, %c0_79, %c0_80] : memref<8x96x96xf32, #tpu.memory_space<vmem>>, vector<1x96x96xf32>
    %281 = vector.shape_cast %280 : vector<1x96x96xf32> to vector<96x96xf32>
    %cst_81 = arith.constant dense<0.000000e+00> : vector<2x96xf32>
    %282 = tpu.matmul %279, %281, %cst_81 {dimension_numbers = #tpu.dot_dimension_numbers<[1], [0], [0], [1], [0, 0, 1, 1], [], []>} : vector<2x96xf32>, vector<96x96xf32>, vector<2x96xf32> -> vector<2x96xf32>
    %283 = arith.addf %277, %282 : vector<2x96xf32>
    %c0_82 = arith.constant 0 : index
    %c1_83 = arith.constant 1 : index
    %c0_84 = arith.constant 0 : index
    %284 = vector.load %arg28[%c0_82, %c1_83, %c0_84] : memref<2x8x96xf32, #tpu.memory_space<vmem>>, vector<2x1x96xf32>
    %285 = vector.shape_cast %284 : vector<2x1x96xf32> to vector<2x96xf32>
    %c1_85 = arith.constant 1 : index
    %c0_86 = arith.constant 0 : index
    %c0_87 = arith.constant 0 : index
    %286 = vector.load %arg10[%c1_85, %c0_86, %c0_87] : memref<8x96x96xf32, #tpu.memory_space<vmem>>, vector<1x96x96xf32>
    %287 = vector.shape_cast %286 : vector<1x96x96xf32> to vector<96x96xf32>
    %cst_88 = arith.constant dense<0.000000e+00> : vector<2x96xf32>
    %288 = tpu.matmul %285, %287, %cst_88 {dimension_numbers = #tpu.dot_dimension_numbers<[1], [0], [0], [1], [0, 0, 1, 1], [], []>} : vector<2x96xf32>, vector<96x96xf32>, vector<2x96xf32> -> vector<2x96xf32>
    %289 = arith.addf %283, %288 : vector<2x96xf32>
    %c0_89 = arith.constant 0 : index
    %c2_90 = arith.constant 2 : index
    %c0_91 = arith.constant 0 : index
    %290 = vector.load %arg28[%c0_89, %c2_90, %c0_91] : memref<2x8x96xf32, #tpu.memory_space<vmem>>, vector<2x1x96xf32>
    %291 = vector.shape_cast %290 : vector<2x1x96xf32> to vector<2x96xf32>
    %c2_92 = arith.constant 2 : index
    %c0_93 = arith.constant 0 : index
    %c0_94 = arith.constant 0 : index
    %292 = vector.load %arg10[%c2_92, %c0_93, %c0_94] : memref<8x96x96xf32, #tpu.memory_space<vmem>>, vector<1x96x96xf32>
    %293 = vector.shape_cast %292 : vector<1x96x96xf32> to vector<96x96xf32>
    %cst_95 = arith.constant dense<0.000000e+00> : vector<2x96xf32>
    %294 = tpu.matmul %291, %293, %cst_95 {dimension_numbers = #tpu.dot_dimension_numbers<[1], [0], [0], [1], [0, 0, 1, 1], [], []>} : vector<2x96xf32>, vector<96x96xf32>, vector<2x96xf32> -> vector<2x96xf32>
    %295 = arith.addf %289, %294 : vector<2x96xf32>
    %c0_96 = arith.constant 0 : index
    %c3_97 = arith.constant 3 : index
    %c0_98 = arith.constant 0 : index
    %296 = vector.load %arg28[%c0_96, %c3_97, %c0_98] : memref<2x8x96xf32, #tpu.memory_space<vmem>>, vector<2x1x96xf32>
    %297 = vector.shape_cast %296 : vector<2x1x96xf32> to vector<2x96xf32>
    %c3_99 = arith.constant 3 : index
    %c0_100 = arith.constant 0 : index
    %c0_101 = arith.constant 0 : index
    %298 = vector.load %arg10[%c3_99, %c0_100, %c0_101] : memref<8x96x96xf32, #tpu.memory_space<vmem>>, vector<1x96x96xf32>
    %299 = vector.shape_cast %298 : vector<1x96x96xf32> to vector<96x96xf32>
    %cst_102 = arith.constant dense<0.000000e+00> : vector<2x96xf32>
    %300 = tpu.matmul %297, %299, %cst_102 {dimension_numbers = #tpu.dot_dimension_numbers<[1], [0], [0], [1], [0, 0, 1, 1], [], []>} : vector<2x96xf32>, vector<96x96xf32>, vector<2x96xf32> -> vector<2x96xf32>
    %301 = arith.addf %295, %300 : vector<2x96xf32>
    %c0_103 = arith.constant 0 : index
    %c4_104 = arith.constant 4 : index
    %c0_105 = arith.constant 0 : index
    %302 = vector.load %arg28[%c0_103, %c4_104, %c0_105] : memref<2x8x96xf32, #tpu.memory_space<vmem>>, vector<2x1x96xf32>
    %303 = vector.shape_cast %302 : vector<2x1x96xf32> to vector<2x96xf32>
    %c4_106 = arith.constant 4 : index
    %c0_107 = arith.constant 0 : index
    %c0_108 = arith.constant 0 : index
    %304 = vector.load %arg10[%c4_106, %c0_107, %c0_108] : memref<8x96x96xf32, #tpu.memory_space<vmem>>, vector<1x96x96xf32>
    %305 = vector.shape_cast %304 : vector<1x96x96xf32> to vector<96x96xf32>
    %cst_109 = arith.constant dense<0.000000e+00> : vector<2x96xf32>
    %306 = tpu.matmul %303, %305, %cst_109 {dimension_numbers = #tpu.dot_dimension_numbers<[1], [0], [0], [1], [0, 0, 1, 1], [], []>} : vector<2x96xf32>, vector<96x96xf32>, vector<2x96xf32> -> vector<2x96xf32>
    %307 = arith.addf %301, %306 : vector<2x96xf32>
    %c0_110 = arith.constant 0 : index
    %c5_111 = arith.constant 5 : index
    %c0_112 = arith.constant 0 : index
    %308 = vector.load %arg28[%c0_110, %c5_111, %c0_112] : memref<2x8x96xf32, #tpu.memory_space<vmem>>, vector<2x1x96xf32>
    %309 = vector.shape_cast %308 : vector<2x1x96xf32> to vector<2x96xf32>
    %c5_113 = arith.constant 5 : index
    %c0_114 = arith.constant 0 : index
    %c0_115 = arith.constant 0 : index
    %310 = vector.load %arg10[%c5_113, %c0_114, %c0_115] : memref<8x96x96xf32, #tpu.memory_space<vmem>>, vector<1x96x96xf32>
    %311 = vector.shape_cast %310 : vector<1x96x96xf32> to vector<96x96xf32>
    %cst_116 = arith.constant dense<0.000000e+00> : vector<2x96xf32>
    %312 = tpu.matmul %309, %311, %cst_116 {dimension_numbers = #tpu.dot_dimension_numbers<[1], [0], [0], [1], [0, 0, 1, 1], [], []>} : vector<2x96xf32>, vector<96x96xf32>, vector<2x96xf32> -> vector<2x96xf32>
    %313 = arith.addf %307, %312 : vector<2x96xf32>
    %c0_117 = arith.constant 0 : index
    %c6_118 = arith.constant 6 : index
    %c0_119 = arith.constant 0 : index
    %314 = vector.load %arg28[%c0_117, %c6_118, %c0_119] : memref<2x8x96xf32, #tpu.memory_space<vmem>>, vector<2x1x96xf32>
    %315 = vector.shape_cast %314 : vector<2x1x96xf32> to vector<2x96xf32>
    %c6_120 = arith.constant 6 : index
    %c0_121 = arith.constant 0 : index
    %c0_122 = arith.constant 0 : index
    %316 = vector.load %arg10[%c6_120, %c0_121, %c0_122] : memref<8x96x96xf32, #tpu.memory_space<vmem>>, vector<1x96x96xf32>
    %317 = vector.shape_cast %316 : vector<1x96x96xf32> to vector<96x96xf32>
    %cst_123 = arith.constant dense<0.000000e+00> : vector<2x96xf32>
    %318 = tpu.matmul %315, %317, %cst_123 {dimension_numbers = #tpu.dot_dimension_numbers<[1], [0], [0], [1], [0, 0, 1, 1], [], []>} : vector<2x96xf32>, vector<96x96xf32>, vector<2x96xf32> -> vector<2x96xf32>
    %319 = arith.addf %313, %318 : vector<2x96xf32>
    %c0_124 = arith.constant 0 : index
    %c7_125 = arith.constant 7 : index
    %c0_126 = arith.constant 0 : index
    %320 = vector.load %arg28[%c0_124, %c7_125, %c0_126] : memref<2x8x96xf32, #tpu.memory_space<vmem>>, vector<2x1x96xf32>
    %321 = vector.shape_cast %320 : vector<2x1x96xf32> to vector<2x96xf32>
    %c7_127 = arith.constant 7 : index
    %c0_128 = arith.constant 0 : index
    %c0_129 = arith.constant 0 : index
    %322 = vector.load %arg10[%c7_127, %c0_128, %c0_129] : memref<8x96x96xf32, #tpu.memory_space<vmem>>, vector<1x96x96xf32>
    %323 = vector.shape_cast %322 : vector<1x96x96xf32> to vector<96x96xf32>
    %cst_130 = arith.constant dense<0.000000e+00> : vector<2x96xf32>
    %324 = tpu.matmul %321, %323, %cst_130 {dimension_numbers = #tpu.dot_dimension_numbers<[1], [0], [0], [1], [0, 0, 1, 1], [], []>} : vector<2x96xf32>, vector<96x96xf32>, vector<2x96xf32> -> vector<2x96xf32>
    %325 = arith.addf %319, %324 : vector<2x96xf32>
    %c0_131 = arith.constant 0 : index
    %c0_132 = arith.constant 0 : index
    %326 = vector.load %arg0[%c0_131, %c0_132] : memref<2x96xf32, #tpu.memory_space<vmem>>, vector<2x96xf32>
    %327 = arith.subf %326, %165 : vector<2x96xf32>
    %c0_133 = arith.constant 0 : index
    %c0_134 = arith.constant 0 : index
    %328 = vector.load %arg11[%c0_133, %c0_134] : memref<96x96xf32, #tpu.memory_space<vmem>>, vector<96x96xf32>
    %cst_135 = arith.constant dense<0.000000e+00> : vector<2x96xf32>
    %329 = tpu.matmul %327, %328, %cst_135 {dimension_numbers = #tpu.dot_dimension_numbers<[1], [0], [0], [1], [0, 0, 1, 1], [], []>} : vector<2x96xf32>, vector<96x96xf32>, vector<2x96xf32> -> vector<2x96xf32>
    %330 = arith.subf %327, %329 : vector<2x96xf32>
    %c0_136 = arith.constant 0 : index
    %c0_137 = arith.constant 0 : index
    %331 = vector.load %arg12[%c0_136, %c0_137] : memref<96x96xf32, #tpu.memory_space<vmem>>, vector<96x96xf32>
    %cst_138 = arith.constant dense<0.000000e+00> : vector<2x96xf32>
    %332 = tpu.matmul %329, %331, %cst_138 {dimension_numbers = #tpu.dot_dimension_numbers<[1], [0], [0], [1], [0, 0, 1, 1], [], []>} : vector<2x96xf32>, vector<96x96xf32>, vector<2x96xf32> -> vector<2x96xf32>
    %c0_139 = arith.constant 0 : index
    %c0_140 = arith.constant 0 : index
    %333 = vector.load %arg13[%c0_139, %c0_140] : memref<1x96xf32, #tpu.memory_space<vmem>>, vector<1x96xf32>
    %334 = vector.broadcast %333 : vector<1x96xf32> to vector<2x96xf32>
    %335 = arith.addf %332, %334 : vector<2x96xf32>
    %c0_141 = arith.constant 0 : index
    %c0_142 = arith.constant 0 : index
    %336 = vector.load %arg14[%c0_141, %c0_142] : memref<96x96xf32, #tpu.memory_space<vmem>>, vector<96x96xf32>
    %cst_143 = arith.constant dense<0.000000e+00> : vector<2x96xf32>
    %337 = tpu.matmul %329, %336, %cst_143 {dimension_numbers = #tpu.dot_dimension_numbers<[1], [0], [0], [1], [0, 0, 1, 1], [], []>} : vector<2x96xf32>, vector<96x96xf32>, vector<2x96xf32> -> vector<2x96xf32>
    %c0_144 = arith.constant 0 : index
    %c0_145 = arith.constant 0 : index
    %338 = vector.load %arg15[%c0_144, %c0_145] : memref<1x96xf32, #tpu.memory_space<vmem>>, vector<1x96xf32>
    %339 = vector.broadcast %338 : vector<1x96xf32> to vector<2x96xf32>
    %340 = arith.addf %337, %339 : vector<2x96xf32>
    %341 = arith.negf %340 : vector<2x96xf32>
    %342 = math.exp %341 : vector<2x96xf32>
    %cst_146 = arith.constant 1.000000e+00 : f32
    %343 = vector.broadcast %cst_146 : f32 to vector<2x96xf32>
    %344 = arith.addf %343, %342 : vector<2x96xf32>
    %345 = arith.divf %343, %344 : vector<2x96xf32>
    %c0_147 = arith.constant 0 : index
    %c0_148 = arith.constant 0 : index
    %c0_149 = arith.constant 0 : index
    %346 = vector.load %arg16[%c0_147, %c0_148, %c0_149] : memref<2x96x96xf32, #tpu.memory_space<vmem>>, vector<1x96x96xf32>
    %347 = vector.shape_cast %346 : vector<1x96x96xf32> to vector<96x96xf32>
    %cst_150 = arith.constant dense<0.000000e+00> : vector<2x96xf32>
    %348 = tpu.matmul %329, %347, %cst_150 {dimension_numbers = #tpu.dot_dimension_numbers<[1], [0], [0], [1], [0, 0, 1, 1], [], []>} : vector<2x96xf32>, vector<96x96xf32>, vector<2x96xf32> -> vector<2x96xf32>
    %349 = arith.mulf %329, %329 : vector<2x96xf32>
    %c1_151 = arith.constant 1 : index
    %c0_152 = arith.constant 0 : index
    %c0_153 = arith.constant 0 : index
    %350 = vector.load %arg16[%c1_151, %c0_152, %c0_153] : memref<2x96x96xf32, #tpu.memory_space<vmem>>, vector<1x96x96xf32>
    %351 = vector.shape_cast %350 : vector<1x96x96xf32> to vector<96x96xf32>
    %cst_154 = arith.constant dense<0.000000e+00> : vector<2x96xf32>
    %352 = tpu.matmul %349, %351, %cst_154 {dimension_numbers = #tpu.dot_dimension_numbers<[1], [0], [0], [1], [0, 0, 1, 1], [], []>} : vector<2x96xf32>, vector<96x96xf32>, vector<2x96xf32> -> vector<2x96xf32>
    %353 = arith.addf %348, %352 : vector<2x96xf32>
    %c0_155 = arith.constant 0 : index
    %c0_156 = arith.constant 0 : index
    %354 = vector.load %arg17[%c0_155, %c0_156] : memref<1x96xf32, #tpu.memory_space<vmem>>, vector<1x96xf32>
    %355 = vector.broadcast %354 : vector<1x96xf32> to vector<2x96xf32>
    %356 = arith.addf %353, %355 : vector<2x96xf32>
    %357 = arith.mulf %345, %356 : vector<2x96xf32>
    %cst_157 = arith.constant 1.000000e+00 : f32
    %358 = vector.broadcast %cst_157 : f32 to vector<2x96xf32>
    %359 = arith.subf %358, %345 : vector<2x96xf32>
    %360 = arith.mulf %359, %335 : vector<2x96xf32>
    %361 = arith.addf %357, %360 : vector<2x96xf32>
    %362 = arith.addf %361, %329 : vector<2x96xf32>
    %c0_158 = arith.constant 0 : index
    %c0_159 = arith.constant 0 : index
    %c0_160 = arith.constant 0 : index
    %363 = vector.load %arg18[%c0_158, %c0_159, %c0_160] : memref<2x96x96xf32, #tpu.memory_space<vmem>>, vector<1x96x96xf32>
    %364 = vector.shape_cast %363 : vector<1x96x96xf32> to vector<96x96xf32>
    %cst_161 = arith.constant dense<0.000000e+00> : vector<2x96xf32>
    %365 = tpu.matmul %330, %364, %cst_161 {dimension_numbers = #tpu.dot_dimension_numbers<[1], [0], [0], [1], [0, 0, 1, 1], [], []>} : vector<2x96xf32>, vector<96x96xf32>, vector<2x96xf32> -> vector<2x96xf32>
    %c0_162 = arith.constant 0 : index
    %c0_163 = arith.constant 0 : index
    %c0_164 = arith.constant 0 : index
    %366 = vector.load %arg19[%c0_162, %c0_163, %c0_164] : memref<2x1x96xf32, #tpu.memory_space<vmem>>, vector<1x1x96xf32>
    %367 = vector.shape_cast %366 : vector<1x1x96xf32> to vector<1x96xf32>
    %368 = vector.broadcast %367 : vector<1x96xf32> to vector<2x96xf32>
    %369 = arith.addf %365, %368 : vector<2x96xf32>
    %370 = math.tanh %369 : vector<2x96xf32>
    %c0_165 = arith.constant 0 : index
    %c0_166 = arith.constant 0 : index
    %c0_167 = arith.constant 0 : index
    %371 = vector.load %arg20[%c0_165, %c0_166, %c0_167] : memref<2x96x96xf32, #tpu.memory_space<vmem>>, vector<1x96x96xf32>
    %372 = vector.shape_cast %371 : vector<1x96x96xf32> to vector<96x96xf32>
    %cst_168 = arith.constant dense<0.000000e+00> : vector<2x96xf32>
    %373 = tpu.matmul %330, %372, %cst_168 {dimension_numbers = #tpu.dot_dimension_numbers<[1], [0], [0], [1], [0, 0, 1, 1], [], []>} : vector<2x96xf32>, vector<96x96xf32>, vector<2x96xf32> -> vector<2x96xf32>
    %c0_169 = arith.constant 0 : index
    %c0_170 = arith.constant 0 : index
    %c0_171 = arith.constant 0 : index
    %374 = vector.load %arg21[%c0_169, %c0_170, %c0_171] : memref<2x1x96xf32, #tpu.memory_space<vmem>>, vector<1x1x96xf32>
    %375 = vector.shape_cast %374 : vector<1x1x96xf32> to vector<1x96xf32>
    %376 = vector.broadcast %375 : vector<1x96xf32> to vector<2x96xf32>
    %377 = arith.addf %373, %376 : vector<2x96xf32>
    %378 = arith.negf %377 : vector<2x96xf32>
    %379 = math.exp %378 : vector<2x96xf32>
    %cst_172 = arith.constant 1.000000e+00 : f32
    %380 = vector.broadcast %cst_172 : f32 to vector<2x96xf32>
    %381 = arith.addf %380, %379 : vector<2x96xf32>
    %382 = arith.divf %380, %381 : vector<2x96xf32>
    %383 = arith.mulf %382, %370 : vector<2x96xf32>
    %cst_173 = arith.constant 1.000000e+00 : f32
    %384 = vector.broadcast %cst_173 : f32 to vector<2x96xf32>
    %385 = arith.subf %384, %382 : vector<2x96xf32>
    %386 = arith.mulf %385, %330 : vector<2x96xf32>
    %387 = arith.addf %383, %386 : vector<2x96xf32>
    %c0_174 = arith.constant 0 : index
    %c0_175 = arith.constant 0 : index
    %c0_176 = arith.constant 0 : index
    %388 = vector.load %arg22[%c0_174, %c0_175, %c0_176] : memref<2x96x96xf32, #tpu.memory_space<vmem>>, vector<1x96x96xf32>
    %389 = vector.shape_cast %388 : vector<1x96x96xf32> to vector<96x96xf32>
    %cst_177 = arith.constant dense<0.000000e+00> : vector<2x96xf32>
    %390 = tpu.matmul %387, %389, %cst_177 {dimension_numbers = #tpu.dot_dimension_numbers<[1], [0], [0], [1], [0, 0, 1, 1], [], []>} : vector<2x96xf32>, vector<96x96xf32>, vector<2x96xf32> -> vector<2x96xf32>
    %c0_178 = arith.constant 0 : index
    %c0_179 = arith.constant 0 : index
    %c0_180 = arith.constant 0 : index
    %391 = vector.load %arg23[%c0_178, %c0_179, %c0_180] : memref<2x1x96xf32, #tpu.memory_space<vmem>>, vector<1x1x96xf32>
    %392 = vector.shape_cast %391 : vector<1x1x96xf32> to vector<1x96xf32>
    %393 = vector.broadcast %392 : vector<1x96xf32> to vector<2x96xf32>
    %394 = arith.addf %390, %393 : vector<2x96xf32>
    %395 = math.tanh %394 : vector<2x96xf32>
    %c0_181 = arith.constant 0 : index
    %c0_182 = arith.constant 0 : index
    %c0_183 = arith.constant 0 : index
    %396 = vector.load %arg24[%c0_181, %c0_182, %c0_183] : memref<2x96x96xf32, #tpu.memory_space<vmem>>, vector<1x96x96xf32>
    %397 = vector.shape_cast %396 : vector<1x96x96xf32> to vector<96x96xf32>
    %cst_184 = arith.constant dense<0.000000e+00> : vector<2x96xf32>
    %398 = tpu.matmul %387, %397, %cst_184 {dimension_numbers = #tpu.dot_dimension_numbers<[1], [0], [0], [1], [0, 0, 1, 1], [], []>} : vector<2x96xf32>, vector<96x96xf32>, vector<2x96xf32> -> vector<2x96xf32>
    %c0_185 = arith.constant 0 : index
    %c0_186 = arith.constant 0 : index
    %c0_187 = arith.constant 0 : index
    %399 = vector.load %arg25[%c0_185, %c0_186, %c0_187] : memref<2x1x96xf32, #tpu.memory_space<vmem>>, vector<1x1x96xf32>
    %400 = vector.shape_cast %399 : vector<1x1x96xf32> to vector<1x96xf32>
    %401 = vector.broadcast %400 : vector<1x96xf32> to vector<2x96xf32>
    %402 = arith.addf %398, %401 : vector<2x96xf32>
    %403 = arith.negf %402 : vector<2x96xf32>
    %404 = math.exp %403 : vector<2x96xf32>
    %cst_188 = arith.constant 1.000000e+00 : f32
    %405 = vector.broadcast %cst_188 : f32 to vector<2x96xf32>
    %406 = arith.addf %405, %404 : vector<2x96xf32>
    %407 = arith.divf %405, %406 : vector<2x96xf32>
    %408 = arith.mulf %407, %395 : vector<2x96xf32>
    %cst_189 = arith.constant 1.000000e+00 : f32
    %409 = vector.broadcast %cst_189 : f32 to vector<2x96xf32>
    %410 = arith.subf %409, %407 : vector<2x96xf32>
    %411 = arith.mulf %410, %387 : vector<2x96xf32>
    %412 = arith.addf %408, %411 : vector<2x96xf32>
    %413 = math.tanh %412 : vector<2x96xf32>
    %414 = arith.addf %330, %413 : vector<2x96xf32>
    %c1_190 = arith.constant 1 : index
    %c0_191 = arith.constant 0 : index
    %c0_192 = arith.constant 0 : index
    %415 = vector.load %arg18[%c1_190, %c0_191, %c0_192] : memref<2x96x96xf32, #tpu.memory_space<vmem>>, vector<1x96x96xf32>
    %416 = vector.shape_cast %415 : vector<1x96x96xf32> to vector<96x96xf32>
    %cst_193 = arith.constant dense<0.000000e+00> : vector<2x96xf32>
    %417 = tpu.matmul %414, %416, %cst_193 {dimension_numbers = #tpu.dot_dimension_numbers<[1], [0], [0], [1], [0, 0, 1, 1], [], []>} : vector<2x96xf32>, vector<96x96xf32>, vector<2x96xf32> -> vector<2x96xf32>
    %c1_194 = arith.constant 1 : index
    %c0_195 = arith.constant 0 : index
    %c0_196 = arith.constant 0 : index
    %418 = vector.load %arg19[%c1_194, %c0_195, %c0_196] : memref<2x1x96xf32, #tpu.memory_space<vmem>>, vector<1x1x96xf32>
    %419 = vector.shape_cast %418 : vector<1x1x96xf32> to vector<1x96xf32>
    %420 = vector.broadcast %419 : vector<1x96xf32> to vector<2x96xf32>
    %421 = arith.addf %417, %420 : vector<2x96xf32>
    %422 = math.tanh %421 : vector<2x96xf32>
    %c1_197 = arith.constant 1 : index
    %c0_198 = arith.constant 0 : index
    %c0_199 = arith.constant 0 : index
    %423 = vector.load %arg20[%c1_197, %c0_198, %c0_199] : memref<2x96x96xf32, #tpu.memory_space<vmem>>, vector<1x96x96xf32>
    %424 = vector.shape_cast %423 : vector<1x96x96xf32> to vector<96x96xf32>
    %cst_200 = arith.constant dense<0.000000e+00> : vector<2x96xf32>
    %425 = tpu.matmul %414, %424, %cst_200 {dimension_numbers = #tpu.dot_dimension_numbers<[1], [0], [0], [1], [0, 0, 1, 1], [], []>} : vector<2x96xf32>, vector<96x96xf32>, vector<2x96xf32> -> vector<2x96xf32>
    %c1_201 = arith.constant 1 : index
    %c0_202 = arith.constant 0 : index
    %c0_203 = arith.constant 0 : index
    %426 = vector.load %arg21[%c1_201, %c0_202, %c0_203] : memref<2x1x96xf32, #tpu.memory_space<vmem>>, vector<1x1x96xf32>
    %427 = vector.shape_cast %426 : vector<1x1x96xf32> to vector<1x96xf32>
    %428 = vector.broadcast %427 : vector<1x96xf32> to vector<2x96xf32>
    %429 = arith.addf %425, %428 : vector<2x96xf32>
    %430 = arith.negf %429 : vector<2x96xf32>
    %431 = math.exp %430 : vector<2x96xf32>
    %cst_204 = arith.constant 1.000000e+00 : f32
    %432 = vector.broadcast %cst_204 : f32 to vector<2x96xf32>
    %433 = arith.addf %432, %431 : vector<2x96xf32>
    %434 = arith.divf %432, %433 : vector<2x96xf32>
    %435 = arith.mulf %434, %422 : vector<2x96xf32>
    %cst_205 = arith.constant 1.000000e+00 : f32
    %436 = vector.broadcast %cst_205 : f32 to vector<2x96xf32>
    %437 = arith.subf %436, %434 : vector<2x96xf32>
    %438 = arith.mulf %437, %414 : vector<2x96xf32>
    %439 = arith.addf %435, %438 : vector<2x96xf32>
    %c1_206 = arith.constant 1 : index
    %c0_207 = arith.constant 0 : index
    %c0_208 = arith.constant 0 : index
    %440 = vector.load %arg22[%c1_206, %c0_207, %c0_208] : memref<2x96x96xf32, #tpu.memory_space<vmem>>, vector<1x96x96xf32>
    %441 = vector.shape_cast %440 : vector<1x96x96xf32> to vector<96x96xf32>
    %cst_209 = arith.constant dense<0.000000e+00> : vector<2x96xf32>
    %442 = tpu.matmul %439, %441, %cst_209 {dimension_numbers = #tpu.dot_dimension_numbers<[1], [0], [0], [1], [0, 0, 1, 1], [], []>} : vector<2x96xf32>, vector<96x96xf32>, vector<2x96xf32> -> vector<2x96xf32>
    %c1_210 = arith.constant 1 : index
    %c0_211 = arith.constant 0 : index
    %c0_212 = arith.constant 0 : index
    %443 = vector.load %arg23[%c1_210, %c0_211, %c0_212] : memref<2x1x96xf32, #tpu.memory_space<vmem>>, vector<1x1x96xf32>
    %444 = vector.shape_cast %443 : vector<1x1x96xf32> to vector<1x96xf32>
    %445 = vector.broadcast %444 : vector<1x96xf32> to vector<2x96xf32>
    %446 = arith.addf %442, %445 : vector<2x96xf32>
    %447 = math.tanh %446 : vector<2x96xf32>
    %c1_213 = arith.constant 1 : index
    %c0_214 = arith.constant 0 : index
    %c0_215 = arith.constant 0 : index
    %448 = vector.load %arg24[%c1_213, %c0_214, %c0_215] : memref<2x96x96xf32, #tpu.memory_space<vmem>>, vector<1x96x96xf32>
    %449 = vector.shape_cast %448 : vector<1x96x96xf32> to vector<96x96xf32>
    %cst_216 = arith.constant dense<0.000000e+00> : vector<2x96xf32>
    %450 = tpu.matmul %439, %449, %cst_216 {dimension_numbers = #tpu.dot_dimension_numbers<[1], [0], [0], [1], [0, 0, 1, 1], [], []>} : vector<2x96xf32>, vector<96x96xf32>, vector<2x96xf32> -> vector<2x96xf32>
    %c1_217 = arith.constant 1 : index
    %c0_218 = arith.constant 0 : index
    %c0_219 = arith.constant 0 : index
    %451 = vector.load %arg25[%c1_217, %c0_218, %c0_219] : memref<2x1x96xf32, #tpu.memory_space<vmem>>, vector<1x1x96xf32>
    %452 = vector.shape_cast %451 : vector<1x1x96xf32> to vector<1x96xf32>
    %453 = vector.broadcast %452 : vector<1x96xf32> to vector<2x96xf32>
    %454 = arith.addf %450, %453 : vector<2x96xf32>
    %455 = arith.negf %454 : vector<2x96xf32>
    %456 = math.exp %455 : vector<2x96xf32>
    %cst_220 = arith.constant 1.000000e+00 : f32
    %457 = vector.broadcast %cst_220 : f32 to vector<2x96xf32>
    %458 = arith.addf %457, %456 : vector<2x96xf32>
    %459 = arith.divf %457, %458 : vector<2x96xf32>
    %460 = arith.mulf %459, %447 : vector<2x96xf32>
    %cst_221 = arith.constant 1.000000e+00 : f32
    %461 = vector.broadcast %cst_221 : f32 to vector<2x96xf32>
    %462 = arith.subf %461, %459 : vector<2x96xf32>
    %463 = arith.mulf %462, %439 : vector<2x96xf32>
    %464 = arith.addf %460, %463 : vector<2x96xf32>
    %465 = math.tanh %464 : vector<2x96xf32>
    %466 = arith.addf %414, %465 : vector<2x96xf32>
    %467 = arith.addf %362, %325 : vector<2x96xf32>
    %468 = arith.addf %467, %466 : vector<2x96xf32>
    %c0_222 = arith.constant 0 : index
    %c0_223 = arith.constant 0 : index
    %469 = vector.load %arg26[%c0_222, %c0_223] : memref<2x96xf32, #tpu.memory_space<vmem>>, vector<2x96xf32>
    tpu.vector_store %arg26[%c0_222, %c0_223], %468 {strides = array<i32>} : memref<2x96xf32, #tpu.memory_space<vmem>>, vector<2x96xf32>,
    return
  }
}

</mosaic_0001>

<llo_original>
// kernel: _lambda_.1
$region0: #{_lambda_.1}
  #allocation0 [shape = 'u32[]', space=smem, size = 0x4, offset = 0x4, fixed_abs, tag = 'smem constant byte address 0x4 - core index']
  #allocation1 [shape = 'u32[72,128]{1,0:T(1,128)}', space=vmem, size = 0x9000, scoped, tag = 'internal scratch']
  #allocation2 [shape = 'f32[2,8,96]{2,1,0:T(8,128)}', space=vmem, size = 0x2000, scoped, tag = 'scratch operand']
  #allocation3 [shape = 'f32[2,8,96]{2,1,0:T(8,128)}', space=vmem, size = 0x2000, scoped, tag = 'scratch operand']
  %s0 = inlined_call_operand.vmem [shape: f32[2,96], index: 0, kind: input, shape index: {}]
  %s1 = inlined_call_operand.vmem [shape: f32[2,8,4], index: 1, kind: input, shape index: {}]
  %s2 = inlined_call_operand.vmem [shape: f32[2,8,4], index: 2, kind: input, shape index: {}]
  %s3 = inlined_call_operand.vmem [shape: f32[1,96], index: 3, kind: input, shape index: {}]
  %s4 = inlined_call_operand.vmem [shape: f32[1,96], index: 4, kind: input, shape index: {}]
  %s5 = inlined_call_operand.vmem [shape: f32[1,96], index: 5, kind: input, shape index: {}]
  %s6 = inlined_call_operand.vmem [shape: f32[1,96], index: 6, kind: input, shape index: {}]
  %s7 = inlined_call_operand.vmem [shape: f32[4,96], index: 7, kind: input, shape index: {}]
  %s8 = inlined_call_operand.vmem [shape: f32[4,96], index: 8, kind: input, shape index: {}]
  %s9 = inlined_call_operand.hbm [shape: f32[8,96,96], index: 9, kind: input, shape index: {}, may-alias: {9,10}]
  %s10 = inlined_call_operand.hbm [shape: f32[8,96,96], index: 10, kind: input, shape index: {}, may-alias: {9,10}]
  %s11 = inlined_call_operand.vmem [shape: f32[96,96], index: 11, kind: input, shape index: {}]
  %s12 = inlined_call_operand.hbm [shape: f32[96,96], index: 12, kind: input, shape index: {}]
  %s13 = inlined_call_operand.vmem [shape: f32[1,96], index: 13, kind: input, shape index: {}]
  %s14 = inlined_call_operand.hbm [shape: f32[96,96], index: 14, kind: input, shape index: {}]
  %s15 = inlined_call_operand.vmem [shape: f32[1,96], index: 15, kind: input, shape index: {}]
  %s16 = inlined_call_operand.hbm [shape: f32[2,96,96], index: 16, kind: input, shape index: {}]
  %s17 = inlined_call_operand.vmem [shape: f32[1,96], index: 17, kind: input, shape index: {}]
  %s18 = inlined_call_operand.hbm [shape: f32[2,96,96], index: 18, kind: input, shape index: {}]
  %s19 = inlined_call_operand.vmem [shape: f32[2,1,96], index: 19, kind: input, shape index: {}]
  %s20 = inlined_call_operand.hbm [shape: f32[2,96,96], index: 20, kind: input, shape index: {}]
  %s21 = inlined_call_operand.vmem [shape: f32[2,1,96], index: 21, kind: input, shape index: {}]
  %s22 = inlined_call_operand.hbm [shape: f32[2,96,96], index: 22, kind: input, shape index: {}]
  %s23 = inlined_call_operand.vmem [shape: f32[2,1,96], index: 23, kind: input, shape index: {}]
  %s24 = inlined_call_operand.hbm [shape: f32[2,96,96], index: 24, kind: input, shape index: {}]
  %s25 = inlined_call_operand.vmem [shape: f32[2,1,96], index: 25, kind: input, shape index: {}]
  %s26 = inlined_call_operand.vmem [shape: f32[2,96], index: 26, kind: output, shape index: {}]
  %s27 = sld [smem:[#allocation0]]
  $region150: #{_lambda_.1} parent=0
    _
  %s29 = ssub.s32 1, %s27
  %s30 = scalar_select 0, %s29, %s27
  $region1: #{_lambda_.1} parent=0
    #allocation4 [shape = 'u8[393216]{0}', space=vmem, size = 0x60000, scoped, tag = 'input window, operand 9, single buffered']
    #allocation5 [shape = 's32[1]{0}', space=sflag, size = 0x4, scoped, tag = 'scoped memory for _lambda_.1']
    #allocation6 [shape = 'u8[393216]{0}', space=vmem, size = 0x60000, scoped, tag = 'input window, operand 10, single buffered']
    #allocation7 [shape = 's32[1]{0}', space=sflag, size = 0x4, scoped, tag = 'scoped memory for _lambda_.1']
    #allocation8 [shape = 'u8[49152]{0}', space=vmem, size = 0xc000, scoped, tag = 'input window, operand 12, single buffered']
    #allocation9 [shape = 'u8[49152]{0}', space=vmem, size = 0xc000, scoped, tag = 'input window, operand 14, single buffered']
    #allocation10 [shape = 's32[1]{0}', space=sflag, size = 0x4, scoped, tag = 'scoped memory for _lambda_.1']
    #allocation11 [shape = 'u8[98304]{0}', space=vmem, size = 0x18000, scoped, tag = 'input window, operand 16, single buffered']
    #allocation12 [shape = 'u8[98304]{0}', space=vmem, size = 0x18000, scoped, tag = 'input window, operand 18, single buffered']
    #allocation13 [shape = 's32[1]{0}', space=sflag, size = 0x4, scoped, tag = 'scoped memory for _lambda_.1']
    #allocation14 [shape = 'u8[98304]{0}', space=vmem, size = 0x18000, scoped, tag = 'input window, operand 20, single buffered']
    #allocation15 [shape = 'u8[98304]{0}', space=vmem, size = 0x18000, scoped, tag = 'input window, operand 22, single buffered']
    #allocation16 [shape = 's32[1]{0}', space=sflag, size = 0x4, scoped, tag = 'scoped memory for _lambda_.1']
    #allocation17 [shape = 'u8[98304]{0}', space=vmem, size = 0x18000, scoped, tag = 'input window, operand 24, single buffered']
    %31 = vsyncpa [#allocation5], 0
    %32 = vsyncpa [#allocation7], 0
    %33 = vsyncpa [#allocation10], 0
    %34 = vsyncpa [#allocation13], 0
    %35 = vsyncpa [#allocation16], 0
    // Predicated region
    $region2: #{_lambda_.1} parent=1 // pred_check
      _
    $region3: #{_lambda_.1} parent=1 // pred_check_branch
      %37 = sbr.rel (0) target = $region5
    $region4: #{_lambda_.1} parent=1 // pred_region
      _
    $region5: #{_lambda_.1} parent=1 // pred_fallthru
      _
    // Predicated region
    $region6: #{_lambda_.1} parent=1 // pred_check
      _
    $region7: #{_lambda_.1} parent=1 // pred_check_branch
      %39 = sbr.rel (0) target = $region9
    $region8: #{_lambda_.1} parent=1 // pred_region
      _
    $region9: #{_lambda_.1} parent=1 // pred_fallthru
      _
    // Predicated region
    $region10: #{_lambda_.1} parent=1 // pred_check
      _
    $region11: #{_lambda_.1} parent=1 // pred_check_branch
      %41 = sbr.rel (0) target = $region13
    $region12: #{_lambda_.1} parent=1 // pred_region
      _
    $region13: #{_lambda_.1} parent=1 // pred_fallthru
      _
    // Predicated region
    $region14: #{_lambda_.1} parent=1 // pred_check
      _
    $region15: #{_lambda_.1} parent=1 // pred_check_branch
      %43 = sbr.rel (0) target = $region17
    $region16: #{_lambda_.1} parent=1 // pred_region
      _
    $region17: #{_lambda_.1} parent=1 // pred_fallthru
      _
    // Predicated region
    $region18: #{_lambda_.1} parent=1 // pred_check
      _
    $region19: #{_lambda_.1} parent=1 // pred_check_branch
      %45 = sbr.rel (0) target = $region21
    $region20: #{_lambda_.1} parent=1 // pred_region
      _
    $region21: #{_lambda_.1} parent=1 // pred_fallthru
      _
    // Predicated region
    $region22: #{_lambda_.1} parent=1 // pred_check
      _
    $region23: #{_lambda_.1} parent=1 // pred_check_branch
      %47 = sbr.rel (0) target = $region25
    $region24: #{_lambda_.1} parent=1 // pred_region
      _
    $region25: #{_lambda_.1} parent=1 // pred_fallthru
      _
    // Predicated region
    $region26: #{_lambda_.1} parent=1 // pred_check
      _
    $region27: #{_lambda_.1} parent=1 // pred_check_branch
      %49 = sbr.rel (0) target = $region29
    $region28: #{_lambda_.1} parent=1 // pred_region
      _
    $region29: #{_lambda_.1} parent=1 // pred_fallthru
      _
    // Predicated region
    $region30: #{_lambda_.1} parent=1 // pred_check
      _
    $region31: #{_lambda_.1} parent=1 // pred_check_branch
      %51 = sbr.rel (0) target = $region33
    $region32: #{_lambda_.1} parent=1 // pred_region
      _
    $region33: #{_lambda_.1} parent=1 // pred_fallthru
      _
    // Predicated region
    $region34: #{_lambda_.1} parent=1 // pred_check
      _
    $region35: #{_lambda_.1} parent=1 // pred_check_branch
      %53 = sbr.rel (0) target = $region37
    $region36: #{_lambda_.1} parent=1 // pred_region
      _
    $region37: #{_lambda_.1} parent=1 // pred_fallthru
      _
    // Predicated region
    $region38: #{_lambda_.1} parent=1 // pred_check
      _
    $region39: #{_lambda_.1} parent=1 // pred_check_branch
      %55 = sbr.rel (0) target = $region41
    $region40: #{_lambda_.1} parent=1 // pred_region
      %57 = vsyncadd [#allocation5], 0
      %s58 = sshll.u32 %s9, 4
      %s59 = int_to_ptr.hbm [resolvable:$true] %s58
      %s60 = sshll.u32 [#allocation4], 4
      %s61 = int_to_ptr.vmem [resolvable:$true] %s60
      %66 = dma.hbm_to_vmem [thread:$0]  %s59, 12288, %s61, [#allocation5], 128, 128, 8
    $region41: #{_lambda_.1} parent=1 // pred_fallthru
      _
    // Predicated region
    $region42: #{_lambda_.1} parent=1 // pred_check
      _
    $region43: #{_lambda_.1} parent=1 // pred_check_branch
      %68 = sbr.rel (0) target = $region45
    $region44: #{_lambda_.1} parent=1 // pred_region
      %70 = vsyncadd [#allocation7], 0
      %s71 = sshll.u32 %s10, 4
      %s72 = int_to_ptr.hbm [resolvable:$true] %s71
      %s73 = sshll.u32 [#allocation6], 4
      %s74 = int_to_ptr.vmem [resolvable:$true] %s73
      %79 = dma.hbm_to_vmem [thread:$0]  %s72, 12288, %s74, [#allocation7], 128, 128, 8
    $region45: #{_lambda_.1} parent=1 // pred_fallthru
      _
    // Predicated region
    $region46: #{_lambda_.1} parent=1 // pred_check
      _
    $region47: #{_lambda_.1} parent=1 // pred_check_branch
      %81 = sbr.rel (0) target = $region49
    $region48: #{_lambda_.1} parent=1 // pred_region
      _
    $region49: #{_lambda_.1} parent=1 // pred_fallthru
      _
    // Predicated region
    $region50: #{_lambda_.1} parent=1 // pred_check
      _
    $region51: #{_lambda_.1} parent=1 // pred_check_branch
      %83 = sbr.rel (0) target = $region53
    $region52: #{_lambda_.1} parent=1 // pred_region
      %85 = vsyncadd [#allocation7], 0
      %s86 = sshll.u32 %s12, 4
      %s87 = int_to_ptr.hbm [resolvable:$true] %s86
      %s88 = sshll.u32 [#allocation8], 4
      %s89 = int_to_ptr.vmem [resolvable:$true] %s88
      %94 = dma.hbm_to_vmem [thread:$0]  %s87, 1536, %s89, [#allocation7], 128, 128, 8
    $region53: #{_lambda_.1} parent=1 // pred_fallthru
      _
    // Predicated region
    $region54: #{_lambda_.1} parent=1 // pred_check
      _
    $region55: #{_lambda_.1} parent=1 // pred_check_branch
      %96 = sbr.rel (0) target = $region57
    $region56: #{_lambda_.1} parent=1 // pred_region
      _
    $region57: #{_lambda_.1} parent=1 // pred_fallthru
      _
    // Predicated region
    $region58: #{_lambda_.1} parent=1 // pred_check
      _
    $region59: #{_lambda_.1} parent=1 // pred_check_branch
      %98 = sbr.rel (0) target = $region61
    $region60: #{_lambda_.1} parent=1 // pred_region
      %100 = vsyncadd [#allocation10], 0
      %s101 = sshll.u32 %s14, 4
      %s102 = int_to_ptr.hbm [resolvable:$true] %s101
      %s103 = sshll.u32 [#allocation9], 4
      %s104 = int_to_ptr.vmem [resolvable:$true] %s103
      %109 = dma.hbm_to_vmem [thread:$0]  %s102, 1536, %s104, [#allocation10], 128, 128, 8
    $region61: #{_lambda_.1} parent=1 // pred_fallthru
      _
    // Predicated region
    $region62: #{_lambda_.1} parent=1 // pred_check
      _
    $region63: #{_lambda_.1} parent=1 // pred_check_branch
      %111 = sbr.rel (0) target = $region65
    $region64: #{_lambda_.1} parent=1 // pred_region
      _
    $region65: #{_lambda_.1} parent=1 // pred_fallthru
      _
    // Predicated region
    $region66: #{_lambda_.1} parent=1 // pred_check
      _
    $region67: #{_lambda_.1} parent=1 // pred_check_branch
      %113 = sbr.rel (0) target = $region69
    $region68: #{_lambda_.1} parent=1 // pred_region
      %115 = vsyncadd [#allocation10], 0
      %s116 = sshll.u32 %s16, 4
      %s117 = int_to_ptr.hbm [resolvable:$true] %s116
      %s118 = sshll.u32 [#allocation11], 4
      %s119 = int_to_ptr.vmem [resolvable:$true] %s118
      %124 = dma.hbm_to_vmem [thread:$0]  %s117, 3072, %s119, [#allocation10], 128, 128, 8
    $region69: #{_lambda_.1} parent=1 // pred_fallthru
      _
    // Predicated region
    $region70: #{_lambda_.1} parent=1 // pred_check
      _
    $region71: #{_lambda_.1} parent=1 // pred_check_branch
      %126 = sbr.rel (0) target = $region73
    $region72: #{_lambda_.1} parent=1 // pred_region
      _
    $region73: #{_lambda_.1} parent=1 // pred_fallthru
      _
    // Predicated region
    $region74: #{_lambda_.1} parent=1 // pred_check
      _
    $region75: #{_lambda_.1} parent=1 // pred_check_branch
      %128 = sbr.rel (0) target = $region77
    $region76: #{_lambda_.1} parent=1 // pred_region
      %130 = vsyncadd [#allocation13], 0
      %s131 = sshll.u32 %s18, 4
      %s132 = int_to_ptr.hbm [resolvable:$true] %s131
      %s133 = sshll.u32 [#allocation12], 4
      %s134 = int_to_ptr.vmem [resolvable:$true] %s133
      %139 = dma.hbm_to_vmem [thread:$0]  %s132, 3072, %s134, [#allocation13], 128, 128, 8
    $region77: #{_lambda_.1} parent=1 // pred_fallthru
      _
    // Predicated region
    $region78: #{_lambda_.1} parent=1 // pred_check
      _
    $region79: #{_lambda_.1} parent=1 // pred_check_branch
      %141 = sbr.rel (0) target = $region81
    $region80: #{_lambda_.1} parent=1 // pred_region
      _
    $region81: #{_lambda_.1} parent=1 // pred_fallthru
      _
    // Predicated region
    $region82: #{_lambda_.1} parent=1 // pred_check
      _
    $region83: #{_lambda_.1} parent=1 // pred_check_branch
      %143 = sbr.rel (0) target = $region85
    $region84: #{_lambda_.1} parent=1 // pred_region
      %145 = vsyncadd [#allocation13], 0
      %s146 = sshll.u32 %s20, 4
      %s147 = int_to_ptr.hbm [resolvable:$true] %s146
      %s148 = sshll.u32 [#allocation14], 4
      %s149 = int_to_ptr.vmem [resolvable:$true] %s148
      %154 = dma.hbm_to_vmem [thread:$0]  %s147, 3072, %s149, [#allocation13], 128, 128, 8
    $region85: #{_lambda_.1} parent=1 // pred_fallthru
      _
    // Predicated region
    $region86: #{_lambda_.1} parent=1 // pred_check
      _
    $region87: #{_lambda_.1} parent=1 // pred_check_branch
      %156 = sbr.rel (0) target = $region89
    $region88: #{_lambda_.1} parent=1 // pred_region
      _
    $region89: #{_lambda_.1} parent=1 // pred_fallthru
      _
    // Predicated region
    $region90: #{_lambda_.1} parent=1 // pred_check
      _
    $region91: #{_lambda_.1} parent=1 // pred_check_branch
      %158 = sbr.rel (0) target = $region93
    $region92: #{_lambda_.1} parent=1 // pred_region
      %160 = vsyncadd [#allocation16], 0
      %s161 = sshll.u32 %s22, 4
      %s162 = int_to_ptr.hbm [resolvable:$true] %s161
      %s163 = sshll.u32 [#allocation15], 4
      %s164 = int_to_ptr.vmem [resolvable:$true] %s163
      %169 = dma.hbm_to_vmem [thread:$0]  %s162, 3072, %s164, [#allocation16], 128, 128, 8
    $region93: #{_lambda_.1} parent=1 // pred_fallthru
      _
    // Predicated region
    $region94: #{_lambda_.1} parent=1 // pred_check
      _
    $region95: #{_lambda_.1} parent=1 // pred_check_branch
      %171 = sbr.rel (0) target = $region97
    $region96: #{_lambda_.1} parent=1 // pred_region
      _
    $region97: #{_lambda_.1} parent=1 // pred_fallthru
      _
    // Predicated region
    $region98: #{_lambda_.1} parent=1 // pred_check
      _
    $region99: #{_lambda_.1} parent=1 // pred_check_branch
      %173 = sbr.rel (0) target = $region101
    $region100: #{_lambda_.1} parent=1 // pred_region
      %175 = vsyncadd [#allocation16], 0
      %s176 = sshll.u32 %s24, 4
      %s177 = int_to_ptr.hbm [resolvable:$true] %s176
      %s178 = sshll.u32 [#allocation17], 4
      %s179 = int_to_ptr.vmem [resolvable:$true] %s178
      %184 = dma.hbm_to_vmem [thread:$0]  %s177, 3072, %s179, [#allocation16], 128, 128, 8
    $region101: #{_lambda_.1} parent=1 // pred_fallthru
      _
    // Predicated region
    $region102: #{_lambda_.1} parent=1 // pred_check
      _
    $region103: #{_lambda_.1} parent=1 // pred_check_branch
      %186 = sbr.rel (0) target = $region105
    $region104: #{_lambda_.1} parent=1 // pred_region
      _
    $region105: #{_lambda_.1} parent=1 // pred_fallthru
      _
    // Predicated region
    $region106: #{_lambda_.1} parent=1 // pred_check
      _
    $region107: #{_lambda_.1} parent=1 // pred_check_branch
      %188 = sbr.rel (0) target = $region109
    $region108: #{_lambda_.1} parent=1 // pred_region
      %190 = dma.done [#allocation5], 12288
    $region109: #{_lambda_.1} parent=1 // pred_fallthru
      _
    // Predicated region
    $region110: #{_lambda_.1} parent=1 // pred_check
      _
    $region111: #{_lambda_.1} parent=1 // pred_check_branch
      %192 = sbr.rel (0) target = $region113
    $region112: #{_lambda_.1} parent=1 // pred_region
      %194 = dma.done [#allocation7], 12288
    $region113: #{_lambda_.1} parent=1 // pred_fallthru
      _
    // Predicated region
    $region114: #{_lambda_.1} parent=1 // pred_check
      _
    $region115: #{_lambda_.1} parent=1 // pred_check_branch
      %196 = sbr.rel (0) target = $region117
    $region116: #{_lambda_.1} parent=1 // pred_region
      %198 = dma.done [#allocation7], 1536
    $region117: #{_lambda_.1} parent=1 // pred_fallthru
      _
    // Predicated region
    $region118: #{_lambda_.1} parent=1 // pred_check
      _
    $region119: #{_lambda_.1} parent=1 // pred_check_branch
      %200 = sbr.rel (0) target = $region121
    $region120: #{_lambda_.1} parent=1 // pred_region
      %202 = dma.done [#allocation10], 1536
    $region121: #{_lambda_.1} parent=1 // pred_fallthru
      _
    // Predicated region
    $region122: #{_lambda_.1} parent=1 // pred_check
      _
    $region123: #{_lambda_.1} parent=1 // pred_check_branch
      %204 = sbr.rel (0) target = $region125
    $region124: #{_lambda_.1} parent=1 // pred_region
      %206 = dma.done [#allocation10], 3072
    $region125: #{_lambda_.1} parent=1 // pred_fallthru
      _
    // Predicated region
    $region126: #{_lambda_.1} parent=1 // pred_check
      _
    $region127: #{_lambda_.1} parent=1 // pred_check_branch
      %208 = sbr.rel (0) target = $region129
    $region128: #{_lambda_.1} parent=1 // pred_region
      %210 = dma.done [#allocation13], 3072
    $region129: #{_lambda_.1} parent=1 // pred_fallthru
      _
    // Predicated region
    $region130: #{_lambda_.1} parent=1 // pred_check
      _
    $region131: #{_lambda_.1} parent=1 // pred_check_branch
      %212 = sbr.rel (0) target = $region133
    $region132: #{_lambda_.1} parent=1 // pred_region
      %214 = dma.done [#allocation13], 3072
    $region133: #{_lambda_.1} parent=1 // pred_fallthru
      _
    // Predicated region
    $region134: #{_lambda_.1} parent=1 // pred_check
      _
    $region135: #{_lambda_.1} parent=1 // pred_check_branch
      %216 = sbr.rel (0) target = $region137
    $region136: #{_lambda_.1} parent=1 // pred_region
      %218 = dma.done [#allocation16], 3072
    $region137: #{_lambda_.1} parent=1 // pred_fallthru
      _
    // Predicated region
    $region138: #{_lambda_.1} parent=1 // pred_check
      _
    $region139: #{_lambda_.1} parent=1 // pred_check_branch
      %220 = sbr.rel (0) target = $region141
    $region140: #{_lambda_.1} parent=1 // pred_region
      %222 = dma.done [#allocation16], 3072
    $region141: #{_lambda_.1} parent=1 // pred_fallthru
      _
    %v223 = vld [vmem:[%s3] sm:$0x1]
    %v224 = vld [vmem:[%s4] sm:$0x1]
    %v225 = vld [vmem:[%s5] sm:$0x1]
    %v226 = vld [vmem:[%s6] sm:$0x1]
    %v227 = vld [vmem:[%s7] sm:$0xf]
    %v228 = vld [vmem:[%s8] sm:$0xf]
    %v229 = vld [vmem:[%s1] sm:$0xff]
    %v230 = vld [vmem:[%s1 + $0x8] sm:$0xff]
    %232 = vset.pattern.permute.xlu0 0
    %233 = vperm.xlu0 %232, %v229
    %v234 = vpop.permute.xlu0 %233
    %237 = vset.pattern.permute.xlu0 0
    %238 = vperm.xlu0 %237, %v230
    %v239 = vpop.permute.xlu0 %238
    %v242 = vperm.slane %v223, 0
    %v244 = vmul.f32 %v234, %v242
    %v245 = vmul.f32 %v239, %v242
    %v247 = vperm.slane %v225, 0
    %v249 = vadd.f32 %v244, %v247
    %v250 = vadd.f32 %v245, %v247
    %v251 = vand.u32 2147483647, %v249
    %vm252 = vcmp.le.f32.partialorder %v251, 0.7853982
    %vm253 = vcmp.lt.s32.totalorder %v249, 0
    %v254 = vand.u32 %v249, 2139095040
    %v255 = vshrl.u32 %v254, 23
    %v256 = vsub.s32 %v255, 127
    %v257 = vand.u32 2147483647, %v249
    %v258 = vand.u32 %v257, 8388607
    %v259 = vor.u32 %v258, 8388608
    %v260 = vsub.s32 0, %v259
    %v261 = vadd.s32 %v256, 1
    %vm262 = vcmp.gt.s32.totalorder %v261, 0
    %v263 = vsel %vm262, %v261, 0
    %v264 = vshrl.u32 %v263, 5
    %v265 = vand.u32 %v263, 31
    %v266 = vsub.s32 32, %v265
    %v267 = vshrl.u32 683565275, %v266
    %v268 = vshll.u32 683565275, %v265
    %v269 = vshrl.u32 2475754826, %v266
    %v270 = vor.u32 %v268, %v269
    %v271 = vshll.u32 2475754826, %v265
    %v272 = vshrl.u32 2131351028, %v266
    %v273 = vor.u32 %v271, %v272
    %v274 = vshll.u32 2131351028, %v265
    %v275 = vshrl.u32 2102212464, %v266
    %v276 = vor.u32 %v274, %v275
    %v277 = vshll.u32 2102212464, %v265
    %v278 = vshrl.u32 920167782, %v266
    %v279 = vor.u32 %v277, %v278
    %v280 = vshll.u32 920167782, %v265
    %v281 = vshrl.u32 1326507024, %v266
    %v282 = vor.u32 %v280, %v281
    %vm283 = vcmp.lt.s32.totalorder %v264, 1
    %vm284 = vcmp.lt.s32.totalorder %v264, 2
    %vm285 = vcmp.lt.s32.totalorder %v264, 3
    %vm286 = vcmp.lt.s32.totalorder %v264, 4
    %v287 = vsel %vm283, %v267, %v270
    %v288 = vsel %vm286, %v276, 2102212464
    %v289 = vsel %vm285, %v273, %v288
    %v290 = vsel %vm284, %v287, %v289
    %v291 = vsel %vm283, %v270, %v273
    %v292 = vsel %vm286, %v279, 920167782
    %v293 = vsel %vm285, %v276, %v292
    %v294 = vsel %vm284, %v291, %v293
    %v295 = vsel %vm283, %v273, %v276
    %v296 = vsel %vm286, %v282, 1326507024
    %v297 = vsel %vm285, %v279, %v296
    %v298 = vsel %vm284, %v295, %v297
    %v299 = vshll.u32 %v259, 8
    %v300 = vand.u32 %v299, 65535
    %v301 = vshrl.u32 %v299, 16
    %v302 = vand.u32 %v298, 65535
    %v303 = vshrl.u32 %v298, 16
    %v304 = vmul.u32 %v300, %v302
    %v305 = vmul.u32 %v300, %v303
    %v306 = vmul.u32 %v301, %v302
    %v307 = vmul.u32 %v301, %v303
    %v308 = vshll.u32 %v305, 16
    %v309 = vshrl.u32 %v305, 16
    %v310 = vshll.u32 %v306, 16
    %v311 = vshrl.u32 %v306, 16
    %vm312 = vc.u32 %v304, %v308
    %v313 = vsel %vm312, 1, 0
    %v314 = vadd.s32 %v304, %v308
    %v315 = vadd.s32 %v307, %v313
    %vm316 = vc.u32 %v314, %v310
    %v317 = vsel %vm316, 1, 0
    %v318 = vadd.s32 %v314, %v310
    %v319 = vadd.s32 %v315, %v317
    %v320 = vadd.s32 %v319, %v309
    %v321 = vadd.s32 %v320, %v311
    %v322 = vand.u32 %v299, 65535
    %v323 = vshrl.u32 %v299, 16
    %v324 = vand.u32 %v294, 65535
    %v325 = vshrl.u32 %v294, 16
    %v326 = vmul.u32 %v322, %v324
    %v327 = vmul.u32 %v322, %v325
    %v328 = vmul.u32 %v323, %v324
    %v329 = vmul.u32 %v323, %v325
    %v330 = vshll.u32 %v327, 16
    %v331 = vshrl.u32 %v327, 16
    %v332 = vshll.u32 %v328, 16
    %v333 = vshrl.u32 %v328, 16
    %vm334 = vc.u32 %v326, %v330
    %v335 = vsel %vm334, 1, 0
    %v336 = vadd.s32 %v326, %v330
    %v337 = vadd.s32 %v329, %v335
    %vm338 = vc.u32 %v336, %v332
    %v339 = vsel %vm338, 1, 0
    %v340 = vadd.s32 %v336, %v332
    %v341 = vadd.s32 %v337, %v339
    %v342 = vadd.s32 %v341, %v331
    %v343 = vadd.s32 %v342, %v333
    %v344 = vmul.u32 %v299, %v290
    %v345 = vadd.s32 %v321, %v340
    %vm346 = vc.u32 %v321, %v340
    %v347 = vadd.s32 %v343, 1
    %v348 = vsel %vm346, %v347, %v343
    %v349 = vadd.s32 %v344, %v348
    %v350 = vadd.s32 %v349, 536870912
    %v351 = vshrl.u32 %v350, 30
    %v352 = vshll.u32 %v351, 30
    %v353 = vsub.s32 %v349, %v352
    %vm354 = vcmp.lt.s32.totalorder %v353, 0
    %v355 = vsub.s32 0, %v353
    %v356 = vsel %vm354, %v355, %v353
    %v357 = vclz %v356
    %v358 = vsub.s32 %v357, 2
    %vm359 = vcmp.gt.s32.totalorder 0, %v358
    %v360 = vsel %vm359, 0, %v358
    %v361 = vsub.s32 32, %v360
    %v362 = vshll.u32 %v353, %v360
    %v363 = vshrl.u32 %v345, %v361
    %v364 = vor.u32 %v362, %v363
    %v365 = vsub.s32 4294967266, %v360
    %v366 = vadd.s32 %v365, 127
    %v367 = vshll.u32 %v366, 23
    %v368 = vor.u32 4788187, %v367
    %v369 = vand.u32 2147483647, %v368
    %v371 = vcvt.s32.f32 %v364
    %v372 = vmul.f32 %v371, %v369
    %v373 = vxor.u32 %v372, 2147483648
    %v374 = vsel %vm253, %v373, %v372
    %v375 = vsub.s32 4, %v351
    %v376 = vsel %vm253, %v375, %v351
    %v377 = vsel %vm252, %v249, %v374
    %v378 = vsel %vm252, 0, %v376
    %v379 = vmul.f32 %v377, %v377
    %v380 = vmul.f32 %v379, -0.001358992
    %v381 = vadd.f32 %v380, 0.041655596
    %v382 = vmul.f32 %v379, %v381
    %v383 = vadd.f32 %v382, -0.4999988
    %v384 = vmul.f32 %v379, %v383
    %v385 = vadd.f32 1.0, %v384
    %v386 = vmul.f32 %v377, %v377
    %v387 = vmul.f32 %v386, -0.00019511016
    %v388 = vadd.f32 %v387, 0.008332121
    %v389 = vmul.f32 %v386, %v388
    %v390 = vadd.f32 %v389, -0.16666654
    %v391 = vmul.f32 %v386, %v390
    %v392 = vadd.f32 %v391, 1.0
    %v393 = vmul.f32 %v392, %v377
    %vm394 = vweird.f32 %v249
    %v395 = vadd.s32 %v378, 3
    %v396 = vand.u32 %v395, 3
    %vm397 = vcmp.lt.s32.totalorder %v396, 2
    %vm398 = vcmp.eq.s32.totalorder %v396, 0
    %v399 = vxor.u32 %v393, 2147483648
    %v400 = vsel %vm398, %v385, %v399
    %vm401 = vcmp.eq.s32.totalorder %v396, 2
    %v402 = vxor.u32 %v385, 2147483648
    %v403 = vsel %vm401, %v402, %v393
    %v404 = vsel %vm397, %v400, %v403
    %v405 = vsel %vm394, nan, %v404
    %v406 = vand.u32 2147483647, %v250
    %vm407 = vcmp.le.f32.partialorder %v406, 0.7853982
    %vm408 = vcmp.lt.s32.totalorder %v250, 0
    %v409 = vand.u32 %v250, 2139095040
    %v410 = vshrl.u32 %v409, 23
    %v411 = vsub.s32 %v410, 127
    %v412 = vand.u32 2147483647, %v250
    %v413 = vand.u32 %v412, 8388607
    %v414 = vor.u32 %v413, 8388608
    %v415 = vsub.s32 0, %v414
    %v416 = vadd.s32 %v411, 1
    %vm417 = vcmp.gt.s32.totalorder %v416, 0
    %v418 = vsel %vm417, %v416, 0
    %v419 = vshrl.u32 %v418, 5
    %v420 = vand.u32 %v418, 31
    %v421 = vsub.s32 32, %v420
    %v422 = vshrl.u32 683565275, %v421
    %v423 = vshll.u32 683565275, %v420
    %v424 = vshrl.u32 2475754826, %v421
    %v425 = vor.u32 %v423, %v424
    %v426 = vshll.u32 2475754826, %v420
    %v427 = vshrl.u32 2131351028, %v421
    %v428 = vor.u32 %v426, %v427
    %v429 = vshll.u32 2131351028, %v420
    %v430 = vshrl.u32 2102212464, %v421
    %v431 = vor.u32 %v429, %v430
    %v432 = vshll.u32 2102212464, %v420
    %v433 = vshrl.u32 920167782, %v421
    %v434 = vor.u32 %v432, %v433
    %v435 = vshll.u32 920167782, %v420
    %v436 = vshrl.u32 1326507024, %v421
    %v437 = vor.u32 %v435, %v436
    %vm438 = vcmp.lt.s32.totalorder %v419, 1
    %vm439 = vcmp.lt.s32.totalorder %v419, 2
    %vm440 = vcmp.lt.s32.totalorder %v419, 3
    %vm441 = vcmp.lt.s32.totalorder %v419, 4
    %v442 = vsel %vm438, %v422, %v425
    %v443 = vsel %vm441, %v431, 2102212464
    %v444 = vsel %vm440, %v428, %v443
    %v445 = vsel %vm439, %v442, %v444
    %v446 = vsel %vm438, %v425, %v428
    %v447 = vsel %vm441, %v434, 920167782
    %v448 = vsel %vm440, %v431, %v447
    %v449 = vsel %vm439, %v446, %v448
    %v450 = vsel %vm438, %v428, %v431
    %v451 = vsel %vm441, %v437, 1326507024
    %v452 = vsel %vm440, %v434, %v451
    %v453 = vsel %vm439, %v450, %v452
    %v454 = vshll.u32 %v414, 8
    %v455 = vand.u32 %v454, 65535
    %v456 = vshrl.u32 %v454, 16
    %v457 = vand.u32 %v453, 65535
    %v458 = vshrl.u32 %v453, 16
    %v459 = vmul.u32 %v455, %v457
    %v460 = vmul.u32 %v455, %v458
    %v461 = vmul.u32 %v456, %v457
    %v462 = vmul.u32 %v456, %v458
    %v463 = vshll.u32 %v460, 16
    %v464 = vshrl.u32 %v460, 16
    %v465 = vshll.u32 %v461, 16
    %v466 = vshrl.u32 %v461, 16
    %vm467 = vc.u32 %v459, %v463
    %v468 = vsel %vm467, 1, 0
    %v469 = vadd.s32 %v459, %v463
    %v470 = vadd.s32 %v462, %v468
    %vm471 = vc.u32 %v469, %v465
    %v472 = vsel %vm471, 1, 0
    %v473 = vadd.s32 %v469, %v465
    %v474 = vadd.s32 %v470, %v472
    %v475 = vadd.s32 %v474, %v464
    %v476 = vadd.s32 %v475, %v466
    %v477 = vand.u32 %v454, 65535
    %v478 = vshrl.u32 %v454, 16
    %v479 = vand.u32 %v449, 65535
    %v480 = vshrl.u32 %v449, 16
    %v481 = vmul.u32 %v477, %v479
    %v482 = vmul.u32 %v477, %v480
    %v483 = vmul.u32 %v478, %v479
    %v484 = vmul.u32 %v478, %v480
    %v485 = vshll.u32 %v482, 16
    %v486 = vshrl.u32 %v482, 16
    %v487 = vshll.u32 %v483, 16
    %v488 = vshrl.u32 %v483, 16
    %vm489 = vc.u32 %v481, %v485
    %v490 = vsel %vm489, 1, 0
    %v491 = vadd.s32 %v481, %v485
    %v492 = vadd.s32 %v484, %v490
    %vm493 = vc.u32 %v491, %v487
    %v494 = vsel %vm493, 1, 0
    %v495 = vadd.s32 %v491, %v487
    %v496 = vadd.s32 %v492, %v494
    %v497 = vadd.s32 %v496, %v486
    %v498 = vadd.s32 %v497, %v488
    %v499 = vmul.u32 %v454, %v445
    %v500 = vadd.s32 %v476, %v495
    %vm501 = vc.u32 %v476, %v495
    %v502 = vadd.s32 %v498, 1
    %v503 = vsel %vm501, %v502, %v498
    %v504 = vadd.s32 %v499, %v503
    %v505 = vadd.s32 %v504, 536870912
    %v506 = vshrl.u32 %v505, 30
    %v507 = vshll.u32 %v506, 30
    %v508 = vsub.s32 %v504, %v507
    %vm509 = vcmp.lt.s32.totalorder %v508, 0
    %v510 = vsub.s32 0, %v508
    %v511 = vsel %vm509, %v510, %v508
    %v512 = vclz %v511
    %v513 = vsub.s32 %v512, 2
    %vm514 = vcmp.gt.s32.totalorder 0, %v513
    %v515 = vsel %vm514, 0, %v513
    %v516 = vsub.s32 32, %v515
    %v517 = vshll.u32 %v508, %v515
    %v518 = vshrl.u32 %v500, %v516
    %v519 = vor.u32 %v517, %v518
    %v520 = vsub.s32 4294967266, %v515
    %v521 = vadd.s32 %v520, 127
    %v522 = vshll.u32 %v521, 23
    %v523 = vor.u32 4788187, %v522
    %v524 = vand.u32 2147483647, %v523
    %v526 = vcvt.s32.f32 %v519
    %v527 = vmul.f32 %v526, %v524
    %v528 = vxor.u32 %v527, 2147483648
    %v529 = vsel %vm408, %v528, %v527
    %v530 = vsub.s32 4, %v506
    %v531 = vsel %vm408, %v530, %v506
    %v532 = vsel %vm407, %v250, %v529
    %v533 = vsel %vm407, 0, %v531
    %v534 = vmul.f32 %v532, %v532
    %v535 = vmul.f32 %v534, -0.001358992
    %v536 = vadd.f32 %v535, 0.041655596
    %v537 = vmul.f32 %v534, %v536
    %v538 = vadd.f32 %v537, -0.4999988
    %v539 = vmul.f32 %v534, %v538
    %v540 = vadd.f32 1.0, %v539
    %v541 = vmul.f32 %v532, %v532
    %v542 = vmul.f32 %v541, -0.00019511016
    %v543 = vadd.f32 %v542, 0.008332121
    %v544 = vmul.f32 %v541, %v543
    %v545 = vadd.f32 %v544, -0.16666654
    %v546 = vmul.f32 %v541, %v545
    %v547 = vadd.f32 %v546, 1.0
    %v548 = vmul.f32 %v547, %v532
    %vm549 = vweird.f32 %v250
    %v550 = vadd.s32 %v533, 3
    %v551 = vand.u32 %v550, 3
    %vm552 = vcmp.lt.s32.totalorder %v551, 2
    %vm553 = vcmp.eq.s32.totalorder %v551, 0
    %v554 = vxor.u32 %v548, 2147483648
    %v555 = vsel %vm553, %v540, %v554
    %vm556 = vcmp.eq.s32.totalorder %v551, 2
    %v557 = vxor.u32 %v540, 2147483648
    %v558 = vsel %vm556, %v557, %v548
    %v559 = vsel %vm552, %v555, %v558
    %v560 = vsel %vm549, nan, %v559
    %v561 = vperm.slane %v227, 0
    %v562 = vmul.f32 %v405, %v561
    %v563 = vmul.f32 %v560, %v561
    %v564 = vadd.f32 %v562, 0.0
    %v565 = vadd.f32 %v563, 0.0
    %v567 = vperm.slane %v224, 0
    %v569 = vmul.f32 %v234, %v567
    %v570 = vmul.f32 %v239, %v567
    %v572 = vperm.slane %v226, 0
    %v574 = vadd.f32 %v569, %v572
    %v575 = vadd.f32 %v570, %v572
    %v576 = vand.u32 2147483647, %v574
    %vm577 = vcmp.le.f32.partialorder %v576, 0.7853982
    %vm578 = vcmp.lt.s32.totalorder %v574, 0
    %v579 = vand.u32 %v574, 2139095040
    %v580 = vshrl.u32 %v579, 23
    %v581 = vsub.s32 %v580, 127
    %v582 = vand.u32 2147483647, %v574
    %v583 = vand.u32 %v582, 8388607
    %v584 = vor.u32 %v583, 8388608
    %v585 = vsub.s32 0, %v584
    %v586 = vadd.s32 %v581, 1
    %vm587 = vcmp.gt.s32.totalorder %v586, 0
    %v588 = vsel %vm587, %v586, 0
    %v589 = vshrl.u32 %v588, 5
    %v590 = vand.u32 %v588, 31
    %v591 = vsub.s32 32, %v590
    %v592 = vshrl.u32 683565275, %v591
    %v593 = vshll.u32 683565275, %v590
    %v594 = vshrl.u32 2475754826, %v591
    %v595 = vor.u32 %v593, %v594
    %v596 = vshll.u32 2475754826, %v590
    %v597 = vshrl.u32 2131351028, %v591
    %v598 = vor.u32 %v596, %v597
    %v599 = vshll.u32 2131351028, %v590
    %v600 = vshrl.u32 2102212464, %v591
    %v601 = vor.u32 %v599, %v600
    %v602 = vshll.u32 2102212464, %v590
    %v603 = vshrl.u32 920167782, %v591
    %v604 = vor.u32 %v602, %v603
    %v605 = vshll.u32 920167782, %v590
    %v606 = vshrl.u32 1326507024, %v591
    %v607 = vor.u32 %v605, %v606
    %vm608 = vcmp.lt.s32.totalorder %v589, 1
    %vm609 = vcmp.lt.s32.totalorder %v589, 2
    %vm610 = vcmp.lt.s32.totalorder %v589, 3
    %vm611 = vcmp.lt.s32.totalorder %v589, 4
    %v612 = vsel %vm608, %v592, %v595
    %v613 = vsel %vm611, %v601, 2102212464
    %v614 = vsel %vm610, %v598, %v613
    %v615 = vsel %vm609, %v612, %v614
    %v616 = vsel %vm608, %v595, %v598
    %v617 = vsel %vm611, %v604, 920167782
    %v618 = vsel %vm610, %v601, %v617
    %v619 = vsel %vm609, %v616, %v618
    %v620 = vsel %vm608, %v598, %v601
    %v621 = vsel %vm611, %v607, 1326507024
    %v622 = vsel %vm610, %v604, %v621
    %v623 = vsel %vm609, %v620, %v622
    %v624 = vshll.u32 %v584, 8
    %v625 = vand.u32 %v624, 65535
    %v626 = vshrl.u32 %v624, 16
    %v627 = vand.u32 %v623, 65535
    %v628 = vshrl.u32 %v623, 16
    %v629 = vmul.u32 %v625, %v627
    %v630 = vmul.u32 %v625, %v628
    %v631 = vmul.u32 %v626, %v627
    %v632 = vmul.u32 %v626, %v628
    %v633 = vshll.u32 %v630, 16
    %v634 = vshrl.u32 %v630, 16
    %v635 = vshll.u32 %v631, 16
    %v636 = vshrl.u32 %v631, 16
    %vm637 = vc.u32 %v629, %v633
    %v638 = vsel %vm637, 1, 0
    %v639 = vadd.s32 %v629, %v633
    %v640 = vadd.s32 %v632, %v638
    %vm641 = vc.u32 %v639, %v635
    %v642 = vsel %vm641, 1, 0
    %v643 = vadd.s32 %v639, %v635
    %v644 = vadd.s32 %v640, %v642
    %v645 = vadd.s32 %v644, %v634
    %v646 = vadd.s32 %v645, %v636
    %v647 = vand.u32 %v624, 65535
    %v648 = vshrl.u32 %v624, 16
    %v649 = vand.u32 %v619, 65535
    %v650 = vshrl.u32 %v619, 16
    %v651 = vmul.u32 %v647, %v649
    %v652 = vmul.u32 %v647, %v650
    %v653 = vmul.u32 %v648, %v649
    %v654 = vmul.u32 %v648, %v650
    %v655 = vshll.u32 %v652, 16
    %v656 = vshrl.u32 %v652, 16
    %v657 = vshll.u32 %v653, 16
    %v658 = vshrl.u32 %v653, 16
    %vm659 = vc.u32 %v651, %v655
    %v660 = vsel %vm659, 1, 0
    %v661 = vadd.s32 %v651, %v655
    %v662 = vadd.s32 %v654, %v660
    %vm663 = vc.u32 %v661, %v657
    %v664 = vsel %vm663, 1, 0
    %v665 = vadd.s32 %v661, %v657
    %v666 = vadd.s32 %v662, %v664
    %v667 = vadd.s32 %v666, %v656
    %v668 = vadd.s32 %v667, %v658
    %v669 = vmul.u32 %v624, %v615
    %v670 = vadd.s32 %v646, %v665
    %vm671 = vc.u32 %v646, %v665
    %v672 = vadd.s32 %v668, 1
    %v673 = vsel %vm671, %v672, %v668
    %v674 = vadd.s32 %v669, %v673
    %v675 = vadd.s32 %v674, 536870912
    %v676 = vshrl.u32 %v675, 30
    %v677 = vshll.u32 %v676, 30
    %v678 = vsub.s32 %v674, %v677
    %vm679 = vcmp.lt.s32.totalorder %v678, 0
    %v680 = vsub.s32 0, %v678
    %v681 = vsel %vm679, %v680, %v678
    %v682 = vclz %v681
    %v683 = vsub.s32 %v682, 2
    %vm684 = vcmp.gt.s32.totalorder 0, %v683
    %v685 = vsel %vm684, 0, %v683
    %v686 = vsub.s32 32, %v685
    %v687 = vshll.u32 %v678, %v685
    %v688 = vshrl.u32 %v670, %v686
    %v689 = vor.u32 %v687, %v688
    %v690 = vsub.s32 4294967266, %v685
    %v691 = vadd.s32 %v690, 127
    %v692 = vshll.u32 %v691, 23
    %v693 = vor.u32 4788187, %v692
    %v694 = vand.u32 2147483647, %v693
    %v696 = vcvt.s32.f32 %v689
    %v697 = vmul.f32 %v696, %v694
    %v698 = vxor.u32 %v697, 2147483648
    %v699 = vsel %vm578, %v698, %v697
    %v700 = vsub.s32 4, %v676
    %v701 = vsel %vm578, %v700, %v676
    %v702 = vsel %vm577, %v574, %v699
    %v703 = vsel %vm577, 0, %v701
    %v704 = vmul.f32 %v702, %v702
    %v705 = vmul.f32 %v704, -0.001358992
    %v706 = vadd.f32 %v705, 0.041655596
    %v707 = vmul.f32 %v704, %v706
    %v708 = vadd.f32 %v707, -0.4999988
    %v709 = vmul.f32 %v704, %v708
    %v710 = vadd.f32 1.0, %v709
    %v711 = vmul.f32 %v702, %v702
    %v712 = vmul.f32 %v711, -0.00019511016
    %v713 = vadd.f32 %v712, 0.008332121
    %v714 = vmul.f32 %v711, %v713
    %v715 = vadd.f32 %v714, -0.16666654
    %v716 = vmul.f32 %v711, %v715
    %v717 = vadd.f32 %v716, 1.0
    %v718 = vmul.f32 %v717, %v702
    %vm719 = vweird.f32 %v574
    %v720 = vand.u32 %v703, 3
    %vm721 = vcmp.lt.s32.totalorder %v720, 2
    %vm722 = vcmp.eq.s32.totalorder %v720, 0
    %v723 = vxor.u32 %v718, 2147483648
    %v724 = vsel %vm722, %v710, %v723
    %vm725 = vcmp.eq.s32.totalorder %v720, 2
    %v726 = vxor.u32 %v710, 2147483648
    %v727 = vsel %vm725, %v726, %v718
    %v728 = vsel %vm721, %v724, %v727
    %v729 = vsel %vm719, nan, %v728
    %v730 = vand.u32 2147483647, %v575
    %vm731 = vcmp.le.f32.partialorder %v730, 0.7853982
    %vm732 = vcmp.lt.s32.totalorder %v575, 0
    %v733 = vand.u32 %v575, 2139095040
    %v734 = vshrl.u32 %v733, 23
    %v735 = vsub.s32 %v734, 127
    %v736 = vand.u32 2147483647, %v575
    %v737 = vand.u32 %v736, 8388607
    %v738 = vor.u32 %v737, 8388608
    %v739 = vsub.s32 0, %v738
    %v740 = vadd.s32 %v735, 1
    %vm741 = vcmp.gt.s32.totalorder %v740, 0
    %v742 = vsel %vm741, %v740, 0
    %v743 = vshrl.u32 %v742, 5
    %v744 = vand.u32 %v742, 31
    %v745 = vsub.s32 32, %v744
    %v746 = vshrl.u32 683565275, %v745
    %v747 = vshll.u32 683565275, %v744
    %v748 = vshrl.u32 2475754826, %v745
    %v749 = vor.u32 %v747, %v748
    %v750 = vshll.u32 2475754826, %v744
    %v751 = vshrl.u32 2131351028, %v745
    %v752 = vor.u32 %v750, %v751
    %v753 = vshll.u32 2131351028, %v744
    %v754 = vshrl.u32 2102212464, %v745
    %v755 = vor.u32 %v753, %v754
    %v756 = vshll.u32 2102212464, %v744
    %v757 = vshrl.u32 920167782, %v745
    %v758 = vor.u32 %v756, %v757
    %v759 = vshll.u32 920167782, %v744
    %v760 = vshrl.u32 1326507024, %v745
    %v761 = vor.u32 %v759, %v760
    %vm762 = vcmp.lt.s32.totalorder %v743, 1
    %vm763 = vcmp.lt.s32.totalorder %v743, 2
    %vm764 = vcmp.lt.s32.totalorder %v743, 3
    %vm765 = vcmp.lt.s32.totalorder %v743, 4
    %v766 = vsel %vm762, %v746, %v749
    %v767 = vsel %vm765, %v755, 2102212464
    %v768 = vsel %vm764, %v752, %v767
    %v769 = vsel %vm763, %v766, %v768
    %v770 = vsel %vm762, %v749, %v752
    %v771 = vsel %vm765, %v758, 920167782
    %v772 = vsel %vm764, %v755, %v771
    %v773 = vsel %vm763, %v770, %v772
    %v774 = vsel %vm762, %v752, %v755
    %v775 = vsel %vm765, %v761, 1326507024
    %v776 = vsel %vm764, %v758, %v775
    %v777 = vsel %vm763, %v774, %v776
    %v778 = vshll.u32 %v738, 8
    %v779 = vand.u32 %v778, 65535
    %v780 = vshrl.u32 %v778, 16
    %v781 = vand.u32 %v777, 65535
    %v782 = vshrl.u32 %v777, 16
    %v783 = vmul.u32 %v779, %v781
    %v784 = vmul.u32 %v779, %v782
    %v785 = vmul.u32 %v780, %v781
    %v786 = vmul.u32 %v780, %v782
    %v787 = vshll.u32 %v784, 16
    %v788 = vshrl.u32 %v784, 16
    %v789 = vshll.u32 %v785, 16
    %v790 = vshrl.u32 %v785, 16
    %vm791 = vc.u32 %v783, %v787
    %v792 = vsel %vm791, 1, 0
    %v793 = vadd.s32 %v783, %v787
    %v794 = vadd.s32 %v786, %v792
    %vm795 = vc.u32 %v793, %v789
    %v796 = vsel %vm795, 1, 0
    %v797 = vadd.s32 %v793, %v789
    %v798 = vadd.s32 %v794, %v796
    %v799 = vadd.s32 %v798, %v788
    %v800 = vadd.s32 %v799, %v790
    %v801 = vand.u32 %v778, 65535
    %v802 = vshrl.u32 %v778, 16
    %v803 = vand.u32 %v773, 65535
    %v804 = vshrl.u32 %v773, 16
    %v805 = vmul.u32 %v801, %v803
    %v806 = vmul.u32 %v801, %v804
    %v807 = vmul.u32 %v802, %v803
    %v808 = vmul.u32 %v802, %v804
    %v809 = vshll.u32 %v806, 16
    %v810 = vshrl.u32 %v806, 16
    %v811 = vshll.u32 %v807, 16
    %v812 = vshrl.u32 %v807, 16
    %vm813 = vc.u32 %v805, %v809
    %v814 = vsel %vm813, 1, 0
    %v815 = vadd.s32 %v805, %v809
    %v816 = vadd.s32 %v808, %v814
    %vm817 = vc.u32 %v815, %v811
    %v818 = vsel %vm817, 1, 0
    %v819 = vadd.s32 %v815, %v811
    %v820 = vadd.s32 %v816, %v818
    %v821 = vadd.s32 %v820, %v810
    %v822 = vadd.s32 %v821, %v812
    %v823 = vmul.u32 %v778, %v769
    %v824 = vadd.s32 %v800, %v819
    %vm825 = vc.u32 %v800, %v819
    %v826 = vadd.s32 %v822, 1
    %v827 = vsel %vm825, %v826, %v822
    %v828 = vadd.s32 %v823, %v827
    %v829 = vadd.s32 %v828, 536870912
    %v830 = vshrl.u32 %v829, 30
    %v831 = vshll.u32 %v830, 30
    %v832 = vsub.s32 %v828, %v831
    %vm833 = vcmp.lt.s32.totalorder %v832, 0
    %v834 = vsub.s32 0, %v832
    %v835 = vsel %vm833, %v834, %v832
    %v836 = vclz %v835
    %v837 = vsub.s32 %v836, 2
    %vm838 = vcmp.gt.s32.totalorder 0, %v837
    %v839 = vsel %vm838, 0, %v837
    %v840 = vsub.s32 32, %v839
    %v841 = vshll.u32 %v832, %v839
    %v842 = vshrl.u32 %v824, %v840
    %v843 = vor.u32 %v841, %v842
    %v844 = vsub.s32 4294967266, %v839
    %v845 = vadd.s32 %v844, 127
    %v846 = vshll.u32 %v845, 23
    %v847 = vor.u32 4788187, %v846
    %v848 = vand.u32 2147483647, %v847
    %v850 = vcvt.s32.f32 %v843
    %v851 = vmul.f32 %v850, %v848
    %v852 = vxor.u32 %v851, 2147483648
    %v853 = vsel %vm732, %v852, %v851
    %v854 = vsub.s32 4, %v830
    %v855 = vsel %vm732, %v854, %v830
    %v856 = vsel %vm731, %v575, %v853
    %v857 = vsel %vm731, 0, %v855
    %v858 = vmul.f32 %v856, %v856
    %v859 = vmul.f32 %v858, -0.001358992
    %v860 = vadd.f32 %v859, 0.041655596
    %v861 = vmul.f32 %v858, %v860
    %v862 = vadd.f32 %v861, -0.4999988
    %v863 = vmul.f32 %v858, %v862
    %v864 = vadd.f32 1.0, %v863
    %v865 = vmul.f32 %v856, %v856
    %v866 = vmul.f32 %v865, -0.00019511016
    %v867 = vadd.f32 %v866, 0.008332121
    %v868 = vmul.f32 %v865, %v867
    %v869 = vadd.f32 %v868, -0.16666654
    %v870 = vmul.f32 %v865, %v869
    %v871 = vadd.f32 %v870, 1.0
    %v872 = vmul.f32 %v871, %v856
    %vm873 = vweird.f32 %v575
    %v874 = vand.u32 %v857, 3
    %vm875 = vcmp.lt.s32.totalorder %v874, 2
    %vm876 = vcmp.eq.s32.totalorder %v874, 0
    %v877 = vxor.u32 %v872, 2147483648
    %v878 = vsel %vm876, %v864, %v877
    %vm879 = vcmp.eq.s32.totalorder %v874, 2
    %v880 = vxor.u32 %v864, 2147483648
    %v881 = vsel %vm879, %v880, %v872
    %v882 = vsel %vm875, %v878, %v881
    %v883 = vsel %vm873, nan, %v882
    %v884 = vperm.slane %v228, 0
    %v885 = vmul.f32 %v729, %v884
    %v886 = vmul.f32 %v883, %v884
    %v887 = vadd.f32 %v564, %v885
    %v888 = vadd.f32 %v565, %v886
    %889 = vset.pattern.permute.xlu0 1
    %890 = vperm.xlu0 %889, %v229
    %v891 = vpop.permute.xlu0 %890
    %893 = vset.pattern.permute.xlu0 1
    %894 = vperm.xlu0 %893, %v230
    %v895 = vpop.permute.xlu0 %894
    %v897 = vmul.f32 %v891, %v242
    %v898 = vmul.f32 %v895, %v242
    %v899 = vadd.f32 %v897, %v247
    %v900 = vadd.f32 %v898, %v247
    %v901 = vand.u32 2147483647, %v899
    %vm902 = vcmp.le.f32.partialorder %v901, 0.7853982
    %vm903 = vcmp.lt.s32.totalorder %v899, 0
    %v904 = vand.u32 %v899, 2139095040
    %v905 = vshrl.u32 %v904, 23
    %v906 = vsub.s32 %v905, 127
    %v907 = vand.u32 2147483647, %v899
    %v908 = vand.u32 %v907, 8388607
    %v909 = vor.u32 %v908, 8388608
    %v910 = vsub.s32 0, %v909
    %v911 = vadd.s32 %v906, 1
    %vm912 = vcmp.gt.s32.totalorder %v911, 0
    %v913 = vsel %vm912, %v911, 0
    %v914 = vshrl.u32 %v913, 5
    %v915 = vand.u32 %v913, 31
    %v916 = vsub.s32 32, %v915
    %v917 = vshrl.u32 683565275, %v916
    %v918 = vshll.u32 683565275, %v915
    %v919 = vshrl.u32 2475754826, %v916
    %v920 = vor.u32 %v918, %v919
    %v921 = vshll.u32 2475754826, %v915
    %v922 = vshrl.u32 2131351028, %v916
    %v923 = vor.u32 %v921, %v922
    %v924 = vshll.u32 2131351028, %v915
    %v925 = vshrl.u32 2102212464, %v916
    %v926 = vor.u32 %v924, %v925
    %v927 = vshll.u32 2102212464, %v915
    %v928 = vshrl.u32 920167782, %v916
    %v929 = vor.u32 %v927, %v928
    %v930 = vshll.u32 920167782, %v915
    %v931 = vshrl.u32 1326507024, %v916
    %v932 = vor.u32 %v930, %v931
    %vm933 = vcmp.lt.s32.totalorder %v914, 1
    %vm934 = vcmp.lt.s32.totalorder %v914, 2
    %vm935 = vcmp.lt.s32.totalorder %v914, 3
    %vm936 = vcmp.lt.s32.totalorder %v914, 4
    %v937 = vsel %vm933, %v917, %v920
    %v938 = vsel %vm936, %v926, 2102212464
    %v939 = vsel %vm935, %v923, %v938
    %v940 = vsel %vm934, %v937, %v939
    %v941 = vsel %vm933, %v920, %v923
    %v942 = vsel %vm936, %v929, 920167782
    %v943 = vsel %vm935, %v926, %v942
    %v944 = vsel %vm934, %v941, %v943
    %v945 = vsel %vm933, %v923, %v926
    %v946 = vsel %vm936, %v932, 1326507024
    %v947 = vsel %vm935, %v929, %v946
    %v948 = vsel %vm934, %v945, %v947
    %v949 = vshll.u32 %v909, 8
    %v950 = vand.u32 %v949, 65535
    %v951 = vshrl.u32 %v949, 16
    %v952 = vand.u32 %v948, 65535
    %v953 = vshrl.u32 %v948, 16
    %v954 = vmul.u32 %v950, %v952
    %v955 = vmul.u32 %v950, %v953
    %v956 = vmul.u32 %v951, %v952
    %v957 = vmul.u32 %v951, %v953
    %v958 = vshll.u32 %v955, 16
    %v959 = vshrl.u32 %v955, 16
    %v960 = vshll.u32 %v956, 16
    %v961 = vshrl.u32 %v956, 16
    %vm962 = vc.u32 %v954, %v958
    %v963 = vsel %vm962, 1, 0
    %v964 = vadd.s32 %v954, %v958
    %v965 = vadd.s32 %v957, %v963
    %vm966 = vc.u32 %v964, %v960
    %v967 = vsel %vm966, 1, 0
    %v968 = vadd.s32 %v964, %v960
    %v969 = vadd.s32 %v965, %v967
    %v970 = vadd.s32 %v969, %v959
    %v971 = vadd.s32 %v970, %v961
    %v972 = vand.u32 %v949, 65535
    %v973 = vshrl.u32 %v949, 16
    %v974 = vand.u32 %v944, 65535
    %v975 = vshrl.u32 %v944, 16
    %v976 = vmul.u32 %v972, %v974
    %v977 = vmul.u32 %v972, %v975
    %v978 = vmul.u32 %v973, %v974
    %v979 = vmul.u32 %v973, %v975
    %v980 = vshll.u32 %v977, 16
    %v981 = vshrl.u32 %v977, 16
    %v982 = vshll.u32 %v978, 16
    %v983 = vshrl.u32 %v978, 16
    %vm984 = vc.u32 %v976, %v980
    %v985 = vsel %vm984, 1, 0
    %v986 = vadd.s32 %v976, %v980
    %v987 = vadd.s32 %v979, %v985
    %vm988 = vc.u32 %v986, %v982
    %v989 = vsel %vm988, 1, 0
    %v990 = vadd.s32 %v986, %v982
    %v991 = vadd.s32 %v987, %v989
    %v992 = vadd.s32 %v991, %v981
    %v993 = vadd.s32 %v992, %v983
    %v994 = vmul.u32 %v949, %v940
    %v995 = vadd.s32 %v971, %v990
    %vm996 = vc.u32 %v971, %v990
    %v997 = vadd.s32 %v993, 1
    %v998 = vsel %vm996, %v997, %v993
    %v999 = vadd.s32 %v994, %v998
    %v1000 = vadd.s32 %v999, 536870912
    %v1001 = vshrl.u32 %v1000, 30
    %v1002 = vshll.u32 %v1001, 30
    %v1003 = vsub.s32 %v999, %v1002
    %vm1004 = vcmp.lt.s32.totalorder %v1003, 0
    %v1005 = vsub.s32 0, %v1003
    %v1006 = vsel %vm1004, %v1005, %v1003
    %v1007 = vclz %v1006
    %v1008 = vsub.s32 %v1007, 2
    %vm1009 = vcmp.gt.s32.totalorder 0, %v1008
    %v1010 = vsel %vm1009, 0, %v1008
    %v1011 = vsub.s32 32, %v1010
    %v1012 = vshll.u32 %v1003, %v1010
    %v1013 = vshrl.u32 %v995, %v1011
    %v1014 = vor.u32 %v1012, %v1013
    %v1015 = vsub.s32 4294967266, %v1010
    %v1016 = vadd.s32 %v1015, 127
    %v1017 = vshll.u32 %v1016, 23
    %v1018 = vor.u32 4788187, %v1017
    %v1019 = vand.u32 2147483647, %v1018
    %v1021 = vcvt.s32.f32 %v1014
    %v1022 = vmul.f32 %v1021, %v1019
    %v1023 = vxor.u32 %v1022, 2147483648
    %v1024 = vsel %vm903, %v1023, %v1022
    %v1025 = vsub.s32 4, %v1001
    %v1026 = vsel %vm903, %v1025, %v1001
    %v1027 = vsel %vm902, %v899, %v1024
    %v1028 = vsel %vm902, 0, %v1026
    %v1029 = vmul.f32 %v1027, %v1027
    %v1030 = vmul.f32 %v1029, -0.001358992
    %v1031 = vadd.f32 %v1030, 0.041655596
    %v1032 = vmul.f32 %v1029, %v1031
    %v1033 = vadd.f32 %v1032, -0.4999988
    %v1034 = vmul.f32 %v1029, %v1033
    %v1035 = vadd.f32 1.0, %v1034
    %v1036 = vmul.f32 %v1027, %v1027
    %v1037 = vmul.f32 %v1036, -0.00019511016
    %v1038 = vadd.f32 %v1037, 0.008332121
    %v1039 = vmul.f32 %v1036, %v1038
    %v1040 = vadd.f32 %v1039, -0.16666654
    %v1041 = vmul.f32 %v1036, %v1040
    %v1042 = vadd.f32 %v1041, 1.0
    %v1043 = vmul.f32 %v1042, %v1027
    %vm1044 = vweird.f32 %v899
    %v1045 = vadd.s32 %v1028, 3
    %v1046 = vand.u32 %v1045, 3
    %vm1047 = vcmp.lt.s32.totalorder %v1046, 2
    %vm1048 = vcmp.eq.s32.totalorder %v1046, 0
    %v1049 = vxor.u32 %v1043, 2147483648
    %v1050 = vsel %vm1048, %v1035, %v1049
    %vm1051 = vcmp.eq.s32.totalorder %v1046, 2
    %v1052 = vxor.u32 %v1035, 2147483648
    %v1053 = vsel %vm1051, %v1052, %v1043
    %v1054 = vsel %vm1047, %v1050, %v1053
    %v1055 = vsel %vm1044, nan, %v1054
    %v1056 = vand.u32 2147483647, %v900
    %vm1057 = vcmp.le.f32.partialorder %v1056, 0.7853982
    %vm1058 = vcmp.lt.s32.totalorder %v900, 0
    %v1059 = vand.u32 %v900, 2139095040
    %v1060 = vshrl.u32 %v1059, 23
    %v1061 = vsub.s32 %v1060, 127
    %v1062 = vand.u32 2147483647, %v900
    %v1063 = vand.u32 %v1062, 8388607
    %v1064 = vor.u32 %v1063, 8388608
    %v1065 = vsub.s32 0, %v1064
    %v1066 = vadd.s32 %v1061, 1
    %vm1067 = vcmp.gt.s32.totalorder %v1066, 0
    %v1068 = vsel %vm1067, %v1066, 0
    %v1069 = vshrl.u32 %v1068, 5
    %v1070 = vand.u32 %v1068, 31
    %v1071 = vsub.s32 32, %v1070
    %v1072 = vshrl.u32 683565275, %v1071
    %v1073 = vshll.u32 683565275, %v1070
    %v1074 = vshrl.u32 2475754826, %v1071
    %v1075 = vor.u32 %v1073, %v1074
    %v1076 = vshll.u32 2475754826, %v1070
    %v1077 = vshrl.u32 2131351028, %v1071
    %v1078 = vor.u32 %v1076, %v1077
    %v1079 = vshll.u32 2131351028, %v1070
    %v1080 = vshrl.u32 2102212464, %v1071
    %v1081 = vor.u32 %v1079, %v1080
    %v1082 = vshll.u32 2102212464, %v1070
    %v1083 = vshrl.u32 920167782, %v1071
    %v1084 = vor.u32 %v1082, %v1083
    %v1085 = vshll.u32 920167782, %v1070
    %v1086 = vshrl.u32 1326507024, %v1071
    %v1087 = vor.u32 %v1085, %v1086
    %vm1088 = vcmp.lt.s32.totalorder %v1069, 1
    %vm1089 = vcmp.lt.s32.totalorder %v1069, 2
    %vm1090 = vcmp.lt.s32.totalorder %v1069, 3
    %vm1091 = vcmp.lt.s32.totalorder %v1069, 4
    %v1092 = vsel %vm1088, %v1072, %v1075
    %v1093 = vsel %vm1091, %v1081, 2102212464
    %v1094 = vsel %vm1090, %v1078, %v1093
    %v1095 = vsel %vm1089, %v1092, %v1094
    %v1096 = vsel %vm1088, %v1075, %v1078
    %v1097 = vsel %vm1091, %v1084, 920167782
    %v1098 = vsel %vm1090, %v1081, %v1097
    %v1099 = vsel %vm1089, %v1096, %v1098
    %v1100 = vsel %vm1088, %v1078, %v1081
    %v1101 = vsel %vm1091, %v1087, 1326507024
    %v1102 = vsel %vm1090, %v1084, %v1101
    %v1103 = vsel %vm1089, %v1100, %v1102
    %v1104 = vshll.u32 %v1064, 8
    %v1105 = vand.u32 %v1104, 65535
    %v1106 = vshrl.u32 %v1104, 16
    %v1107 = vand.u32 %v1103, 65535
    %v1108 = vshrl.u32 %v1103, 16
    %v1109 = vmul.u32 %v1105, %v1107
    %v1110 = vmul.u32 %v1105, %v1108
    %v1111 = vmul.u32 %v1106, %v1107
    %v1112 = vmul.u32 %v1106, %v1108
    %v1113 = vshll.u32 %v1110, 16
    %v1114 = vshrl.u32 %v1110, 16
    %v1115 = vshll.u32 %v1111, 16
    %v1116 = vshrl.u32 %v1111, 16
    %vm1117 = vc.u32 %v1109, %v1113
    %v1118 = vsel %vm1117, 1, 0
    %v1119 = vadd.s32 %v1109, %v1113
    %v1120 = vadd.s32 %v1112, %v1118
    %vm1121 = vc.u32 %v1119, %v1115
    %v1122 = vsel %vm1121, 1, 0
    %v1123 = vadd.s32 %v1119, %v1115
    %v1124 = vadd.s32 %v1120, %v1122
    %v1125 = vadd.s32 %v1124, %v1114
    %v1126 = vadd.s32 %v1125, %v1116
    %v1127 = vand.u32 %v1104, 65535
    %v1128 = vshrl.u32 %v1104, 16
    %v1129 = vand.u32 %v1099, 65535
    %v1130 = vshrl.u32 %v1099, 16
    %v1131 = vmul.u32 %v1127, %v1129
    %v1132 = vmul.u32 %v1127, %v1130
    %v1133 = vmul.u32 %v1128, %v1129
    %v1134 = vmul.u32 %v1128, %v1130
    %v1135 = vshll.u32 %v1132, 16
    %v1136 = vshrl.u32 %v1132, 16
    %v1137 = vshll.u32 %v1133, 16
    %v1138 = vshrl.u32 %v1133, 16
    %vm1139 = vc.u32 %v1131, %v1135
    %v1140 = vsel %vm1139, 1, 0
    %v1141 = vadd.s32 %v1131, %v1135
    %v1142 = vadd.s32 %v1134, %v1140
    %vm1143 = vc.u32 %v1141, %v1137
    %v1144 = vsel %vm1143, 1, 0
    %v1145 = vadd.s32 %v1141, %v1137
    %v1146 = vadd.s32 %v1142, %v1144
    %v1147 = vadd.s32 %v1146, %v1136
    %v1148 = vadd.s32 %v1147, %v1138
    %v1149 = vmul.u32 %v1104, %v1095
    %v1150 = vadd.s32 %v1126, %v1145
    %vm1151 = vc.u32 %v1126, %v1145
    %v1152 = vadd.s32 %v1148, 1
    %v1153 = vsel %vm1151, %v1152, %v1148
    %v1154 = vadd.s32 %v1149, %v1153
    %v1155 = vadd.s32 %v1154, 536870912
    %v1156 = vshrl.u32 %v1155, 30
    %v1157 = vshll.u32 %v1156, 30
    %v1158 = vsub.s32 %v1154, %v1157
    %vm1159 = vcmp.lt.s32.totalorder %v1158, 0
    %v1160 = vsub.s32 0, %v1158
    %v1161 = vsel %vm1159, %v1160, %v1158
    %v1162 = vclz %v1161
    %v1163 = vsub.s32 %v1162, 2
    %vm1164 = vcmp.gt.s32.totalorder 0, %v1163
    %v1165 = vsel %vm1164, 0, %v1163
    %v1166 = vsub.s32 32, %v1165
    %v1167 = vshll.u32 %v1158, %v1165
    %v1168 = vshrl.u32 %v1150, %v1166
    %v1169 = vor.u32 %v1167, %v1168
    %v1170 = vsub.s32 4294967266, %v1165
    %v1171 = vadd.s32 %v1170, 127
    %v1172 = vshll.u32 %v1171, 23
    %v1173 = vor.u32 4788187, %v1172
    %v1174 = vand.u32 2147483647, %v1173
    %v1176 = vcvt.s32.f32 %v1169
    %v1177 = vmul.f32 %v1176, %v1174
    %v1178 = vxor.u32 %v1177, 2147483648
    %v1179 = vsel %vm1058, %v1178, %v1177
    %v1180 = vsub.s32 4, %v1156
    %v1181 = vsel %vm1058, %v1180, %v1156
    %v1182 = vsel %vm1057, %v900, %v1179
    %v1183 = vsel %vm1057, 0, %v1181
    %v1184 = vmul.f32 %v1182, %v1182
    %v1185 = vmul.f32 %v1184, -0.001358992
    %v1186 = vadd.f32 %v1185, 0.041655596
    %v1187 = vmul.f32 %v1184, %v1186
    %v1188 = vadd.f32 %v1187, -0.4999988
    %v1189 = vmul.f32 %v1184, %v1188
    %v1190 = vadd.f32 1.0, %v1189
    %v1191 = vmul.f32 %v1182, %v1182
    %v1192 = vmul.f32 %v1191, -0.00019511016
    %v1193 = vadd.f32 %v1192, 0.008332121
    %v1194 = vmul.f32 %v1191, %v1193
    %v1195 = vadd.f32 %v1194, -0.16666654
    %v1196 = vmul.f32 %v1191, %v1195
    %v1197 = vadd.f32 %v1196, 1.0
    %v1198 = vmul.f32 %v1197, %v1182
    %vm1199 = vweird.f32 %v900
    %v1200 = vadd.s32 %v1183, 3
    %v1201 = vand.u32 %v1200, 3
    %vm1202 = vcmp.lt.s32.totalorder %v1201, 2
    %vm1203 = vcmp.eq.s32.totalorder %v1201, 0
    %v1204 = vxor.u32 %v1198, 2147483648
    %v1205 = vsel %vm1203, %v1190, %v1204
    %vm1206 = vcmp.eq.s32.totalorder %v1201, 2
    %v1207 = vxor.u32 %v1190, 2147483648
    %v1208 = vsel %vm1206, %v1207, %v1198
    %v1209 = vsel %vm1202, %v1205, %v1208
    %v1210 = vsel %vm1199, nan, %v1209
    %v1211 = vperm.slane %v227, 1
    %v1212 = vmul.f32 %v1055, %v1211
    %v1213 = vmul.f32 %v1210, %v1211
    %v1214 = vadd.f32 %v887, %v1212
    %v1215 = vadd.f32 %v888, %v1213
    %v1216 = vmul.f32 %v891, %v567
    %v1217 = vmul.f32 %v895, %v567
    %v1218 = vadd.f32 %v1216, %v572
    %v1219 = vadd.f32 %v1217, %v572
    %v1220 = vand.u32 2147483647, %v1218
    %vm1221 = vcmp.le.f32.partialorder %v1220, 0.7853982
    %vm1222 = vcmp.lt.s32.totalorder %v1218, 0
    %v1223 = vand.u32 %v1218, 2139095040
    %v1224 = vshrl.u32 %v1223, 23
    %v1225 = vsub.s32 %v1224, 127
    %v1226 = vand.u32 2147483647, %v1218
    %v1227 = vand.u32 %v1226, 8388607
    %v1228 = vor.u32 %v1227, 8388608
    %v1229 = vsub.s32 0, %v1228
    %v1230 = vadd.s32 %v1225, 1
    %vm1231 = vcmp.gt.s32.totalorder %v1230, 0
    %v1232 = vsel %vm1231, %v1230, 0
    %v1233 = vshrl.u32 %v1232, 5
    %v1234 = vand.u32 %v1232, 31
    %v1235 = vsub.s32 32, %v1234
    %v1236 = vshrl.u32 683565275, %v1235
    %v1237 = vshll.u32 683565275, %v1234
    %v1238 = vshrl.u32 2475754826, %v1235
    %v1239 = vor.u32 %v1237, %v1238
    %v1240 = vshll.u32 2475754826, %v1234
    %v1241 = vshrl.u32 2131351028, %v1235
    %v1242 = vor.u32 %v1240, %v1241
    %v1243 = vshll.u32 2131351028, %v1234
    %v1244 = vshrl.u32 2102212464, %v1235
    %v1245 = vor.u32 %v1243, %v1244
    %v1246 = vshll.u32 2102212464, %v1234
    %v1247 = vshrl.u32 920167782, %v1235
    %v1248 = vor.u32 %v1246, %v1247
    %v1249 = vshll.u32 920167782, %v1234
    %v1250 = vshrl.u32 1326507024, %v1235
    %v1251 = vor.u32 %v1249, %v1250
    %vm1252 = vcmp.lt.s32.totalorder %v1233, 1
    %vm1253 = vcmp.lt.s32.totalorder %v1233, 2
    %vm1254 = vcmp.lt.s32.totalorder %v1233, 3
    %vm1255 = vcmp.lt.s32.totalorder %v1233, 4
    %v1256 = vsel %vm1252, %v1236, %v1239
    %v1257 = vsel %vm1255, %v1245, 2102212464
    %v1258 = vsel %vm1254, %v1242, %v1257
    %v1259 = vsel %vm1253, %v1256, %v1258
    %v1260 = vsel %vm1252, %v1239, %v1242
    %v1261 = vsel %vm1255, %v1248, 920167782
    %v1262 = vsel %vm1254, %v1245, %v1261
    %v1263 = vsel %vm1253, %v1260, %v1262
    %v1264 = vsel %vm1252, %v1242, %v1245
    %v1265 = vsel %vm1255, %v1251, 1326507024
    %v1266 = vsel %vm1254, %v1248, %v1265
    %v1267 = vsel %vm1253, %v1264, %v1266
    %v1268 = vshll.u32 %v1228, 8
    %v1269 = vand.u32 %v1268, 65535
    %v1270 = vshrl.u32 %v1268, 16
    %v1271 = vand.u32 %v1267, 65535
    %v1272 = vshrl.u32 %v1267, 16
    %v1273 = vmul.u32 %v1269, %v1271
    %v1274 = vmul.u32 %v1269, %v1272
    %v1275 = vmul.u32 %v1270, %v1271
    %v1276 = vmul.u32 %v1270, %v1272
    %v1277 = vshll.u32 %v1274, 16
    %v1278 = vshrl.u32 %v1274, 16
    %v1279 = vshll.u32 %v1275, 16
    %v1280 = vshrl.u32 %v1275, 16
    %vm1281 = vc.u32 %v1273, %v1277
    %v1282 = vsel %vm1281, 1, 0
    %v1283 = vadd.s32 %v1273, %v1277
    %v1284 = vadd.s32 %v1276, %v1282
    %vm1285 = vc.u32 %v1283, %v1279
    %v1286 = vsel %vm1285, 1, 0
    %v1287 = vadd.s32 %v1283, %v1279
    %v1288 = vadd.s32 %v1284, %v1286
    %v1289 = vadd.s32 %v1288, %v1278
    %v1290 = vadd.s32 %v1289, %v1280
    %v1291 = vand.u32 %v1268, 65535
    %v1292 = vshrl.u32 %v1268, 16
    %v1293 = vand.u32 %v1263, 65535
    %v1294 = vshrl.u32 %v1263, 16
    %v1295 = vmul.u32 %v1291, %v1293
    %v1296 = vmul.u32 %v1291, %v1294
    %v1297 = vmul.u32 %v1292, %v1293
    %v1298 = vmul.u32 %v1292, %v1294
    %v1299 = vshll.u32 %v1296, 16
    %v1300 = vshrl.u32 %v1296, 16
    %v1301 = vshll.u32 %v1297, 16
    %v1302 = vshrl.u32 %v1297, 16
    %vm1303 = vc.u32 %v1295, %v1299
    %v1304 = vsel %vm1303, 1, 0
    %v1305 = vadd.s32 %v1295, %v1299
    %v1306 = vadd.s32 %v1298, %v1304
    %vm1307 = vc.u32 %v1305, %v1301
    %v1308 = vsel %vm1307, 1, 0
    %v1309 = vadd.s32 %v1305, %v1301
    %v1310 = vadd.s32 %v1306, %v1308
    %v1311 = vadd.s32 %v1310, %v1300
    %v1312 = vadd.s32 %v1311, %v1302
    %v1313 = vmul.u32 %v1268, %v1259
    %v1314 = vadd.s32 %v1290, %v1309
    %vm1315 = vc.u32 %v1290, %v1309
    %v1316 = vadd.s32 %v1312, 1
    %v1317 = vsel %vm1315, %v1316, %v1312
    %v1318 = vadd.s32 %v1313, %v1317
    %v1319 = vadd.s32 %v1318, 536870912
    %v1320 = vshrl.u32 %v1319, 30
    %v1321 = vshll.u32 %v1320, 30
    %v1322 = vsub.s32 %v1318, %v1321
    %vm1323 = vcmp.lt.s32.totalorder %v1322, 0
    %v1324 = vsub.s32 0, %v1322
    %v1325 = vsel %vm1323, %v1324, %v1322
    %v1326 = vclz %v1325
    %v1327 = vsub.s32 %v1326, 2
    %vm1328 = vcmp.gt.s32.totalorder 0, %v1327
    %v1329 = vsel %vm1328, 0, %v1327
    %v1330 = vsub.s32 32, %v1329
    %v1331 = vshll.u32 %v1322, %v1329
    %v1332 = vshrl.u32 %v1314, %v1330
    %v1333 = vor.u32 %v1331, %v1332
    %v1334 = vsub.s32 4294967266, %v1329
    %v1335 = vadd.s32 %v1334, 127
    %v1336 = vshll.u32 %v1335, 23
    %v1337 = vor.u32 4788187, %v1336
    %v1338 = vand.u32 2147483647, %v1337
    %v1340 = vcvt.s32.f32 %v1333
    %v1341 = vmul.f32 %v1340, %v1338
    %v1342 = vxor.u32 %v1341, 2147483648
    %v1343 = vsel %vm1222, %v1342, %v1341
    %v1344 = vsub.s32 4, %v1320
    %v1345 = vsel %vm1222, %v1344, %v1320
    %v1346 = vsel %vm1221, %v1218, %v1343
    %v1347 = vsel %vm1221, 0, %v1345
    %v1348 = vmul.f32 %v1346, %v1346
    %v1349 = vmul.f32 %v1348, -0.001358992
    %v1350 = vadd.f32 %v1349, 0.041655596
    %v1351 = vmul.f32 %v1348, %v1350
    %v1352 = vadd.f32 %v1351, -0.4999988
    %v1353 = vmul.f32 %v1348, %v1352
    %v1354 = vadd.f32 1.0, %v1353
    %v1355 = vmul.f32 %v1346, %v1346
    %v1356 = vmul.f32 %v1355, -0.00019511016
    %v1357 = vadd.f32 %v1356, 0.008332121
    %v1358 = vmul.f32 %v1355, %v1357
    %v1359 = vadd.f32 %v1358, -0.16666654
    %v1360 = vmul.f32 %v1355, %v1359
    %v1361 = vadd.f32 %v1360, 1.0
    %v1362 = vmul.f32 %v1361, %v1346
    %vm1363 = vweird.f32 %v1218
    %v1364 = vand.u32 %v1347, 3
    %vm1365 = vcmp.lt.s32.totalorder %v1364, 2
    %vm1366 = vcmp.eq.s32.totalorder %v1364, 0
    %v1367 = vxor.u32 %v1362, 2147483648
    %v1368 = vsel %vm1366, %v1354, %v1367
    %vm1369 = vcmp.eq.s32.totalorder %v1364, 2
    %v1370 = vxor.u32 %v1354, 2147483648
    %v1371 = vsel %vm1369, %v1370, %v1362
    %v1372 = vsel %vm1365, %v1368, %v1371
    %v1373 = vsel %vm1363, nan, %v1372
    %v1374 = vand.u32 2147483647, %v1219
    %vm1375 = vcmp.le.f32.partialorder %v1374, 0.7853982
    %vm1376 = vcmp.lt.s32.totalorder %v1219, 0
    %v1377 = vand.u32 %v1219, 2139095040
    %v1378 = vshrl.u32 %v1377, 23
    %v1379 = vsub.s32 %v1378, 127
    %v1380 = vand.u32 2147483647, %v1219
    %v1381 = vand.u32 %v1380, 8388607
    %v1382 = vor.u32 %v1381, 8388608
    %v1383 = vsub.s32 0, %v1382
    %v1384 = vadd.s32 %v1379, 1
    %vm1385 = vcmp.gt.s32.totalorder %v1384, 0
    %v1386 = vsel %vm1385, %v1384, 0
    %v1387 = vshrl.u32 %v1386, 5
    %v1388 = vand.u32 %v1386, 31
    %v1389 = vsub.s32 32, %v1388
    %v1390 = vshrl.u32 683565275, %v1389
    %v1391 = vshll.u32 683565275, %v1388
    %v1392 = vshrl.u32 2475754826, %v1389
    %v1393 = vor.u32 %v1391, %v1392
    %v1394 = vshll.u32 2475754826, %v1388
    %v1395 = vshrl.u32 2131351028, %v1389
    %v1396 = vor.u32 %v1394, %v1395
    %v1397 = vshll.u32 2131351028, %v1388
    %v1398 = vshrl.u32 2102212464, %v1389
    %v1399 = vor.u32 %v1397, %v1398
    %v1400 = vshll.u32 2102212464, %v1388
    %v1401 = vshrl.u32 920167782, %v1389
    %v1402 = vor.u32 %v1400, %v1401
    %v1403 = vshll.u32 920167782, %v1388
    %v1404 = vshrl.u32 1326507024, %v1389
    %v1405 = vor.u32 %v1403, %v1404
    %vm1406 = vcmp.lt.s32.totalorder %v1387, 1
    %vm1407 = vcmp.lt.s32.totalorder %v1387, 2
    %vm1408 = vcmp.lt.s32.totalorder %v1387, 3
    %vm1409 = vcmp.lt.s32.totalorder %v1387, 4
    %v1410 = vsel %vm1406, %v1390, %v1393
    %v1411 = vsel %vm1409, %v1399, 2102212464
    %v1412 = vsel %vm1408, %v1396, %v1411
    %v1413 = vsel %vm1407, %v1410, %v1412
    %v1414 = vsel %vm1406, %v1393, %v1396
    %v1415 = vsel %vm1409, %v1402, 920167782
    %v1416 = vsel %vm1408, %v1399, %v1415
    %v1417 = vsel %vm1407, %v1414, %v1416
    %v1418 = vsel %vm1406, %v1396, %v1399
    %v1419 = vsel %vm1409, %v1405, 1326507024
    %v1420 = vsel %vm1408, %v1402, %v1419
    %v1421 = vsel %vm1407, %v1418, %v1420
    %v1422 = vshll.u32 %v1382, 8
    %v1423 = vand.u32 %v1422, 65535
    %v1424 = vshrl.u32 %v1422, 16
    %v1425 = vand.u32 %v1421, 65535
    %v1426 = vshrl.u32 %v1421, 16
    %v1427 = vmul.u32 %v1423, %v1425
    %v1428 = vmul.u32 %v1423, %v1426
    %v1429 = vmul.u32 %v1424, %v1425
    %v1430 = vmul.u32 %v1424, %v1426
    %v1431 = vshll.u32 %v1428, 16
    %v1432 = vshrl.u32 %v1428, 16
    %v1433 = vshll.u32 %v1429, 16
    %v1434 = vshrl.u32 %v1429, 16
    %vm1435 = vc.u32 %v1427, %v1431
    %v1436 = vsel %vm1435, 1, 0
    %v1437 = vadd.s32 %v1427, %v1431
    %v1438 = vadd.s32 %v1430, %v1436
    %vm1439 = vc.u32 %v1437, %v1433
    %v1440 = vsel %vm1439, 1, 0
    %v1441 = vadd.s32 %v1437, %v1433
    %v1442 = vadd.s32 %v1438, %v1440
    %v1443 = vadd.s32 %v1442, %v1432
    %v1444 = vadd.s32 %v1443, %v1434
    %v1445 = vand.u32 %v1422, 65535
    %v1446 = vshrl.u32 %v1422, 16
    %v1447 = vand.u32 %v1417, 65535
    %v1448 = vshrl.u32 %v1417, 16
    %v1449 = vmul.u32 %v1445, %v1447
    %v1450 = vmul.u32 %v1445, %v1448
    %v1451 = vmul.u32 %v1446, %v1447
    %v1452 = vmul.u32 %v1446, %v1448
    %v1453 = vshll.u32 %v1450, 16
    %v1454 = vshrl.u32 %v1450, 16
    %v1455 = vshll.u32 %v1451, 16
    %v1456 = vshrl.u32 %v1451, 16
    %vm1457 = vc.u32 %v1449, %v1453
    %v1458 = vsel %vm1457, 1, 0
    %v1459 = vadd.s32 %v1449, %v1453
    %v1460 = vadd.s32 %v1452, %v1458
    %vm1461 = vc.u32 %v1459, %v1455
    %v1462 = vsel %vm1461, 1, 0
    %v1463 = vadd.s32 %v1459, %v1455
    %v1464 = vadd.s32 %v1460, %v1462
    %v1465 = vadd.s32 %v1464, %v1454
    %v1466 = vadd.s32 %v1465, %v1456
    %v1467 = vmul.u32 %v1422, %v1413
    %v1468 = vadd.s32 %v1444, %v1463
    %vm1469 = vc.u32 %v1444, %v1463
    %v1470 = vadd.s32 %v1466, 1
    %v1471 = vsel %vm1469, %v1470, %v1466
    %v1472 = vadd.s32 %v1467, %v1471
    %v1473 = vadd.s32 %v1472, 536870912
    %v1474 = vshrl.u32 %v1473, 30
    %v1475 = vshll.u32 %v1474, 30
    %v1476 = vsub.s32 %v1472, %v1475
    %vm1477 = vcmp.lt.s32.totalorder %v1476, 0
    %v1478 = vsub.s32 0, %v1476
    %v1479 = vsel %vm1477, %v1478, %v1476
    %v1480 = vclz %v1479
    %v1481 = vsub.s32 %v1480, 2
    %vm1482 = vcmp.gt.s32.totalorder 0, %v1481
    %v1483 = vsel %vm1482, 0, %v1481
    %v1484 = vsub.s32 32, %v1483
    %v1485 = vshll.u32 %v1476, %v1483
    %v1486 = vshrl.u32 %v1468, %v1484
    %v1487 = vor.u32 %v1485, %v1486
    %v1488 = vsub.s32 4294967266, %v1483
    %v1489 = vadd.s32 %v1488, 127
    %v1490 = vshll.u32 %v1489, 23
    %v1491 = vor.u32 4788187, %v1490
    %v1492 = vand.u32 2147483647, %v1491
    %v1494 = vcvt.s32.f32 %v1487
    %v1495 = vmul.f32 %v1494, %v1492
    %v1496 = vxor.u32 %v1495, 2147483648
    %v1497 = vsel %vm1376, %v1496, %v1495
    %v1498 = vsub.s32 4, %v1474
    %v1499 = vsel %vm1376, %v1498, %v1474
    %v1500 = vsel %vm1375, %v1219, %v1497
    %v1501 = vsel %vm1375, 0, %v1499
    %v1502 = vmul.f32 %v1500, %v1500
    %v1503 = vmul.f32 %v1502, -0.001358992
    %v1504 = vadd.f32 %v1503, 0.041655596
    %v1505 = vmul.f32 %v1502, %v1504
    %v1506 = vadd.f32 %v1505, -0.4999988
    %v1507 = vmul.f32 %v1502, %v1506
    %v1508 = vadd.f32 1.0, %v1507
    %v1509 = vmul.f32 %v1500, %v1500
    %v1510 = vmul.f32 %v1509, -0.00019511016
    %v1511 = vadd.f32 %v1510, 0.008332121
    %v1512 = vmul.f32 %v1509, %v1511
    %v1513 = vadd.f32 %v1512, -0.16666654
    %v1514 = vmul.f32 %v1509, %v1513
    %v1515 = vadd.f32 %v1514, 1.0
    %v1516 = vmul.f32 %v1515, %v1500
    %vm1517 = vweird.f32 %v1219
    %v1518 = vand.u32 %v1501, 3
    %vm1519 = vcmp.lt.s32.totalorder %v1518, 2
    %vm1520 = vcmp.eq.s32.totalorder %v1518, 0
    %v1521 = vxor.u32 %v1516, 2147483648
    %v1522 = vsel %vm1520, %v1508, %v1521
    %vm1523 = vcmp.eq.s32.totalorder %v1518, 2
    %v1524 = vxor.u32 %v1508, 2147483648
    %v1525 = vsel %vm1523, %v1524, %v1516
    %v1526 = vsel %vm1519, %v1522, %v1525
    %v1527 = vsel %vm1517, nan, %v1526
    %v1528 = vperm.slane %v228, 1
    %v1529 = vmul.f32 %v1373, %v1528
    %v1530 = vmul.f32 %v1527, %v1528
    %v1531 = vadd.f32 %v1214, %v1529
    %v1532 = vadd.f32 %v1215, %v1530
    %1533 = vset.pattern.permute.xlu0 2
    %1534 = vperm.xlu0 %1533, %v229
    %v1535 = vpop.permute.xlu0 %1534
    %1537 = vset.pattern.permute.xlu0 2
    %1538 = vperm.xlu0 %1537, %v230
    %v1539 = vpop.permute.xlu0 %1538
    %v1541 = vmul.f32 %v1535, %v242
    %v1542 = vmul.f32 %v1539, %v242
    %v1543 = vadd.f32 %v1541, %v247
    %v1544 = vadd.f32 %v1542, %v247
    %v1545 = vand.u32 2147483647, %v1543
    %vm1546 = vcmp.le.f32.partialorder %v1545, 0.7853982
    %vm1547 = vcmp.lt.s32.totalorder %v1543, 0
    %v1548 = vand.u32 %v1543, 2139095040
    %v1549 = vshrl.u32 %v1548, 23
    %v1550 = vsub.s32 %v1549, 127
    %v1551 = vand.u32 2147483647, %v1543
    %v1552 = vand.u32 %v1551, 8388607
    %v1553 = vor.u32 %v1552, 8388608
    %v1554 = vsub.s32 0, %v1553
    %v1555 = vadd.s32 %v1550, 1
    %vm1556 = vcmp.gt.s32.totalorder %v1555, 0
    %v1557 = vsel %vm1556, %v1555, 0
    %v1558 = vshrl.u32 %v1557, 5
    %v1559 = vand.u32 %v1557, 31
    %v1560 = vsub.s32 32, %v1559
    %v1561 = vshrl.u32 683565275, %v1560
    %v1562 = vshll.u32 683565275, %v1559
    %v1563 = vshrl.u32 2475754826, %v1560
    %v1564 = vor.u32 %v1562, %v1563
    %v1565 = vshll.u32 2475754826, %v1559
    %v1566 = vshrl.u32 2131351028, %v1560
    %v1567 = vor.u32 %v1565, %v1566
    %v1568 = vshll.u32 2131351028, %v1559
    %v1569 = vshrl.u32 2102212464, %v1560
    %v1570 = vor.u32 %v1568, %v1569
    %v1571 = vshll.u32 2102212464, %v1559
    %v1572 = vshrl.u32 920167782, %v1560
    %v1573 = vor.u32 %v1571, %v1572
    %v1574 = vshll.u32 920167782, %v1559
    %v1575 = vshrl.u32 1326507024, %v1560
    %v1576 = vor.u32 %v1574, %v1575
    %vm1577 = vcmp.lt.s32.totalorder %v1558, 1
    %vm1578 = vcmp.lt.s32.totalorder %v1558, 2
    %vm1579 = vcmp.lt.s32.totalorder %v1558, 3
    %vm1580 = vcmp.lt.s32.totalorder %v1558, 4
    %v1581 = vsel %vm1577, %v1561, %v1564
    %v1582 = vsel %vm1580, %v1570, 2102212464
    %v1583 = vsel %vm1579, %v1567, %v1582
    %v1584 = vsel %vm1578, %v1581, %v1583
    %v1585 = vsel %vm1577, %v1564, %v1567
    %v1586 = vsel %vm1580, %v1573, 920167782
    %v1587 = vsel %vm1579, %v1570, %v1586
    %v1588 = vsel %vm1578, %v1585, %v1587
    %v1589 = vsel %vm1577, %v1567, %v1570
    %v1590 = vsel %vm1580, %v1576, 1326507024
    %v1591 = vsel %vm1579, %v1573, %v1590
    %v1592 = vsel %vm1578, %v1589, %v1591
    %v1593 = vshll.u32 %v1553, 8
    %v1594 = vand.u32 %v1593, 65535
    %v1595 = vshrl.u32 %v1593, 16
    %v1596 = vand.u32 %v1592, 65535
    %v1597 = vshrl.u32 %v1592, 16
    %v1598 = vmul.u32 %v1594, %v1596
    %v1599 = vmul.u32 %v1594, %v1597
    %v1600 = vmul.u32 %v1595, %v1596
    %v1601 = vmul.u32 %v1595, %v1597
    %v1602 = vshll.u32 %v1599, 16
    %v1603 = vshrl.u32 %v1599, 16
    %v1604 = vshll.u32 %v1600, 16
    %v1605 = vshrl.u32 %v1600, 16
    %vm1606 = vc.u32 %v1598, %v1602
    %v1607 = vsel %vm1606, 1, 0
    %v1608 = vadd.s32 %v1598, %v1602
    %v1609 = vadd.s32 %v1601, %v1607
    %vm1610 = vc.u32 %v1608, %v1604
    %v1611 = vsel %vm1610, 1, 0
    %v1612 = vadd.s32 %v1608, %v1604
    %v1613 = vadd.s32 %v1609, %v1611
    %v1614 = vadd.s32 %v1613, %v1603
    %v1615 = vadd.s32 %v1614, %v1605
    %v1616 = vand.u32 %v1593, 65535
    %v1617 = vshrl.u32 %v1593, 16
    %v1618 = vand.u32 %v1588, 65535
    %v1619 = vshrl.u32 %v1588, 16
    %v1620 = vmul.u32 %v1616, %v1618
    %v1621 = vmul.u32 %v1616, %v1619
    %v1622 = vmul.u32 %v1617, %v1618
    %v1623 = vmul.u32 %v1617, %v1619
    %v1624 = vshll.u32 %v1621, 16
    %v1625 = vshrl.u32 %v1621, 16
    %v1626 = vshll.u32 %v1622, 16
    %v1627 = vshrl.u32 %v1622, 16
    %vm1628 = vc.u32 %v1620, %v1624
    %v1629 = vsel %vm1628, 1, 0
    %v1630 = vadd.s32 %v1620, %v1624
    %v1631 = vadd.s32 %v1623, %v1629
    %vm1632 = vc.u32 %v1630, %v1626
    %v1633 = vsel %vm1632, 1, 0
    %v1634 = vadd.s32 %v1630, %v1626
    %v1635 = vadd.s32 %v1631, %v1633
    %v1636 = vadd.s32 %v1635, %v1625
    %v1637 = vadd.s32 %v1636, %v1627
    %v1638 = vmul.u32 %v1593, %v1584
    %v1639 = vadd.s32 %v1615, %v1634
    %vm1640 = vc.u32 %v1615, %v1634
    %v1641 = vadd.s32 %v1637, 1
    %v1642 = vsel %vm1640, %v1641, %v1637
    %v1643 = vadd.s32 %v1638, %v1642
    %v1644 = vadd.s32 %v1643, 536870912
    %v1645 = vshrl.u32 %v1644, 30
    %v1646 = vshll.u32 %v1645, 30
    %v1647 = vsub.s32 %v1643, %v1646
    %vm1648 = vcmp.lt.s32.totalorder %v1647, 0
    %v1649 = vsub.s32 0, %v1647
    %v1650 = vsel %vm1648, %v1649, %v1647
    %v1651 = vclz %v1650
    %v1652 = vsub.s32 %v1651, 2
    %vm1653 = vcmp.gt.s32.totalorder 0, %v1652
    %v1654 = vsel %vm1653, 0, %v1652
    %v1655 = vsub.s32 32, %v1654
    %v1656 = vshll.u32 %v1647, %v1654
    %v1657 = vshrl.u32 %v1639, %v1655
    %v1658 = vor.u32 %v1656, %v1657
    %v1659 = vsub.s32 4294967266, %v1654
    %v1660 = vadd.s32 %v1659, 127
    %v1661 = vshll.u32 %v1660, 23
    %v1662 = vor.u32 4788187, %v1661
    %v1663 = vand.u32 2147483647, %v1662
    %v1665 = vcvt.s32.f32 %v1658
    %v1666 = vmul.f32 %v1665, %v1663
    %v1667 = vxor.u32 %v1666, 2147483648
    %v1668 = vsel %vm1547, %v1667, %v1666
    %v1669 = vsub.s32 4, %v1645
    %v1670 = vsel %vm1547, %v1669, %v1645
    %v1671 = vsel %vm1546, %v1543, %v1668
    %v1672 = vsel %vm1546, 0, %v1670
    %v1673 = vmul.f32 %v1671, %v1671
    %v1674 = vmul.f32 %v1673, -0.001358992
    %v1675 = vadd.f32 %v1674, 0.041655596
    %v1676 = vmul.f32 %v1673, %v1675
    %v1677 = vadd.f32 %v1676, -0.4999988
    %v1678 = vmul.f32 %v1673, %v1677
    %v1679 = vadd.f32 1.0, %v1678
    %v1680 = vmul.f32 %v1671, %v1671
    %v1681 = vmul.f32 %v1680, -0.00019511016
    %v1682 = vadd.f32 %v1681, 0.008332121
    %v1683 = vmul.f32 %v1680, %v1682
    %v1684 = vadd.f32 %v1683, -0.16666654
    %v1685 = vmul.f32 %v1680, %v1684
    %v1686 = vadd.f32 %v1685, 1.0
    %v1687 = vmul.f32 %v1686, %v1671
    %vm1688 = vweird.f32 %v1543
    %v1689 = vadd.s32 %v1672, 3
    %v1690 = vand.u32 %v1689, 3
    %vm1691 = vcmp.lt.s32.totalorder %v1690, 2
    %vm1692 = vcmp.eq.s32.totalorder %v1690, 0
    %v1693 = vxor.u32 %v1687, 2147483648
    %v1694 = vsel %vm1692, %v1679, %v1693
    %vm1695 = vcmp.eq.s32.totalorder %v1690, 2
    %v1696 = vxor.u32 %v1679, 2147483648
    %v1697 = vsel %vm1695, %v1696, %v1687
    %v1698 = vsel %vm1691, %v1694, %v1697
    %v1699 = vsel %vm1688, nan, %v1698
    %v1700 = vand.u32 2147483647, %v1544
    %vm1701 = vcmp.le.f32.partialorder %v1700, 0.7853982
    %vm1702 = vcmp.lt.s32.totalorder %v1544, 0
    %v1703 = vand.u32 %v1544, 2139095040
    %v1704 = vshrl.u32 %v1703, 23
    %v1705 = vsub.s32 %v1704, 127
    %v1706 = vand.u32 2147483647, %v1544
    %v1707 = vand.u32 %v1706, 8388607
    %v1708 = vor.u32 %v1707, 8388608
    %v1709 = vsub.s32 0, %v1708
    %v1710 = vadd.s32 %v1705, 1
    %vm1711 = vcmp.gt.s32.totalorder %v1710, 0
    %v1712 = vsel %vm1711, %v1710, 0
    %v1713 = vshrl.u32 %v1712, 5
    %v1714 = vand.u32 %v1712, 31
    %v1715 = vsub.s32 32, %v1714
    %v1716 = vshrl.u32 683565275, %v1715
    %v1717 = vshll.u32 683565275, %v1714
    %v1718 = vshrl.u32 2475754826, %v1715
    %v1719 = vor.u32 %v1717, %v1718
    %v1720 = vshll.u32 2475754826, %v1714
    %v1721 = vshrl.u32 2131351028, %v1715
    %v1722 = vor.u32 %v1720, %v1721
    %v1723 = vshll.u32 2131351028, %v1714
    %v1724 = vshrl.u32 2102212464, %v1715
    %v1725 = vor.u32 %v1723, %v1724
    %v1726 = vshll.u32 2102212464, %v1714
    %v1727 = vshrl.u32 920167782, %v1715
    %v1728 = vor.u32 %v1726, %v1727
    %v1729 = vshll.u32 920167782, %v1714
    %v1730 = vshrl.u32 1326507024, %v1715
    %v1731 = vor.u32 %v1729, %v1730
    %vm1732 = vcmp.lt.s32.totalorder %v1713, 1
    %vm1733 = vcmp.lt.s32.totalorder %v1713, 2
    %vm1734 = vcmp.lt.s32.totalorder %v1713, 3
    %vm1735 = vcmp.lt.s32.totalorder %v1713, 4
    %v1736 = vsel %vm1732, %v1716, %v1719
    %v1737 = vsel %vm1735, %v1725, 2102212464
    %v1738 = vsel %vm1734, %v1722, %v1737
    %v1739 = vsel %vm1733, %v1736, %v1738
    %v1740 = vsel %vm1732, %v1719, %v1722
    %v1741 = vsel %vm1735, %v1728, 920167782
    %v1742 = vsel %vm1734, %v1725, %v1741
    %v1743 = vsel %vm1733, %v1740, %v1742
    %v1744 = vsel %vm1732, %v1722, %v1725
    %v1745 = vsel %vm1735, %v1731, 1326507024
    %v1746 = vsel %vm1734, %v1728, %v1745
    %v1747 = vsel %vm1733, %v1744, %v1746
    %v1748 = vshll.u32 %v1708, 8
    %v1749 = vand.u32 %v1748, 65535
    %v1750 = vshrl.u32 %v1748, 16
    %v1751 = vand.u32 %v1747, 65535
    %v1752 = vshrl.u32 %v1747, 16
    %v1753 = vmul.u32 %v1749, %v1751
    %v1754 = vmul.u32 %v1749, %v1752
    %v1755 = vmul.u32 %v1750, %v1751
    %v1756 = vmul.u32 %v1750, %v1752
    %v1757 = vshll.u32 %v1754, 16
    %v1758 = vshrl.u32 %v1754, 16
    %v1759 = vshll.u32 %v1755, 16
    %v1760 = vshrl.u32 %v1755, 16
    %vm1761 = vc.u32 %v1753, %v1757
    %v1762 = vsel %vm1761, 1, 0
    %v1763 = vadd.s32 %v1753, %v1757
    %v1764 = vadd.s32 %v1756, %v1762
    %vm1765 = vc.u32 %v1763, %v1759
    %v1766 = vsel %vm1765, 1, 0
    %v1767 = vadd.s32 %v1763, %v1759
    %v1768 = vadd.s32 %v1764, %v1766
    %v1769 = vadd.s32 %v1768, %v1758
    %v1770 = vadd.s32 %v1769, %v1760
    %v1771 = vand.u32 %v1748, 65535
    %v1772 = vshrl.u32 %v1748, 16
    %v1773 = vand.u32 %v1743, 65535
    %v1774 = vshrl.u32 %v1743, 16
    %v1775 = vmul.u32 %v1771, %v1773
    %v1776 = vmul.u32 %v1771, %v1774
    %v1777 = vmul.u32 %v1772, %v1773
    %v1778 = vmul.u32 %v1772, %v1774
    %v1779 = vshll.u32 %v1776, 16
    %v1780 = vshrl.u32 %v1776, 16
    %v1781 = vshll.u32 %v1777, 16
    %v1782 = vshrl.u32 %v1777, 16
    %vm1783 = vc.u32 %v1775, %v1779
    %v1784 = vsel %vm1783, 1, 0
    %v1785 = vadd.s32 %v1775, %v1779
    %v1786 = vadd.s32 %v1778, %v1784
    %vm1787 = vc.u32 %v1785, %v1781
    %v1788 = vsel %vm1787, 1, 0
    %v1789 = vadd.s32 %v1785, %v1781
    %v1790 = vadd.s32 %v1786, %v1788
    %v1791 = vadd.s32 %v1790, %v1780
    %v1792 = vadd.s32 %v1791, %v1782
    %v1793 = vmul.u32 %v1748, %v1739
    %v1794 = vadd.s32 %v1770, %v1789
    %vm1795 = vc.u32 %v1770, %v1789
    %v1796 = vadd.s32 %v1792, 1
    %v1797 = vsel %vm1795, %v1796, %v1792
    %v1798 = vadd.s32 %v1793, %v1797
    %v1799 = vadd.s32 %v1798, 536870912
    %v1800 = vshrl.u32 %v1799, 30
    %v1801 = vshll.u32 %v1800, 30
    %v1802 = vsub.s32 %v1798, %v1801
    %vm1803 = vcmp.lt.s32.totalorder %v1802, 0
    %v1804 = vsub.s32 0, %v1802
    %v1805 = vsel %vm1803, %v1804, %v1802
    %v1806 = vclz %v1805
    %v1807 = vsub.s32 %v1806, 2
    %vm1808 = vcmp.gt.s32.totalorder 0, %v1807
    %v1809 = vsel %vm1808, 0, %v1807
    %v1810 = vsub.s32 32, %v1809
    %v1811 = vshll.u32 %v1802, %v1809
    %v1812 = vshrl.u32 %v1794, %v1810
    %v1813 = vor.u32 %v1811, %v1812
    %v1814 = vsub.s32 4294967266, %v1809
    %v1815 = vadd.s32 %v1814, 127
    %v1816 = vshll.u32 %v1815, 23
    %v1817 = vor.u32 4788187, %v1816
    %v1818 = vand.u32 2147483647, %v1817
    %v1820 = vcvt.s32.f32 %v1813
    %v1821 = vmul.f32 %v1820, %v1818
    %v1822 = vxor.u32 %v1821, 2147483648
    %v1823 = vsel %vm1702, %v1822, %v1821
    %v1824 = vsub.s32 4, %v1800
    %v1825 = vsel %vm1702, %v1824, %v1800
    %v1826 = vsel %vm1701, %v1544, %v1823
    %v1827 = vsel %vm1701, 0, %v1825
    %v1828 = vmul.f32 %v1826, %v1826
    %v1829 = vmul.f32 %v1828, -0.001358992
    %v1830 = vadd.f32 %v1829, 0.041655596
    %v1831 = vmul.f32 %v1828, %v1830
    %v1832 = vadd.f32 %v1831, -0.4999988
    %v1833 = vmul.f32 %v1828, %v1832
    %v1834 = vadd.f32 1.0, %v1833
    %v1835 = vmul.f32 %v1826, %v1826
    %v1836 = vmul.f32 %v1835, -0.00019511016
    %v1837 = vadd.f32 %v1836, 0.008332121
    %v1838 = vmul.f32 %v1835, %v1837
    %v1839 = vadd.f32 %v1838, -0.16666654
    %v1840 = vmul.f32 %v1835, %v1839
    %v1841 = vadd.f32 %v1840, 1.0
    %v1842 = vmul.f32 %v1841, %v1826
    %vm1843 = vweird.f32 %v1544
    %v1844 = vadd.s32 %v1827, 3
    %v1845 = vand.u32 %v1844, 3
    %vm1846 = vcmp.lt.s32.totalorder %v1845, 2
    %vm1847 = vcmp.eq.s32.totalorder %v1845, 0
    %v1848 = vxor.u32 %v1842, 2147483648
    %v1849 = vsel %vm1847, %v1834, %v1848
    %vm1850 = vcmp.eq.s32.totalorder %v1845, 2
    %v1851 = vxor.u32 %v1834, 2147483648
    %v1852 = vsel %vm1850, %v1851, %v1842
    %v1853 = vsel %vm1846, %v1849, %v1852
    %v1854 = vsel %vm1843, nan, %v1853
    %v1855 = vperm.slane %v227, 2
    %v1856 = vmul.f32 %v1699, %v1855
    %v1857 = vmul.f32 %v1854, %v1855
    %v1858 = vadd.f32 %v1531, %v1856
    %v1859 = vadd.f32 %v1532, %v1857
    %v1860 = vmul.f32 %v1535, %v567
    %v1861 = vmul.f32 %v1539, %v567
    %v1862 = vadd.f32 %v1860, %v572
    %v1863 = vadd.f32 %v1861, %v572
    %v1864 = vand.u32 2147483647, %v1862
    %vm1865 = vcmp.le.f32.partialorder %v1864, 0.7853982
    %vm1866 = vcmp.lt.s32.totalorder %v1862, 0
    %v1867 = vand.u32 %v1862, 2139095040
    %v1868 = vshrl.u32 %v1867, 23
    %v1869 = vsub.s32 %v1868, 127
    %v1870 = vand.u32 2147483647, %v1862
    %v1871 = vand.u32 %v1870, 8388607
    %v1872 = vor.u32 %v1871, 8388608
    %v1873 = vsub.s32 0, %v1872
    %v1874 = vadd.s32 %v1869, 1
    %vm1875 = vcmp.gt.s32.totalorder %v1874, 0
    %v1876 = vsel %vm1875, %v1874, 0
    %v1877 = vshrl.u32 %v1876, 5
    %v1878 = vand.u32 %v1876, 31
    %v1879 = vsub.s32 32, %v1878
    %v1880 = vshrl.u32 683565275, %v1879
    %v1881 = vshll.u32 683565275, %v1878
    %v1882 = vshrl.u32 2475754826, %v1879
    %v1883 = vor.u32 %v1881, %v1882
    %v1884 = vshll.u32 2475754826, %v1878
    %v1885 = vshrl.u32 2131351028, %v1879
    %v1886 = vor.u32 %v1884, %v1885
    %v1887 = vshll.u32 2131351028, %v1878
    %v1888 = vshrl.u32 2102212464, %v1879
    %v1889 = vor.u32 %v1887, %v1888
    %v1890 = vshll.u32 2102212464, %v1878
    %v1891 = vshrl.u32 920167782, %v1879
    %v1892 = vor.u32 %v1890, %v1891
    %v1893 = vshll.u32 920167782, %v1878
    %v1894 = vshrl.u32 1326507024, %v1879
    %v1895 = vor.u32 %v1893, %v1894
    %vm1896 = vcmp.lt.s32.totalorder %v1877, 1
    %vm1897 = vcmp.lt.s32.totalorder %v1877, 2
    %vm1898 = vcmp.lt.s32.totalorder %v1877, 3
    %vm1899 = vcmp.lt.s32.totalorder %v1877, 4
    %v1900 = vsel %vm1896, %v1880, %v1883
    %v1901 = vsel %vm1899, %v1889, 2102212464
    %v1902 = vsel %vm1898, %v1886, %v1901
    %v1903 = vsel %vm1897, %v1900, %v1902
    %v1904 = vsel %vm1896, %v1883, %v1886
    %v1905 = vsel %vm1899, %v1892, 920167782
    %v1906 = vsel %vm1898, %v1889, %v1905
    %v1907 = vsel %vm1897, %v1904, %v1906
    %v1908 = vsel %vm1896, %v1886, %v1889
    %v1909 = vsel %vm1899, %v1895, 1326507024
    %v1910 = vsel %vm1898, %v1892, %v1909
    %v1911 = vsel %vm1897, %v1908, %v1910
    %v1912 = vshll.u32 %v1872, 8
    %v1913 = vand.u32 %v1912, 65535
    %v1914 = vshrl.u32 %v1912, 16
    %v1915 = vand.u32 %v1911, 65535
    %v1916 = vshrl.u32 %v1911, 16
    %v1917 = vmul.u32 %v1913, %v1915
    %v1918 = vmul.u32 %v1913, %v1916
    %v1919 = vmul.u32 %v1914, %v1915
    %v1920 = vmul.u32 %v1914, %v1916
    %v1921 = vshll.u32 %v1918, 16
    %v1922 = vshrl.u32 %v1918, 16
    %v1923 = vshll.u32 %v1919, 16
    %v1924 = vshrl.u32 %v1919, 16
    %vm1925 = vc.u32 %v1917, %v1921
    %v1926 = vsel %vm1925, 1, 0
    %v1927 = vadd.s32 %v1917, %v1921
    %v1928 = vadd.s32 %v1920, %v1926
    %vm1929 = vc.u32 %v1927, %v1923
    %v1930 = vsel %vm1929, 1, 0
    %v1931 = vadd.s32 %v1927, %v1923
    %v1932 = vadd.s32 %v1928, %v1930
    %v1933 = vadd.s32 %v1932, %v1922
    %v1934 = vadd.s32 %v1933, %v1924
    %v1935 = vand.u32 %v1912, 65535
    %v1936 = vshrl.u32 %v1912, 16
    %v1937 = vand.u32 %v1907, 65535
    %v1938 = vshrl.u32 %v1907, 16
    %v1939 = vmul.u32 %v1935, %v1937
    %v1940 = vmul.u32 %v1935, %v1938
    %v1941 = vmul.u32 %v1936, %v1937
    %v1942 = vmul.u32 %v1936, %v1938
    %v1943 = vshll.u32 %v1940, 16
    %v1944 = vshrl.u32 %v1940, 16
    %v1945 = vshll.u32 %v1941, 16
    %v1946 = vshrl.u32 %v1941, 16
    %vm1947 = vc.u32 %v1939, %v1943
    %v1948 = vsel %vm1947, 1, 0
    %v1949 = vadd.s32 %v1939, %v1943
    %v1950 = vadd.s32 %v1942, %v1948
    %vm1951 = vc.u32 %v1949, %v1945
    %v1952 = vsel %vm1951, 1, 0
    %v1953 = vadd.s32 %v1949, %v1945
    %v1954 = vadd.s32 %v1950, %v1952
    %v1955 = vadd.s32 %v1954, %v1944
    %v1956 = vadd.s32 %v1955, %v1946
    %v1957 = vmul.u32 %v1912, %v1903
    %v1958 = vadd.s32 %v1934, %v1953
    %vm1959 = vc.u32 %v1934, %v1953
    %v1960 = vadd.s32 %v1956, 1
    %v1961 = vsel %vm1959, %v1960, %v1956
    %v1962 = vadd.s32 %v1957, %v1961
    %v1963 = vadd.s32 %v1962, 536870912
    %v1964 = vshrl.u32 %v1963, 30
    %v1965 = vshll.u32 %v1964, 30
    %v1966 = vsub.s32 %v1962, %v1965
    %vm1967 = vcmp.lt.s32.totalorder %v1966, 0
    %v1968 = vsub.s32 0, %v1966
    %v1969 = vsel %vm1967, %v1968, %v1966
    %v1970 = vclz %v1969
    %v1971 = vsub.s32 %v1970, 2
    %vm1972 = vcmp.gt.s32.totalorder 0, %v1971
    %v1973 = vsel %vm1972, 0, %v1971
    %v1974 = vsub.s32 32, %v1973
    %v1975 = vshll.u32 %v1966, %v1973
    %v1976 = vshrl.u32 %v1958, %v1974
    %v1977 = vor.u32 %v1975, %v1976
    %v1978 = vsub.s32 4294967266, %v1973
    %v1979 = vadd.s32 %v1978, 127
    %v1980 = vshll.u32 %v1979, 23
    %v1981 = vor.u32 4788187, %v1980
    %v1982 = vand.u32 2147483647, %v1981
    %v1984 = vcvt.s32.f32 %v1977
    %v1985 = vmul.f32 %v1984, %v1982
    %v1986 = vxor.u32 %v1985, 2147483648
    %v1987 = vsel %vm1866, %v1986, %v1985
    %v1988 = vsub.s32 4, %v1964
    %v1989 = vsel %vm1866, %v1988, %v1964
    %v1990 = vsel %vm1865, %v1862, %v1987
    %v1991 = vsel %vm1865, 0, %v1989
    %v1992 = vmul.f32 %v1990, %v1990
    %v1993 = vmul.f32 %v1992, -0.001358992
    %v1994 = vadd.f32 %v1993, 0.041655596
    %v1995 = vmul.f32 %v1992, %v1994
    %v1996 = vadd.f32 %v1995, -0.4999988
    %v1997 = vmul.f32 %v1992, %v1996
    %v1998 = vadd.f32 1.0, %v1997
    %v1999 = vmul.f32 %v1990, %v1990
    %v2000 = vmul.f32 %v1999, -0.00019511016
    %v2001 = vadd.f32 %v2000, 0.008332121
    %v2002 = vmul.f32 %v1999, %v2001
    %v2003 = vadd.f32 %v2002, -0.16666654
    %v2004 = vmul.f32 %v1999, %v2003
    %v2005 = vadd.f32 %v2004, 1.0
    %v2006 = vmul.f32 %v2005, %v1990
    %vm2007 = vweird.f32 %v1862
    %v2008 = vand.u32 %v1991, 3
    %vm2009 = vcmp.lt.s32.totalorder %v2008, 2
    %vm2010 = vcmp.eq.s32.totalorder %v2008, 0
    %v2011 = vxor.u32 %v2006, 2147483648
    %v2012 = vsel %vm2010, %v1998, %v2011
    %vm2013 = vcmp.eq.s32.totalorder %v2008, 2
    %v2014 = vxor.u32 %v1998, 2147483648
    %v2015 = vsel %vm2013, %v2014, %v2006
    %v2016 = vsel %vm2009, %v2012, %v2015
    %v2017 = vsel %vm2007, nan, %v2016
    %v2018 = vand.u32 2147483647, %v1863
    %vm2019 = vcmp.le.f32.partialorder %v2018, 0.7853982
    %vm2020 = vcmp.lt.s32.totalorder %v1863, 0
    %v2021 = vand.u32 %v1863, 2139095040
    %v2022 = vshrl.u32 %v2021, 23
    %v2023 = vsub.s32 %v2022, 127
    %v2024 = vand.u32 2147483647, %v1863
    %v2025 = vand.u32 %v2024, 8388607
    %v2026 = vor.u32 %v2025, 8388608
    %v2027 = vsub.s32 0, %v2026
    %v2028 = vadd.s32 %v2023, 1
    %vm2029 = vcmp.gt.s32.totalorder %v2028, 0
    %v2030 = vsel %vm2029, %v2028, 0
    %v2031 = vshrl.u32 %v2030, 5
    %v2032 = vand.u32 %v2030, 31
    %v2033 = vsub.s32 32, %v2032
    %v2034 = vshrl.u32 683565275, %v2033
    %v2035 = vshll.u32 683565275, %v2032
    %v2036 = vshrl.u32 2475754826, %v2033
    %v2037 = vor.u32 %v2035, %v2036
    %v2038 = vshll.u32 2475754826, %v2032
    %v2039 = vshrl.u32 2131351028, %v2033
    %v2040 = vor.u32 %v2038, %v2039
    %v2041 = vshll.u32 2131351028, %v2032
    %v2042 = vshrl.u32 2102212464, %v2033
    %v2043 = vor.u32 %v2041, %v2042
    %v2044 = vshll.u32 2102212464, %v2032
    %v2045 = vshrl.u32 920167782, %v2033
    %v2046 = vor.u32 %v2044, %v2045
    %v2047 = vshll.u32 920167782, %v2032
    %v2048 = vshrl.u32 1326507024, %v2033
    %v2049 = vor.u32 %v2047, %v2048
    %vm2050 = vcmp.lt.s32.totalorder %v2031, 1
    %vm2051 = vcmp.lt.s32.totalorder %v2031, 2
    %vm2052 = vcmp.lt.s32.totalorder %v2031, 3
    %vm2053 = vcmp.lt.s32.totalorder %v2031, 4
    %v2054 = vsel %vm2050, %v2034, %v2037
    %v2055 = vsel %vm2053, %v2043, 2102212464
    %v2056 = vsel %vm2052, %v2040, %v2055
    %v2057 = vsel %vm2051, %v2054, %v2056
    %v2058 = vsel %vm2050, %v2037, %v2040
    %v2059 = vsel %vm2053, %v2046, 920167782
    %v2060 = vsel %vm2052, %v2043, %v2059
    %v2061 = vsel %vm2051, %v2058, %v2060
    %v2062 = vsel %vm2050, %v2040, %v2043
    %v2063 = vsel %vm2053, %v2049, 1326507024
    %v2064 = vsel %vm2052, %v2046, %v2063
    %v2065 = vsel %vm2051, %v2062, %v2064
    %v2066 = vshll.u32 %v2026, 8
    %v2067 = vand.u32 %v2066, 65535
    %v2068 = vshrl.u32 %v2066, 16
    %v2069 = vand.u32 %v2065, 65535
    %v2070 = vshrl.u32 %v2065, 16
    %v2071 = vmul.u32 %v2067, %v2069
    %v2072 = vmul.u32 %v2067, %v2070
    %v2073 = vmul.u32 %v2068, %v2069
    %v2074 = vmul.u32 %v2068, %v2070
    %v2075 = vshll.u32 %v2072, 16
    %v2076 = vshrl.u32 %v2072, 16
    %v2077 = vshll.u32 %v2073, 16
    %v2078 = vshrl.u32 %v2073, 16
    %vm2079 = vc.u32 %v2071, %v2075
    %v2080 = vsel %vm2079, 1, 0
    %v2081 = vadd.s32 %v2071, %v2075
    %v2082 = vadd.s32 %v2074, %v2080
    %vm2083 = vc.u32 %v2081, %v2077
    %v2084 = vsel %vm2083, 1, 0
    %v2085 = vadd.s32 %v2081, %v2077
    %v2086 = vadd.s32 %v2082, %v2084
    %v2087 = vadd.s32 %v2086, %v2076
    %v2088 = vadd.s32 %v2087, %v2078
    %v2089 = vand.u32 %v2066, 65535
    %v2090 = vshrl.u32 %v2066, 16
    %v2091 = vand.u32 %v2061, 65535
    %v2092 = vshrl.u32 %v2061, 16
    %v2093 = vmul.u32 %v2089, %v2091
    %v2094 = vmul.u32 %v2089, %v2092
    %v2095 = vmul.u32 %v2090, %v2091
    %v2096 = vmul.u32 %v2090, %v2092
    %v2097 = vshll.u32 %v2094, 16
    %v2098 = vshrl.u32 %v2094, 16
    %v2099 = vshll.u32 %v2095, 16
    %v2100 = vshrl.u32 %v2095, 16
    %vm2101 = vc.u32 %v2093, %v2097
    %v2102 = vsel %vm2101, 1, 0
    %v2103 = vadd.s32 %v2093, %v2097
    %v2104 = vadd.s32 %v2096, %v2102
    %vm2105 = vc.u32 %v2103, %v2099
    %v2106 = vsel %vm2105, 1, 0
    %v2107 = vadd.s32 %v2103, %v2099
    %v2108 = vadd.s32 %v2104, %v2106
    %v2109 = vadd.s32 %v2108, %v2098
    %v2110 = vadd.s32 %v2109, %v2100
    %v2111 = vmul.u32 %v2066, %v2057
    %v2112 = vadd.s32 %v2088, %v2107
    %vm2113 = vc.u32 %v2088, %v2107
    %v2114 = vadd.s32 %v2110, 1
    %v2115 = vsel %vm2113, %v2114, %v2110
    %v2116 = vadd.s32 %v2111, %v2115
    %v2117 = vadd.s32 %v2116, 536870912
    %v2118 = vshrl.u32 %v2117, 30
    %v2119 = vshll.u32 %v2118, 30
    %v2120 = vsub.s32 %v2116, %v2119
    %vm2121 = vcmp.lt.s32.totalorder %v2120, 0
    %v2122 = vsub.s32 0, %v2120
    %v2123 = vsel %vm2121, %v2122, %v2120
    %v2124 = vclz %v2123
    %v2125 = vsub.s32 %v2124, 2
    %vm2126 = vcmp.gt.s32.totalorder 0, %v2125
    %v2127 = vsel %vm2126, 0, %v2125
    %v2128 = vsub.s32 32, %v2127
    %v2129 = vshll.u32 %v2120, %v2127
    %v2130 = vshrl.u32 %v2112, %v2128
    %v2131 = vor.u32 %v2129, %v2130
    %v2132 = vsub.s32 4294967266, %v2127
    %v2133 = vadd.s32 %v2132, 127
    %v2134 = vshll.u32 %v2133, 23
    %v2135 = vor.u32 4788187, %v2134
    %v2136 = vand.u32 2147483647, %v2135
    %v2138 = vcvt.s32.f32 %v2131
    %v2139 = vmul.f32 %v2138, %v2136
    %v2140 = vxor.u32 %v2139, 2147483648
    %v2141 = vsel %vm2020, %v2140, %v2139
    %v2142 = vsub.s32 4, %v2118
    %v2143 = vsel %vm2020, %v2142, %v2118
    %v2144 = vsel %vm2019, %v1863, %v2141
    %v2145 = vsel %vm2019, 0, %v2143
    %v2146 = vmul.f32 %v2144, %v2144
    %v2147 = vmul.f32 %v2146, -0.001358992
    %v2148 = vadd.f32 %v2147, 0.041655596
    %v2149 = vmul.f32 %v2146, %v2148
    %v2150 = vadd.f32 %v2149, -0.4999988
    %v2151 = vmul.f32 %v2146, %v2150
    %v2152 = vadd.f32 1.0, %v2151
    %v2153 = vmul.f32 %v2144, %v2144
    %v2154 = vmul.f32 %v2153, -0.00019511016
    %v2155 = vadd.f32 %v2154, 0.008332121
    %v2156 = vmul.f32 %v2153, %v2155
    %v2157 = vadd.f32 %v2156, -0.16666654
    %v2158 = vmul.f32 %v2153, %v2157
    %v2159 = vadd.f32 %v2158, 1.0
    %v2160 = vmul.f32 %v2159, %v2144
    %vm2161 = vweird.f32 %v1863
    %v2162 = vand.u32 %v2145, 3
    %vm2163 = vcmp.lt.s32.totalorder %v2162, 2
    %vm2164 = vcmp.eq.s32.totalorder %v2162, 0
    %v2165 = vxor.u32 %v2160, 2147483648
    %v2166 = vsel %vm2164, %v2152, %v2165
    %vm2167 = vcmp.eq.s32.totalorder %v2162, 2
    %v2168 = vxor.u32 %v2152, 2147483648
    %v2169 = vsel %vm2167, %v2168, %v2160
    %v2170 = vsel %vm2163, %v2166, %v2169
    %v2171 = vsel %vm2161, nan, %v2170
    %v2172 = vperm.slane %v228, 2
    %v2173 = vmul.f32 %v2017, %v2172
    %v2174 = vmul.f32 %v2171, %v2172
    %v2175 = vadd.f32 %v1858, %v2173
    %v2176 = vadd.f32 %v1859, %v2174
    %2177 = vset.pattern.permute.xlu0 3
    %2178 = vperm.xlu0 %2177, %v229
    %v2179 = vpop.permute.xlu0 %2178
    %2181 = vset.pattern.permute.xlu0 3
    %2182 = vperm.xlu0 %2181, %v230
    %v2183 = vpop.permute.xlu0 %2182
    %v2185 = vmul.f32 %v2179, %v242
    %v2186 = vmul.f32 %v2183, %v242
    %v2187 = vadd.f32 %v2185, %v247
    %v2188 = vadd.f32 %v2186, %v247
    %v2189 = vand.u32 2147483647, %v2187
    %vm2190 = vcmp.le.f32.partialorder %v2189, 0.7853982
    %vm2191 = vcmp.lt.s32.totalorder %v2187, 0
    %v2192 = vand.u32 %v2187, 2139095040
    %v2193 = vshrl.u32 %v2192, 23
    %v2194 = vsub.s32 %v2193, 127
    %v2195 = vand.u32 2147483647, %v2187
    %v2196 = vand.u32 %v2195, 8388607
    %v2197 = vor.u32 %v2196, 8388608
    %v2198 = vsub.s32 0, %v2197
    %v2199 = vadd.s32 %v2194, 1
    %vm2200 = vcmp.gt.s32.totalorder %v2199, 0
    %v2201 = vsel %vm2200, %v2199, 0
    %v2202 = vshrl.u32 %v2201, 5
    %v2203 = vand.u32 %v2201, 31
    %v2204 = vsub.s32 32, %v2203
    %v2205 = vshrl.u32 683565275, %v2204
    %v2206 = vshll.u32 683565275, %v2203
    %v2207 = vshrl.u32 2475754826, %v2204
    %v2208 = vor.u32 %v2206, %v2207
    %v2209 = vshll.u32 2475754826, %v2203
    %v2210 = vshrl.u32 2131351028, %v2204
    %v2211 = vor.u32 %v2209, %v2210
    %v2212 = vshll.u32 2131351028, %v2203
    %v2213 = vshrl.u32 2102212464, %v2204
    %v2214 = vor.u32 %v2212, %v2213
    %v2215 = vshll.u32 2102212464, %v2203
    %v2216 = vshrl.u32 920167782, %v2204
    %v2217 = vor.u32 %v2215, %v2216
    %v2218 = vshll.u32 920167782, %v2203
    %v2219 = vshrl.u32 1326507024, %v2204
    %v2220 = vor.u32 %v2218, %v2219
    %vm2221 = vcmp.lt.s32.totalorder %v2202, 1
    %vm2222 = vcmp.lt.s32.totalorder %v2202, 2
    %vm2223 = vcmp.lt.s32.totalorder %v2202, 3
    %vm2224 = vcmp.lt.s32.totalorder %v2202, 4
    %v2225 = vsel %vm2221, %v2205, %v2208
    %v2226 = vsel %vm2224, %v2214, 2102212464
    %v2227 = vsel %vm2223, %v2211, %v2226
    %v2228 = vsel %vm2222, %v2225, %v2227
    %v2229 = vsel %vm2221, %v2208, %v2211
    %v2230 = vsel %vm2224, %v2217, 920167782
    %v2231 = vsel %vm2223, %v2214, %v2230
    %v2232 = vsel %vm2222, %v2229, %v2231
    %v2233 = vsel %vm2221, %v2211, %v2214
    %v2234 = vsel %vm2224, %v2220, 1326507024
    %v2235 = vsel %vm2223, %v2217, %v2234
    %v2236 = vsel %vm2222, %v2233, %v2235
    %v2237 = vshll.u32 %v2197, 8
    %v2238 = vand.u32 %v2237, 65535
    %v2239 = vshrl.u32 %v2237, 16
    %v2240 = vand.u32 %v2236, 65535
    %v2241 = vshrl.u32 %v2236, 16
    %v2242 = vmul.u32 %v2238, %v2240
    %v2243 = vmul.u32 %v2238, %v2241
    %v2244 = vmul.u32 %v2239, %v2240
    %v2245 = vmul.u32 %v2239, %v2241
    %v2246 = vshll.u32 %v2243, 16
    %v2247 = vshrl.u32 %v2243, 16
    %v2248 = vshll.u32 %v2244, 16
    %v2249 = vshrl.u32 %v2244, 16
    %vm2250 = vc.u32 %v2242, %v2246
    %v2251 = vsel %vm2250, 1, 0
    %v2252 = vadd.s32 %v2242, %v2246
    %v2253 = vadd.s32 %v2245, %v2251
    %vm2254 = vc.u32 %v2252, %v2248
    %v2255 = vsel %vm2254, 1, 0
    %v2256 = vadd.s32 %v2252, %v2248
    %v2257 = vadd.s32 %v2253, %v2255
    %v2258 = vadd.s32 %v2257, %v2247
    %v2259 = vadd.s32 %v2258, %v2249
    %v2260 = vand.u32 %v2237, 65535
    %v2261 = vshrl.u32 %v2237, 16
    %v2262 = vand.u32 %v2232, 65535
    %v2263 = vshrl.u32 %v2232, 16
    %v2264 = vmul.u32 %v2260, %v2262
    %v2265 = vmul.u32 %v2260, %v2263
    %v2266 = vmul.u32 %v2261, %v2262
    %v2267 = vmul.u32 %v2261, %v2263
    %v2268 = vshll.u32 %v2265, 16
    %v2269 = vshrl.u32 %v2265, 16
    %v2270 = vshll.u32 %v2266, 16
    %v2271 = vshrl.u32 %v2266, 16
    %vm2272 = vc.u32 %v2264, %v2268
    %v2273 = vsel %vm2272, 1, 0
    %v2274 = vadd.s32 %v2264, %v2268
    %v2275 = vadd.s32 %v2267, %v2273
    %vm2276 = vc.u32 %v2274, %v2270
    %v2277 = vsel %vm2276, 1, 0
    %v2278 = vadd.s32 %v2274, %v2270
    %v2279 = vadd.s32 %v2275, %v2277
    %v2280 = vadd.s32 %v2279, %v2269
    %v2281 = vadd.s32 %v2280, %v2271
    %v2282 = vmul.u32 %v2237, %v2228
    %v2283 = vadd.s32 %v2259, %v2278
    %vm2284 = vc.u32 %v2259, %v2278
    %v2285 = vadd.s32 %v2281, 1
    %v2286 = vsel %vm2284, %v2285, %v2281
    %v2287 = vadd.s32 %v2282, %v2286
    %v2288 = vadd.s32 %v2287, 536870912
    %v2289 = vshrl.u32 %v2288, 30
    %v2290 = vshll.u32 %v2289, 30
    %v2291 = vsub.s32 %v2287, %v2290
    %vm2292 = vcmp.lt.s32.totalorder %v2291, 0
    %v2293 = vsub.s32 0, %v2291
    %v2294 = vsel %vm2292, %v2293, %v2291
    %v2295 = vclz %v2294
    %v2296 = vsub.s32 %v2295, 2
    %vm2297 = vcmp.gt.s32.totalorder 0, %v2296
    %v2298 = vsel %vm2297, 0, %v2296
    %v2299 = vsub.s32 32, %v2298
    %v2300 = vshll.u32 %v2291, %v2298
    %v2301 = vshrl.u32 %v2283, %v2299
    %v2302 = vor.u32 %v2300, %v2301
    %v2303 = vsub.s32 4294967266, %v2298
    %v2304 = vadd.s32 %v2303, 127
    %v2305 = vshll.u32 %v2304, 23
    %v2306 = vor.u32 4788187, %v2305
    %v2307 = vand.u32 2147483647, %v2306
    %v2309 = vcvt.s32.f32 %v2302
    %v2310 = vmul.f32 %v2309, %v2307
    %v2311 = vxor.u32 %v2310, 2147483648
    %v2312 = vsel %vm2191, %v2311, %v2310
    %v2313 = vsub.s32 4, %v2289
    %v2314 = vsel %vm2191, %v2313, %v2289
    %v2315 = vsel %vm2190, %v2187, %v2312
    %v2316 = vsel %vm2190, 0, %v2314
    %v2317 = vmul.f32 %v2315, %v2315
    %v2318 = vmul.f32 %v2317, -0.001358992
    %v2319 = vadd.f32 %v2318, 0.041655596
    %v2320 = vmul.f32 %v2317, %v2319
    %v2321 = vadd.f32 %v2320, -0.4999988
    %v2322 = vmul.f32 %v2317, %v2321
    %v2323 = vadd.f32 1.0, %v2322
    %v2324 = vmul.f32 %v2315, %v2315
    %v2325 = vmul.f32 %v2324, -0.00019511016
    %v2326 = vadd.f32 %v2325, 0.008332121
    %v2327 = vmul.f32 %v2324, %v2326
    %v2328 = vadd.f32 %v2327, -0.16666654
    %v2329 = vmul.f32 %v2324, %v2328
    %v2330 = vadd.f32 %v2329, 1.0
    %v2331 = vmul.f32 %v2330, %v2315
    %vm2332 = vweird.f32 %v2187
    %v2333 = vadd.s32 %v2316, 3
    %v2334 = vand.u32 %v2333, 3
    %vm2335 = vcmp.lt.s32.totalorder %v2334, 2
    %vm2336 = vcmp.eq.s32.totalorder %v2334, 0
    %v2337 = vxor.u32 %v2331, 2147483648
    %v2338 = vsel %vm2336, %v2323, %v2337
    %vm2339 = vcmp.eq.s32.totalorder %v2334, 2
    %v2340 = vxor.u32 %v2323, 2147483648
    %v2341 = vsel %vm2339, %v2340, %v2331
    %v2342 = vsel %vm2335, %v2338, %v2341
    %v2343 = vsel %vm2332, nan, %v2342
    %v2344 = vand.u32 2147483647, %v2188
    %vm2345 = vcmp.le.f32.partialorder %v2344, 0.7853982
    %vm2346 = vcmp.lt.s32.totalorder %v2188, 0
    %v2347 = vand.u32 %v2188, 2139095040
    %v2348 = vshrl.u32 %v2347, 23
    %v2349 = vsub.s32 %v2348, 127
    %v2350 = vand.u32 2147483647, %v2188
    %v2351 = vand.u32 %v2350, 8388607
    %v2352 = vor.u32 %v2351, 8388608
    %v2353 = vsub.s32 0, %v2352
    %v2354 = vadd.s32 %v2349, 1
    %vm2355 = vcmp.gt.s32.totalorder %v2354, 0
    %v2356 = vsel %vm2355, %v2354, 0
    %v2357 = vshrl.u32 %v2356, 5
    %v2358 = vand.u32 %v2356, 31
    %v2359 = vsub.s32 32, %v2358
    %v2360 = vshrl.u32 683565275, %v2359
    %v2361 = vshll.u32 683565275, %v2358
    %v2362 = vshrl.u32 2475754826, %v2359
    %v2363 = vor.u32 %v2361, %v2362
    %v2364 = vshll.u32 2475754826, %v2358
    %v2365 = vshrl.u32 2131351028, %v2359
    %v2366 = vor.u32 %v2364, %v2365
    %v2367 = vshll.u32 2131351028, %v2358
    %v2368 = vshrl.u32 2102212464, %v2359
    %v2369 = vor.u32 %v2367, %v2368
    %v2370 = vshll.u32 2102212464, %v2358
    %v2371 = vshrl.u32 920167782, %v2359
    %v2372 = vor.u32 %v2370, %v2371
    %v2373 = vshll.u32 920167782, %v2358
    %v2374 = vshrl.u32 1326507024, %v2359
    %v2375 = vor.u32 %v2373, %v2374
    %vm2376 = vcmp.lt.s32.totalorder %v2357, 1
    %vm2377 = vcmp.lt.s32.totalorder %v2357, 2
    %vm2378 = vcmp.lt.s32.totalorder %v2357, 3
    %vm2379 = vcmp.lt.s32.totalorder %v2357, 4
    %v2380 = vsel %vm2376, %v2360, %v2363
    %v2381 = vsel %vm2379, %v2369, 2102212464
    %v2382 = vsel %vm2378, %v2366, %v2381
    %v2383 = vsel %vm2377, %v2380, %v2382
    %v2384 = vsel %vm2376, %v2363, %v2366
    %v2385 = vsel %vm2379, %v2372, 920167782
    %v2386 = vsel %vm2378, %v2369, %v2385
    %v2387 = vsel %vm2377, %v2384, %v2386
    %v2388 = vsel %vm2376, %v2366, %v2369
    %v2389 = vsel %vm2379, %v2375, 1326507024
    %v2390 = vsel %vm2378, %v2372, %v2389
    %v2391 = vsel %vm2377, %v2388, %v2390
    %v2392 = vshll.u32 %v2352, 8
    %v2393 = vand.u32 %v2392, 65535
    %v2394 = vshrl.u32 %v2392, 16
    %v2395 = vand.u32 %v2391, 65535
    %v2396 = vshrl.u32 %v2391, 16
    %v2397 = vmul.u32 %v2393, %v2395
    %v2398 = vmul.u32 %v2393, %v2396
    %v2399 = vmul.u32 %v2394, %v2395
    %v2400 = vmul.u32 %v2394, %v2396
    %v2401 = vshll.u32 %v2398, 16
    %v2402 = vshrl.u32 %v2398, 16
    %v2403 = vshll.u32 %v2399, 16
    %v2404 = vshrl.u32 %v2399, 16
    %vm2405 = vc.u32 %v2397, %v2401
    %v2406 = vsel %vm2405, 1, 0
    %v2407 = vadd.s32 %v2397, %v2401
    %v2408 = vadd.s32 %v2400, %v2406
    %vm2409 = vc.u32 %v2407, %v2403
    %v2410 = vsel %vm2409, 1, 0
    %v2411 = vadd.s32 %v2407, %v2403
    %v2412 = vadd.s32 %v2408, %v2410
    %v2413 = vadd.s32 %v2412, %v2402
    %v2414 = vadd.s32 %v2413, %v2404
    %v2415 = vand.u32 %v2392, 65535
    %v2416 = vshrl.u32 %v2392, 16
    %v2417 = vand.u32 %v2387, 65535
    %v2418 = vshrl.u32 %v2387, 16
    %v2419 = vmul.u32 %v2415, %v2417
    %v2420 = vmul.u32 %v2415, %v2418
    %v2421 = vmul.u32 %v2416, %v2417
    %v2422 = vmul.u32 %v2416, %v2418
    %v2423 = vshll.u32 %v2420, 16
    %v2424 = vshrl.u32 %v2420, 16
    %v2425 = vshll.u32 %v2421, 16
    %v2426 = vshrl.u32 %v2421, 16
    %vm2427 = vc.u32 %v2419, %v2423
    %v2428 = vsel %vm2427, 1, 0
    %v2429 = vadd.s32 %v2419, %v2423
    %v2430 = vadd.s32 %v2422, %v2428
    %vm2431 = vc.u32 %v2429, %v2425
    %v2432 = vsel %vm2431, 1, 0
    %v2433 = vadd.s32 %v2429, %v2425
    %v2434 = vadd.s32 %v2430, %v2432
    %v2435 = vadd.s32 %v2434, %v2424
    %v2436 = vadd.s32 %v2435, %v2426
    %v2437 = vmul.u32 %v2392, %v2383
    %v2438 = vadd.s32 %v2414, %v2433
    %vm2439 = vc.u32 %v2414, %v2433
    %v2440 = vadd.s32 %v2436, 1
    %v2441 = vsel %vm2439, %v2440, %v2436
    %v2442 = vadd.s32 %v2437, %v2441
    %v2443 = vadd.s32 %v2442, 536870912
    %v2444 = vshrl.u32 %v2443, 30
    %v2445 = vshll.u32 %v2444, 30
    %v2446 = vsub.s32 %v2442, %v2445
    %vm2447 = vcmp.lt.s32.totalorder %v2446, 0
    %v2448 = vsub.s32 0, %v2446
    %v2449 = vsel %vm2447, %v2448, %v2446
    %v2450 = vclz %v2449
    %v2451 = vsub.s32 %v2450, 2
    %vm2452 = vcmp.gt.s32.totalorder 0, %v2451
    %v2453 = vsel %vm2452, 0, %v2451
    %v2454 = vsub.s32 32, %v2453
    %v2455 = vshll.u32 %v2446, %v2453
    %v2456 = vshrl.u32 %v2438, %v2454
    %v2457 = vor.u32 %v2455, %v2456
    %v2458 = vsub.s32 4294967266, %v2453
    %v2459 = vadd.s32 %v2458, 127
    %v2460 = vshll.u32 %v2459, 23
    %v2461 = vor.u32 4788187, %v2460
    %v2462 = vand.u32 2147483647, %v2461
    %v2464 = vcvt.s32.f32 %v2457
    %v2465 = vmul.f32 %v2464, %v2462
    %v2466 = vxor.u32 %v2465, 2147483648
    %v2467 = vsel %vm2346, %v2466, %v2465
    %v2468 = vsub.s32 4, %v2444
    %v2469 = vsel %vm2346, %v2468, %v2444
    %v2470 = vsel %vm2345, %v2188, %v2467
    %v2471 = vsel %vm2345, 0, %v2469
    %v2472 = vmul.f32 %v2470, %v2470
    %v2473 = vmul.f32 %v2472, -0.001358992
    %v2474 = vadd.f32 %v2473, 0.041655596
    %v2475 = vmul.f32 %v2472, %v2474
    %v2476 = vadd.f32 %v2475, -0.4999988
    %v2477 = vmul.f32 %v2472, %v2476
    %v2478 = vadd.f32 1.0, %v2477
    %v2479 = vmul.f32 %v2470, %v2470
    %v2480 = vmul.f32 %v2479, -0.00019511016
    %v2481 = vadd.f32 %v2480, 0.008332121
    %v2482 = vmul.f32 %v2479, %v2481
    %v2483 = vadd.f32 %v2482, -0.16666654
    %v2484 = vmul.f32 %v2479, %v2483
    %v2485 = vadd.f32 %v2484, 1.0
    %v2486 = vmul.f32 %v2485, %v2470
    %vm2487 = vweird.f32 %v2188
    %v2488 = vadd.s32 %v2471, 3
    %v2489 = vand.u32 %v2488, 3
    %vm2490 = vcmp.lt.s32.totalorder %v2489, 2
    %vm2491 = vcmp.eq.s32.totalorder %v2489, 0
    %v2492 = vxor.u32 %v2486, 2147483648
    %v2493 = vsel %vm2491, %v2478, %v2492
    %vm2494 = vcmp.eq.s32.totalorder %v2489, 2
    %v2495 = vxor.u32 %v2478, 2147483648
    %v2496 = vsel %vm2494, %v2495, %v2486
    %v2497 = vsel %vm2490, %v2493, %v2496
    %v2498 = vsel %vm2487, nan, %v2497
    %v2499 = vperm.slane %v227, 3
    %v2500 = vmul.f32 %v2343, %v2499
    %v2501 = vmul.f32 %v2498, %v2499
    %v2502 = vadd.f32 %v2175, %v2500
    %v2503 = vadd.f32 %v2176, %v2501
    %v2504 = vmul.f32 %v2179, %v567
    %v2505 = vmul.f32 %v2183, %v567
    %v2506 = vadd.f32 %v2504, %v572
    %v2507 = vadd.f32 %v2505, %v572
    %v2508 = vand.u32 2147483647, %v2506
    %vm2509 = vcmp.le.f32.partialorder %v2508, 0.7853982
    %vm2510 = vcmp.lt.s32.totalorder %v2506, 0
    %v2511 = vand.u32 %v2506, 2139095040
    %v2512 = vshrl.u32 %v2511, 23
    %v2513 = vsub.s32 %v2512, 127
    %v2514 = vand.u32 2147483647, %v2506
    %v2515 = vand.u32 %v2514, 8388607
    %v2516 = vor.u32 %v2515, 8388608
    %v2517 = vsub.s32 0, %v2516
    %v2518 = vadd.s32 %v2513, 1
    %vm2519 = vcmp.gt.s32.totalorder %v2518, 0
    %v2520 = vsel %vm2519, %v2518, 0
    %v2521 = vshrl.u32 %v2520, 5
    %v2522 = vand.u32 %v2520, 31
    %v2523 = vsub.s32 32, %v2522
    %v2524 = vshrl.u32 683565275, %v2523
    %v2525 = vshll.u32 683565275, %v2522
    %v2526 = vshrl.u32 2475754826, %v2523
    %v2527 = vor.u32 %v2525, %v2526
    %v2528 = vshll.u32 2475754826, %v2522
    %v2529 = vshrl.u32 2131351028, %v2523
    %v2530 = vor.u32 %v2528, %v2529
    %v2531 = vshll.u32 2131351028, %v2522
    %v2532 = vshrl.u32 2102212464, %v2523
    %v2533 = vor.u32 %v2531, %v2532
    %v2534 = vshll.u32 2102212464, %v2522
    %v2535 = vshrl.u32 920167782, %v2523
    %v2536 = vor.u32 %v2534, %v2535
    %v2537 = vshll.u32 920167782, %v2522
    %v2538 = vshrl.u32 1326507024, %v2523
    %v2539 = vor.u32 %v2537, %v2538
    %vm2540 = vcmp.lt.s32.totalorder %v2521, 1
    %vm2541 = vcmp.lt.s32.totalorder %v2521, 2
    %vm2542 = vcmp.lt.s32.totalorder %v2521, 3
    %vm2543 = vcmp.lt.s32.totalorder %v2521, 4
    %v2544 = vsel %vm2540, %v2524, %v2527
    %v2545 = vsel %vm2543, %v2533, 2102212464
    %v2546 = vsel %vm2542, %v2530, %v2545
    %v2547 = vsel %vm2541, %v2544, %v2546
    %v2548 = vsel %vm2540, %v2527, %v2530
    %v2549 = vsel %vm2543, %v2536, 920167782
    %v2550 = vsel %vm2542, %v2533, %v2549
    %v2551 = vsel %vm2541, %v2548, %v2550
    %v2552 = vsel %vm2540, %v2530, %v2533
    %v2553 = vsel %vm2543, %v2539, 1326507024
    %v2554 = vsel %vm2542, %v2536, %v2553
    %v2555 = vsel %vm2541, %v2552, %v2554
    %v2556 = vshll.u32 %v2516, 8
    %v2557 = vand.u32 %v2556, 65535
    %v2558 = vshrl.u32 %v2556, 16
    %v2559 = vand.u32 %v2555, 65535
    %v2560 = vshrl.u32 %v2555, 16
    %v2561 = vmul.u32 %v2557, %v2559
    %v2562 = vmul.u32 %v2557, %v2560
    %v2563 = vmul.u32 %v2558, %v2559
    %v2564 = vmul.u32 %v2558, %v2560
    %v2565 = vshll.u32 %v2562, 16
    %v2566 = vshrl.u32 %v2562, 16
    %v2567 = vshll.u32 %v2563, 16
    %v2568 = vshrl.u32 %v2563, 16
    %vm2569 = vc.u32 %v2561, %v2565
    %v2570 = vsel %vm2569, 1, 0
    %v2571 = vadd.s32 %v2561, %v2565
    %v2572 = vadd.s32 %v2564, %v2570
    %vm2573 = vc.u32 %v2571, %v2567
    %v2574 = vsel %vm2573, 1, 0
    %v2575 = vadd.s32 %v2571, %v2567
    %v2576 = vadd.s32 %v2572, %v2574
    %v2577 = vadd.s32 %v2576, %v2566
    %v2578 = vadd.s32 %v2577, %v2568
    %v2579 = vand.u32 %v2556, 65535
    %v2580 = vshrl.u32 %v2556, 16
    %v2581 = vand.u32 %v2551, 65535
    %v2582 = vshrl.u32 %v2551, 16
    %v2583 = vmul.u32 %v2579, %v2581
    %v2584 = vmul.u32 %v2579, %v2582
    %v2585 = vmul.u32 %v2580, %v2581
    %v2586 = vmul.u32 %v2580, %v2582
    %v2587 = vshll.u32 %v2584, 16
    %v2588 = vshrl.u32 %v2584, 16
    %v2589 = vshll.u32 %v2585, 16
    %v2590 = vshrl.u32 %v2585, 16
    %vm2591 = vc.u32 %v2583, %v2587
    %v2592 = vsel %vm2591, 1, 0
    %v2593 = vadd.s32 %v2583, %v2587
    %v2594 = vadd.s32 %v2586, %v2592
    %vm2595 = vc.u32 %v2593, %v2589
    %v2596 = vsel %vm2595, 1, 0
    %v2597 = vadd.s32 %v2593, %v2589
    %v2598 = vadd.s32 %v2594, %v2596
    %v2599 = vadd.s32 %v2598, %v2588
    %v2600 = vadd.s32 %v2599, %v2590
    %v2601 = vmul.u32 %v2556, %v2547
    %v2602 = vadd.s32 %v2578, %v2597
    %vm2603 = vc.u32 %v2578, %v2597
    %v2604 = vadd.s32 %v2600, 1
    %v2605 = vsel %vm2603, %v2604, %v2600
    %v2606 = vadd.s32 %v2601, %v2605
    %v2607 = vadd.s32 %v2606, 536870912
    %v2608 = vshrl.u32 %v2607, 30
    %v2609 = vshll.u32 %v2608, 30
    %v2610 = vsub.s32 %v2606, %v2609
    %vm2611 = vcmp.lt.s32.totalorder %v2610, 0
    %v2612 = vsub.s32 0, %v2610
    %v2613 = vsel %vm2611, %v2612, %v2610
    %v2614 = vclz %v2613
    %v2615 = vsub.s32 %v2614, 2
    %vm2616 = vcmp.gt.s32.totalorder 0, %v2615
    %v2617 = vsel %vm2616, 0, %v2615
    %v2618 = vsub.s32 32, %v2617
    %v2619 = vshll.u32 %v2610, %v2617
    %v2620 = vshrl.u32 %v2602, %v2618
    %v2621 = vor.u32 %v2619, %v2620
    %v2622 = vsub.s32 4294967266, %v2617
    %v2623 = vadd.s32 %v2622, 127
    %v2624 = vshll.u32 %v2623, 23
    %v2625 = vor.u32 4788187, %v2624
    %v2626 = vand.u32 2147483647, %v2625
    %v2628 = vcvt.s32.f32 %v2621
    %v2629 = vmul.f32 %v2628, %v2626
    %v2630 = vxor.u32 %v2629, 2147483648
    %v2631 = vsel %vm2510, %v2630, %v2629
    %v2632 = vsub.s32 4, %v2608
    %v2633 = vsel %vm2510, %v2632, %v2608
    %v2634 = vsel %vm2509, %v2506, %v2631
    %v2635 = vsel %vm2509, 0, %v2633
    %v2636 = vmul.f32 %v2634, %v2634
    %v2637 = vmul.f32 %v2636, -0.001358992
    %v2638 = vadd.f32 %v2637, 0.041655596
    %v2639 = vmul.f32 %v2636, %v2638
    %v2640 = vadd.f32 %v2639, -0.4999988
    %v2641 = vmul.f32 %v2636, %v2640
    %v2642 = vadd.f32 1.0, %v2641
    %v2643 = vmul.f32 %v2634, %v2634
    %v2644 = vmul.f32 %v2643, -0.00019511016
    %v2645 = vadd.f32 %v2644, 0.008332121
    %v2646 = vmul.f32 %v2643, %v2645
    %v2647 = vadd.f32 %v2646, -0.16666654
    %v2648 = vmul.f32 %v2643, %v2647
    %v2649 = vadd.f32 %v2648, 1.0
    %v2650 = vmul.f32 %v2649, %v2634
    %vm2651 = vweird.f32 %v2506
    %v2652 = vand.u32 %v2635, 3
    %vm2653 = vcmp.lt.s32.totalorder %v2652, 2
    %vm2654 = vcmp.eq.s32.totalorder %v2652, 0
    %v2655 = vxor.u32 %v2650, 2147483648
    %v2656 = vsel %vm2654, %v2642, %v2655
    %vm2657 = vcmp.eq.s32.totalorder %v2652, 2
    %v2658 = vxor.u32 %v2642, 2147483648
    %v2659 = vsel %vm2657, %v2658, %v2650
    %v2660 = vsel %vm2653, %v2656, %v2659
    %v2661 = vsel %vm2651, nan, %v2660
    %v2662 = vand.u32 2147483647, %v2507
    %vm2663 = vcmp.le.f32.partialorder %v2662, 0.7853982
    %vm2664 = vcmp.lt.s32.totalorder %v2507, 0
    %v2665 = vand.u32 %v2507, 2139095040
    %v2666 = vshrl.u32 %v2665, 23
    %v2667 = vsub.s32 %v2666, 127
    %v2668 = vand.u32 2147483647, %v2507
    %v2669 = vand.u32 %v2668, 8388607
    %v2670 = vor.u32 %v2669, 8388608
    %v2671 = vsub.s32 0, %v2670
    %v2672 = vadd.s32 %v2667, 1
    %vm2673 = vcmp.gt.s32.totalorder %v2672, 0
    %v2674 = vsel %vm2673, %v2672, 0
    %v2675 = vshrl.u32 %v2674, 5
    %v2676 = vand.u32 %v2674, 31
    %v2677 = vsub.s32 32, %v2676
    %v2678 = vshrl.u32 683565275, %v2677
    %v2679 = vshll.u32 683565275, %v2676
    %v2680 = vshrl.u32 2475754826, %v2677
    %v2681 = vor.u32 %v2679, %v2680
    %v2682 = vshll.u32 2475754826, %v2676
    %v2683 = vshrl.u32 2131351028, %v2677
    %v2684 = vor.u32 %v2682, %v2683
    %v2685 = vshll.u32 2131351028, %v2676
    %v2686 = vshrl.u32 2102212464, %v2677
    %v2687 = vor.u32 %v2685, %v2686
    %v2688 = vshll.u32 2102212464, %v2676
    %v2689 = vshrl.u32 920167782, %v2677
    %v2690 = vor.u32 %v2688, %v2689
    %v2691 = vshll.u32 920167782, %v2676
    %v2692 = vshrl.u32 1326507024, %v2677
    %v2693 = vor.u32 %v2691, %v2692
    %vm2694 = vcmp.lt.s32.totalorder %v2675, 1
    %vm2695 = vcmp.lt.s32.totalorder %v2675, 2
    %vm2696 = vcmp.lt.s32.totalorder %v2675, 3
    %vm2697 = vcmp.lt.s32.totalorder %v2675, 4
    %v2698 = vsel %vm2694, %v2678, %v2681
    %v2699 = vsel %vm2697, %v2687, 2102212464
    %v2700 = vsel %vm2696, %v2684, %v2699
    %v2701 = vsel %vm2695, %v2698, %v2700
    %v2702 = vsel %vm2694, %v2681, %v2684
    %v2703 = vsel %vm2697, %v2690, 920167782
    %v2704 = vsel %vm2696, %v2687, %v2703
    %v2705 = vsel %vm2695, %v2702, %v2704
    %v2706 = vsel %vm2694, %v2684, %v2687
    %v2707 = vsel %vm2697, %v2693, 1326507024
    %v2708 = vsel %vm2696, %v2690, %v2707
    %v2709 = vsel %vm2695, %v2706, %v2708
    %v2710 = vshll.u32 %v2670, 8
    %v2711 = vand.u32 %v2710, 65535
    %v2712 = vshrl.u32 %v2710, 16
    %v2713 = vand.u32 %v2709, 65535
    %v2714 = vshrl.u32 %v2709, 16
    %v2715 = vmul.u32 %v2711, %v2713
    %v2716 = vmul.u32 %v2711, %v2714
    %v2717 = vmul.u32 %v2712, %v2713
    %v2718 = vmul.u32 %v2712, %v2714
    %v2719 = vshll.u32 %v2716, 16
    %v2720 = vshrl.u32 %v2716, 16
    %v2721 = vshll.u32 %v2717, 16
    %v2722 = vshrl.u32 %v2717, 16
    %vm2723 = vc.u32 %v2715, %v2719
    %v2724 = vsel %vm2723, 1, 0
    %v2725 = vadd.s32 %v2715, %v2719
    %v2726 = vadd.s32 %v2718, %v2724
    %vm2727 = vc.u32 %v2725, %v2721
    %v2728 = vsel %vm2727, 1, 0
    %v2729 = vadd.s32 %v2725, %v2721
    %v2730 = vadd.s32 %v2726, %v2728
    %v2731 = vadd.s32 %v2730, %v2720
    %v2732 = vadd.s32 %v2731, %v2722
    %v2733 = vand.u32 %v2710, 65535
    %v2734 = vshrl.u32 %v2710, 16
    %v2735 = vand.u32 %v2705, 65535
    %v2736 = vshrl.u32 %v2705, 16
    %v2737 = vmul.u32 %v2733, %v2735
    %v2738 = vmul.u32 %v2733, %v2736
    %v2739 = vmul.u32 %v2734, %v2735
    %v2740 = vmul.u32 %v2734, %v2736
    %v2741 = vshll.u32 %v2738, 16
    %v2742 = vshrl.u32 %v2738, 16
    %v2743 = vshll.u32 %v2739, 16
    %v2744 = vshrl.u32 %v2739, 16
    %vm2745 = vc.u32 %v2737, %v2741
    %v2746 = vsel %vm2745, 1, 0
    %v2747 = vadd.s32 %v2737, %v2741
    %v2748 = vadd.s32 %v2740, %v2746
    %vm2749 = vc.u32 %v2747, %v2743
    %v2750 = vsel %vm2749, 1, 0
    %v2751 = vadd.s32 %v2747, %v2743
    %v2752 = vadd.s32 %v2748, %v2750
    %v2753 = vadd.s32 %v2752, %v2742
    %v2754 = vadd.s32 %v2753, %v2744
    %v2755 = vmul.u32 %v2710, %v2701
    %v2756 = vadd.s32 %v2732, %v2751
    %vm2757 = vc.u32 %v2732, %v2751
    %v2758 = vadd.s32 %v2754, 1
    %v2759 = vsel %vm2757, %v2758, %v2754
    %v2760 = vadd.s32 %v2755, %v2759
    %v2761 = vadd.s32 %v2760, 536870912
    %v2762 = vshrl.u32 %v2761, 30
    %v2763 = vshll.u32 %v2762, 30
    %v2764 = vsub.s32 %v2760, %v2763
    %vm2765 = vcmp.lt.s32.totalorder %v2764, 0
    %v2766 = vsub.s32 0, %v2764
    %v2767 = vsel %vm2765, %v2766, %v2764
    %v2768 = vclz %v2767
    %v2769 = vsub.s32 %v2768, 2
    %vm2770 = vcmp.gt.s32.totalorder 0, %v2769
    %v2771 = vsel %vm2770, 0, %v2769
    %v2772 = vsub.s32 32, %v2771
    %v2773 = vshll.u32 %v2764, %v2771
    %v2774 = vshrl.u32 %v2756, %v2772
    %v2775 = vor.u32 %v2773, %v2774
    %v2776 = vsub.s32 4294967266, %v2771
    %v2777 = vadd.s32 %v2776, 127
    %v2778 = vshll.u32 %v2777, 23
    %v2779 = vor.u32 4788187, %v2778
    %v2780 = vand.u32 2147483647, %v2779
    %v2782 = vcvt.s32.f32 %v2775
    %v2783 = vmul.f32 %v2782, %v2780
    %v2784 = vxor.u32 %v2783, 2147483648
    %v2785 = vsel %vm2664, %v2784, %v2783
    %v2786 = vsub.s32 4, %v2762
    %v2787 = vsel %vm2664, %v2786, %v2762
    %v2788 = vsel %vm2663, %v2507, %v2785
    %v2789 = vsel %vm2663, 0, %v2787
    %v2790 = vmul.f32 %v2788, %v2788
    %v2791 = vmul.f32 %v2790, -0.001358992
    %v2792 = vadd.f32 %v2791, 0.041655596
    %v2793 = vmul.f32 %v2790, %v2792
    %v2794 = vadd.f32 %v2793, -0.4999988
    %v2795 = vmul.f32 %v2790, %v2794
    %v2796 = vadd.f32 1.0, %v2795
    %v2797 = vmul.f32 %v2788, %v2788
    %v2798 = vmul.f32 %v2797, -0.00019511016
    %v2799 = vadd.f32 %v2798, 0.008332121
    %v2800 = vmul.f32 %v2797, %v2799
    %v2801 = vadd.f32 %v2800, -0.16666654
    %v2802 = vmul.f32 %v2797, %v2801
    %v2803 = vadd.f32 %v2802, 1.0
    %v2804 = vmul.f32 %v2803, %v2788
    %vm2805 = vweird.f32 %v2507
    %v2806 = vand.u32 %v2789, 3
    %vm2807 = vcmp.lt.s32.totalorder %v2806, 2
    %vm2808 = vcmp.eq.s32.totalorder %v2806, 0
    %v2809 = vxor.u32 %v2804, 2147483648
    %v2810 = vsel %vm2808, %v2796, %v2809
    %vm2811 = vcmp.eq.s32.totalorder %v2806, 2
    %v2812 = vxor.u32 %v2796, 2147483648
    %v2813 = vsel %vm2811, %v2812, %v2804
    %v2814 = vsel %vm2807, %v2810, %v2813
    %v2815 = vsel %vm2805, nan, %v2814
    %v2816 = vperm.slane %v228, 3
    %v2817 = vmul.f32 %v2661, %v2816
    %v2818 = vmul.f32 %v2815, %v2816
    %v2819 = vadd.f32 %v2502, %v2817
    %v2820 = vadd.f32 %v2503, %v2818
    %vm2821 = vcmask 785408
    %2822 = vst.msk [vmem:[#allocation2] sm:$0xff] %vm2821, %v2819
    %2823 = vst.msk [vmem:[#allocation2 + $0x8] sm:$0xff] %vm2821, %v2820
    %v2824 = vld [vmem:[#allocation2] sm:$0x1]
    %v2825 = vld [vmem:[#allocation2 + $0x8] sm:$0x1]
    %v2826 = vld [vmem:[#allocation4] sm:$0xff]
    %v2827 = vld [vmem:[#allocation4 + $0x8] sm:$0xff]
    %v2828 = vld [vmem:[#allocation4 + $0x10] sm:$0xff]
    %v2829 = vld [vmem:[#allocation4 + $0x18] sm:$0xff]
    %v2830 = vld [vmem:[#allocation4 + $0x20] sm:$0xff]
    %v2831 = vld [vmem:[#allocation4 + $0x28] sm:$0xff]
    %v2832 = vld [vmem:[#allocation4 + $0x30] sm:$0xff]
    %v2833 = vld [vmem:[#allocation4 + $0x38] sm:$0xff]
    %v2834 = vld [vmem:[#allocation4 + $0x40] sm:$0xff]
    %v2835 = vld [vmem:[#allocation4 + $0x48] sm:$0xff]
    %v2836 = vld [vmem:[#allocation4 + $0x50] sm:$0xff]
    %v2837 = vld [vmem:[#allocation4 + $0x58] sm:$0xff]
    %v2838 = vld [vmem:[#allocation2 + $0x1] sm:$0x1]
    %v2839 = vld [vmem:[#allocation2 + $0x9] sm:$0x1]
    %s2840 = scalar_lea.vmem [#allocation4], 96
    %v2841 = vld [vmem:[%s2840] sm:$0xff]
    %v2842 = vld [vmem:[%s2840 + $0x8] sm:$0xff]
    %v2843 = vld [vmem:[%s2840 + $0x10] sm:$0xff]
    %v2844 = vld [vmem:[%s2840 + $0x18] sm:$0xff]
    %v2845 = vld [vmem:[%s2840 + $0x20] sm:$0xff]
    %v2846 = vld [vmem:[%s2840 + $0x28] sm:$0xff]
    %v2847 = vld [vmem:[%s2840 + $0x30] sm:$0xff]
    %v2848 = vld [vmem:[%s2840 + $0x38] sm:$0xff]
    %v2849 = vld [vmem:[%s2840 + $0x40] sm:$0xff]
    %v2850 = vld [vmem:[%s2840 + $0x48] sm:$0xff]
    %v2851 = vld [vmem:[%s2840 + $0x50] sm:$0xff]
    %v2852 = vld [vmem:[%s2840 + $0x58] sm:$0xff]
    %v2855 = vrot.slane %v2839, 7
    %vm2856 = vcmask 1041409
    %v2857 = vsel %vm2856, %v2855, %v2838
    %v2858 = vsel %vm2821, %v2857, 0
    %2860 = vmatpush.msra.mxu0 0.0
    %2861 = vmatpush.msra.mxu0 0.0
    %2862 = vmatpush.msra.mxu0 0.0
    %2863 = vmatpush.msra.mxu0 0.0
    %2864 = vmatpush.msra.mxu0 %v2852
    %2865 = vmatpush.msra.mxu0 %v2851
    %2866 = vmatpush.msra.mxu0 %v2850
    %2867 = vmatpush.msra.mxu0 %v2849
    %2868 = vmatpush.msra.mxu0 %v2848
    %2869 = vmatpush.msra.mxu0 %v2847
    %2870 = vmatpush.msra.mxu0 %v2846
    %2871 = vmatpush.msra.mxu0 %v2845
    %2872 = vmatpush.msra.mxu0 %v2844
    %2873 = vmatpush.msra.mxu0 %v2843
    %2874 = vmatpush.msra.mxu0 %v2842
    %2875 = vmatpush.msra.mxu0 %v2841
    %2876 = vmatmul.f32.gmra.mxu0 %v2858
    %v2877 = vpop.f32.mrf.mxu0
    %v2878 = vadd.f32 0.0, %v2877
    %2879 = vdwg.mxu0
    %v2882 = vrot.slane %v2825, 7
    %v2883 = vsel %vm2856, %v2882, %v2824
    %v2884 = vsel %vm2821, %v2883, 0
    %2886 = vmatpush.msra.mxu0 0.0
    %2887 = vmatpush.msra.mxu0 0.0
    %2888 = vmatpush.msra.mxu0 0.0
    %2889 = vmatpush.msra.mxu0 0.0
    %2890 = vmatpush.msra.mxu0 %v2837
    %2891 = vmatpush.msra.mxu0 %v2836
    %2892 = vmatpush.msra.mxu0 %v2835
    %2893 = vmatpush.msra.mxu0 %v2834
    %2894 = vmatpush.msra.mxu0 %v2833
    %2895 = vmatpush.msra.mxu0 %v2832
    %2896 = vmatpush.msra.mxu0 %v2831
    %2897 = vmatpush.msra.mxu0 %v2830
    %2898 = vmatpush.msra.mxu0 %v2829
    %2899 = vmatpush.msra.mxu0 %v2828
    %2900 = vmatpush.msra.mxu0 %v2827
    %2901 = vmatpush.msra.mxu0 %v2826
    %2902 = vmatmul.f32.gmra.mxu0 %v2884
    %v2903 = vpop.f32.mrf.mxu0
    %v2904 = vadd.f32 %v2878, %v2903
    %2905 = vdwg.mxu0
    %v2906 = vld [vmem:[#allocation2 + $0x2] sm:$0x1]
    %v2907 = vld [vmem:[#allocation2 + $0xa] sm:$0x1]
    %s2908 = scalar_lea.vmem [#allocation4], 192
    %v2909 = vld [vmem:[%s2908] sm:$0xff]
    %v2910 = vld [vmem:[%s2908 + $0x8] sm:$0xff]
    %v2911 = vld [vmem:[%s2908 + $0x10] sm:$0xff]
    %v2912 = vld [vmem:[%s2908 + $0x18] sm:$0xff]
    %v2913 = vld [vmem:[%s2908 + $0x20] sm:$0xff]
    %v2914 = vld [vmem:[%s2908 + $0x28] sm:$0xff]
    %v2915 = vld [vmem:[%s2908 + $0x30] sm:$0xff]
    %v2916 = vld [vmem:[%s2908 + $0x38] sm:$0xff]
    %v2917 = vld [vmem:[%s2908 + $0x40] sm:$0xff]
    %v2918 = vld [vmem:[%s2908 + $0x48] sm:$0xff]
    %v2919 = vld [vmem:[%s2908 + $0x50] sm:$0xff]
    %v2920 = vld [vmem:[%s2908 + $0x58] sm:$0xff]
    %v2923 = vrot.slane %v2907, 7
    %v2924 = vsel %vm2856, %v2923, %v2906
    %v2925 = vsel %vm2821, %v2924, 0
    %2927 = vmatpush.msra.mxu0 0.0
    %2928 = vmatpush.msra.mxu0 0.0
    %2929 = vmatpush.msra.mxu0 0.0
    %2930 = vmatpush.msra.mxu0 0.0
    %2931 = vmatpush.msra.mxu0 %v2920
    %2932 = vmatpush.msra.mxu0 %v2919
    %2933 = vmatpush.msra.mxu0 %v2918
    %2934 = vmatpush.msra.mxu0 %v2917
    %2935 = vmatpush.msra.mxu0 %v2916
    %2936 = vmatpush.msra.mxu0 %v2915
    %2937 = vmatpush.msra.mxu0 %v2914
    %2938 = vmatpush.msra.mxu0 %v2913
    %2939 = vmatpush.msra.mxu0 %v2912
    %2940 = vmatpush.msra.mxu0 %v2911
    %2941 = vmatpush.msra.mxu0 %v2910
    %2942 = vmatpush.msra.mxu0 %v2909
    %2943 = vmatmul.f32.gmra.mxu0 %v2925
    %v2944 = vpop.f32.mrf.mxu0
    %v2945 = vadd.f32 0.0, %v2944
    %2946 = vdwg.mxu0
    %v2947 = vadd.f32 %v2904, %v2945
    %v2948 = vld [vmem:[#allocation2 + $0x3] sm:$0x1]
    %v2949 = vld [vmem:[#allocation2 + $0xb] sm:$0x1]
    %s2950 = scalar_lea.vmem [#allocation4], 288
    %v2951 = vld [vmem:[%s2950] sm:$0xff]
    %v2952 = vld [vmem:[%s2950 + $0x8] sm:$0xff]
    %v2953 = vld [vmem:[%s2950 + $0x10] sm:$0xff]
    %v2954 = vld [vmem:[%s2950 + $0x18] sm:$0xff]
    %v2955 = vld [vmem:[%s2950 + $0x20] sm:$0xff]
    %v2956 = vld [vmem:[%s2950 + $0x28] sm:$0xff]
    %v2957 = vld [vmem:[%s2950 + $0x30] sm:$0xff]
    %v2958 = vld [vmem:[%s2950 + $0x38] sm:$0xff]
    %v2959 = vld [vmem:[%s2950 + $0x40] sm:$0xff]
    %v2960 = vld [vmem:[%s2950 + $0x48] sm:$0xff]
    %v2961 = vld [vmem:[%s2950 + $0x50] sm:$0xff]
    %v2962 = vld [vmem:[%s2950 + $0x58] sm:$0xff]
    %v2965 = vrot.slane %v2949, 7
    %v2966 = vsel %vm2856, %v2965, %v2948
    %v2967 = vsel %vm2821, %v2966, 0
    %2969 = vmatpush.msra.mxu0 0.0
    %2970 = vmatpush.msra.mxu0 0.0
    %2971 = vmatpush.msra.mxu0 0.0
    %2972 = vmatpush.msra.mxu0 0.0
    %2973 = vmatpush.msra.mxu0 %v2962
    %2974 = vmatpush.msra.mxu0 %v2961
    %2975 = vmatpush.msra.mxu0 %v2960
    %2976 = vmatpush.msra.mxu0 %v2959
    %2977 = vmatpush.msra.mxu0 %v2958
    %2978 = vmatpush.msra.mxu0 %v2957
    %2979 = vmatpush.msra.mxu0 %v2956
    %2980 = vmatpush.msra.mxu0 %v2955
    %2981 = vmatpush.msra.mxu0 %v2954
    %2982 = vmatpush.msra.mxu0 %v2953
    %2983 = vmatpush.msra.mxu0 %v2952
    %2984 = vmatpush.msra.mxu0 %v2951
    %2985 = vmatmul.f32.gmra.mxu0 %v2967
    %v2986 = vpop.f32.mrf.mxu0
    %v2987 = vadd.f32 0.0, %v2986
    %2988 = vdwg.mxu0
    %v2989 = vadd.f32 %v2947, %v2987
    %v2990 = vld [vmem:[#allocation2 + $0x4] sm:$0x1]
    %v2991 = vld [vmem:[#allocation2 + $0xc] sm:$0x1]
    %s2992 = scalar_lea.vmem [#allocation4], 384
    %v2993 = vld [vmem:[%s2992] sm:$0xff]
    %v2994 = vld [vmem:[%s2992 + $0x8] sm:$0xff]
    %v2995 = vld [vmem:[%s2992 + $0x10] sm:$0xff]
    %v2996 = vld [vmem:[%s2992 + $0x18] sm:$0xff]
    %v2997 = vld [vmem:[%s2992 + $0x20] sm:$0xff]
    %v2998 = vld [vmem:[%s2992 + $0x28] sm:$0xff]
    %v2999 = vld [vmem:[%s2992 + $0x30] sm:$0xff]
    %v3000 = vld [vmem:[%s2992 + $0x38] sm:$0xff]
    %v3001 = vld [vmem:[%s2992 + $0x40] sm:$0xff]
    %v3002 = vld [vmem:[%s2992 + $0x48] sm:$0xff]
    %v3003 = vld [vmem:[%s2992 + $0x50] sm:$0xff]
    %v3004 = vld [vmem:[%s2992 + $0x58] sm:$0xff]
    %v3007 = vrot.slane %v2991, 7
    %v3008 = vsel %vm2856, %v3007, %v2990
    %v3009 = vsel %vm2821, %v3008, 0
    %3011 = vmatpush.msra.mxu0 0.0
    %3012 = vmatpush.msra.mxu0 0.0
    %3013 = vmatpush.msra.mxu0 0.0
    %3014 = vmatpush.msra.mxu0 0.0
    %3015 = vmatpush.msra.mxu0 %v3004
    %3016 = vmatpush.msra.mxu0 %v3003
    %3017 = vmatpush.msra.mxu0 %v3002
    %3018 = vmatpush.msra.mxu0 %v3001
    %3019 = vmatpush.msra.mxu0 %v3000
    %3020 = vmatpush.msra.mxu0 %v2999
    %3021 = vmatpush.msra.mxu0 %v2998
    %3022 = vmatpush.msra.mxu0 %v2997
    %3023 = vmatpush.msra.mxu0 %v2996
    %3024 = vmatpush.msra.mxu0 %v2995
    %3025 = vmatpush.msra.mxu0 %v2994
    %3026 = vmatpush.msra.mxu0 %v2993
    %3027 = vmatmul.f32.gmra.mxu0 %v3009
    %v3028 = vpop.f32.mrf.mxu0
    %v3029 = vadd.f32 0.0, %v3028
    %3030 = vdwg.mxu0
    %v3031 = vadd.f32 %v2989, %v3029
    %v3032 = vld [vmem:[#allocation2 + $0x5] sm:$0x1]
    %v3033 = vld [vmem:[#allocation2 + $0xd] sm:$0x1]
    %s3034 = scalar_lea.vmem [#allocation4], 480
    %v3035 = vld [vmem:[%s3034] sm:$0xff]
    %v3036 = vld [vmem:[%s3034 + $0x8] sm:$0xff]
    %v3037 = vld [vmem:[%s3034 + $0x10] sm:$0xff]
    %v3038 = vld [vmem:[%s3034 + $0x18] sm:$0xff]
    %v3039 = vld [vmem:[%s3034 + $0x20] sm:$0xff]
    %v3040 = vld [vmem:[%s3034 + $0x28] sm:$0xff]
    %v3041 = vld [vmem:[%s3034 + $0x30] sm:$0xff]
    %v3042 = vld [vmem:[%s3034 + $0x38] sm:$0xff]
    %v3043 = vld [vmem:[%s3034 + $0x40] sm:$0xff]
    %v3044 = vld [vmem:[%s3034 + $0x48] sm:$0xff]
    %v3045 = vld [vmem:[%s3034 + $0x50] sm:$0xff]
    %v3046 = vld [vmem:[%s3034 + $0x58] sm:$0xff]
    %v3049 = vrot.slane %v3033, 7
    %v3050 = vsel %vm2856, %v3049, %v3032
    %v3051 = vsel %vm2821, %v3050, 0
    %3053 = vmatpush.msra.mxu0 0.0
    %3054 = vmatpush.msra.mxu0 0.0
    %3055 = vmatpush.msra.mxu0 0.0
    %3056 = vmatpush.msra.mxu0 0.0
    %3057 = vmatpush.msra.mxu0 %v3046
    %3058 = vmatpush.msra.mxu0 %v3045
    %3059 = vmatpush.msra.mxu0 %v3044
    %3060 = vmatpush.msra.mxu0 %v3043
    %3061 = vmatpush.msra.mxu0 %v3042
    %3062 = vmatpush.msra.mxu0 %v3041
    %3063 = vmatpush.msra.mxu0 %v3040
    %3064 = vmatpush.msra.mxu0 %v3039
    %3065 = vmatpush.msra.mxu0 %v3038
    %3066 = vmatpush.msra.mxu0 %v3037
    %3067 = vmatpush.msra.mxu0 %v3036
    %3068 = vmatpush.msra.mxu0 %v3035
    %3069 = vmatmul.f32.gmra.mxu0 %v3051
    %v3070 = vpop.f32.mrf.mxu0
    %v3071 = vadd.f32 0.0, %v3070
    %3072 = vdwg.mxu0
    %v3073 = vadd.f32 %v3031, %v3071
    %v3074 = vld [vmem:[#allocation2 + $0x6] sm:$0x1]
    %v3075 = vld [vmem:[#allocation2 + $0xe] sm:$0x1]
    %s3076 = scalar_lea.vmem [#allocation4], 576
    %v3077 = vld [vmem:[%s3076] sm:$0xff]
    %v3078 = vld [vmem:[%s3076 + $0x8] sm:$0xff]
    %v3079 = vld [vmem:[%s3076 + $0x10] sm:$0xff]
    %v3080 = vld [vmem:[%s3076 + $0x18] sm:$0xff]
    %v3081 = vld [vmem:[%s3076 + $0x20] sm:$0xff]
    %v3082 = vld [vmem:[%s3076 + $0x28] sm:$0xff]
    %v3083 = vld [vmem:[%s3076 + $0x30] sm:$0xff]
    %v3084 = vld [vmem:[%s3076 + $0x38] sm:$0xff]
    %v3085 = vld [vmem:[%s3076 + $0x40] sm:$0xff]
    %v3086 = vld [vmem:[%s3076 + $0x48] sm:$0xff]
    %v3087 = vld [vmem:[%s3076 + $0x50] sm:$0xff]
    %v3088 = vld [vmem:[%s3076 + $0x58] sm:$0xff]
    %v3091 = vrot.slane %v3075, 7
    %v3092 = vsel %vm2856, %v3091, %v3074
    %v3093 = vsel %vm2821, %v3092, 0
    %3095 = vmatpush.msra.mxu0 0.0
    %3096 = vmatpush.msra.mxu0 0.0
    %3097 = vmatpush.msra.mxu0 0.0
    %3098 = vmatpush.msra.mxu0 0.0
    %3099 = vmatpush.msra.mxu0 %v3088
    %3100 = vmatpush.msra.mxu0 %v3087
    %3101 = vmatpush.msra.mxu0 %v3086
    %3102 = vmatpush.msra.mxu0 %v3085
    %3103 = vmatpush.msra.mxu0 %v3084
    %3104 = vmatpush.msra.mxu0 %v3083
    %3105 = vmatpush.msra.mxu0 %v3082
    %3106 = vmatpush.msra.mxu0 %v3081
    %3107 = vmatpush.msra.mxu0 %v3080
    %3108 = vmatpush.msra.mxu0 %v3079
    %3109 = vmatpush.msra.mxu0 %v3078
    %3110 = vmatpush.msra.mxu0 %v3077
    %3111 = vmatmul.f32.gmra.mxu0 %v3093
    %v3112 = vpop.f32.mrf.mxu0
    %v3113 = vadd.f32 0.0, %v3112
    %3114 = vdwg.mxu0
    %v3115 = vadd.f32 %v3073, %v3113
    %v3116 = vld [vmem:[#allocation2 + $0x7] sm:$0x1]
    %v3117 = vld [vmem:[#allocation2 + $0xf] sm:$0x1]
    %s3118 = scalar_lea.vmem [#allocation4], 672
    %v3119 = vld [vmem:[%s3118] sm:$0xff]
    %v3120 = vld [vmem:[%s3118 + $0x8] sm:$0xff]
    %v3121 = vld [vmem:[%s3118 + $0x10] sm:$0xff]
    %v3122 = vld [vmem:[%s3118 + $0x18] sm:$0xff]
    %v3123 = vld [vmem:[%s3118 + $0x20] sm:$0xff]
    %v3124 = vld [vmem:[%s3118 + $0x28] sm:$0xff]
    %v3125 = vld [vmem:[%s3118 + $0x30] sm:$0xff]
    %v3126 = vld [vmem:[%s3118 + $0x38] sm:$0xff]
    %v3127 = vld [vmem:[%s3118 + $0x40] sm:$0xff]
    %v3128 = vld [vmem:[%s3118 + $0x48] sm:$0xff]
    %v3129 = vld [vmem:[%s3118 + $0x50] sm:$0xff]
    %v3130 = vld [vmem:[%s3118 + $0x58] sm:$0xff]
    %v3133 = vrot.slane %v3117, 7
    %v3134 = vsel %vm2856, %v3133, %v3116
    %v3135 = vsel %vm2821, %v3134, 0
    %3137 = vmatpush.msra.mxu0 0.0
    %3138 = vmatpush.msra.mxu0 0.0
    %3139 = vmatpush.msra.mxu0 0.0
    %3140 = vmatpush.msra.mxu0 0.0
    %3141 = vmatpush.msra.mxu0 %v3130
    %3142 = vmatpush.msra.mxu0 %v3129
    %3143 = vmatpush.msra.mxu0 %v3128
    %3144 = vmatpush.msra.mxu0 %v3127
    %3145 = vmatpush.msra.mxu0 %v3126
    %3146 = vmatpush.msra.mxu0 %v3125
    %3147 = vmatpush.msra.mxu0 %v3124
    %3148 = vmatpush.msra.mxu0 %v3123
    %3149 = vmatpush.msra.mxu0 %v3122
    %3150 = vmatpush.msra.mxu0 %v3121
    %3151 = vmatpush.msra.mxu0 %v3120
    %3152 = vmatpush.msra.mxu0 %v3119
    %3153 = vmatmul.f32.gmra.mxu0 %v3135
    %v3154 = vpop.f32.mrf.mxu0
    %v3155 = vadd.f32 0.0, %v3154
    %3156 = vdwg.mxu0
    %v3157 = vadd.f32 %v3115, %v3155
    %v3158 = vld [vmem:[%s2] sm:$0xff]
    %v3159 = vld [vmem:[%s2 + $0x8] sm:$0xff]
    %3161 = vset.pattern.permute.xlu0 0
    %3162 = vperm.xlu0 %3161, %v3158
    %v3163 = vpop.permute.xlu0 %3162
    %3166 = vset.pattern.permute.xlu0 0
    %3167 = vperm.xlu0 %3166, %v3159
    %v3168 = vpop.permute.xlu0 %3167
    %v3170 = vmul.f32 %v3163, %v242
    %v3171 = vmul.f32 %v3168, %v242
    %v3172 = vadd.f32 %v3170, %v247
    %v3173 = vadd.f32 %v3171, %v247
    %v3174 = vand.u32 2147483647, %v3172
    %vm3175 = vcmp.le.f32.partialorder %v3174, 0.7853982
    %vm3176 = vcmp.lt.s32.totalorder %v3172, 0
    %v3177 = vand.u32 %v3172, 2139095040
    %v3178 = vshrl.u32 %v3177, 23
    %v3179 = vsub.s32 %v3178, 127
    %v3180 = vand.u32 2147483647, %v3172
    %v3181 = vand.u32 %v3180, 8388607
    %v3182 = vor.u32 %v3181, 8388608
    %v3183 = vsub.s32 0, %v3182
    %v3184 = vadd.s32 %v3179, 1
    %vm3185 = vcmp.gt.s32.totalorder %v3184, 0
    %v3186 = vsel %vm3185, %v3184, 0
    %v3187 = vshrl.u32 %v3186, 5
    %v3188 = vand.u32 %v3186, 31
    %v3189 = vsub.s32 32, %v3188
    %v3190 = vshrl.u32 683565275, %v3189
    %v3191 = vshll.u32 683565275, %v3188
    %v3192 = vshrl.u32 2475754826, %v3189
    %v3193 = vor.u32 %v3191, %v3192
    %v3194 = vshll.u32 2475754826, %v3188
    %v3195 = vshrl.u32 2131351028, %v3189
    %v3196 = vor.u32 %v3194, %v3195
    %v3197 = vshll.u32 2131351028, %v3188
    %v3198 = vshrl.u32 2102212464, %v3189
    %v3199 = vor.u32 %v3197, %v3198
    %v3200 = vshll.u32 2102212464, %v3188
    %v3201 = vshrl.u32 920167782, %v3189
    %v3202 = vor.u32 %v3200, %v3201
    %v3203 = vshll.u32 920167782, %v3188
    %v3204 = vshrl.u32 1326507024, %v3189
    %v3205 = vor.u32 %v3203, %v3204
    %vm3206 = vcmp.lt.s32.totalorder %v3187, 1
    %vm3207 = vcmp.lt.s32.totalorder %v3187, 2
    %vm3208 = vcmp.lt.s32.totalorder %v3187, 3
    %vm3209 = vcmp.lt.s32.totalorder %v3187, 4
    %v3210 = vsel %vm3206, %v3190, %v3193
    %v3211 = vsel %vm3209, %v3199, 2102212464
    %v3212 = vsel %vm3208, %v3196, %v3211
    %v3213 = vsel %vm3207, %v3210, %v3212
    %v3214 = vsel %vm3206, %v3193, %v3196
    %v3215 = vsel %vm3209, %v3202, 920167782
    %v3216 = vsel %vm3208, %v3199, %v3215
    %v3217 = vsel %vm3207, %v3214, %v3216
    %v3218 = vsel %vm3206, %v3196, %v3199
    %v3219 = vsel %vm3209, %v3205, 1326507024
    %v3220 = vsel %vm3208, %v3202, %v3219
    %v3221 = vsel %vm3207, %v3218, %v3220
    %v3222 = vshll.u32 %v3182, 8
    %v3223 = vand.u32 %v3222, 65535
    %v3224 = vshrl.u32 %v3222, 16
    %v3225 = vand.u32 %v3221, 65535
    %v3226 = vshrl.u32 %v3221, 16
    %v3227 = vmul.u32 %v3223, %v3225
    %v3228 = vmul.u32 %v3223, %v3226
    %v3229 = vmul.u32 %v3224, %v3225
    %v3230 = vmul.u32 %v3224, %v3226
    %v3231 = vshll.u32 %v3228, 16
    %v3232 = vshrl.u32 %v3228, 16
    %v3233 = vshll.u32 %v3229, 16
    %v3234 = vshrl.u32 %v3229, 16
    %vm3235 = vc.u32 %v3227, %v3231
    %v3236 = vsel %vm3235, 1, 0
    %v3237 = vadd.s32 %v3227, %v3231
    %v3238 = vadd.s32 %v3230, %v3236
    %vm3239 = vc.u32 %v3237, %v3233
    %v3240 = vsel %vm3239, 1, 0
    %v3241 = vadd.s32 %v3237, %v3233
    %v3242 = vadd.s32 %v3238, %v3240
    %v3243 = vadd.s32 %v3242, %v3232
    %v3244 = vadd.s32 %v3243, %v3234
    %v3245 = vand.u32 %v3222, 65535
    %v3246 = vshrl.u32 %v3222, 16
    %v3247 = vand.u32 %v3217, 65535
    %v3248 = vshrl.u32 %v3217, 16
    %v3249 = vmul.u32 %v3245, %v3247
    %v3250 = vmul.u32 %v3245, %v3248
    %v3251 = vmul.u32 %v3246, %v3247
    %v3252 = vmul.u32 %v3246, %v3248
    %v3253 = vshll.u32 %v3250, 16
    %v3254 = vshrl.u32 %v3250, 16
    %v3255 = vshll.u32 %v3251, 16
    %v3256 = vshrl.u32 %v3251, 16
    %vm3257 = vc.u32 %v3249, %v3253
    %v3258 = vsel %vm3257, 1, 0
    %v3259 = vadd.s32 %v3249, %v3253
    %v3260 = vadd.s32 %v3252, %v3258
    %vm3261 = vc.u32 %v3259, %v3255
    %v3262 = vsel %vm3261, 1, 0
    %v3263 = vadd.s32 %v3259, %v3255
    %v3264 = vadd.s32 %v3260, %v3262
    %v3265 = vadd.s32 %v3264, %v3254
    %v3266 = vadd.s32 %v3265, %v3256
    %v3267 = vmul.u32 %v3222, %v3213
    %v3268 = vadd.s32 %v3244, %v3263
    %vm3269 = vc.u32 %v3244, %v3263
    %v3270 = vadd.s32 %v3266, 1
    %v3271 = vsel %vm3269, %v3270, %v3266
    %v3272 = vadd.s32 %v3267, %v3271
    %v3273 = vadd.s32 %v3272, 536870912
    %v3274 = vshrl.u32 %v3273, 30
    %v3275 = vshll.u32 %v3274, 30
    %v3276 = vsub.s32 %v3272, %v3275
    %vm3277 = vcmp.lt.s32.totalorder %v3276, 0
    %v3278 = vsub.s32 0, %v3276
    %v3279 = vsel %vm3277, %v3278, %v3276
    %v3280 = vclz %v3279
    %v3281 = vsub.s32 %v3280, 2
    %vm3282 = vcmp.gt.s32.totalorder 0, %v3281
    %v3283 = vsel %vm3282, 0, %v3281
    %v3284 = vsub.s32 32, %v3283
    %v3285 = vshll.u32 %v3276, %v3283
    %v3286 = vshrl.u32 %v3268, %v3284
    %v3287 = vor.u32 %v3285, %v3286
    %v3288 = vsub.s32 4294967266, %v3283
    %v3289 = vadd.s32 %v3288, 127
    %v3290 = vshll.u32 %v3289, 23
    %v3291 = vor.u32 4788187, %v3290
    %v3292 = vand.u32 2147483647, %v3291
    %v3294 = vcvt.s32.f32 %v3287
    %v3295 = vmul.f32 %v3294, %v3292
    %v3296 = vxor.u32 %v3295, 2147483648
    %v3297 = vsel %vm3176, %v3296, %v3295
    %v3298 = vsub.s32 4, %v3274
    %v3299 = vsel %vm3176, %v3298, %v3274
    %v3300 = vsel %vm3175, %v3172, %v3297
    %v3301 = vsel %vm3175, 0, %v3299
    %v3302 = vmul.f32 %v3300, %v3300
    %v3303 = vmul.f32 %v3302, -0.001358992
    %v3304 = vadd.f32 %v3303, 0.041655596
    %v3305 = vmul.f32 %v3302, %v3304
    %v3306 = vadd.f32 %v3305, -0.4999988
    %v3307 = vmul.f32 %v3302, %v3306
    %v3308 = vadd.f32 1.0, %v3307
    %v3309 = vmul.f32 %v3300, %v3300
    %v3310 = vmul.f32 %v3309, -0.00019511016
    %v3311 = vadd.f32 %v3310, 0.008332121
    %v3312 = vmul.f32 %v3309, %v3311
    %v3313 = vadd.f32 %v3312, -0.16666654
    %v3314 = vmul.f32 %v3309, %v3313
    %v3315 = vadd.f32 %v3314, 1.0
    %v3316 = vmul.f32 %v3315, %v3300
    %vm3317 = vweird.f32 %v3172
    %v3318 = vadd.s32 %v3301, 3
    %v3319 = vand.u32 %v3318, 3
    %vm3320 = vcmp.lt.s32.totalorder %v3319, 2
    %vm3321 = vcmp.eq.s32.totalorder %v3319, 0
    %v3322 = vxor.u32 %v3316, 2147483648
    %v3323 = vsel %vm3321, %v3308, %v3322
    %vm3324 = vcmp.eq.s32.totalorder %v3319, 2
    %v3325 = vxor.u32 %v3308, 2147483648
    %v3326 = vsel %vm3324, %v3325, %v3316
    %v3327 = vsel %vm3320, %v3323, %v3326
    %v3328 = vsel %vm3317, nan, %v3327
    %v3329 = vand.u32 2147483647, %v3173
    %vm3330 = vcmp.le.f32.partialorder %v3329, 0.7853982
    %vm3331 = vcmp.lt.s32.totalorder %v3173, 0
    %v3332 = vand.u32 %v3173, 2139095040
    %v3333 = vshrl.u32 %v3332, 23
    %v3334 = vsub.s32 %v3333, 127
    %v3335 = vand.u32 2147483647, %v3173
    %v3336 = vand.u32 %v3335, 8388607
    %v3337 = vor.u32 %v3336, 8388608
    %v3338 = vsub.s32 0, %v3337
    %v3339 = vadd.s32 %v3334, 1
    %vm3340 = vcmp.gt.s32.totalorder %v3339, 0
    %v3341 = vsel %vm3340, %v3339, 0
    %v3342 = vshrl.u32 %v3341, 5
    %v3343 = vand.u32 %v3341, 31
    %v3344 = vsub.s32 32, %v3343
    %v3345 = vshrl.u32 683565275, %v3344
    %v3346 = vshll.u32 683565275, %v3343
    %v3347 = vshrl.u32 2475754826, %v3344
    %v3348 = vor.u32 %v3346, %v3347
    %v3349 = vshll.u32 2475754826, %v3343
    %v3350 = vshrl.u32 2131351028, %v3344
    %v3351 = vor.u32 %v3349, %v3350
    %v3352 = vshll.u32 2131351028, %v3343
    %v3353 = vshrl.u32 2102212464, %v3344
    %v3354 = vor.u32 %v3352, %v3353
    %v3355 = vshll.u32 2102212464, %v3343
    %v3356 = vshrl.u32 920167782, %v3344
    %v3357 = vor.u32 %v3355, %v3356
    %v3358 = vshll.u32 920167782, %v3343
    %v3359 = vshrl.u32 1326507024, %v3344
    %v3360 = vor.u32 %v3358, %v3359
    %vm3361 = vcmp.lt.s32.totalorder %v3342, 1
    %vm3362 = vcmp.lt.s32.totalorder %v3342, 2
    %vm3363 = vcmp.lt.s32.totalorder %v3342, 3
    %vm3364 = vcmp.lt.s32.totalorder %v3342, 4
    %v3365 = vsel %vm3361, %v3345, %v3348
    %v3366 = vsel %vm3364, %v3354, 2102212464
    %v3367 = vsel %vm3363, %v3351, %v3366
    %v3368 = vsel %vm3362, %v3365, %v3367
    %v3369 = vsel %vm3361, %v3348, %v3351
    %v3370 = vsel %vm3364, %v3357, 920167782
    %v3371 = vsel %vm3363, %v3354, %v3370
    %v3372 = vsel %vm3362, %v3369, %v3371
    %v3373 = vsel %vm3361, %v3351, %v3354
    %v3374 = vsel %vm3364, %v3360, 1326507024
    %v3375 = vsel %vm3363, %v3357, %v3374
    %v3376 = vsel %vm3362, %v3373, %v3375
    %v3377 = vshll.u32 %v3337, 8
    %v3378 = vand.u32 %v3377, 65535
    %v3379 = vshrl.u32 %v3377, 16
    %v3380 = vand.u32 %v3376, 65535
    %v3381 = vshrl.u32 %v3376, 16
    %v3382 = vmul.u32 %v3378, %v3380
    %v3383 = vmul.u32 %v3378, %v3381
    %v3384 = vmul.u32 %v3379, %v3380
    %v3385 = vmul.u32 %v3379, %v3381
    %v3386 = vshll.u32 %v3383, 16
    %v3387 = vshrl.u32 %v3383, 16
    %v3388 = vshll.u32 %v3384, 16
    %v3389 = vshrl.u32 %v3384, 16
    %vm3390 = vc.u32 %v3382, %v3386
    %v3391 = vsel %vm3390, 1, 0
    %v3392 = vadd.s32 %v3382, %v3386
    %v3393 = vadd.s32 %v3385, %v3391
    %vm3394 = vc.u32 %v3392, %v3388
    %v3395 = vsel %vm3394, 1, 0
    %v3396 = vadd.s32 %v3392, %v3388
    %v3397 = vadd.s32 %v3393, %v3395
    %v3398 = vadd.s32 %v3397, %v3387
    %v3399 = vadd.s32 %v3398, %v3389
    %v3400 = vand.u32 %v3377, 65535
    %v3401 = vshrl.u32 %v3377, 16
    %v3402 = vand.u32 %v3372, 65535
    %v3403 = vshrl.u32 %v3372, 16
    %v3404 = vmul.u32 %v3400, %v3402
    %v3405 = vmul.u32 %v3400, %v3403
    %v3406 = vmul.u32 %v3401, %v3402
    %v3407 = vmul.u32 %v3401, %v3403
    %v3408 = vshll.u32 %v3405, 16
    %v3409 = vshrl.u32 %v3405, 16
    %v3410 = vshll.u32 %v3406, 16
    %v3411 = vshrl.u32 %v3406, 16
    %vm3412 = vc.u32 %v3404, %v3408
    %v3413 = vsel %vm3412, 1, 0
    %v3414 = vadd.s32 %v3404, %v3408
    %v3415 = vadd.s32 %v3407, %v3413
    %vm3416 = vc.u32 %v3414, %v3410
    %v3417 = vsel %vm3416, 1, 0
    %v3418 = vadd.s32 %v3414, %v3410
    %v3419 = vadd.s32 %v3415, %v3417
    %v3420 = vadd.s32 %v3419, %v3409
    %v3421 = vadd.s32 %v3420, %v3411
    %v3422 = vmul.u32 %v3377, %v3368
    %v3423 = vadd.s32 %v3399, %v3418
    %vm3424 = vc.u32 %v3399, %v3418
    %v3425 = vadd.s32 %v3421, 1
    %v3426 = vsel %vm3424, %v3425, %v3421
    %v3427 = vadd.s32 %v3422, %v3426
    %v3428 = vadd.s32 %v3427, 536870912
    %v3429 = vshrl.u32 %v3428, 30
    %v3430 = vshll.u32 %v3429, 30
    %v3431 = vsub.s32 %v3427, %v3430
    %vm3432 = vcmp.lt.s32.totalorder %v3431, 0
    %v3433 = vsub.s32 0, %v3431
    %v3434 = vsel %vm3432, %v3433, %v3431
    %v3435 = vclz %v3434
    %v3436 = vsub.s32 %v3435, 2
    %vm3437 = vcmp.gt.s32.totalorder 0, %v3436
    %v3438 = vsel %vm3437, 0, %v3436
    %v3439 = vsub.s32 32, %v3438
    %v3440 = vshll.u32 %v3431, %v3438
    %v3441 = vshrl.u32 %v3423, %v3439
    %v3442 = vor.u32 %v3440, %v3441
    %v3443 = vsub.s32 4294967266, %v3438
    %v3444 = vadd.s32 %v3443, 127
    %v3445 = vshll.u32 %v3444, 23
    %v3446 = vor.u32 4788187, %v3445
    %v3447 = vand.u32 2147483647, %v3446
    %v3449 = vcvt.s32.f32 %v3442
    %v3450 = vmul.f32 %v3449, %v3447
    %v3451 = vxor.u32 %v3450, 2147483648
    %v3452 = vsel %vm3331, %v3451, %v3450
    %v3453 = vsub.s32 4, %v3429
    %v3454 = vsel %vm3331, %v3453, %v3429
    %v3455 = vsel %vm3330, %v3173, %v3452
    %v3456 = vsel %vm3330, 0, %v3454
    %v3457 = vmul.f32 %v3455, %v3455
    %v3458 = vmul.f32 %v3457, -0.001358992
    %v3459 = vadd.f32 %v3458, 0.041655596
    %v3460 = vmul.f32 %v3457, %v3459
    %v3461 = vadd.f32 %v3460, -0.4999988
    %v3462 = vmul.f32 %v3457, %v3461
    %v3463 = vadd.f32 1.0, %v3462
    %v3464 = vmul.f32 %v3455, %v3455
    %v3465 = vmul.f32 %v3464, -0.00019511016
    %v3466 = vadd.f32 %v3465, 0.008332121
    %v3467 = vmul.f32 %v3464, %v3466
    %v3468 = vadd.f32 %v3467, -0.16666654
    %v3469 = vmul.f32 %v3464, %v3468
    %v3470 = vadd.f32 %v3469, 1.0
    %v3471 = vmul.f32 %v3470, %v3455
    %vm3472 = vweird.f32 %v3173
    %v3473 = vadd.s32 %v3456, 3
    %v3474 = vand.u32 %v3473, 3
    %vm3475 = vcmp.lt.s32.totalorder %v3474, 2
    %vm3476 = vcmp.eq.s32.totalorder %v3474, 0
    %v3477 = vxor.u32 %v3471, 2147483648
    %v3478 = vsel %vm3476, %v3463, %v3477
    %vm3479 = vcmp.eq.s32.totalorder %v3474, 2
    %v3480 = vxor.u32 %v3463, 2147483648
    %v3481 = vsel %vm3479, %v3480, %v3471
    %v3482 = vsel %vm3475, %v3478, %v3481
    %v3483 = vsel %vm3472, nan, %v3482
    %v3484 = vmul.f32 %v3328, %v561
    %v3485 = vmul.f32 %v3483, %v561
    %v3486 = vadd.f32 %v3484, 0.0
    %v3487 = vadd.f32 %v3485, 0.0
    %v3488 = vmul.f32 %v3163, %v567
    %v3489 = vmul.f32 %v3168, %v567
    %v3490 = vadd.f32 %v3488, %v572
    %v3491 = vadd.f32 %v3489, %v572
    %v3492 = vand.u32 2147483647, %v3490
    %vm3493 = vcmp.le.f32.partialorder %v3492, 0.7853982
    %vm3494 = vcmp.lt.s32.totalorder %v3490, 0
    %v3495 = vand.u32 %v3490, 2139095040
    %v3496 = vshrl.u32 %v3495, 23
    %v3497 = vsub.s32 %v3496, 127
    %v3498 = vand.u32 2147483647, %v3490
    %v3499 = vand.u32 %v3498, 8388607
    %v3500 = vor.u32 %v3499, 8388608
    %v3501 = vsub.s32 0, %v3500
    %v3502 = vadd.s32 %v3497, 1
    %vm3503 = vcmp.gt.s32.totalorder %v3502, 0
    %v3504 = vsel %vm3503, %v3502, 0
    %v3505 = vshrl.u32 %v3504, 5
    %v3506 = vand.u32 %v3504, 31
    %v3507 = vsub.s32 32, %v3506
    %v3508 = vshrl.u32 683565275, %v3507
    %v3509 = vshll.u32 683565275, %v3506
    %v3510 = vshrl.u32 2475754826, %v3507
    %v3511 = vor.u32 %v3509, %v3510
    %v3512 = vshll.u32 2475754826, %v3506
    %v3513 = vshrl.u32 2131351028, %v3507
    %v3514 = vor.u32 %v3512, %v3513
    %v3515 = vshll.u32 2131351028, %v3506
    %v3516 = vshrl.u32 2102212464, %v3507
    %v3517 = vor.u32 %v3515, %v3516
    %v3518 = vshll.u32 2102212464, %v3506
    %v3519 = vshrl.u32 920167782, %v3507
    %v3520 = vor.u32 %v3518, %v3519
    %v3521 = vshll.u32 920167782, %v3506
    %v3522 = vshrl.u32 1326507024, %v3507
    %v3523 = vor.u32 %v3521, %v3522
    %vm3524 = vcmp.lt.s32.totalorder %v3505, 1
    %vm3525 = vcmp.lt.s32.totalorder %v3505, 2
    %vm3526 = vcmp.lt.s32.totalorder %v3505, 3
    %vm3527 = vcmp.lt.s32.totalorder %v3505, 4
    %v3528 = vsel %vm3524, %v3508, %v3511
    %v3529 = vsel %vm3527, %v3517, 2102212464
    %v3530 = vsel %vm3526, %v3514, %v3529
    %v3531 = vsel %vm3525, %v3528, %v3530
    %v3532 = vsel %vm3524, %v3511, %v3514
    %v3533 = vsel %vm3527, %v3520, 920167782
    %v3534 = vsel %vm3526, %v3517, %v3533
    %v3535 = vsel %vm3525, %v3532, %v3534
    %v3536 = vsel %vm3524, %v3514, %v3517
    %v3537 = vsel %vm3527, %v3523, 1326507024
    %v3538 = vsel %vm3526, %v3520, %v3537
    %v3539 = vsel %vm3525, %v3536, %v3538
    %v3540 = vshll.u32 %v3500, 8
    %v3541 = vand.u32 %v3540, 65535
    %v3542 = vshrl.u32 %v3540, 16
    %v3543 = vand.u32 %v3539, 65535
    %v3544 = vshrl.u32 %v3539, 16
    %v3545 = vmul.u32 %v3541, %v3543
    %v3546 = vmul.u32 %v3541, %v3544
    %v3547 = vmul.u32 %v3542, %v3543
    %v3548 = vmul.u32 %v3542, %v3544
    %v3549 = vshll.u32 %v3546, 16
    %v3550 = vshrl.u32 %v3546, 16
    %v3551 = vshll.u32 %v3547, 16
    %v3552 = vshrl.u32 %v3547, 16
    %vm3553 = vc.u32 %v3545, %v3549
    %v3554 = vsel %vm3553, 1, 0
    %v3555 = vadd.s32 %v3545, %v3549
    %v3556 = vadd.s32 %v3548, %v3554
    %vm3557 = vc.u32 %v3555, %v3551
    %v3558 = vsel %vm3557, 1, 0
    %v3559 = vadd.s32 %v3555, %v3551
    %v3560 = vadd.s32 %v3556, %v3558
    %v3561 = vadd.s32 %v3560, %v3550
    %v3562 = vadd.s32 %v3561, %v3552
    %v3563 = vand.u32 %v3540, 65535
    %v3564 = vshrl.u32 %v3540, 16
    %v3565 = vand.u32 %v3535, 65535
    %v3566 = vshrl.u32 %v3535, 16
    %v3567 = vmul.u32 %v3563, %v3565
    %v3568 = vmul.u32 %v3563, %v3566
    %v3569 = vmul.u32 %v3564, %v3565
    %v3570 = vmul.u32 %v3564, %v3566
    %v3571 = vshll.u32 %v3568, 16
    %v3572 = vshrl.u32 %v3568, 16
    %v3573 = vshll.u32 %v3569, 16
    %v3574 = vshrl.u32 %v3569, 16
    %vm3575 = vc.u32 %v3567, %v3571
    %v3576 = vsel %vm3575, 1, 0
    %v3577 = vadd.s32 %v3567, %v3571
    %v3578 = vadd.s32 %v3570, %v3576
    %vm3579 = vc.u32 %v3577, %v3573
    %v3580 = vsel %vm3579, 1, 0
    %v3581 = vadd.s32 %v3577, %v3573
    %v3582 = vadd.s32 %v3578, %v3580
    %v3583 = vadd.s32 %v3582, %v3572
    %v3584 = vadd.s32 %v3583, %v3574
    %v3585 = vmul.u32 %v3540, %v3531
    %v3586 = vadd.s32 %v3562, %v3581
    %vm3587 = vc.u32 %v3562, %v3581
    %v3588 = vadd.s32 %v3584, 1
    %v3589 = vsel %vm3587, %v3588, %v3584
    %v3590 = vadd.s32 %v3585, %v3589
    %v3591 = vadd.s32 %v3590, 536870912
    %v3592 = vshrl.u32 %v3591, 30
    %v3593 = vshll.u32 %v3592, 30
    %v3594 = vsub.s32 %v3590, %v3593
    %vm3595 = vcmp.lt.s32.totalorder %v3594, 0
    %v3596 = vsub.s32 0, %v3594
    %v3597 = vsel %vm3595, %v3596, %v3594
    %v3598 = vclz %v3597
    %v3599 = vsub.s32 %v3598, 2
    %vm3600 = vcmp.gt.s32.totalorder 0, %v3599
    %v3601 = vsel %vm3600, 0, %v3599
    %v3602 = vsub.s32 32, %v3601
    %v3603 = vshll.u32 %v3594, %v3601
    %v3604 = vshrl.u32 %v3586, %v3602
    %v3605 = vor.u32 %v3603, %v3604
    %v3606 = vsub.s32 4294967266, %v3601
    %v3607 = vadd.s32 %v3606, 127
    %v3608 = vshll.u32 %v3607, 23
    %v3609 = vor.u32 4788187, %v3608
    %v3610 = vand.u32 2147483647, %v3609
    %v3612 = vcvt.s32.f32 %v3605
    %v3613 = vmul.f32 %v3612, %v3610
    %v3614 = vxor.u32 %v3613, 2147483648
    %v3615 = vsel %vm3494, %v3614, %v3613
    %v3616 = vsub.s32 4, %v3592
    %v3617 = vsel %vm3494, %v3616, %v3592
    %v3618 = vsel %vm3493, %v3490, %v3615
    %v3619 = vsel %vm3493, 0, %v3617
    %v3620 = vmul.f32 %v3618, %v3618
    %v3621 = vmul.f32 %v3620, -0.001358992
    %v3622 = vadd.f32 %v3621, 0.041655596
    %v3623 = vmul.f32 %v3620, %v3622
    %v3624 = vadd.f32 %v3623, -0.4999988
    %v3625 = vmul.f32 %v3620, %v3624
    %v3626 = vadd.f32 1.0, %v3625
    %v3627 = vmul.f32 %v3618, %v3618
    %v3628 = vmul.f32 %v3627, -0.00019511016
    %v3629 = vadd.f32 %v3628, 0.008332121
    %v3630 = vmul.f32 %v3627, %v3629
    %v3631 = vadd.f32 %v3630, -0.16666654
    %v3632 = vmul.f32 %v3627, %v3631
    %v3633 = vadd.f32 %v3632, 1.0
    %v3634 = vmul.f32 %v3633, %v3618
    %vm3635 = vweird.f32 %v3490
    %v3636 = vand.u32 %v3619, 3
    %vm3637 = vcmp.lt.s32.totalorder %v3636, 2
    %vm3638 = vcmp.eq.s32.totalorder %v3636, 0
    %v3639 = vxor.u32 %v3634, 2147483648
    %v3640 = vsel %vm3638, %v3626, %v3639
    %vm3641 = vcmp.eq.s32.totalorder %v3636, 2
    %v3642 = vxor.u32 %v3626, 2147483648
    %v3643 = vsel %vm3641, %v3642, %v3634
    %v3644 = vsel %vm3637, %v3640, %v3643
    %v3645 = vsel %vm3635, nan, %v3644
    %v3646 = vand.u32 2147483647, %v3491
    %vm3647 = vcmp.le.f32.partialorder %v3646, 0.7853982
    %vm3648 = vcmp.lt.s32.totalorder %v3491, 0
    %v3649 = vand.u32 %v3491, 2139095040
    %v3650 = vshrl.u32 %v3649, 23
    %v3651 = vsub.s32 %v3650, 127
    %v3652 = vand.u32 2147483647, %v3491
    %v3653 = vand.u32 %v3652, 8388607
    %v3654 = vor.u32 %v3653, 8388608
    %v3655 = vsub.s32 0, %v3654
    %v3656 = vadd.s32 %v3651, 1
    %vm3657 = vcmp.gt.s32.totalorder %v3656, 0
    %v3658 = vsel %vm3657, %v3656, 0
    %v3659 = vshrl.u32 %v3658, 5
    %v3660 = vand.u32 %v3658, 31
    %v3661 = vsub.s32 32, %v3660
    %v3662 = vshrl.u32 683565275, %v3661
    %v3663 = vshll.u32 683565275, %v3660
    %v3664 = vshrl.u32 2475754826, %v3661
    %v3665 = vor.u32 %v3663, %v3664
    %v3666 = vshll.u32 2475754826, %v3660
    %v3667 = vshrl.u32 2131351028, %v3661
    %v3668 = vor.u32 %v3666, %v3667
    %v3669 = vshll.u32 2131351028, %v3660
    %v3670 = vshrl.u32 2102212464, %v3661
    %v3671 = vor.u32 %v3669, %v3670
    %v3672 = vshll.u32 2102212464, %v3660
    %v3673 = vshrl.u32 920167782, %v3661
    %v3674 = vor.u32 %v3672, %v3673
    %v3675 = vshll.u32 920167782, %v3660
    %v3676 = vshrl.u32 1326507024, %v3661
    %v3677 = vor.u32 %v3675, %v3676
    %vm3678 = vcmp.lt.s32.totalorder %v3659, 1
    %vm3679 = vcmp.lt.s32.totalorder %v3659, 2
    %vm3680 = vcmp.lt.s32.totalorder %v3659, 3
    %vm3681 = vcmp.lt.s32.totalorder %v3659, 4
    %v3682 = vsel %vm3678, %v3662, %v3665
    %v3683 = vsel %vm3681, %v3671, 2102212464
    %v3684 = vsel %vm3680, %v3668, %v3683
    %v3685 = vsel %vm3679, %v3682, %v3684
    %v3686 = vsel %vm3678, %v3665, %v3668
    %v3687 = vsel %vm3681, %v3674, 920167782
    %v3688 = vsel %vm3680, %v3671, %v3687
    %v3689 = vsel %vm3679, %v3686, %v3688
    %v3690 = vsel %vm3678, %v3668, %v3671
    %v3691 = vsel %vm3681, %v3677, 1326507024
    %v3692 = vsel %vm3680, %v3674, %v3691
    %v3693 = vsel %vm3679, %v3690, %v3692
    %v3694 = vshll.u32 %v3654, 8
    %v3695 = vand.u32 %v3694, 65535
    %v3696 = vshrl.u32 %v3694, 16
    %v3697 = vand.u32 %v3693, 65535
    %v3698 = vshrl.u32 %v3693, 16
    %v3699 = vmul.u32 %v3695, %v3697
    %v3700 = vmul.u32 %v3695, %v3698
    %v3701 = vmul.u32 %v3696, %v3697
    %v3702 = vmul.u32 %v3696, %v3698
    %v3703 = vshll.u32 %v3700, 16
    %v3704 = vshrl.u32 %v3700, 16
    %v3705 = vshll.u32 %v3701, 16
    %v3706 = vshrl.u32 %v3701, 16
    %vm3707 = vc.u32 %v3699, %v3703
    %v3708 = vsel %vm3707, 1, 0
    %v3709 = vadd.s32 %v3699, %v3703
    %v3710 = vadd.s32 %v3702, %v3708
    %vm3711 = vc.u32 %v3709, %v3705
    %v3712 = vsel %vm3711, 1, 0
    %v3713 = vadd.s32 %v3709, %v3705
    %v3714 = vadd.s32 %v3710, %v3712
    %v3715 = vadd.s32 %v3714, %v3704
    %v3716 = vadd.s32 %v3715, %v3706
    %v3717 = vand.u32 %v3694, 65535
    %v3718 = vshrl.u32 %v3694, 16
    %v3719 = vand.u32 %v3689, 65535
    %v3720 = vshrl.u32 %v3689, 16
    %v3721 = vmul.u32 %v3717, %v3719
    %v3722 = vmul.u32 %v3717, %v3720
    %v3723 = vmul.u32 %v3718, %v3719
    %v3724 = vmul.u32 %v3718, %v3720
    %v3725 = vshll.u32 %v3722, 16
    %v3726 = vshrl.u32 %v3722, 16
    %v3727 = vshll.u32 %v3723, 16
    %v3728 = vshrl.u32 %v3723, 16
    %vm3729 = vc.u32 %v3721, %v3725
    %v3730 = vsel %vm3729, 1, 0
    %v3731 = vadd.s32 %v3721, %v3725
    %v3732 = vadd.s32 %v3724, %v3730
    %vm3733 = vc.u32 %v3731, %v3727
    %v3734 = vsel %vm3733, 1, 0
    %v3735 = vadd.s32 %v3731, %v3727
    %v3736 = vadd.s32 %v3732, %v3734
    %v3737 = vadd.s32 %v3736, %v3726
    %v3738 = vadd.s32 %v3737, %v3728
    %v3739 = vmul.u32 %v3694, %v3685
    %v3740 = vadd.s32 %v3716, %v3735
    %vm3741 = vc.u32 %v3716, %v3735
    %v3742 = vadd.s32 %v3738, 1
    %v3743 = vsel %vm3741, %v3742, %v3738
    %v3744 = vadd.s32 %v3739, %v3743
    %v3745 = vadd.s32 %v3744, 536870912
    %v3746 = vshrl.u32 %v3745, 30
    %v3747 = vshll.u32 %v3746, 30
    %v3748 = vsub.s32 %v3744, %v3747
    %vm3749 = vcmp.lt.s32.totalorder %v3748, 0
    %v3750 = vsub.s32 0, %v3748
    %v3751 = vsel %vm3749, %v3750, %v3748
    %v3752 = vclz %v3751
    %v3753 = vsub.s32 %v3752, 2
    %vm3754 = vcmp.gt.s32.totalorder 0, %v3753
    %v3755 = vsel %vm3754, 0, %v3753
    %v3756 = vsub.s32 32, %v3755
    %v3757 = vshll.u32 %v3748, %v3755
    %v3758 = vshrl.u32 %v3740, %v3756
    %v3759 = vor.u32 %v3757, %v3758
    %v3760 = vsub.s32 4294967266, %v3755
    %v3761 = vadd.s32 %v3760, 127
    %v3762 = vshll.u32 %v3761, 23
    %v3763 = vor.u32 4788187, %v3762
    %v3764 = vand.u32 2147483647, %v3763
    %v3766 = vcvt.s32.f32 %v3759
    %v3767 = vmul.f32 %v3766, %v3764
    %v3768 = vxor.u32 %v3767, 2147483648
    %v3769 = vsel %vm3648, %v3768, %v3767
    %v3770 = vsub.s32 4, %v3746
    %v3771 = vsel %vm3648, %v3770, %v3746
    %v3772 = vsel %vm3647, %v3491, %v3769
    %v3773 = vsel %vm3647, 0, %v3771
    %v3774 = vmul.f32 %v3772, %v3772
    %v3775 = vmul.f32 %v3774, -0.001358992
    %v3776 = vadd.f32 %v3775, 0.041655596
    %v3777 = vmul.f32 %v3774, %v3776
    %v3778 = vadd.f32 %v3777, -0.4999988
    %v3779 = vmul.f32 %v3774, %v3778
    %v3780 = vadd.f32 1.0, %v3779
    %v3781 = vmul.f32 %v3772, %v3772
    %v3782 = vmul.f32 %v3781, -0.00019511016
    %v3783 = vadd.f32 %v3782, 0.008332121
    %v3784 = vmul.f32 %v3781, %v3783
    %v3785 = vadd.f32 %v3784, -0.16666654
    %v3786 = vmul.f32 %v3781, %v3785
    %v3787 = vadd.f32 %v3786, 1.0
    %v3788 = vmul.f32 %v3787, %v3772
    %vm3789 = vweird.f32 %v3491
    %v3790 = vand.u32 %v3773, 3
    %vm3791 = vcmp.lt.s32.totalorder %v3790, 2
    %vm3792 = vcmp.eq.s32.totalorder %v3790, 0
    %v3793 = vxor.u32 %v3788, 2147483648
    %v3794 = vsel %vm3792, %v3780, %v3793
    %vm3795 = vcmp.eq.s32.totalorder %v3790, 2
    %v3796 = vxor.u32 %v3780, 2147483648
    %v3797 = vsel %vm3795, %v3796, %v3788
    %v3798 = vsel %vm3791, %v3794, %v3797
    %v3799 = vsel %vm3789, nan, %v3798
    %v3800 = vmul.f32 %v3645, %v884
    %v3801 = vmul.f32 %v3799, %v884
    %v3802 = vadd.f32 %v3486, %v3800
    %v3803 = vadd.f32 %v3487, %v3801
    %3804 = vset.pattern.permute.xlu0 1
    %3805 = vperm.xlu0 %3804, %v3158
    %v3806 = vpop.permute.xlu0 %3805
    %3808 = vset.pattern.permute.xlu0 1
    %3809 = vperm.xlu0 %3808, %v3159
    %v3810 = vpop.permute.xlu0 %3809
    %v3812 = vmul.f32 %v3806, %v242
    %v3813 = vmul.f32 %v3810, %v242
    %v3814 = vadd.f32 %v3812, %v247
    %v3815 = vadd.f32 %v3813, %v247
    %v3816 = vand.u32 2147483647, %v3814
    %vm3817 = vcmp.le.f32.partialorder %v3816, 0.7853982
    %vm3818 = vcmp.lt.s32.totalorder %v3814, 0
    %v3819 = vand.u32 %v3814, 2139095040
    %v3820 = vshrl.u32 %v3819, 23
    %v3821 = vsub.s32 %v3820, 127
    %v3822 = vand.u32 2147483647, %v3814
    %v3823 = vand.u32 %v3822, 8388607
    %v3824 = vor.u32 %v3823, 8388608
    %v3825 = vsub.s32 0, %v3824
    %v3826 = vadd.s32 %v3821, 1
    %vm3827 = vcmp.gt.s32.totalorder %v3826, 0
    %v3828 = vsel %vm3827, %v3826, 0
    %v3829 = vshrl.u32 %v3828, 5
    %v3830 = vand.u32 %v3828, 31
    %v3831 = vsub.s32 32, %v3830
    %v3832 = vshrl.u32 683565275, %v3831
    %v3833 = vshll.u32 683565275, %v3830
    %v3834 = vshrl.u32 2475754826, %v3831
    %v3835 = vor.u32 %v3833, %v3834
    %v3836 = vshll.u32 2475754826, %v3830
    %v3837 = vshrl.u32 2131351028, %v3831
    %v3838 = vor.u32 %v3836, %v3837
    %v3839 = vshll.u32 2131351028, %v3830
    %v3840 = vshrl.u32 2102212464, %v3831
    %v3841 = vor.u32 %v3839, %v3840
    %v3842 = vshll.u32 2102212464, %v3830
    %v3843 = vshrl.u32 920167782, %v3831
    %v3844 = vor.u32 %v3842, %v3843
    %v3845 = vshll.u32 920167782, %v3830
    %v3846 = vshrl.u32 1326507024, %v3831
    %v3847 = vor.u32 %v3845, %v3846
    %vm3848 = vcmp.lt.s32.totalorder %v3829, 1
    %vm3849 = vcmp.lt.s32.totalorder %v3829, 2
    %vm3850 = vcmp.lt.s32.totalorder %v3829, 3
    %vm3851 = vcmp.lt.s32.totalorder %v3829, 4
    %v3852 = vsel %vm3848, %v3832, %v3835
    %v3853 = vsel %vm3851, %v3841, 2102212464
    %v3854 = vsel %vm3850, %v3838, %v3853
    %v3855 = vsel %vm3849, %v3852, %v3854
    %v3856 = vsel %vm3848, %v3835, %v3838
    %v3857 = vsel %vm3851, %v3844, 920167782
    %v3858 = vsel %vm3850, %v3841, %v3857
    %v3859 = vsel %vm3849, %v3856, %v3858
    %v3860 = vsel %vm3848, %v3838, %v3841
    %v3861 = vsel %vm3851, %v3847, 1326507024
    %v3862 = vsel %vm3850, %v3844, %v3861
    %v3863 = vsel %vm3849, %v3860, %v3862
    %v3864 = vshll.u32 %v3824, 8
    %v3865 = vand.u32 %v3864, 65535
    %v3866 = vshrl.u32 %v3864, 16
    %v3867 = vand.u32 %v3863, 65535
    %v3868 = vshrl.u32 %v3863, 16
    %v3869 = vmul.u32 %v3865, %v3867
    %v3870 = vmul.u32 %v3865, %v3868
    %v3871 = vmul.u32 %v3866, %v3867
    %v3872 = vmul.u32 %v3866, %v3868
    %v3873 = vshll.u32 %v3870, 16
    %v3874 = vshrl.u32 %v3870, 16
    %v3875 = vshll.u32 %v3871, 16
    %v3876 = vshrl.u32 %v3871, 16
    %vm3877 = vc.u32 %v3869, %v3873
    %v3878 = vsel %vm3877, 1, 0
    %v3879 = vadd.s32 %v3869, %v3873
    %v3880 = vadd.s32 %v3872, %v3878
    %vm3881 = vc.u32 %v3879, %v3875
    %v3882 = vsel %vm3881, 1, 0
    %v3883 = vadd.s32 %v3879, %v3875
    %v3884 = vadd.s32 %v3880, %v3882
    %v3885 = vadd.s32 %v3884, %v3874
    %v3886 = vadd.s32 %v3885, %v3876
    %v3887 = vand.u32 %v3864, 65535
    %v3888 = vshrl.u32 %v3864, 16
    %v3889 = vand.u32 %v3859, 65535
    %v3890 = vshrl.u32 %v3859, 16
    %v3891 = vmul.u32 %v3887, %v3889
    %v3892 = vmul.u32 %v3887, %v3890
    %v3893 = vmul.u32 %v3888, %v3889
    %v3894 = vmul.u32 %v3888, %v3890
    %v3895 = vshll.u32 %v3892, 16
    %v3896 = vshrl.u32 %v3892, 16
    %v3897 = vshll.u32 %v3893, 16
    %v3898 = vshrl.u32 %v3893, 16
    %vm3899 = vc.u32 %v3891, %v3895
    %v3900 = vsel %vm3899, 1, 0
    %v3901 = vadd.s32 %v3891, %v3895
    %v3902 = vadd.s32 %v3894, %v3900
    %vm3903 = vc.u32 %v3901, %v3897
    %v3904 = vsel %vm3903, 1, 0
    %v3905 = vadd.s32 %v3901, %v3897
    %v3906 = vadd.s32 %v3902, %v3904
    %v3907 = vadd.s32 %v3906, %v3896
    %v3908 = vadd.s32 %v3907, %v3898
    %v3909 = vmul.u32 %v3864, %v3855
    %v3910 = vadd.s32 %v3886, %v3905
    %vm3911 = vc.u32 %v3886, %v3905
    %v3912 = vadd.s32 %v3908, 1
    %v3913 = vsel %vm3911, %v3912, %v3908
    %v3914 = vadd.s32 %v3909, %v3913
    %v3915 = vadd.s32 %v3914, 536870912
    %v3916 = vshrl.u32 %v3915, 30
    %v3917 = vshll.u32 %v3916, 30
    %v3918 = vsub.s32 %v3914, %v3917
    %vm3919 = vcmp.lt.s32.totalorder %v3918, 0
    %v3920 = vsub.s32 0, %v3918
    %v3921 = vsel %vm3919, %v3920, %v3918
    %v3922 = vclz %v3921
    %v3923 = vsub.s32 %v3922, 2
    %vm3924 = vcmp.gt.s32.totalorder 0, %v3923
    %v3925 = vsel %vm3924, 0, %v3923
    %v3926 = vsub.s32 32, %v3925
    %v3927 = vshll.u32 %v3918, %v3925
    %v3928 = vshrl.u32 %v3910, %v3926
    %v3929 = vor.u32 %v3927, %v3928
    %v3930 = vsub.s32 4294967266, %v3925
    %v3931 = vadd.s32 %v3930, 127
    %v3932 = vshll.u32 %v3931, 23
    %v3933 = vor.u32 4788187, %v3932
    %v3934 = vand.u32 2147483647, %v3933
    %v3936 = vcvt.s32.f32 %v3929
    %v3937 = vmul.f32 %v3936, %v3934
    %v3938 = vxor.u32 %v3937, 2147483648
    %v3939 = vsel %vm3818, %v3938, %v3937
    %v3940 = vsub.s32 4, %v3916
    %v3941 = vsel %vm3818, %v3940, %v3916
    %v3942 = vsel %vm3817, %v3814, %v3939
    %v3943 = vsel %vm3817, 0, %v3941
    %v3944 = vmul.f32 %v3942, %v3942
    %v3945 = vmul.f32 %v3944, -0.001358992
    %v3946 = vadd.f32 %v3945, 0.041655596
    %v3947 = vmul.f32 %v3944, %v3946
    %v3948 = vadd.f32 %v3947, -0.4999988
    %v3949 = vmul.f32 %v3944, %v3948
    %v3950 = vadd.f32 1.0, %v3949
    %v3951 = vmul.f32 %v3942, %v3942
    %v3952 = vmul.f32 %v3951, -0.00019511016
    %v3953 = vadd.f32 %v3952, 0.008332121
    %v3954 = vmul.f32 %v3951, %v3953
    %v3955 = vadd.f32 %v3954, -0.16666654
    %v3956 = vmul.f32 %v3951, %v3955
    %v3957 = vadd.f32 %v3956, 1.0
    %v3958 = vmul.f32 %v3957, %v3942
    %vm3959 = vweird.f32 %v3814
    %v3960 = vadd.s32 %v3943, 3
    %v3961 = vand.u32 %v3960, 3
    %vm3962 = vcmp.lt.s32.totalorder %v3961, 2
    %vm3963 = vcmp.eq.s32.totalorder %v3961, 0
    %v3964 = vxor.u32 %v3958, 2147483648
    %v3965 = vsel %vm3963, %v3950, %v3964
    %vm3966 = vcmp.eq.s32.totalorder %v3961, 2
    %v3967 = vxor.u32 %v3950, 2147483648
    %v3968 = vsel %vm3966, %v3967, %v3958
    %v3969 = vsel %vm3962, %v3965, %v3968
    %v3970 = vsel %vm3959, nan, %v3969
    %v3971 = vand.u32 2147483647, %v3815
    %vm3972 = vcmp.le.f32.partialorder %v3971, 0.7853982
    %vm3973 = vcmp.lt.s32.totalorder %v3815, 0
    %v3974 = vand.u32 %v3815, 2139095040
    %v3975 = vshrl.u32 %v3974, 23
    %v3976 = vsub.s32 %v3975, 127
    %v3977 = vand.u32 2147483647, %v3815
    %v3978 = vand.u32 %v3977, 8388607
    %v3979 = vor.u32 %v3978, 8388608
    %v3980 = vsub.s32 0, %v3979
    %v3981 = vadd.s32 %v3976, 1
    %vm3982 = vcmp.gt.s32.totalorder %v3981, 0
    %v3983 = vsel %vm3982, %v3981, 0
    %v3984 = vshrl.u32 %v3983, 5
    %v3985 = vand.u32 %v3983, 31
    %v3986 = vsub.s32 32, %v3985
    %v3987 = vshrl.u32 683565275, %v3986
    %v3988 = vshll.u32 683565275, %v3985
    %v3989 = vshrl.u32 2475754826, %v3986
    %v3990 = vor.u32 %v3988, %v3989
    %v3991 = vshll.u32 2475754826, %v3985
    %v3992 = vshrl.u32 2131351028, %v3986
    %v3993 = vor.u32 %v3991, %v3992
    %v3994 = vshll.u32 2131351028, %v3985
    %v3995 = vshrl.u32 2102212464, %v3986
    %v3996 = vor.u32 %v3994, %v3995
    %v3997 = vshll.u32 2102212464, %v3985
    %v3998 = vshrl.u32 920167782, %v3986
    %v3999 = vor.u32 %v3997, %v3998
    %v4000 = vshll.u32 920167782, %v3985
    %v4001 = vshrl.u32 1326507024, %v3986
    %v4002 = vor.u32 %v4000, %v4001
    %vm4003 = vcmp.lt.s32.totalorder %v3984, 1
    %vm4004 = vcmp.lt.s32.totalorder %v3984, 2
    %vm4005 = vcmp.lt.s32.totalorder %v3984, 3
    %vm4006 = vcmp.lt.s32.totalorder %v3984, 4
    %v4007 = vsel %vm4003, %v3987, %v3990
    %v4008 = vsel %vm4006, %v3996, 2102212464
    %v4009 = vsel %vm4005, %v3993, %v4008
    %v4010 = vsel %vm4004, %v4007, %v4009
    %v4011 = vsel %vm4003, %v3990, %v3993
    %v4012 = vsel %vm4006, %v3999, 920167782
    %v4013 = vsel %vm4005, %v3996, %v4012
    %v4014 = vsel %vm4004, %v4011, %v4013
    %v4015 = vsel %vm4003, %v3993, %v3996
    %v4016 = vsel %vm4006, %v4002, 1326507024
    %v4017 = vsel %vm4005, %v3999, %v4016
    %v4018 = vsel %vm4004, %v4015, %v4017
    %v4019 = vshll.u32 %v3979, 8
    %v4020 = vand.u32 %v4019, 65535
    %v4021 = vshrl.u32 %v4019, 16
    %v4022 = vand.u32 %v4018, 65535
    %v4023 = vshrl.u32 %v4018, 16
    %v4024 = vmul.u32 %v4020, %v4022
    %v4025 = vmul.u32 %v4020, %v4023
    %v4026 = vmul.u32 %v4021, %v4022
    %v4027 = vmul.u32 %v4021, %v4023
    %v4028 = vshll.u32 %v4025, 16
    %v4029 = vshrl.u32 %v4025, 16
    %v4030 = vshll.u32 %v4026, 16
    %v4031 = vshrl.u32 %v4026, 16
    %vm4032 = vc.u32 %v4024, %v4028
    %v4033 = vsel %vm4032, 1, 0
    %v4034 = vadd.s32 %v4024, %v4028
    %v4035 = vadd.s32 %v4027, %v4033
    %vm4036 = vc.u32 %v4034, %v4030
    %v4037 = vsel %vm4036, 1, 0
    %v4038 = vadd.s32 %v4034, %v4030
    %v4039 = vadd.s32 %v4035, %v4037
    %v4040 = vadd.s32 %v4039, %v4029
    %v4041 = vadd.s32 %v4040, %v4031
    %v4042 = vand.u32 %v4019, 65535
    %v4043 = vshrl.u32 %v4019, 16
    %v4044 = vand.u32 %v4014, 65535
    %v4045 = vshrl.u32 %v4014, 16
    %v4046 = vmul.u32 %v4042, %v4044
    %v4047 = vmul.u32 %v4042, %v4045
    %v4048 = vmul.u32 %v4043, %v4044
    %v4049 = vmul.u32 %v4043, %v4045
    %v4050 = vshll.u32 %v4047, 16
    %v4051 = vshrl.u32 %v4047, 16
    %v4052 = vshll.u32 %v4048, 16
    %v4053 = vshrl.u32 %v4048, 16
    %vm4054 = vc.u32 %v4046, %v4050
    %v4055 = vsel %vm4054, 1, 0
    %v4056 = vadd.s32 %v4046, %v4050
    %v4057 = vadd.s32 %v4049, %v4055
    %vm4058 = vc.u32 %v4056, %v4052
    %v4059 = vsel %vm4058, 1, 0
    %v4060 = vadd.s32 %v4056, %v4052
    %v4061 = vadd.s32 %v4057, %v4059
    %v4062 = vadd.s32 %v4061, %v4051
    %v4063 = vadd.s32 %v4062, %v4053
    %v4064 = vmul.u32 %v4019, %v4010
    %v4065 = vadd.s32 %v4041, %v4060
    %vm4066 = vc.u32 %v4041, %v4060
    %v4067 = vadd.s32 %v4063, 1
    %v4068 = vsel %vm4066, %v4067, %v4063
    %v4069 = vadd.s32 %v4064, %v4068
    %v4070 = vadd.s32 %v4069, 536870912
    %v4071 = vshrl.u32 %v4070, 30
    %v4072 = vshll.u32 %v4071, 30
    %v4073 = vsub.s32 %v4069, %v4072
    %vm4074 = vcmp.lt.s32.totalorder %v4073, 0
    %v4075 = vsub.s32 0, %v4073
    %v4076 = vsel %vm4074, %v4075, %v4073
    %v4077 = vclz %v4076
    %v4078 = vsub.s32 %v4077, 2
    %vm4079 = vcmp.gt.s32.totalorder 0, %v4078
    %v4080 = vsel %vm4079, 0, %v4078
    %v4081 = vsub.s32 32, %v4080
    %v4082 = vshll.u32 %v4073, %v4080
    %v4083 = vshrl.u32 %v4065, %v4081
    %v4084 = vor.u32 %v4082, %v4083
    %v4085 = vsub.s32 4294967266, %v4080
    %v4086 = vadd.s32 %v4085, 127
    %v4087 = vshll.u32 %v4086, 23
    %v4088 = vor.u32 4788187, %v4087
    %v4089 = vand.u32 2147483647, %v4088
    %v4091 = vcvt.s32.f32 %v4084
    %v4092 = vmul.f32 %v4091, %v4089
    %v4093 = vxor.u32 %v4092, 2147483648
    %v4094 = vsel %vm3973, %v4093, %v4092
    %v4095 = vsub.s32 4, %v4071
    %v4096 = vsel %vm3973, %v4095, %v4071
    %v4097 = vsel %vm3972, %v3815, %v4094
    %v4098 = vsel %vm3972, 0, %v4096
    %v4099 = vmul.f32 %v4097, %v4097
    %v4100 = vmul.f32 %v4099, -0.001358992
    %v4101 = vadd.f32 %v4100, 0.041655596
    %v4102 = vmul.f32 %v4099, %v4101
    %v4103 = vadd.f32 %v4102, -0.4999988
    %v4104 = vmul.f32 %v4099, %v4103
    %v4105 = vadd.f32 1.0, %v4104
    %v4106 = vmul.f32 %v4097, %v4097
    %v4107 = vmul.f32 %v4106, -0.00019511016
    %v4108 = vadd.f32 %v4107, 0.008332121
    %v4109 = vmul.f32 %v4106, %v4108
    %v4110 = vadd.f32 %v4109, -0.16666654
    %v4111 = vmul.f32 %v4106, %v4110
    %v4112 = vadd.f32 %v4111, 1.0
    %v4113 = vmul.f32 %v4112, %v4097
    %vm4114 = vweird.f32 %v3815
    %v4115 = vadd.s32 %v4098, 3
    %v4116 = vand.u32 %v4115, 3
    %vm4117 = vcmp.lt.s32.totalorder %v4116, 2
    %vm4118 = vcmp.eq.s32.totalorder %v4116, 0
    %v4119 = vxor.u32 %v4113, 2147483648
    %v4120 = vsel %vm4118, %v4105, %v4119
    %vm4121 = vcmp.eq.s32.totalorder %v4116, 2
    %v4122 = vxor.u32 %v4105, 2147483648
    %v4123 = vsel %vm4121, %v4122, %v4113
    %v4124 = vsel %vm4117, %v4120, %v4123
    %v4125 = vsel %vm4114, nan, %v4124
    %v4126 = vmul.f32 %v3970, %v1211
    %v4127 = vmul.f32 %v4125, %v1211
    %v4128 = vadd.f32 %v3802, %v4126
    %v4129 = vadd.f32 %v3803, %v4127
    %v4130 = vmul.f32 %v3806, %v567
    %v4131 = vmul.f32 %v3810, %v567
    %v4132 = vadd.f32 %v4130, %v572
    %v4133 = vadd.f32 %v4131, %v572
    %v4134 = vand.u32 2147483647, %v4132
    %vm4135 = vcmp.le.f32.partialorder %v4134, 0.7853982
    %vm4136 = vcmp.lt.s32.totalorder %v4132, 0
    %v4137 = vand.u32 %v4132, 2139095040
    %v4138 = vshrl.u32 %v4137, 23
    %v4139 = vsub.s32 %v4138, 127
    %v4140 = vand.u32 2147483647, %v4132
    %v4141 = vand.u32 %v4140, 8388607
    %v4142 = vor.u32 %v4141, 8388608
    %v4143 = vsub.s32 0, %v4142
    %v4144 = vadd.s32 %v4139, 1
    %vm4145 = vcmp.gt.s32.totalorder %v4144, 0
    %v4146 = vsel %vm4145, %v4144, 0
    %v4147 = vshrl.u32 %v4146, 5
    %v4148 = vand.u32 %v4146, 31
    %v4149 = vsub.s32 32, %v4148
    %v4150 = vshrl.u32 683565275, %v4149
    %v4151 = vshll.u32 683565275, %v4148
    %v4152 = vshrl.u32 2475754826, %v4149
    %v4153 = vor.u32 %v4151, %v4152
    %v4154 = vshll.u32 2475754826, %v4148
    %v4155 = vshrl.u32 2131351028, %v4149
    %v4156 = vor.u32 %v4154, %v4155
    %v4157 = vshll.u32 2131351028, %v4148
    %v4158 = vshrl.u32 2102212464, %v4149
    %v4159 = vor.u32 %v4157, %v4158
    %v4160 = vshll.u32 2102212464, %v4148
    %v4161 = vshrl.u32 920167782, %v4149
    %v4162 = vor.u32 %v4160, %v4161
    %v4163 = vshll.u32 920167782, %v4148
    %v4164 = vshrl.u32 1326507024, %v4149
    %v4165 = vor.u32 %v4163, %v4164
    %vm4166 = vcmp.lt.s32.totalorder %v4147, 1
    %vm4167 = vcmp.lt.s32.totalorder %v4147, 2
    %vm4168 = vcmp.lt.s32.totalorder %v4147, 3
    %vm4169 = vcmp.lt.s32.totalorder %v4147, 4
    %v4170 = vsel %vm4166, %v4150, %v4153
    %v4171 = vsel %vm4169, %v4159, 2102212464
    %v4172 = vsel %vm4168, %v4156, %v4171
    %v4173 = vsel %vm4167, %v4170, %v4172
    %v4174 = vsel %vm4166, %v4153, %v4156
    %v4175 = vsel %vm4169, %v4162, 920167782
    %v4176 = vsel %vm4168, %v4159, %v4175
    %v4177 = vsel %vm4167, %v4174, %v4176
    %v4178 = vsel %vm4166, %v4156, %v4159
    %v4179 = vsel %vm4169, %v4165, 1326507024
    %v4180 = vsel %vm4168, %v4162, %v4179
    %v4181 = vsel %vm4167, %v4178, %v4180
    %v4182 = vshll.u32 %v4142, 8
    %v4183 = vand.u32 %v4182, 65535
    %v4184 = vshrl.u32 %v4182, 16
    %v4185 = vand.u32 %v4181, 65535
    %v4186 = vshrl.u32 %v4181, 16
    %v4187 = vmul.u32 %v4183, %v4185
    %v4188 = vmul.u32 %v4183, %v4186
    %v4189 = vmul.u32 %v4184, %v4185
    %v4190 = vmul.u32 %v4184, %v4186
    %v4191 = vshll.u32 %v4188, 16
    %v4192 = vshrl.u32 %v4188, 16
    %v4193 = vshll.u32 %v4189, 16
    %v4194 = vshrl.u32 %v4189, 16
    %vm4195 = vc.u32 %v4187, %v4191
    %v4196 = vsel %vm4195, 1, 0
    %v4197 = vadd.s32 %v4187, %v4191
    %v4198 = vadd.s32 %v4190, %v4196
    %vm4199 = vc.u32 %v4197, %v4193
    %v4200 = vsel %vm4199, 1, 0
    %v4201 = vadd.s32 %v4197, %v4193
    %v4202 = vadd.s32 %v4198, %v4200
    %v4203 = vadd.s32 %v4202, %v4192
    %v4204 = vadd.s32 %v4203, %v4194
    %v4205 = vand.u32 %v4182, 65535
    %v4206 = vshrl.u32 %v4182, 16
    %v4207 = vand.u32 %v4177, 65535
    %v4208 = vshrl.u32 %v4177, 16
    %v4209 = vmul.u32 %v4205, %v4207
    %v4210 = vmul.u32 %v4205, %v4208
    %v4211 = vmul.u32 %v4206, %v4207
    %v4212 = vmul.u32 %v4206, %v4208
    %v4213 = vshll.u32 %v4210, 16
    %v4214 = vshrl.u32 %v4210, 16
    %v4215 = vshll.u32 %v4211, 16
    %v4216 = vshrl.u32 %v4211, 16
    %vm4217 = vc.u32 %v4209, %v4213
    %v4218 = vsel %vm4217, 1, 0
    %v4219 = vadd.s32 %v4209, %v4213
    %v4220 = vadd.s32 %v4212, %v4218
    %vm4221 = vc.u32 %v4219, %v4215
    %v4222 = vsel %vm4221, 1, 0
    %v4223 = vadd.s32 %v4219, %v4215
    %v4224 = vadd.s32 %v4220, %v4222
    %v4225 = vadd.s32 %v4224, %v4214
    %v4226 = vadd.s32 %v4225, %v4216
    %v4227 = vmul.u32 %v4182, %v4173
    %v4228 = vadd.s32 %v4204, %v4223
    %vm4229 = vc.u32 %v4204, %v4223
    %v4230 = vadd.s32 %v4226, 1
    %v4231 = vsel %vm4229, %v4230, %v4226
    %v4232 = vadd.s32 %v4227, %v4231
    %v4233 = vadd.s32 %v4232, 536870912
    %v4234 = vshrl.u32 %v4233, 30
    %v4235 = vshll.u32 %v4234, 30
    %v4236 = vsub.s32 %v4232, %v4235
    %vm4237 = vcmp.lt.s32.totalorder %v4236, 0
    %v4238 = vsub.s32 0, %v4236
    %v4239 = vsel %vm4237, %v4238, %v4236
    %v4240 = vclz %v4239
    %v4241 = vsub.s32 %v4240, 2
    %vm4242 = vcmp.gt.s32.totalorder 0, %v4241
    %v4243 = vsel %vm4242, 0, %v4241
    %v4244 = vsub.s32 32, %v4243
    %v4245 = vshll.u32 %v4236, %v4243
    %v4246 = vshrl.u32 %v4228, %v4244
    %v4247 = vor.u32 %v4245, %v4246
    %v4248 = vsub.s32 4294967266, %v4243
    %v4249 = vadd.s32 %v4248, 127
    %v4250 = vshll.u32 %v4249, 23
    %v4251 = vor.u32 4788187, %v4250
    %v4252 = vand.u32 2147483647, %v4251
    %v4254 = vcvt.s32.f32 %v4247
    %v4255 = vmul.f32 %v4254, %v4252
    %v4256 = vxor.u32 %v4255, 2147483648
    %v4257 = vsel %vm4136, %v4256, %v4255
    %v4258 = vsub.s32 4, %v4234
    %v4259 = vsel %vm4136, %v4258, %v4234
    %v4260 = vsel %vm4135, %v4132, %v4257
    %v4261 = vsel %vm4135, 0, %v4259
    %v4262 = vmul.f32 %v4260, %v4260
    %v4263 = vmul.f32 %v4262, -0.001358992
    %v4264 = vadd.f32 %v4263, 0.041655596
    %v4265 = vmul.f32 %v4262, %v4264
    %v4266 = vadd.f32 %v4265, -0.4999988
    %v4267 = vmul.f32 %v4262, %v4266
    %v4268 = vadd.f32 1.0, %v4267
    %v4269 = vmul.f32 %v4260, %v4260
    %v4270 = vmul.f32 %v4269, -0.00019511016
    %v4271 = vadd.f32 %v4270, 0.008332121
    %v4272 = vmul.f32 %v4269, %v4271
    %v4273 = vadd.f32 %v4272, -0.16666654
    %v4274 = vmul.f32 %v4269, %v4273
    %v4275 = vadd.f32 %v4274, 1.0
    %v4276 = vmul.f32 %v4275, %v4260
    %vm4277 = vweird.f32 %v4132
    %v4278 = vand.u32 %v4261, 3
    %vm4279 = vcmp.lt.s32.totalorder %v4278, 2
    %vm4280 = vcmp.eq.s32.totalorder %v4278, 0
    %v4281 = vxor.u32 %v4276, 2147483648
    %v4282 = vsel %vm4280, %v4268, %v4281
    %vm4283 = vcmp.eq.s32.totalorder %v4278, 2
    %v4284 = vxor.u32 %v4268, 2147483648
    %v4285 = vsel %vm4283, %v4284, %v4276
    %v4286 = vsel %vm4279, %v4282, %v4285
    %v4287 = vsel %vm4277, nan, %v4286
    %v4288 = vand.u32 2147483647, %v4133
    %vm4289 = vcmp.le.f32.partialorder %v4288, 0.7853982
    %vm4290 = vcmp.lt.s32.totalorder %v4133, 0
    %v4291 = vand.u32 %v4133, 2139095040
    %v4292 = vshrl.u32 %v4291, 23
    %v4293 = vsub.s32 %v4292, 127
    %v4294 = vand.u32 2147483647, %v4133
    %v4295 = vand.u32 %v4294, 8388607
    %v4296 = vor.u32 %v4295, 8388608
    %v4297 = vsub.s32 0, %v4296
    %v4298 = vadd.s32 %v4293, 1
    %vm4299 = vcmp.gt.s32.totalorder %v4298, 0
    %v4300 = vsel %vm4299, %v4298, 0
    %v4301 = vshrl.u32 %v4300, 5
    %v4302 = vand.u32 %v4300, 31
    %v4303 = vsub.s32 32, %v4302
    %v4304 = vshrl.u32 683565275, %v4303
    %v4305 = vshll.u32 683565275, %v4302
    %v4306 = vshrl.u32 2475754826, %v4303
    %v4307 = vor.u32 %v4305, %v4306
    %v4308 = vshll.u32 2475754826, %v4302
    %v4309 = vshrl.u32 2131351028, %v4303
    %v4310 = vor.u32 %v4308, %v4309
    %v4311 = vshll.u32 2131351028, %v4302
    %v4312 = vshrl.u32 2102212464, %v4303
    %v4313 = vor.u32 %v4311, %v4312
    %v4314 = vshll.u32 2102212464, %v4302
    %v4315 = vshrl.u32 920167782, %v4303
    %v4316 = vor.u32 %v4314, %v4315
    %v4317 = vshll.u32 920167782, %v4302
    %v4318 = vshrl.u32 1326507024, %v4303
    %v4319 = vor.u32 %v4317, %v4318
    %vm4320 = vcmp.lt.s32.totalorder %v4301, 1
    %vm4321 = vcmp.lt.s32.totalorder %v4301, 2
    %vm4322 = vcmp.lt.s32.totalorder %v4301, 3
    %vm4323 = vcmp.lt.s32.totalorder %v4301, 4
    %v4324 = vsel %vm4320, %v4304, %v4307
    %v4325 = vsel %vm4323, %v4313, 2102212464
    %v4326 = vsel %vm4322, %v4310, %v4325
    %v4327 = vsel %vm4321, %v4324, %v4326
    %v4328 = vsel %vm4320, %v4307, %v4310
    %v4329 = vsel %vm4323, %v4316, 920167782
    %v4330 = vsel %vm4322, %v4313, %v4329
    %v4331 = vsel %vm4321, %v4328, %v4330
    %v4332 = vsel %vm4320, %v4310, %v4313
    %v4333 = vsel %vm4323, %v4319, 1326507024
    %v4334 = vsel %vm4322, %v4316, %v4333
    %v4335 = vsel %vm4321, %v4332, %v4334
    %v4336 = vshll.u32 %v4296, 8
    %v4337 = vand.u32 %v4336, 65535
    %v4338 = vshrl.u32 %v4336, 16
    %v4339 = vand.u32 %v4335, 65535
    %v4340 = vshrl.u32 %v4335, 16
    %v4341 = vmul.u32 %v4337, %v4339
    %v4342 = vmul.u32 %v4337, %v4340
    %v4343 = vmul.u32 %v4338, %v4339
    %v4344 = vmul.u32 %v4338, %v4340
    %v4345 = vshll.u32 %v4342, 16
    %v4346 = vshrl.u32 %v4342, 16
    %v4347 = vshll.u32 %v4343, 16
    %v4348 = vshrl.u32 %v4343, 16
    %vm4349 = vc.u32 %v4341, %v4345
    %v4350 = vsel %vm4349, 1, 0
    %v4351 = vadd.s32 %v4341, %v4345
    %v4352 = vadd.s32 %v4344, %v4350
    %vm4353 = vc.u32 %v4351, %v4347
    %v4354 = vsel %vm4353, 1, 0
    %v4355 = vadd.s32 %v4351, %v4347
    %v4356 = vadd.s32 %v4352, %v4354
    %v4357 = vadd.s32 %v4356, %v4346
    %v4358 = vadd.s32 %v4357, %v4348
    %v4359 = vand.u32 %v4336, 65535
    %v4360 = vshrl.u32 %v4336, 16
    %v4361 = vand.u32 %v4331, 65535
    %v4362 = vshrl.u32 %v4331, 16
    %v4363 = vmul.u32 %v4359, %v4361
    %v4364 = vmul.u32 %v4359, %v4362
    %v4365 = vmul.u32 %v4360, %v4361
    %v4366 = vmul.u32 %v4360, %v4362
    %v4367 = vshll.u32 %v4364, 16
    %v4368 = vshrl.u32 %v4364, 16
    %v4369 = vshll.u32 %v4365, 16
    %v4370 = vshrl.u32 %v4365, 16
    %vm4371 = vc.u32 %v4363, %v4367
    %v4372 = vsel %vm4371, 1, 0
    %v4373 = vadd.s32 %v4363, %v4367
    %v4374 = vadd.s32 %v4366, %v4372
    %vm4375 = vc.u32 %v4373, %v4369
    %v4376 = vsel %vm4375, 1, 0
    %v4377 = vadd.s32 %v4373, %v4369
    %v4378 = vadd.s32 %v4374, %v4376
    %v4379 = vadd.s32 %v4378, %v4368
    %v4380 = vadd.s32 %v4379, %v4370
    %v4381 = vmul.u32 %v4336, %v4327
    %v4382 = vadd.s32 %v4358, %v4377
    %vm4383 = vc.u32 %v4358, %v4377
    %v4384 = vadd.s32 %v4380, 1
    %v4385 = vsel %vm4383, %v4384, %v4380
    %v4386 = vadd.s32 %v4381, %v4385
    %v4387 = vadd.s32 %v4386, 536870912
    %v4388 = vshrl.u32 %v4387, 30
    %v4389 = vshll.u32 %v4388, 30
    %v4390 = vsub.s32 %v4386, %v4389
    %vm4391 = vcmp.lt.s32.totalorder %v4390, 0
    %v4392 = vsub.s32 0, %v4390
    %v4393 = vsel %vm4391, %v4392, %v4390
    %v4394 = vclz %v4393
    %v4395 = vsub.s32 %v4394, 2
    %vm4396 = vcmp.gt.s32.totalorder 0, %v4395
    %v4397 = vsel %vm4396, 0, %v4395
    %v4398 = vsub.s32 32, %v4397
    %v4399 = vshll.u32 %v4390, %v4397
    %v4400 = vshrl.u32 %v4382, %v4398
    %v4401 = vor.u32 %v4399, %v4400
    %v4402 = vsub.s32 4294967266, %v4397
    %v4403 = vadd.s32 %v4402, 127
    %v4404 = vshll.u32 %v4403, 23
    %v4405 = vor.u32 4788187, %v4404
    %v4406 = vand.u32 2147483647, %v4405
    %v4408 = vcvt.s32.f32 %v4401
    %v4409 = vmul.f32 %v4408, %v4406
    %v4410 = vxor.u32 %v4409, 2147483648
    %v4411 = vsel %vm4290, %v4410, %v4409
    %v4412 = vsub.s32 4, %v4388
    %v4413 = vsel %vm4290, %v4412, %v4388
    %v4414 = vsel %vm4289, %v4133, %v4411
    %v4415 = vsel %vm4289, 0, %v4413
    %v4416 = vmul.f32 %v4414, %v4414
    %v4417 = vmul.f32 %v4416, -0.001358992
    %v4418 = vadd.f32 %v4417, 0.041655596
    %v4419 = vmul.f32 %v4416, %v4418
    %v4420 = vadd.f32 %v4419, -0.4999988
    %v4421 = vmul.f32 %v4416, %v4420
    %v4422 = vadd.f32 1.0, %v4421
    %v4423 = vmul.f32 %v4414, %v4414
    %v4424 = vmul.f32 %v4423, -0.00019511016
    %v4425 = vadd.f32 %v4424, 0.008332121
    %v4426 = vmul.f32 %v4423, %v4425
    %v4427 = vadd.f32 %v4426, -0.16666654
    %v4428 = vmul.f32 %v4423, %v4427
    %v4429 = vadd.f32 %v4428, 1.0
    %v4430 = vmul.f32 %v4429, %v4414
    %vm4431 = vweird.f32 %v4133
    %v4432 = vand.u32 %v4415, 3
    %vm4433 = vcmp.lt.s32.totalorder %v4432, 2
    %vm4434 = vcmp.eq.s32.totalorder %v4432, 0
    %v4435 = vxor.u32 %v4430, 2147483648
    %v4436 = vsel %vm4434, %v4422, %v4435
    %vm4437 = vcmp.eq.s32.totalorder %v4432, 2
    %v4438 = vxor.u32 %v4422, 2147483648
    %v4439 = vsel %vm4437, %v4438, %v4430
    %v4440 = vsel %vm4433, %v4436, %v4439
    %v4441 = vsel %vm4431, nan, %v4440
    %v4442 = vmul.f32 %v4287, %v1528
    %v4443 = vmul.f32 %v4441, %v1528
    %v4444 = vadd.f32 %v4128, %v4442
    %v4445 = vadd.f32 %v4129, %v4443
    %4446 = vset.pattern.permute.xlu0 2
    %4447 = vperm.xlu0 %4446, %v3158
    %v4448 = vpop.permute.xlu0 %4447
    %4450 = vset.pattern.permute.xlu0 2
    %4451 = vperm.xlu0 %4450, %v3159
    %v4452 = vpop.permute.xlu0 %4451
    %v4454 = vmul.f32 %v4448, %v242
    %v4455 = vmul.f32 %v4452, %v242
    %v4456 = vadd.f32 %v4454, %v247
    %v4457 = vadd.f32 %v4455, %v247
    %v4458 = vand.u32 2147483647, %v4456
    %vm4459 = vcmp.le.f32.partialorder %v4458, 0.7853982
    %vm4460 = vcmp.lt.s32.totalorder %v4456, 0
    %v4461 = vand.u32 %v4456, 2139095040
    %v4462 = vshrl.u32 %v4461, 23
    %v4463 = vsub.s32 %v4462, 127
    %v4464 = vand.u32 2147483647, %v4456
    %v4465 = vand.u32 %v4464, 8388607
    %v4466 = vor.u32 %v4465, 8388608
    %v4467 = vsub.s32 0, %v4466
    %v4468 = vadd.s32 %v4463, 1
    %vm4469 = vcmp.gt.s32.totalorder %v4468, 0
    %v4470 = vsel %vm4469, %v4468, 0
    %v4471 = vshrl.u32 %v4470, 5
    %v4472 = vand.u32 %v4470, 31
    %v4473 = vsub.s32 32, %v4472
    %v4474 = vshrl.u32 683565275, %v4473
    %v4475 = vshll.u32 683565275, %v4472
    %v4476 = vshrl.u32 2475754826, %v4473
    %v4477 = vor.u32 %v4475, %v4476
    %v4478 = vshll.u32 2475754826, %v4472
    %v4479 = vshrl.u32 2131351028, %v4473
    %v4480 = vor.u32 %v4478, %v4479
    %v4481 = vshll.u32 2131351028, %v4472
    %v4482 = vshrl.u32 2102212464, %v4473
    %v4483 = vor.u32 %v4481, %v4482
    %v4484 = vshll.u32 2102212464, %v4472
    %v4485 = vshrl.u32 920167782, %v4473
    %v4486 = vor.u32 %v4484, %v4485
    %v4487 = vshll.u32 920167782, %v4472
    %v4488 = vshrl.u32 1326507024, %v4473
    %v4489 = vor.u32 %v4487, %v4488
    %vm4490 = vcmp.lt.s32.totalorder %v4471, 1
    %vm4491 = vcmp.lt.s32.totalorder %v4471, 2
    %vm4492 = vcmp.lt.s32.totalorder %v4471, 3
    %vm4493 = vcmp.lt.s32.totalorder %v4471, 4
    %v4494 = vsel %vm4490, %v4474, %v4477
    %v4495 = vsel %vm4493, %v4483, 2102212464
    %v4496 = vsel %vm4492, %v4480, %v4495
    %v4497 = vsel %vm4491, %v4494, %v4496
    %v4498 = vsel %vm4490, %v4477, %v4480
    %v4499 = vsel %vm4493, %v4486, 920167782
    %v4500 = vsel %vm4492, %v4483, %v4499
    %v4501 = vsel %vm4491, %v4498, %v4500
    %v4502 = vsel %vm4490, %v4480, %v4483
    %v4503 = vsel %vm4493, %v4489, 1326507024
    %v4504 = vsel %vm4492, %v4486, %v4503
    %v4505 = vsel %vm4491, %v4502, %v4504
    %v4506 = vshll.u32 %v4466, 8
    %v4507 = vand.u32 %v4506, 65535
    %v4508 = vshrl.u32 %v4506, 16
    %v4509 = vand.u32 %v4505, 65535
    %v4510 = vshrl.u32 %v4505, 16
    %v4511 = vmul.u32 %v4507, %v4509
    %v4512 = vmul.u32 %v4507, %v4510
    %v4513 = vmul.u32 %v4508, %v4509
    %v4514 = vmul.u32 %v4508, %v4510
    %v4515 = vshll.u32 %v4512, 16
    %v4516 = vshrl.u32 %v4512, 16
    %v4517 = vshll.u32 %v4513, 16
    %v4518 = vshrl.u32 %v4513, 16
    %vm4519 = vc.u32 %v4511, %v4515
    %v4520 = vsel %vm4519, 1, 0
    %v4521 = vadd.s32 %v4511, %v4515
    %v4522 = vadd.s32 %v4514, %v4520
    %vm4523 = vc.u32 %v4521, %v4517
    %v4524 = vsel %vm4523, 1, 0
    %v4525 = vadd.s32 %v4521, %v4517
    %v4526 = vadd.s32 %v4522, %v4524
    %v4527 = vadd.s32 %v4526, %v4516
    %v4528 = vadd.s32 %v4527, %v4518
    %v4529 = vand.u32 %v4506, 65535
    %v4530 = vshrl.u32 %v4506, 16
    %v4531 = vand.u32 %v4501, 65535
    %v4532 = vshrl.u32 %v4501, 16
    %v4533 = vmul.u32 %v4529, %v4531
    %v4534 = vmul.u32 %v4529, %v4532
    %v4535 = vmul.u32 %v4530, %v4531
    %v4536 = vmul.u32 %v4530, %v4532
    %v4537 = vshll.u32 %v4534, 16
    %v4538 = vshrl.u32 %v4534, 16
    %v4539 = vshll.u32 %v4535, 16
    %v4540 = vshrl.u32 %v4535, 16
    %vm4541 = vc.u32 %v4533, %v4537
    %v4542 = vsel %vm4541, 1, 0
    %v4543 = vadd.s32 %v4533, %v4537
    %v4544 = vadd.s32 %v4536, %v4542
    %vm4545 = vc.u32 %v4543, %v4539
    %v4546 = vsel %vm4545, 1, 0
    %v4547 = vadd.s32 %v4543, %v4539
    %v4548 = vadd.s32 %v4544, %v4546
    %v4549 = vadd.s32 %v4548, %v4538
    %v4550 = vadd.s32 %v4549, %v4540
    %v4551 = vmul.u32 %v4506, %v4497
    %v4552 = vadd.s32 %v4528, %v4547
    %vm4553 = vc.u32 %v4528, %v4547
    %v4554 = vadd.s32 %v4550, 1
    %v4555 = vsel %vm4553, %v4554, %v4550
    %v4556 = vadd.s32 %v4551, %v4555
    %v4557 = vadd.s32 %v4556, 536870912
    %v4558 = vshrl.u32 %v4557, 30
    %v4559 = vshll.u32 %v4558, 30
    %v4560 = vsub.s32 %v4556, %v4559
    %vm4561 = vcmp.lt.s32.totalorder %v4560, 0
    %v4562 = vsub.s32 0, %v4560
    %v4563 = vsel %vm4561, %v4562, %v4560
    %v4564 = vclz %v4563
    %v4565 = vsub.s32 %v4564, 2
    %vm4566 = vcmp.gt.s32.totalorder 0, %v4565
    %v4567 = vsel %vm4566, 0, %v4565
    %v4568 = vsub.s32 32, %v4567
    %v4569 = vshll.u32 %v4560, %v4567
    %v4570 = vshrl.u32 %v4552, %v4568
    %v4571 = vor.u32 %v4569, %v4570
    %v4572 = vsub.s32 4294967266, %v4567
    %v4573 = vadd.s32 %v4572, 127
    %v4574 = vshll.u32 %v4573, 23
    %v4575 = vor.u32 4788187, %v4574
    %v4576 = vand.u32 2147483647, %v4575
    %v4578 = vcvt.s32.f32 %v4571
    %v4579 = vmul.f32 %v4578, %v4576
    %v4580 = vxor.u32 %v4579, 2147483648
    %v4581 = vsel %vm4460, %v4580, %v4579
    %v4582 = vsub.s32 4, %v4558
    %v4583 = vsel %vm4460, %v4582, %v4558
    %v4584 = vsel %vm4459, %v4456, %v4581
    %v4585 = vsel %vm4459, 0, %v4583
    %v4586 = vmul.f32 %v4584, %v4584
    %v4587 = vmul.f32 %v4586, -0.001358992
    %v4588 = vadd.f32 %v4587, 0.041655596
    %v4589 = vmul.f32 %v4586, %v4588
    %v4590 = vadd.f32 %v4589, -0.4999988
    %v4591 = vmul.f32 %v4586, %v4590
    %v4592 = vadd.f32 1.0, %v4591
    %v4593 = vmul.f32 %v4584, %v4584
    %v4594 = vmul.f32 %v4593, -0.00019511016
    %v4595 = vadd.f32 %v4594, 0.008332121
    %v4596 = vmul.f32 %v4593, %v4595
    %v4597 = vadd.f32 %v4596, -0.16666654
    %v4598 = vmul.f32 %v4593, %v4597
    %v4599 = vadd.f32 %v4598, 1.0
    %v4600 = vmul.f32 %v4599, %v4584
    %vm4601 = vweird.f32 %v4456
    %v4602 = vadd.s32 %v4585, 3
    %v4603 = vand.u32 %v4602, 3
    %vm4604 = vcmp.lt.s32.totalorder %v4603, 2
    %vm4605 = vcmp.eq.s32.totalorder %v4603, 0
    %v4606 = vxor.u32 %v4600, 2147483648
    %v4607 = vsel %vm4605, %v4592, %v4606
    %vm4608 = vcmp.eq.s32.totalorder %v4603, 2
    %v4609 = vxor.u32 %v4592, 2147483648
    %v4610 = vsel %vm4608, %v4609, %v4600
    %v4611 = vsel %vm4604, %v4607, %v4610
    %v4612 = vsel %vm4601, nan, %v4611
    %v4613 = vand.u32 2147483647, %v4457
    %vm4614 = vcmp.le.f32.partialorder %v4613, 0.7853982
    %vm4615 = vcmp.lt.s32.totalorder %v4457, 0
    %v4616 = vand.u32 %v4457, 2139095040
    %v4617 = vshrl.u32 %v4616, 23
    %v4618 = vsub.s32 %v4617, 127
    %v4619 = vand.u32 2147483647, %v4457
    %v4620 = vand.u32 %v4619, 8388607
    %v4621 = vor.u32 %v4620, 8388608
    %v4622 = vsub.s32 0, %v4621
    %v4623 = vadd.s32 %v4618, 1
    %vm4624 = vcmp.gt.s32.totalorder %v4623, 0
    %v4625 = vsel %vm4624, %v4623, 0
    %v4626 = vshrl.u32 %v4625, 5
    %v4627 = vand.u32 %v4625, 31
    %v4628 = vsub.s32 32, %v4627
    %v4629 = vshrl.u32 683565275, %v4628
    %v4630 = vshll.u32 683565275, %v4627
    %v4631 = vshrl.u32 2475754826, %v4628
    %v4632 = vor.u32 %v4630, %v4631
    %v4633 = vshll.u32 2475754826, %v4627
    %v4634 = vshrl.u32 2131351028, %v4628
    %v4635 = vor.u32 %v4633, %v4634
    %v4636 = vshll.u32 2131351028, %v4627
    %v4637 = vshrl.u32 2102212464, %v4628
    %v4638 = vor.u32 %v4636, %v4637
    %v4639 = vshll.u32 2102212464, %v4627
    %v4640 = vshrl.u32 920167782, %v4628
    %v4641 = vor.u32 %v4639, %v4640
    %v4642 = vshll.u32 920167782, %v4627
    %v4643 = vshrl.u32 1326507024, %v4628
    %v4644 = vor.u32 %v4642, %v4643
    %vm4645 = vcmp.lt.s32.totalorder %v4626, 1
    %vm4646 = vcmp.lt.s32.totalorder %v4626, 2
    %vm4647 = vcmp.lt.s32.totalorder %v4626, 3
    %vm4648 = vcmp.lt.s32.totalorder %v4626, 4
    %v4649 = vsel %vm4645, %v4629, %v4632
    %v4650 = vsel %vm4648, %v4638, 2102212464
    %v4651 = vsel %vm4647, %v4635, %v4650
    %v4652 = vsel %vm4646, %v4649, %v4651
    %v4653 = vsel %vm4645, %v4632, %v4635
    %v4654 = vsel %vm4648, %v4641, 920167782
    %v4655 = vsel %vm4647, %v4638, %v4654
    %v4656 = vsel %vm4646, %v4653, %v4655
    %v4657 = vsel %vm4645, %v4635, %v4638
    %v4658 = vsel %vm4648, %v4644, 1326507024
    %v4659 = vsel %vm4647, %v4641, %v4658
    %v4660 = vsel %vm4646, %v4657, %v4659
    %v4661 = vshll.u32 %v4621, 8
    %v4662 = vand.u32 %v4661, 65535
    %v4663 = vshrl.u32 %v4661, 16
    %v4664 = vand.u32 %v4660, 65535
    %v4665 = vshrl.u32 %v4660, 16
    %v4666 = vmul.u32 %v4662, %v4664
    %v4667 = vmul.u32 %v4662, %v4665
    %v4668 = vmul.u32 %v4663, %v4664
    %v4669 = vmul.u32 %v4663, %v4665
    %v4670 = vshll.u32 %v4667, 16
    %v4671 = vshrl.u32 %v4667, 16
    %v4672 = vshll.u32 %v4668, 16
    %v4673 = vshrl.u32 %v4668, 16
    %vm4674 = vc.u32 %v4666, %v4670
    %v4675 = vsel %vm4674, 1, 0
    %v4676 = vadd.s32 %v4666, %v4670
    %v4677 = vadd.s32 %v4669, %v4675
    %vm4678 = vc.u32 %v4676, %v4672
    %v4679 = vsel %vm4678, 1, 0
    %v4680 = vadd.s32 %v4676, %v4672
    %v4681 = vadd.s32 %v4677, %v4679
    %v4682 = vadd.s32 %v4681, %v4671
    %v4683 = vadd.s32 %v4682, %v4673
    %v4684 = vand.u32 %v4661, 65535
    %v4685 = vshrl.u32 %v4661, 16
    %v4686 = vand.u32 %v4656, 65535
    %v4687 = vshrl.u32 %v4656, 16
    %v4688 = vmul.u32 %v4684, %v4686
    %v4689 = vmul.u32 %v4684, %v4687
    %v4690 = vmul.u32 %v4685, %v4686
    %v4691 = vmul.u32 %v4685, %v4687
    %v4692 = vshll.u32 %v4689, 16
    %v4693 = vshrl.u32 %v4689, 16
    %v4694 = vshll.u32 %v4690, 16
    %v4695 = vshrl.u32 %v4690, 16
    %vm4696 = vc.u32 %v4688, %v4692
    %v4697 = vsel %vm4696, 1, 0
    %v4698 = vadd.s32 %v4688, %v4692
    %v4699 = vadd.s32 %v4691, %v4697
    %vm4700 = vc.u32 %v4698, %v4694
    %v4701 = vsel %vm4700, 1, 0
    %v4702 = vadd.s32 %v4698, %v4694
    %v4703 = vadd.s32 %v4699, %v4701
    %v4704 = vadd.s32 %v4703, %v4693
    %v4705 = vadd.s32 %v4704, %v4695
    %v4706 = vmul.u32 %v4661, %v4652
    %v4707 = vadd.s32 %v4683, %v4702
    %vm4708 = vc.u32 %v4683, %v4702
    %v4709 = vadd.s32 %v4705, 1
    %v4710 = vsel %vm4708, %v4709, %v4705
    %v4711 = vadd.s32 %v4706, %v4710
    %v4712 = vadd.s32 %v4711, 536870912
    %v4713 = vshrl.u32 %v4712, 30
    %v4714 = vshll.u32 %v4713, 30
    %v4715 = vsub.s32 %v4711, %v4714
    %vm4716 = vcmp.lt.s32.totalorder %v4715, 0
    %v4717 = vsub.s32 0, %v4715
    %v4718 = vsel %vm4716, %v4717, %v4715
    %v4719 = vclz %v4718
    %v4720 = vsub.s32 %v4719, 2
    %vm4721 = vcmp.gt.s32.totalorder 0, %v4720
    %v4722 = vsel %vm4721, 0, %v4720
    %v4723 = vsub.s32 32, %v4722
    %v4724 = vshll.u32 %v4715, %v4722
    %v4725 = vshrl.u32 %v4707, %v4723
    %v4726 = vor.u32 %v4724, %v4725
    %v4727 = vsub.s32 4294967266, %v4722
    %v4728 = vadd.s32 %v4727, 127
    %v4729 = vshll.u32 %v4728, 23
    %v4730 = vor.u32 4788187, %v4729
    %v4731 = vand.u32 2147483647, %v4730
    %v4733 = vcvt.s32.f32 %v4726
    %v4734 = vmul.f32 %v4733, %v4731
    %v4735 = vxor.u32 %v4734, 2147483648
    %v4736 = vsel %vm4615, %v4735, %v4734
    %v4737 = vsub.s32 4, %v4713
    %v4738 = vsel %vm4615, %v4737, %v4713
    %v4739 = vsel %vm4614, %v4457, %v4736
    %v4740 = vsel %vm4614, 0, %v4738
    %v4741 = vmul.f32 %v4739, %v4739
    %v4742 = vmul.f32 %v4741, -0.001358992
    %v4743 = vadd.f32 %v4742, 0.041655596
    %v4744 = vmul.f32 %v4741, %v4743
    %v4745 = vadd.f32 %v4744, -0.4999988
    %v4746 = vmul.f32 %v4741, %v4745
    %v4747 = vadd.f32 1.0, %v4746
    %v4748 = vmul.f32 %v4739, %v4739
    %v4749 = vmul.f32 %v4748, -0.00019511016
    %v4750 = vadd.f32 %v4749, 0.008332121
    %v4751 = vmul.f32 %v4748, %v4750
    %v4752 = vadd.f32 %v4751, -0.16666654
    %v4753 = vmul.f32 %v4748, %v4752
    %v4754 = vadd.f32 %v4753, 1.0
    %v4755 = vmul.f32 %v4754, %v4739
    %vm4756 = vweird.f32 %v4457
    %v4757 = vadd.s32 %v4740, 3
    %v4758 = vand.u32 %v4757, 3
    %vm4759 = vcmp.lt.s32.totalorder %v4758, 2
    %vm4760 = vcmp.eq.s32.totalorder %v4758, 0
    %v4761 = vxor.u32 %v4755, 2147483648
    %v4762 = vsel %vm4760, %v4747, %v4761
    %vm4763 = vcmp.eq.s32.totalorder %v4758, 2
    %v4764 = vxor.u32 %v4747, 2147483648
    %v4765 = vsel %vm4763, %v4764, %v4755
    %v4766 = vsel %vm4759, %v4762, %v4765
    %v4767 = vsel %vm4756, nan, %v4766
    %v4768 = vmul.f32 %v4612, %v1855
    %v4769 = vmul.f32 %v4767, %v1855
    %v4770 = vadd.f32 %v4444, %v4768
    %v4771 = vadd.f32 %v4445, %v4769
    %v4772 = vmul.f32 %v4448, %v567
    %v4773 = vmul.f32 %v4452, %v567
    %v4774 = vadd.f32 %v4772, %v572
    %v4775 = vadd.f32 %v4773, %v572
    %v4776 = vand.u32 2147483647, %v4774
    %vm4777 = vcmp.le.f32.partialorder %v4776, 0.7853982
    %vm4778 = vcmp.lt.s32.totalorder %v4774, 0
    %v4779 = vand.u32 %v4774, 2139095040
    %v4780 = vshrl.u32 %v4779, 23
    %v4781 = vsub.s32 %v4780, 127
    %v4782 = vand.u32 2147483647, %v4774
    %v4783 = vand.u32 %v4782, 8388607
    %v4784 = vor.u32 %v4783, 8388608
    %v4785 = vsub.s32 0, %v4784
    %v4786 = vadd.s32 %v4781, 1
    %vm4787 = vcmp.gt.s32.totalorder %v4786, 0
    %v4788 = vsel %vm4787, %v4786, 0
    %v4789 = vshrl.u32 %v4788, 5
    %v4790 = vand.u32 %v4788, 31
    %v4791 = vsub.s32 32, %v4790
    %v4792 = vshrl.u32 683565275, %v4791
    %v4793 = vshll.u32 683565275, %v4790
    %v4794 = vshrl.u32 2475754826, %v4791
    %v4795 = vor.u32 %v4793, %v4794
    %v4796 = vshll.u32 2475754826, %v4790
    %v4797 = vshrl.u32 2131351028, %v4791
    %v4798 = vor.u32 %v4796, %v4797
    %v4799 = vshll.u32 2131351028, %v4790
    %v4800 = vshrl.u32 2102212464, %v4791
    %v4801 = vor.u32 %v4799, %v4800
    %v4802 = vshll.u32 2102212464, %v4790
    %v4803 = vshrl.u32 920167782, %v4791
    %v4804 = vor.u32 %v4802, %v4803
    %v4805 = vshll.u32 920167782, %v4790
    %v4806 = vshrl.u32 1326507024, %v4791
    %v4807 = vor.u32 %v4805, %v4806
    %vm4808 = vcmp.lt.s32.totalorder %v4789, 1
    %vm4809 = vcmp.lt.s32.totalorder %v4789, 2
    %vm4810 = vcmp.lt.s32.totalorder %v4789, 3
    %vm4811 = vcmp.lt.s32.totalorder %v4789, 4
    %v4812 = vsel %vm4808, %v4792, %v4795
    %v4813 = vsel %vm4811, %v4801, 2102212464
    %v4814 = vsel %vm4810, %v4798, %v4813
    %v4815 = vsel %vm4809, %v4812, %v4814
    %v4816 = vsel %vm4808, %v4795, %v4798
    %v4817 = vsel %vm4811, %v4804, 920167782
    %v4818 = vsel %vm4810, %v4801, %v4817
    %v4819 = vsel %vm4809, %v4816, %v4818
    %v4820 = vsel %vm4808, %v4798, %v4801
    %v4821 = vsel %vm4811, %v4807, 1326507024
    %v4822 = vsel %vm4810, %v4804, %v4821
    %v4823 = vsel %vm4809, %v4820, %v4822
    %v4824 = vshll.u32 %v4784, 8
    %v4825 = vand.u32 %v4824, 65535
    %v4826 = vshrl.u32 %v4824, 16
    %v4827 = vand.u32 %v4823, 65535
    %v4828 = vshrl.u32 %v4823, 16
    %v4829 = vmul.u32 %v4825, %v4827
    %v4830 = vmul.u32 %v4825, %v4828
    %v4831 = vmul.u32 %v4826, %v4827
    %v4832 = vmul.u32 %v4826, %v4828
    %v4833 = vshll.u32 %v4830, 16
    %v4834 = vshrl.u32 %v4830, 16
    %v4835 = vshll.u32 %v4831, 16
    %v4836 = vshrl.u32 %v4831, 16
    %vm4837 = vc.u32 %v4829, %v4833
    %v4838 = vsel %vm4837, 1, 0
    %v4839 = vadd.s32 %v4829, %v4833
    %v4840 = vadd.s32 %v4832, %v4838
    %vm4841 = vc.u32 %v4839, %v4835
    %v4842 = vsel %vm4841, 1, 0
    %v4843 = vadd.s32 %v4839, %v4835
    %v4844 = vadd.s32 %v4840, %v4842
    %v4845 = vadd.s32 %v4844, %v4834
    %v4846 = vadd.s32 %v4845, %v4836
    %v4847 = vand.u32 %v4824, 65535
    %v4848 = vshrl.u32 %v4824, 16
    %v4849 = vand.u32 %v4819, 65535
    %v4850 = vshrl.u32 %v4819, 16
    %v4851 = vmul.u32 %v4847, %v4849
    %v4852 = vmul.u32 %v4847, %v4850
    %v4853 = vmul.u32 %v4848, %v4849
    %v4854 = vmul.u32 %v4848, %v4850
    %v4855 = vshll.u32 %v4852, 16
    %v4856 = vshrl.u32 %v4852, 16
    %v4857 = vshll.u32 %v4853, 16
    %v4858 = vshrl.u32 %v4853, 16
    %vm4859 = vc.u32 %v4851, %v4855
    %v4860 = vsel %vm4859, 1, 0
    %v4861 = vadd.s32 %v4851, %v4855
    %v4862 = vadd.s32 %v4854, %v4860
    %vm4863 = vc.u32 %v4861, %v4857
    %v4864 = vsel %vm4863, 1, 0
    %v4865 = vadd.s32 %v4861, %v4857
    %v4866 = vadd.s32 %v4862, %v4864
    %v4867 = vadd.s32 %v4866, %v4856
    %v4868 = vadd.s32 %v4867, %v4858
    %v4869 = vmul.u32 %v4824, %v4815
    %v4870 = vadd.s32 %v4846, %v4865
    %vm4871 = vc.u32 %v4846, %v4865
    %v4872 = vadd.s32 %v4868, 1
    %v4873 = vsel %vm4871, %v4872, %v4868
    %v4874 = vadd.s32 %v4869, %v4873
    %v4875 = vadd.s32 %v4874, 536870912
    %v4876 = vshrl.u32 %v4875, 30
    %v4877 = vshll.u32 %v4876, 30
    %v4878 = vsub.s32 %v4874, %v4877
    %vm4879 = vcmp.lt.s32.totalorder %v4878, 0
    %v4880 = vsub.s32 0, %v4878
    %v4881 = vsel %vm4879, %v4880, %v4878
    %v4882 = vclz %v4881
    %v4883 = vsub.s32 %v4882, 2
    %vm4884 = vcmp.gt.s32.totalorder 0, %v4883
    %v4885 = vsel %vm4884, 0, %v4883
    %v4886 = vsub.s32 32, %v4885
    %v4887 = vshll.u32 %v4878, %v4885
    %v4888 = vshrl.u32 %v4870, %v4886
    %v4889 = vor.u32 %v4887, %v4888
    %v4890 = vsub.s32 4294967266, %v4885
    %v4891 = vadd.s32 %v4890, 127
    %v4892 = vshll.u32 %v4891, 23
    %v4893 = vor.u32 4788187, %v4892
    %v4894 = vand.u32 2147483647, %v4893
    %v4896 = vcvt.s32.f32 %v4889
    %v4897 = vmul.f32 %v4896, %v4894
    %v4898 = vxor.u32 %v4897, 2147483648
    %v4899 = vsel %vm4778, %v4898, %v4897
    %v4900 = vsub.s32 4, %v4876
    %v4901 = vsel %vm4778, %v4900, %v4876
    %v4902 = vsel %vm4777, %v4774, %v4899
    %v4903 = vsel %vm4777, 0, %v4901
    %v4904 = vmul.f32 %v4902, %v4902
    %v4905 = vmul.f32 %v4904, -0.001358992
    %v4906 = vadd.f32 %v4905, 0.041655596
    %v4907 = vmul.f32 %v4904, %v4906
    %v4908 = vadd.f32 %v4907, -0.4999988
    %v4909 = vmul.f32 %v4904, %v4908
    %v4910 = vadd.f32 1.0, %v4909
    %v4911 = vmul.f32 %v4902, %v4902
    %v4912 = vmul.f32 %v4911, -0.00019511016
    %v4913 = vadd.f32 %v4912, 0.008332121
    %v4914 = vmul.f32 %v4911, %v4913
    %v4915 = vadd.f32 %v4914, -0.16666654
    %v4916 = vmul.f32 %v4911, %v4915
    %v4917 = vadd.f32 %v4916, 1.0
    %v4918 = vmul.f32 %v4917, %v4902
    %vm4919 = vweird.f32 %v4774
    %v4920 = vand.u32 %v4903, 3
    %vm4921 = vcmp.lt.s32.totalorder %v4920, 2
    %vm4922 = vcmp.eq.s32.totalorder %v4920, 0
    %v4923 = vxor.u32 %v4918, 2147483648
    %v4924 = vsel %vm4922, %v4910, %v4923
    %vm4925 = vcmp.eq.s32.totalorder %v4920, 2
    %v4926 = vxor.u32 %v4910, 2147483648
    %v4927 = vsel %vm4925, %v4926, %v4918
    %v4928 = vsel %vm4921, %v4924, %v4927
    %v4929 = vsel %vm4919, nan, %v4928
    %v4930 = vand.u32 2147483647, %v4775
    %vm4931 = vcmp.le.f32.partialorder %v4930, 0.7853982
    %vm4932 = vcmp.lt.s32.totalorder %v4775, 0
    %v4933 = vand.u32 %v4775, 2139095040
    %v4934 = vshrl.u32 %v4933, 23
    %v4935 = vsub.s32 %v4934, 127
    %v4936 = vand.u32 2147483647, %v4775
    %v4937 = vand.u32 %v4936, 8388607
    %v4938 = vor.u32 %v4937, 8388608
    %v4939 = vsub.s32 0, %v4938
    %v4940 = vadd.s32 %v4935, 1
    %vm4941 = vcmp.gt.s32.totalorder %v4940, 0
    %v4942 = vsel %vm4941, %v4940, 0
    %v4943 = vshrl.u32 %v4942, 5
    %v4944 = vand.u32 %v4942, 31
    %v4945 = vsub.s32 32, %v4944
    %v4946 = vshrl.u32 683565275, %v4945
    %v4947 = vshll.u32 683565275, %v4944
    %v4948 = vshrl.u32 2475754826, %v4945
    %v4949 = vor.u32 %v4947, %v4948
    %v4950 = vshll.u32 2475754826, %v4944
    %v4951 = vshrl.u32 2131351028, %v4945
    %v4952 = vor.u32 %v4950, %v4951
    %v4953 = vshll.u32 2131351028, %v4944
    %v4954 = vshrl.u32 2102212464, %v4945
    %v4955 = vor.u32 %v4953, %v4954
    %v4956 = vshll.u32 2102212464, %v4944
    %v4957 = vshrl.u32 920167782, %v4945
    %v4958 = vor.u32 %v4956, %v4957
    %v4959 = vshll.u32 920167782, %v4944
    %v4960 = vshrl.u32 1326507024, %v4945
    %v4961 = vor.u32 %v4959, %v4960
    %vm4962 = vcmp.lt.s32.totalorder %v4943, 1
    %vm4963 = vcmp.lt.s32.totalorder %v4943, 2
    %vm4964 = vcmp.lt.s32.totalorder %v4943, 3
    %vm4965 = vcmp.lt.s32.totalorder %v4943, 4
    %v4966 = vsel %vm4962, %v4946, %v4949
    %v4967 = vsel %vm4965, %v4955, 2102212464
    %v4968 = vsel %vm4964, %v4952, %v4967
    %v4969 = vsel %vm4963, %v4966, %v4968
    %v4970 = vsel %vm4962, %v4949, %v4952
    %v4971 = vsel %vm4965, %v4958, 920167782
    %v4972 = vsel %vm4964, %v4955, %v4971
    %v4973 = vsel %vm4963, %v4970, %v4972
    %v4974 = vsel %vm4962, %v4952, %v4955
    %v4975 = vsel %vm4965, %v4961, 1326507024
    %v4976 = vsel %vm4964, %v4958, %v4975
    %v4977 = vsel %vm4963, %v4974, %v4976
    %v4978 = vshll.u32 %v4938, 8
    %v4979 = vand.u32 %v4978, 65535
    %v4980 = vshrl.u32 %v4978, 16
    %v4981 = vand.u32 %v4977, 65535
    %v4982 = vshrl.u32 %v4977, 16
    %v4983 = vmul.u32 %v4979, %v4981
    %v4984 = vmul.u32 %v4979, %v4982
    %v4985 = vmul.u32 %v4980, %v4981
    %v4986 = vmul.u32 %v4980, %v4982
    %v4987 = vshll.u32 %v4984, 16
    %v4988 = vshrl.u32 %v4984, 16
    %v4989 = vshll.u32 %v4985, 16
    %v4990 = vshrl.u32 %v4985, 16
    %vm4991 = vc.u32 %v4983, %v4987
    %v4992 = vsel %vm4991, 1, 0
    %v4993 = vadd.s32 %v4983, %v4987
    %v4994 = vadd.s32 %v4986, %v4992
    %vm4995 = vc.u32 %v4993, %v4989
    %v4996 = vsel %vm4995, 1, 0
    %v4997 = vadd.s32 %v4993, %v4989
    %v4998 = vadd.s32 %v4994, %v4996
    %v4999 = vadd.s32 %v4998, %v4988
    %v5000 = vadd.s32 %v4999, %v4990
    %v5001 = vand.u32 %v4978, 65535
    %v5002 = vshrl.u32 %v4978, 16
    %v5003 = vand.u32 %v4973, 65535
    %v5004 = vshrl.u32 %v4973, 16
    %v5005 = vmul.u32 %v5001, %v5003
    %v5006 = vmul.u32 %v5001, %v5004
    %v5007 = vmul.u32 %v5002, %v5003
    %v5008 = vmul.u32 %v5002, %v5004
    %v5009 = vshll.u32 %v5006, 16
    %v5010 = vshrl.u32 %v5006, 16
    %v5011 = vshll.u32 %v5007, 16
    %v5012 = vshrl.u32 %v5007, 16
    %vm5013 = vc.u32 %v5005, %v5009
    %v5014 = vsel %vm5013, 1, 0
    %v5015 = vadd.s32 %v5005, %v5009
    %v5016 = vadd.s32 %v5008, %v5014
    %vm5017 = vc.u32 %v5015, %v5011
    %v5018 = vsel %vm5017, 1, 0
    %v5019 = vadd.s32 %v5015, %v5011
    %v5020 = vadd.s32 %v5016, %v5018
    %v5021 = vadd.s32 %v5020, %v5010
    %v5022 = vadd.s32 %v5021, %v5012
    %v5023 = vmul.u32 %v4978, %v4969
    %v5024 = vadd.s32 %v5000, %v5019
    %vm5025 = vc.u32 %v5000, %v5019
    %v5026 = vadd.s32 %v5022, 1
    %v5027 = vsel %vm5025, %v5026, %v5022
    %v5028 = vadd.s32 %v5023, %v5027
    %v5029 = vadd.s32 %v5028, 536870912
    %v5030 = vshrl.u32 %v5029, 30
    %v5031 = vshll.u32 %v5030, 30
    %v5032 = vsub.s32 %v5028, %v5031
    %vm5033 = vcmp.lt.s32.totalorder %v5032, 0
    %v5034 = vsub.s32 0, %v5032
    %v5035 = vsel %vm5033, %v5034, %v5032
    %v5036 = vclz %v5035
    %v5037 = vsub.s32 %v5036, 2
    %vm5038 = vcmp.gt.s32.totalorder 0, %v5037
    %v5039 = vsel %vm5038, 0, %v5037
    %v5040 = vsub.s32 32, %v5039
    %v5041 = vshll.u32 %v5032, %v5039
    %v5042 = vshrl.u32 %v5024, %v5040
    %v5043 = vor.u32 %v5041, %v5042
    %v5044 = vsub.s32 4294967266, %v5039
    %v5045 = vadd.s32 %v5044, 127
    %v5046 = vshll.u32 %v5045, 23
    %v5047 = vor.u32 4788187, %v5046
    %v5048 = vand.u32 2147483647, %v5047
    %v5050 = vcvt.s32.f32 %v5043
    %v5051 = vmul.f32 %v5050, %v5048
    %v5052 = vxor.u32 %v5051, 2147483648
    %v5053 = vsel %vm4932, %v5052, %v5051
    %v5054 = vsub.s32 4, %v5030
    %v5055 = vsel %vm4932, %v5054, %v5030
    %v5056 = vsel %vm4931, %v4775, %v5053
    %v5057 = vsel %vm4931, 0, %v5055
    %v5058 = vmul.f32 %v5056, %v5056
    %v5059 = vmul.f32 %v5058, -0.001358992
    %v5060 = vadd.f32 %v5059, 0.041655596
    %v5061 = vmul.f32 %v5058, %v5060
    %v5062 = vadd.f32 %v5061, -0.4999988
    %v5063 = vmul.f32 %v5058, %v5062
    %v5064 = vadd.f32 1.0, %v5063
    %v5065 = vmul.f32 %v5056, %v5056
    %v5066 = vmul.f32 %v5065, -0.00019511016
    %v5067 = vadd.f32 %v5066, 0.008332121
    %v5068 = vmul.f32 %v5065, %v5067
    %v5069 = vadd.f32 %v5068, -0.16666654
    %v5070 = vmul.f32 %v5065, %v5069
    %v5071 = vadd.f32 %v5070, 1.0
    %v5072 = vmul.f32 %v5071, %v5056
    %vm5073 = vweird.f32 %v4775
    %v5074 = vand.u32 %v5057, 3
    %vm5075 = vcmp.lt.s32.totalorder %v5074, 2
    %vm5076 = vcmp.eq.s32.totalorder %v5074, 0
    %v5077 = vxor.u32 %v5072, 2147483648
    %v5078 = vsel %vm5076, %v5064, %v5077
    %vm5079 = vcmp.eq.s32.totalorder %v5074, 2
    %v5080 = vxor.u32 %v5064, 2147483648
    %v5081 = vsel %vm5079, %v5080, %v5072
    %v5082 = vsel %vm5075, %v5078, %v5081
    %v5083 = vsel %vm5073, nan, %v5082
    %v5084 = vmul.f32 %v4929, %v2172
    %v5085 = vmul.f32 %v5083, %v2172
    %v5086 = vadd.f32 %v4770, %v5084
    %v5087 = vadd.f32 %v4771, %v5085
    %5088 = vset.pattern.permute.xlu0 3
    %5089 = vperm.xlu0 %5088, %v3158
    %v5090 = vpop.permute.xlu0 %5089
    %5092 = vset.pattern.permute.xlu0 3
    %5093 = vperm.xlu0 %5092, %v3159
    %v5094 = vpop.permute.xlu0 %5093
    %v5096 = vmul.f32 %v5090, %v242
    %v5097 = vmul.f32 %v5094, %v242
    %v5098 = vadd.f32 %v5096, %v247
    %v5099 = vadd.f32 %v5097, %v247
    %v5100 = vand.u32 2147483647, %v5098
    %vm5101 = vcmp.le.f32.partialorder %v5100, 0.7853982
    %vm5102 = vcmp.lt.s32.totalorder %v5098, 0
    %v5103 = vand.u32 %v5098, 2139095040
    %v5104 = vshrl.u32 %v5103, 23
    %v5105 = vsub.s32 %v5104, 127
    %v5106 = vand.u32 2147483647, %v5098
    %v5107 = vand.u32 %v5106, 8388607
    %v5108 = vor.u32 %v5107, 8388608
    %v5109 = vsub.s32 0, %v5108
    %v5110 = vadd.s32 %v5105, 1
    %vm5111 = vcmp.gt.s32.totalorder %v5110, 0
    %v5112 = vsel %vm5111, %v5110, 0
    %v5113 = vshrl.u32 %v5112, 5
    %v5114 = vand.u32 %v5112, 31
    %v5115 = vsub.s32 32, %v5114
    %v5116 = vshrl.u32 683565275, %v5115
    %v5117 = vshll.u32 683565275, %v5114
    %v5118 = vshrl.u32 2475754826, %v5115
    %v5119 = vor.u32 %v5117, %v5118
    %v5120 = vshll.u32 2475754826, %v5114
    %v5121 = vshrl.u32 2131351028, %v5115
    %v5122 = vor.u32 %v5120, %v5121
    %v5123 = vshll.u32 2131351028, %v5114
    %v5124 = vshrl.u32 2102212464, %v5115
    %v5125 = vor.u32 %v5123, %v5124
    %v5126 = vshll.u32 2102212464, %v5114
    %v5127 = vshrl.u32 920167782, %v5115
    %v5128 = vor.u32 %v5126, %v5127
    %v5129 = vshll.u32 920167782, %v5114
    %v5130 = vshrl.u32 1326507024, %v5115
    %v5131 = vor.u32 %v5129, %v5130
    %vm5132 = vcmp.lt.s32.totalorder %v5113, 1
    %vm5133 = vcmp.lt.s32.totalorder %v5113, 2
    %vm5134 = vcmp.lt.s32.totalorder %v5113, 3
    %vm5135 = vcmp.lt.s32.totalorder %v5113, 4
    %v5136 = vsel %vm5132, %v5116, %v5119
    %v5137 = vsel %vm5135, %v5125, 2102212464
    %v5138 = vsel %vm5134, %v5122, %v5137
    %v5139 = vsel %vm5133, %v5136, %v5138
    %v5140 = vsel %vm5132, %v5119, %v5122
    %v5141 = vsel %vm5135, %v5128, 920167782
    %v5142 = vsel %vm5134, %v5125, %v5141
    %v5143 = vsel %vm5133, %v5140, %v5142
    %v5144 = vsel %vm5132, %v5122, %v5125
    %v5145 = vsel %vm5135, %v5131, 1326507024
    %v5146 = vsel %vm5134, %v5128, %v5145
    %v5147 = vsel %vm5133, %v5144, %v5146
    %v5148 = vshll.u32 %v5108, 8
    %v5149 = vand.u32 %v5148, 65535
    %v5150 = vshrl.u32 %v5148, 16
    %v5151 = vand.u32 %v5147, 65535
    %v5152 = vshrl.u32 %v5147, 16
    %v5153 = vmul.u32 %v5149, %v5151
    %v5154 = vmul.u32 %v5149, %v5152
    %v5155 = vmul.u32 %v5150, %v5151
    %v5156 = vmul.u32 %v5150, %v5152
    %v5157 = vshll.u32 %v5154, 16
    %v5158 = vshrl.u32 %v5154, 16
    %v5159 = vshll.u32 %v5155, 16
    %v5160 = vshrl.u32 %v5155, 16
    %vm5161 = vc.u32 %v5153, %v5157
    %v5162 = vsel %vm5161, 1, 0
    %v5163 = vadd.s32 %v5153, %v5157
    %v5164 = vadd.s32 %v5156, %v5162
    %vm5165 = vc.u32 %v5163, %v5159
    %v5166 = vsel %vm5165, 1, 0
    %v5167 = vadd.s32 %v5163, %v5159
    %v5168 = vadd.s32 %v5164, %v5166
    %v5169 = vadd.s32 %v5168, %v5158
    %v5170 = vadd.s32 %v5169, %v5160
    %v5171 = vand.u32 %v5148, 65535
    %v5172 = vshrl.u32 %v5148, 16
    %v5173 = vand.u32 %v5143, 65535
    %v5174 = vshrl.u32 %v5143, 16
    %v5175 = vmul.u32 %v5171, %v5173
    %v5176 = vmul.u32 %v5171, %v5174
    %v5177 = vmul.u32 %v5172, %v5173
    %v5178 = vmul.u32 %v5172, %v5174
    %v5179 = vshll.u32 %v5176, 16
    %v5180 = vshrl.u32 %v5176, 16
    %v5181 = vshll.u32 %v5177, 16
    %v5182 = vshrl.u32 %v5177, 16
    %vm5183 = vc.u32 %v5175, %v5179
    %v5184 = vsel %vm5183, 1, 0
    %v5185 = vadd.s32 %v5175, %v5179
    %v5186 = vadd.s32 %v5178, %v5184
    %vm5187 = vc.u32 %v5185, %v5181
    %v5188 = vsel %vm5187, 1, 0
    %v5189 = vadd.s32 %v5185, %v5181
    %v5190 = vadd.s32 %v5186, %v5188
    %v5191 = vadd.s32 %v5190, %v5180
    %v5192 = vadd.s32 %v5191, %v5182
    %v5193 = vmul.u32 %v5148, %v5139
    %v5194 = vadd.s32 %v5170, %v5189
    %vm5195 = vc.u32 %v5170, %v5189
    %v5196 = vadd.s32 %v5192, 1
    %v5197 = vsel %vm5195, %v5196, %v5192
    %v5198 = vadd.s32 %v5193, %v5197
    %v5199 = vadd.s32 %v5198, 536870912
    %v5200 = vshrl.u32 %v5199, 30
    %v5201 = vshll.u32 %v5200, 30
    %v5202 = vsub.s32 %v5198, %v5201
    %vm5203 = vcmp.lt.s32.totalorder %v5202, 0
    %v5204 = vsub.s32 0, %v5202
    %v5205 = vsel %vm5203, %v5204, %v5202
    %v5206 = vclz %v5205
    %v5207 = vsub.s32 %v5206, 2
    %vm5208 = vcmp.gt.s32.totalorder 0, %v5207
    %v5209 = vsel %vm5208, 0, %v5207
    %v5210 = vsub.s32 32, %v5209
    %v5211 = vshll.u32 %v5202, %v5209
    %v5212 = vshrl.u32 %v5194, %v5210
    %v5213 = vor.u32 %v5211, %v5212
    %v5214 = vsub.s32 4294967266, %v5209
    %v5215 = vadd.s32 %v5214, 127
    %v5216 = vshll.u32 %v5215, 23
    %v5217 = vor.u32 4788187, %v5216
    %v5218 = vand.u32 2147483647, %v5217
    %v5220 = vcvt.s32.f32 %v5213
    %v5221 = vmul.f32 %v5220, %v5218
    %v5222 = vxor.u32 %v5221, 2147483648
    %v5223 = vsel %vm5102, %v5222, %v5221
    %v5224 = vsub.s32 4, %v5200
    %v5225 = vsel %vm5102, %v5224, %v5200
    %v5226 = vsel %vm5101, %v5098, %v5223
    %v5227 = vsel %vm5101, 0, %v5225
    %v5228 = vmul.f32 %v5226, %v5226
    %v5229 = vmul.f32 %v5228, -0.001358992
    %v5230 = vadd.f32 %v5229, 0.041655596
    %v5231 = vmul.f32 %v5228, %v5230
    %v5232 = vadd.f32 %v5231, -0.4999988
    %v5233 = vmul.f32 %v5228, %v5232
    %v5234 = vadd.f32 1.0, %v5233
    %v5235 = vmul.f32 %v5226, %v5226
    %v5236 = vmul.f32 %v5235, -0.00019511016
    %v5237 = vadd.f32 %v5236, 0.008332121
    %v5238 = vmul.f32 %v5235, %v5237
    %v5239 = vadd.f32 %v5238, -0.16666654
    %v5240 = vmul.f32 %v5235, %v5239
    %v5241 = vadd.f32 %v5240, 1.0
    %v5242 = vmul.f32 %v5241, %v5226
    %vm5243 = vweird.f32 %v5098
    %v5244 = vadd.s32 %v5227, 3
    %v5245 = vand.u32 %v5244, 3
    %vm5246 = vcmp.lt.s32.totalorder %v5245, 2
    %vm5247 = vcmp.eq.s32.totalorder %v5245, 0
    %v5248 = vxor.u32 %v5242, 2147483648
    %v5249 = vsel %vm5247, %v5234, %v5248
    %vm5250 = vcmp.eq.s32.totalorder %v5245, 2
    %v5251 = vxor.u32 %v5234, 2147483648
    %v5252 = vsel %vm5250, %v5251, %v5242
    %v5253 = vsel %vm5246, %v5249, %v5252
    %v5254 = vsel %vm5243, nan, %v5253
    %v5255 = vand.u32 2147483647, %v5099
    %vm5256 = vcmp.le.f32.partialorder %v5255, 0.7853982
    %vm5257 = vcmp.lt.s32.totalorder %v5099, 0
    %v5258 = vand.u32 %v5099, 2139095040
    %v5259 = vshrl.u32 %v5258, 23
    %v5260 = vsub.s32 %v5259, 127
    %v5261 = vand.u32 2147483647, %v5099
    %v5262 = vand.u32 %v5261, 8388607
    %v5263 = vor.u32 %v5262, 8388608
    %v5264 = vsub.s32 0, %v5263
    %v5265 = vadd.s32 %v5260, 1
    %vm5266 = vcmp.gt.s32.totalorder %v5265, 0
    %v5267 = vsel %vm5266, %v5265, 0
    %v5268 = vshrl.u32 %v5267, 5
    %v5269 = vand.u32 %v5267, 31
    %v5270 = vsub.s32 32, %v5269
    %v5271 = vshrl.u32 683565275, %v5270
    %v5272 = vshll.u32 683565275, %v5269
    %v5273 = vshrl.u32 2475754826, %v5270
    %v5274 = vor.u32 %v5272, %v5273
    %v5275 = vshll.u32 2475754826, %v5269
    %v5276 = vshrl.u32 2131351028, %v5270
    %v5277 = vor.u32 %v5275, %v5276
    %v5278 = vshll.u32 2131351028, %v5269
    %v5279 = vshrl.u32 2102212464, %v5270
    %v5280 = vor.u32 %v5278, %v5279
    %v5281 = vshll.u32 2102212464, %v5269
    %v5282 = vshrl.u32 920167782, %v5270
    %v5283 = vor.u32 %v5281, %v5282
    %v5284 = vshll.u32 920167782, %v5269
    %v5285 = vshrl.u32 1326507024, %v5270
    %v5286 = vor.u32 %v5284, %v5285
    %vm5287 = vcmp.lt.s32.totalorder %v5268, 1
    %vm5288 = vcmp.lt.s32.totalorder %v5268, 2
    %vm5289 = vcmp.lt.s32.totalorder %v5268, 3
    %vm5290 = vcmp.lt.s32.totalorder %v5268, 4
    %v5291 = vsel %vm5287, %v5271, %v5274
    %v5292 = vsel %vm5290, %v5280, 2102212464
    %v5293 = vsel %vm5289, %v5277, %v5292
    %v5294 = vsel %vm5288, %v5291, %v5293
    %v5295 = vsel %vm5287, %v5274, %v5277
    %v5296 = vsel %vm5290, %v5283, 920167782
    %v5297 = vsel %vm5289, %v5280, %v5296
    %v5298 = vsel %vm5288, %v5295, %v5297
    %v5299 = vsel %vm5287, %v5277, %v5280
    %v5300 = vsel %vm5290, %v5286, 1326507024
    %v5301 = vsel %vm5289, %v5283, %v5300
    %v5302 = vsel %vm5288, %v5299, %v5301
    %v5303 = vshll.u32 %v5263, 8
    %v5304 = vand.u32 %v5303, 65535
    %v5305 = vshrl.u32 %v5303, 16
    %v5306 = vand.u32 %v5302, 65535
    %v5307 = vshrl.u32 %v5302, 16
    %v5308 = vmul.u32 %v5304, %v5306
    %v5309 = vmul.u32 %v5304, %v5307
    %v5310 = vmul.u32 %v5305, %v5306
    %v5311 = vmul.u32 %v5305, %v5307
    %v5312 = vshll.u32 %v5309, 16
    %v5313 = vshrl.u32 %v5309, 16
    %v5314 = vshll.u32 %v5310, 16
    %v5315 = vshrl.u32 %v5310, 16
    %vm5316 = vc.u32 %v5308, %v5312
    %v5317 = vsel %vm5316, 1, 0
    %v5318 = vadd.s32 %v5308, %v5312
    %v5319 = vadd.s32 %v5311, %v5317
    %vm5320 = vc.u32 %v5318, %v5314
    %v5321 = vsel %vm5320, 1, 0
    %v5322 = vadd.s32 %v5318, %v5314
    %v5323 = vadd.s32 %v5319, %v5321
    %v5324 = vadd.s32 %v5323, %v5313
    %v5325 = vadd.s32 %v5324, %v5315
    %v5326 = vand.u32 %v5303, 65535
    %v5327 = vshrl.u32 %v5303, 16
    %v5328 = vand.u32 %v5298, 65535
    %v5329 = vshrl.u32 %v5298, 16
    %v5330 = vmul.u32 %v5326, %v5328
    %v5331 = vmul.u32 %v5326, %v5329
    %v5332 = vmul.u32 %v5327, %v5328
    %v5333 = vmul.u32 %v5327, %v5329
    %v5334 = vshll.u32 %v5331, 16
    %v5335 = vshrl.u32 %v5331, 16
    %v5336 = vshll.u32 %v5332, 16
    %v5337 = vshrl.u32 %v5332, 16
    %vm5338 = vc.u32 %v5330, %v5334
    %v5339 = vsel %vm5338, 1, 0
    %v5340 = vadd.s32 %v5330, %v5334
    %v5341 = vadd.s32 %v5333, %v5339
    %vm5342 = vc.u32 %v5340, %v5336
    %v5343 = vsel %vm5342, 1, 0
    %v5344 = vadd.s32 %v5340, %v5336
    %v5345 = vadd.s32 %v5341, %v5343
    %v5346 = vadd.s32 %v5345, %v5335
    %v5347 = vadd.s32 %v5346, %v5337
    %v5348 = vmul.u32 %v5303, %v5294
    %v5349 = vadd.s32 %v5325, %v5344
    %vm5350 = vc.u32 %v5325, %v5344
    %v5351 = vadd.s32 %v5347, 1
    %v5352 = vsel %vm5350, %v5351, %v5347
    %v5353 = vadd.s32 %v5348, %v5352
    %v5354 = vadd.s32 %v5353, 536870912
    %v5355 = vshrl.u32 %v5354, 30
    %v5356 = vshll.u32 %v5355, 30
    %v5357 = vsub.s32 %v5353, %v5356
    %vm5358 = vcmp.lt.s32.totalorder %v5357, 0
    %v5359 = vsub.s32 0, %v5357
    %v5360 = vsel %vm5358, %v5359, %v5357
    %v5361 = vclz %v5360
    %v5362 = vsub.s32 %v5361, 2
    %vm5363 = vcmp.gt.s32.totalorder 0, %v5362
    %v5364 = vsel %vm5363, 0, %v5362
    %v5365 = vsub.s32 32, %v5364
    %v5366 = vshll.u32 %v5357, %v5364
    %v5367 = vshrl.u32 %v5349, %v5365
    %v5368 = vor.u32 %v5366, %v5367
    %v5369 = vsub.s32 4294967266, %v5364
    %v5370 = vadd.s32 %v5369, 127
    %v5371 = vshll.u32 %v5370, 23
    %v5372 = vor.u32 4788187, %v5371
    %v5373 = vand.u32 2147483647, %v5372
    %v5375 = vcvt.s32.f32 %v5368
    %v5376 = vmul.f32 %v5375, %v5373
    %v5377 = vxor.u32 %v5376, 2147483648
    %v5378 = vsel %vm5257, %v5377, %v5376
    %v5379 = vsub.s32 4, %v5355
    %v5380 = vsel %vm5257, %v5379, %v5355
    %v5381 = vsel %vm5256, %v5099, %v5378
    %v5382 = vsel %vm5256, 0, %v5380
    %v5383 = vmul.f32 %v5381, %v5381
    %v5384 = vmul.f32 %v5383, -0.001358992
    %v5385 = vadd.f32 %v5384, 0.041655596
    %v5386 = vmul.f32 %v5383, %v5385
    %v5387 = vadd.f32 %v5386, -0.4999988
    %v5388 = vmul.f32 %v5383, %v5387
    %v5389 = vadd.f32 1.0, %v5388
    %v5390 = vmul.f32 %v5381, %v5381
    %v5391 = vmul.f32 %v5390, -0.00019511016
    %v5392 = vadd.f32 %v5391, 0.008332121
    %v5393 = vmul.f32 %v5390, %v5392
    %v5394 = vadd.f32 %v5393, -0.16666654
    %v5395 = vmul.f32 %v5390, %v5394
    %v5396 = vadd.f32 %v5395, 1.0
    %v5397 = vmul.f32 %v5396, %v5381
    %vm5398 = vweird.f32 %v5099
    %v5399 = vadd.s32 %v5382, 3
    %v5400 = vand.u32 %v5399, 3
    %vm5401 = vcmp.lt.s32.totalorder %v5400, 2
    %vm5402 = vcmp.eq.s32.totalorder %v5400, 0
    %v5403 = vxor.u32 %v5397, 2147483648
    %v5404 = vsel %vm5402, %v5389, %v5403
    %vm5405 = vcmp.eq.s32.totalorder %v5400, 2
    %v5406 = vxor.u32 %v5389, 2147483648
    %v5407 = vsel %vm5405, %v5406, %v5397
    %v5408 = vsel %vm5401, %v5404, %v5407
    %v5409 = vsel %vm5398, nan, %v5408
    %v5410 = vmul.f32 %v5254, %v2499
    %v5411 = vmul.f32 %v5409, %v2499
    %v5412 = vadd.f32 %v5086, %v5410
    %v5413 = vadd.f32 %v5087, %v5411
    %v5414 = vmul.f32 %v5090, %v567
    %v5415 = vmul.f32 %v5094, %v567
    %v5416 = vadd.f32 %v5414, %v572
    %v5417 = vadd.f32 %v5415, %v572
    %v5418 = vand.u32 2147483647, %v5416
    %vm5419 = vcmp.le.f32.partialorder %v5418, 0.7853982
    %vm5420 = vcmp.lt.s32.totalorder %v5416, 0
    %v5421 = vand.u32 %v5416, 2139095040
    %v5422 = vshrl.u32 %v5421, 23
    %v5423 = vsub.s32 %v5422, 127
    %v5424 = vand.u32 2147483647, %v5416
    %v5425 = vand.u32 %v5424, 8388607
    %v5426 = vor.u32 %v5425, 8388608
    %v5427 = vsub.s32 0, %v5426
    %v5428 = vadd.s32 %v5423, 1
    %vm5429 = vcmp.gt.s32.totalorder %v5428, 0
    %v5430 = vsel %vm5429, %v5428, 0
    %v5431 = vshrl.u32 %v5430, 5
    %v5432 = vand.u32 %v5430, 31
    %v5433 = vsub.s32 32, %v5432
    %v5434 = vshrl.u32 683565275, %v5433
    %v5435 = vshll.u32 683565275, %v5432
    %v5436 = vshrl.u32 2475754826, %v5433
    %v5437 = vor.u32 %v5435, %v5436
    %v5438 = vshll.u32 2475754826, %v5432
    %v5439 = vshrl.u32 2131351028, %v5433
    %v5440 = vor.u32 %v5438, %v5439
    %v5441 = vshll.u32 2131351028, %v5432
    %v5442 = vshrl.u32 2102212464, %v5433
    %v5443 = vor.u32 %v5441, %v5442
    %v5444 = vshll.u32 2102212464, %v5432
    %v5445 = vshrl.u32 920167782, %v5433
    %v5446 = vor.u32 %v5444, %v5445
    %v5447 = vshll.u32 920167782, %v5432
    %v5448 = vshrl.u32 1326507024, %v5433
    %v5449 = vor.u32 %v5447, %v5448
    %vm5450 = vcmp.lt.s32.totalorder %v5431, 1
    %vm5451 = vcmp.lt.s32.totalorder %v5431, 2
    %vm5452 = vcmp.lt.s32.totalorder %v5431, 3
    %vm5453 = vcmp.lt.s32.totalorder %v5431, 4
    %v5454 = vsel %vm5450, %v5434, %v5437
    %v5455 = vsel %vm5453, %v5443, 2102212464
    %v5456 = vsel %vm5452, %v5440, %v5455
    %v5457 = vsel %vm5451, %v5454, %v5456
    %v5458 = vsel %vm5450, %v5437, %v5440
    %v5459 = vsel %vm5453, %v5446, 920167782
    %v5460 = vsel %vm5452, %v5443, %v5459
    %v5461 = vsel %vm5451, %v5458, %v5460
    %v5462 = vsel %vm5450, %v5440, %v5443
    %v5463 = vsel %vm5453, %v5449, 1326507024
    %v5464 = vsel %vm5452, %v5446, %v5463
    %v5465 = vsel %vm5451, %v5462, %v5464
    %v5466 = vshll.u32 %v5426, 8
    %v5467 = vand.u32 %v5466, 65535
    %v5468 = vshrl.u32 %v5466, 16
    %v5469 = vand.u32 %v5465, 65535
    %v5470 = vshrl.u32 %v5465, 16
    %v5471 = vmul.u32 %v5467, %v5469
    %v5472 = vmul.u32 %v5467, %v5470
    %v5473 = vmul.u32 %v5468, %v5469
    %v5474 = vmul.u32 %v5468, %v5470
    %v5475 = vshll.u32 %v5472, 16
    %v5476 = vshrl.u32 %v5472, 16
    %v5477 = vshll.u32 %v5473, 16
    %v5478 = vshrl.u32 %v5473, 16
    %vm5479 = vc.u32 %v5471, %v5475
    %v5480 = vsel %vm5479, 1, 0
    %v5481 = vadd.s32 %v5471, %v5475
    %v5482 = vadd.s32 %v5474, %v5480
    %vm5483 = vc.u32 %v5481, %v5477
    %v5484 = vsel %vm5483, 1, 0
    %v5485 = vadd.s32 %v5481, %v5477
    %v5486 = vadd.s32 %v5482, %v5484
    %v5487 = vadd.s32 %v5486, %v5476
    %v5488 = vadd.s32 %v5487, %v5478
    %v5489 = vand.u32 %v5466, 65535
    %v5490 = vshrl.u32 %v5466, 16
    %v5491 = vand.u32 %v5461, 65535
    %v5492 = vshrl.u32 %v5461, 16
    %v5493 = vmul.u32 %v5489, %v5491
    %v5494 = vmul.u32 %v5489, %v5492
    %v5495 = vmul.u32 %v5490, %v5491
    %v5496 = vmul.u32 %v5490, %v5492
    %v5497 = vshll.u32 %v5494, 16
    %v5498 = vshrl.u32 %v5494, 16
    %v5499 = vshll.u32 %v5495, 16
    %v5500 = vshrl.u32 %v5495, 16
    %vm5501 = vc.u32 %v5493, %v5497
    %v5502 = vsel %vm5501, 1, 0
    %v5503 = vadd.s32 %v5493, %v5497
    %v5504 = vadd.s32 %v5496, %v5502
    %vm5505 = vc.u32 %v5503, %v5499
    %v5506 = vsel %vm5505, 1, 0
    %v5507 = vadd.s32 %v5503, %v5499
    %v5508 = vadd.s32 %v5504, %v5506
    %v5509 = vadd.s32 %v5508, %v5498
    %v5510 = vadd.s32 %v5509, %v5500
    %v5511 = vmul.u32 %v5466, %v5457
    %v5512 = vadd.s32 %v5488, %v5507
    %vm5513 = vc.u32 %v5488, %v5507
    %v5514 = vadd.s32 %v5510, 1
    %v5515 = vsel %vm5513, %v5514, %v5510
    %v5516 = vadd.s32 %v5511, %v5515
    %v5517 = vadd.s32 %v5516, 536870912
    %v5518 = vshrl.u32 %v5517, 30
    %v5519 = vshll.u32 %v5518, 30
    %v5520 = vsub.s32 %v5516, %v5519
    %vm5521 = vcmp.lt.s32.totalorder %v5520, 0
    %v5522 = vsub.s32 0, %v5520
    %v5523 = vsel %vm5521, %v5522, %v5520
    %v5524 = vclz %v5523
    %v5525 = vsub.s32 %v5524, 2
    %vm5526 = vcmp.gt.s32.totalorder 0, %v5525
    %v5527 = vsel %vm5526, 0, %v5525
    %v5528 = vsub.s32 32, %v5527
    %v5529 = vshll.u32 %v5520, %v5527
    %v5530 = vshrl.u32 %v5512, %v5528
    %v5531 = vor.u32 %v5529, %v5530
    %v5532 = vsub.s32 4294967266, %v5527
    %v5533 = vadd.s32 %v5532, 127
    %v5534 = vshll.u32 %v5533, 23
    %v5535 = vor.u32 4788187, %v5534
    %v5536 = vand.u32 2147483647, %v5535
    %v5538 = vcvt.s32.f32 %v5531
    %v5539 = vmul.f32 %v5538, %v5536
    %v5540 = vxor.u32 %v5539, 2147483648
    %v5541 = vsel %vm5420, %v5540, %v5539
    %v5542 = vsub.s32 4, %v5518
    %v5543 = vsel %vm5420, %v5542, %v5518
    %v5544 = vsel %vm5419, %v5416, %v5541
    %v5545 = vsel %vm5419, 0, %v5543
    %v5546 = vmul.f32 %v5544, %v5544
    %v5547 = vmul.f32 %v5546, -0.001358992
    %v5548 = vadd.f32 %v5547, 0.041655596
    %v5549 = vmul.f32 %v5546, %v5548
    %v5550 = vadd.f32 %v5549, -0.4999988
    %v5551 = vmul.f32 %v5546, %v5550
    %v5552 = vadd.f32 1.0, %v5551
    %v5553 = vmul.f32 %v5544, %v5544
    %v5554 = vmul.f32 %v5553, -0.00019511016
    %v5555 = vadd.f32 %v5554, 0.008332121
    %v5556 = vmul.f32 %v5553, %v5555
    %v5557 = vadd.f32 %v5556, -0.16666654
    %v5558 = vmul.f32 %v5553, %v5557
    %v5559 = vadd.f32 %v5558, 1.0
    %v5560 = vmul.f32 %v5559, %v5544
    %vm5561 = vweird.f32 %v5416
    %v5562 = vand.u32 %v5545, 3
    %vm5563 = vcmp.lt.s32.totalorder %v5562, 2
    %vm5564 = vcmp.eq.s32.totalorder %v5562, 0
    %v5565 = vxor.u32 %v5560, 2147483648
    %v5566 = vsel %vm5564, %v5552, %v5565
    %vm5567 = vcmp.eq.s32.totalorder %v5562, 2
    %v5568 = vxor.u32 %v5552, 2147483648
    %v5569 = vsel %vm5567, %v5568, %v5560
    %v5570 = vsel %vm5563, %v5566, %v5569
    %v5571 = vsel %vm5561, nan, %v5570
    %v5572 = vand.u32 2147483647, %v5417
    %vm5573 = vcmp.le.f32.partialorder %v5572, 0.7853982
    %vm5574 = vcmp.lt.s32.totalorder %v5417, 0
    %v5575 = vand.u32 %v5417, 2139095040
    %v5576 = vshrl.u32 %v5575, 23
    %v5577 = vsub.s32 %v5576, 127
    %v5578 = vand.u32 2147483647, %v5417
    %v5579 = vand.u32 %v5578, 8388607
    %v5580 = vor.u32 %v5579, 8388608
    %v5581 = vsub.s32 0, %v5580
    %v5582 = vadd.s32 %v5577, 1
    %vm5583 = vcmp.gt.s32.totalorder %v5582, 0
    %v5584 = vsel %vm5583, %v5582, 0
    %v5585 = vshrl.u32 %v5584, 5
    %v5586 = vand.u32 %v5584, 31
    %v5587 = vsub.s32 32, %v5586
    %v5588 = vshrl.u32 683565275, %v5587
    %v5589 = vshll.u32 683565275, %v5586
    %v5590 = vshrl.u32 2475754826, %v5587
    %v5591 = vor.u32 %v5589, %v5590
    %v5592 = vshll.u32 2475754826, %v5586
    %v5593 = vshrl.u32 2131351028, %v5587
    %v5594 = vor.u32 %v5592, %v5593
    %v5595 = vshll.u32 2131351028, %v5586
    %v5596 = vshrl.u32 2102212464, %v5587
    %v5597 = vor.u32 %v5595, %v5596
    %v5598 = vshll.u32 2102212464, %v5586
    %v5599 = vshrl.u32 920167782, %v5587
    %v5600 = vor.u32 %v5598, %v5599
    %v5601 = vshll.u32 920167782, %v5586
    %v5602 = vshrl.u32 1326507024, %v5587
    %v5603 = vor.u32 %v5601, %v5602
    %vm5604 = vcmp.lt.s32.totalorder %v5585, 1
    %vm5605 = vcmp.lt.s32.totalorder %v5585, 2
    %vm5606 = vcmp.lt.s32.totalorder %v5585, 3
    %vm5607 = vcmp.lt.s32.totalorder %v5585, 4
    %v5608 = vsel %vm5604, %v5588, %v5591
    %v5609 = vsel %vm5607, %v5597, 2102212464
    %v5610 = vsel %vm5606, %v5594, %v5609
    %v5611 = vsel %vm5605, %v5608, %v5610
    %v5612 = vsel %vm5604, %v5591, %v5594
    %v5613 = vsel %vm5607, %v5600, 920167782
    %v5614 = vsel %vm5606, %v5597, %v5613
    %v5615 = vsel %vm5605, %v5612, %v5614
    %v5616 = vsel %vm5604, %v5594, %v5597
    %v5617 = vsel %vm5607, %v5603, 1326507024
    %v5618 = vsel %vm5606, %v5600, %v5617
    %v5619 = vsel %vm5605, %v5616, %v5618
    %v5620 = vshll.u32 %v5580, 8
    %v5621 = vand.u32 %v5620, 65535
    %v5622 = vshrl.u32 %v5620, 16
    %v5623 = vand.u32 %v5619, 65535
    %v5624 = vshrl.u32 %v5619, 16
    %v5625 = vmul.u32 %v5621, %v5623
    %v5626 = vmul.u32 %v5621, %v5624
    %v5627 = vmul.u32 %v5622, %v5623
    %v5628 = vmul.u32 %v5622, %v5624
    %v5629 = vshll.u32 %v5626, 16
    %v5630 = vshrl.u32 %v5626, 16
    %v5631 = vshll.u32 %v5627, 16
    %v5632 = vshrl.u32 %v5627, 16
    %vm5633 = vc.u32 %v5625, %v5629
    %v5634 = vsel %vm5633, 1, 0
    %v5635 = vadd.s32 %v5625, %v5629
    %v5636 = vadd.s32 %v5628, %v5634
    %vm5637 = vc.u32 %v5635, %v5631
    %v5638 = vsel %vm5637, 1, 0
    %v5639 = vadd.s32 %v5635, %v5631
    %v5640 = vadd.s32 %v5636, %v5638
    %v5641 = vadd.s32 %v5640, %v5630
    %v5642 = vadd.s32 %v5641, %v5632
    %v5643 = vand.u32 %v5620, 65535
    %v5644 = vshrl.u32 %v5620, 16
    %v5645 = vand.u32 %v5615, 65535
    %v5646 = vshrl.u32 %v5615, 16
    %v5647 = vmul.u32 %v5643, %v5645
    %v5648 = vmul.u32 %v5643, %v5646
    %v5649 = vmul.u32 %v5644, %v5645
    %v5650 = vmul.u32 %v5644, %v5646
    %v5651 = vshll.u32 %v5648, 16
    %v5652 = vshrl.u32 %v5648, 16
    %v5653 = vshll.u32 %v5649, 16
    %v5654 = vshrl.u32 %v5649, 16
    %vm5655 = vc.u32 %v5647, %v5651
    %v5656 = vsel %vm5655, 1, 0
    %v5657 = vadd.s32 %v5647, %v5651
    %v5658 = vadd.s32 %v5650, %v5656
    %vm5659 = vc.u32 %v5657, %v5653
    %v5660 = vsel %vm5659, 1, 0
    %v5661 = vadd.s32 %v5657, %v5653
    %v5662 = vadd.s32 %v5658, %v5660
    %v5663 = vadd.s32 %v5662, %v5652
    %v5664 = vadd.s32 %v5663, %v5654
    %v5665 = vmul.u32 %v5620, %v5611
    %v5666 = vadd.s32 %v5642, %v5661
    %vm5667 = vc.u32 %v5642, %v5661
    %v5668 = vadd.s32 %v5664, 1
    %v5669 = vsel %vm5667, %v5668, %v5664
    %v5670 = vadd.s32 %v5665, %v5669
    %v5671 = vadd.s32 %v5670, 536870912
    %v5672 = vshrl.u32 %v5671, 30
    %v5673 = vshll.u32 %v5672, 30
    %v5674 = vsub.s32 %v5670, %v5673
    %vm5675 = vcmp.lt.s32.totalorder %v5674, 0
    %v5676 = vsub.s32 0, %v5674
    %v5677 = vsel %vm5675, %v5676, %v5674
    %v5678 = vclz %v5677
    %v5679 = vsub.s32 %v5678, 2
    %vm5680 = vcmp.gt.s32.totalorder 0, %v5679
    %v5681 = vsel %vm5680, 0, %v5679
    %v5682 = vsub.s32 32, %v5681
    %v5683 = vshll.u32 %v5674, %v5681
    %v5684 = vshrl.u32 %v5666, %v5682
    %v5685 = vor.u32 %v5683, %v5684
    %v5686 = vsub.s32 4294967266, %v5681
    %v5687 = vadd.s32 %v5686, 127
    %v5688 = vshll.u32 %v5687, 23
    %v5689 = vor.u32 4788187, %v5688
    %v5690 = vand.u32 2147483647, %v5689
    %v5692 = vcvt.s32.f32 %v5685
    %v5693 = vmul.f32 %v5692, %v5690
    %v5694 = vxor.u32 %v5693, 2147483648
    %v5695 = vsel %vm5574, %v5694, %v5693
    %v5696 = vsub.s32 4, %v5672
    %v5697 = vsel %vm5574, %v5696, %v5672
    %v5698 = vsel %vm5573, %v5417, %v5695
    %v5699 = vsel %vm5573, 0, %v5697
    %v5700 = vmul.f32 %v5698, %v5698
    %v5701 = vmul.f32 %v5700, -0.001358992
    %v5702 = vadd.f32 %v5701, 0.041655596
    %v5703 = vmul.f32 %v5700, %v5702
    %v5704 = vadd.f32 %v5703, -0.4999988
    %v5705 = vmul.f32 %v5700, %v5704
    %v5706 = vadd.f32 1.0, %v5705
    %v5707 = vmul.f32 %v5698, %v5698
    %v5708 = vmul.f32 %v5707, -0.00019511016
    %v5709 = vadd.f32 %v5708, 0.008332121
    %v5710 = vmul.f32 %v5707, %v5709
    %v5711 = vadd.f32 %v5710, -0.16666654
    %v5712 = vmul.f32 %v5707, %v5711
    %v5713 = vadd.f32 %v5712, 1.0
    %v5714 = vmul.f32 %v5713, %v5698
    %vm5715 = vweird.f32 %v5417
    %v5716 = vand.u32 %v5699, 3
    %vm5717 = vcmp.lt.s32.totalorder %v5716, 2
    %vm5718 = vcmp.eq.s32.totalorder %v5716, 0
    %v5719 = vxor.u32 %v5714, 2147483648
    %v5720 = vsel %vm5718, %v5706, %v5719
    %vm5721 = vcmp.eq.s32.totalorder %v5716, 2
    %v5722 = vxor.u32 %v5706, 2147483648
    %v5723 = vsel %vm5721, %v5722, %v5714
    %v5724 = vsel %vm5717, %v5720, %v5723
    %v5725 = vsel %vm5715, nan, %v5724
    %v5726 = vmul.f32 %v5571, %v2816
    %v5727 = vmul.f32 %v5725, %v2816
    %v5728 = vadd.f32 %v5412, %v5726
    %v5729 = vadd.f32 %v5413, %v5727
    %5730 = vst.msk [vmem:[#allocation3] sm:$0xff] %vm2821, %v5728
    %5731 = vst.msk [vmem:[#allocation3 + $0x8] sm:$0xff] %vm2821, %v5729
    %v5732 = vld [vmem:[#allocation3] sm:$0x1]
    %v5733 = vld [vmem:[#allocation3 + $0x8] sm:$0x1]
    %v5734 = vld [vmem:[#allocation6] sm:$0xff]
    %v5735 = vld [vmem:[#allocation6 + $0x8] sm:$0xff]
    %v5736 = vld [vmem:[#allocation6 + $0x10] sm:$0xff]
    %v5737 = vld [vmem:[#allocation6 + $0x18] sm:$0xff]
    %v5738 = vld [vmem:[#allocation6 + $0x20] sm:$0xff]
    %v5739 = vld [vmem:[#allocation6 + $0x28] sm:$0xff]
    %v5740 = vld [vmem:[#allocation6 + $0x30] sm:$0xff]
    %v5741 = vld [vmem:[#allocation6 + $0x38] sm:$0xff]
    %v5742 = vld [vmem:[#allocation6 + $0x40] sm:$0xff]
    %v5743 = vld [vmem:[#allocation6 + $0x48] sm:$0xff]
    %v5744 = vld [vmem:[#allocation6 + $0x50] sm:$0xff]
    %v5745 = vld [vmem:[#allocation6 + $0x58] sm:$0xff]
    %v5746 = vld [vmem:[#allocation3 + $0x1] sm:$0x1]
    %v5747 = vld [vmem:[#allocation3 + $0x9] sm:$0x1]
    %s5748 = scalar_lea.vmem [#allocation6], 96
    %v5749 = vld [vmem:[%s5748] sm:$0xff]
    %v5750 = vld [vmem:[%s5748 + $0x8] sm:$0xff]
    %v5751 = vld [vmem:[%s5748 + $0x10] sm:$0xff]
    %v5752 = vld [vmem:[%s5748 + $0x18] sm:$0xff]
    %v5753 = vld [vmem:[%s5748 + $0x20] sm:$0xff]
    %v5754 = vld [vmem:[%s5748 + $0x28] sm:$0xff]
    %v5755 = vld [vmem:[%s5748 + $0x30] sm:$0xff]
    %v5756 = vld [vmem:[%s5748 + $0x38] sm:$0xff]
    %v5757 = vld [vmem:[%s5748 + $0x40] sm:$0xff]
    %v5758 = vld [vmem:[%s5748 + $0x48] sm:$0xff]
    %v5759 = vld [vmem:[%s5748 + $0x50] sm:$0xff]
    %v5760 = vld [vmem:[%s5748 + $0x58] sm:$0xff]
    %v5763 = vrot.slane %v5747, 7
    %v5764 = vsel %vm2856, %v5763, %v5746
    %v5765 = vsel %vm2821, %v5764, 0
    %5767 = vmatpush.msra.mxu0 0.0
    %5768 = vmatpush.msra.mxu0 0.0
    %5769 = vmatpush.msra.mxu0 0.0
    %5770 = vmatpush.msra.mxu0 0.0
    %5771 = vmatpush.msra.mxu0 %v5760
    %5772 = vmatpush.msra.mxu0 %v5759
    %5773 = vmatpush.msra.mxu0 %v5758
    %5774 = vmatpush.msra.mxu0 %v5757
    %5775 = vmatpush.msra.mxu0 %v5756
    %5776 = vmatpush.msra.mxu0 %v5755
    %5777 = vmatpush.msra.mxu0 %v5754
    %5778 = vmatpush.msra.mxu0 %v5753
    %5779 = vmatpush.msra.mxu0 %v5752
    %5780 = vmatpush.msra.mxu0 %v5751
    %5781 = vmatpush.msra.mxu0 %v5750
    %5782 = vmatpush.msra.mxu0 %v5749
    %5783 = vmatmul.f32.gmra.mxu0 %v5765
    %v5784 = vpop.f32.mrf.mxu0
    %v5785 = vadd.f32 0.0, %v5784
    %5786 = vdwg.mxu0
    %v5789 = vrot.slane %v5733, 7
    %v5790 = vsel %vm2856, %v5789, %v5732
    %v5791 = vsel %vm2821, %v5790, 0
    %5793 = vmatpush.msra.mxu0 0.0
    %5794 = vmatpush.msra.mxu0 0.0
    %5795 = vmatpush.msra.mxu0 0.0
    %5796 = vmatpush.msra.mxu0 0.0
    %5797 = vmatpush.msra.mxu0 %v5745
    %5798 = vmatpush.msra.mxu0 %v5744
    %5799 = vmatpush.msra.mxu0 %v5743
    %5800 = vmatpush.msra.mxu0 %v5742
    %5801 = vmatpush.msra.mxu0 %v5741
    %5802 = vmatpush.msra.mxu0 %v5740
    %5803 = vmatpush.msra.mxu0 %v5739
    %5804 = vmatpush.msra.mxu0 %v5738
    %5805 = vmatpush.msra.mxu0 %v5737
    %5806 = vmatpush.msra.mxu0 %v5736
    %5807 = vmatpush.msra.mxu0 %v5735
    %5808 = vmatpush.msra.mxu0 %v5734
    %5809 = vmatmul.f32.gmra.mxu0 %v5791
    %v5810 = vpop.f32.mrf.mxu0
    %v5811 = vadd.f32 %v5785, %v5810
    %5812 = vdwg.mxu0
    %v5813 = vld [vmem:[#allocation3 + $0x2] sm:$0x1]
    %v5814 = vld [vmem:[#allocation3 + $0xa] sm:$0x1]
    %s5815 = scalar_lea.vmem [#allocation6], 192
    %v5816 = vld [vmem:[%s5815] sm:$0xff]
    %v5817 = vld [vmem:[%s5815 + $0x8] sm:$0xff]
    %v5818 = vld [vmem:[%s5815 + $0x10] sm:$0xff]
    %v5819 = vld [vmem:[%s5815 + $0x18] sm:$0xff]
    %v5820 = vld [vmem:[%s5815 + $0x20] sm:$0xff]
    %v5821 = vld [vmem:[%s5815 + $0x28] sm:$0xff]
    %v5822 = vld [vmem:[%s5815 + $0x30] sm:$0xff]
    %v5823 = vld [vmem:[%s5815 + $0x38] sm:$0xff]
    %v5824 = vld [vmem:[%s5815 + $0x40] sm:$0xff]
    %v5825 = vld [vmem:[%s5815 + $0x48] sm:$0xff]
    %v5826 = vld [vmem:[%s5815 + $0x50] sm:$0xff]
    %v5827 = vld [vmem:[%s5815 + $0x58] sm:$0xff]
    %v5830 = vrot.slane %v5814, 7
    %v5831 = vsel %vm2856, %v5830, %v5813
    %v5832 = vsel %vm2821, %v5831, 0
    %5834 = vmatpush.msra.mxu0 0.0
    %5835 = vmatpush.msra.mxu0 0.0
    %5836 = vmatpush.msra.mxu0 0.0
    %5837 = vmatpush.msra.mxu0 0.0
    %5838 = vmatpush.msra.mxu0 %v5827
    %5839 = vmatpush.msra.mxu0 %v5826
    %5840 = vmatpush.msra.mxu0 %v5825
    %5841 = vmatpush.msra.mxu0 %v5824
    %5842 = vmatpush.msra.mxu0 %v5823
    %5843 = vmatpush.msra.mxu0 %v5822
    %5844 = vmatpush.msra.mxu0 %v5821
    %5845 = vmatpush.msra.mxu0 %v5820
    %5846 = vmatpush.msra.mxu0 %v5819
    %5847 = vmatpush.msra.mxu0 %v5818
    %5848 = vmatpush.msra.mxu0 %v5817
    %5849 = vmatpush.msra.mxu0 %v5816
    %5850 = vmatmul.f32.gmra.mxu0 %v5832
    %v5851 = vpop.f32.mrf.mxu0
    %v5852 = vadd.f32 0.0, %v5851
    %5853 = vdwg.mxu0
    %v5854 = vadd.f32 %v5811, %v5852
    %v5855 = vld [vmem:[#allocation3 + $0x3] sm:$0x1]
    %v5856 = vld [vmem:[#allocation3 + $0xb] sm:$0x1]
    %s5857 = scalar_lea.vmem [#allocation6], 288
    %v5858 = vld [vmem:[%s5857] sm:$0xff]
    %v5859 = vld [vmem:[%s5857 + $0x8] sm:$0xff]
    %v5860 = vld [vmem:[%s5857 + $0x10] sm:$0xff]
    %v5861 = vld [vmem:[%s5857 + $0x18] sm:$0xff]
    %v5862 = vld [vmem:[%s5857 + $0x20] sm:$0xff]
    %v5863 = vld [vmem:[%s5857 + $0x28] sm:$0xff]
    %v5864 = vld [vmem:[%s5857 + $0x30] sm:$0xff]
    %v5865 = vld [vmem:[%s5857 + $0x38] sm:$0xff]
    %v5866 = vld [vmem:[%s5857 + $0x40] sm:$0xff]
    %v5867 = vld [vmem:[%s5857 + $0x48] sm:$0xff]
    %v5868 = vld [vmem:[%s5857 + $0x50] sm:$0xff]
    %v5869 = vld [vmem:[%s5857 + $0x58] sm:$0xff]
    %v5872 = vrot.slane %v5856, 7
    %v5873 = vsel %vm2856, %v5872, %v5855
    %v5874 = vsel %vm2821, %v5873, 0
    %5876 = vmatpush.msra.mxu0 0.0
    %5877 = vmatpush.msra.mxu0 0.0
    %5878 = vmatpush.msra.mxu0 0.0
    %5879 = vmatpush.msra.mxu0 0.0
    %5880 = vmatpush.msra.mxu0 %v5869
    %5881 = vmatpush.msra.mxu0 %v5868
    %5882 = vmatpush.msra.mxu0 %v5867
    %5883 = vmatpush.msra.mxu0 %v5866
    %5884 = vmatpush.msra.mxu0 %v5865
    %5885 = vmatpush.msra.mxu0 %v5864
    %5886 = vmatpush.msra.mxu0 %v5863
    %5887 = vmatpush.msra.mxu0 %v5862
    %5888 = vmatpush.msra.mxu0 %v5861
    %5889 = vmatpush.msra.mxu0 %v5860
    %5890 = vmatpush.msra.mxu0 %v5859
    %5891 = vmatpush.msra.mxu0 %v5858
    %5892 = vmatmul.f32.gmra.mxu0 %v5874
    %v5893 = vpop.f32.mrf.mxu0
    %v5894 = vadd.f32 0.0, %v5893
    %5895 = vdwg.mxu0
    %v5896 = vadd.f32 %v5854, %v5894
    %v5897 = vld [vmem:[#allocation3 + $0x4] sm:$0x1]
    %v5898 = vld [vmem:[#allocation3 + $0xc] sm:$0x1]
    %s5899 = scalar_lea.vmem [#allocation6], 384
    %v5900 = vld [vmem:[%s5899] sm:$0xff]
    %v5901 = vld [vmem:[%s5899 + $0x8] sm:$0xff]
    %v5902 = vld [vmem:[%s5899 + $0x10] sm:$0xff]
    %v5903 = vld [vmem:[%s5899 + $0x18] sm:$0xff]
    %v5904 = vld [vmem:[%s5899 + $0x20] sm:$0xff]
    %v5905 = vld [vmem:[%s5899 + $0x28] sm:$0xff]
    %v5906 = vld [vmem:[%s5899 + $0x30] sm:$0xff]
    %v5907 = vld [vmem:[%s5899 + $0x38] sm:$0xff]
    %v5908 = vld [vmem:[%s5899 + $0x40] sm:$0xff]
    %v5909 = vld [vmem:[%s5899 + $0x48] sm:$0xff]
    %v5910 = vld [vmem:[%s5899 + $0x50] sm:$0xff]
    %v5911 = vld [vmem:[%s5899 + $0x58] sm:$0xff]
    %v5914 = vrot.slane %v5898, 7
    %v5915 = vsel %vm2856, %v5914, %v5897
    %v5916 = vsel %vm2821, %v5915, 0
    %5918 = vmatpush.msra.mxu0 0.0
    %5919 = vmatpush.msra.mxu0 0.0
    %5920 = vmatpush.msra.mxu0 0.0
    %5921 = vmatpush.msra.mxu0 0.0
    %5922 = vmatpush.msra.mxu0 %v5911
    %5923 = vmatpush.msra.mxu0 %v5910
    %5924 = vmatpush.msra.mxu0 %v5909
    %5925 = vmatpush.msra.mxu0 %v5908
    %5926 = vmatpush.msra.mxu0 %v5907
    %5927 = vmatpush.msra.mxu0 %v5906
    %5928 = vmatpush.msra.mxu0 %v5905
    %5929 = vmatpush.msra.mxu0 %v5904
    %5930 = vmatpush.msra.mxu0 %v5903
    %5931 = vmatpush.msra.mxu0 %v5902
    %5932 = vmatpush.msra.mxu0 %v5901
    %5933 = vmatpush.msra.mxu0 %v5900
    %5934 = vmatmul.f32.gmra.mxu0 %v5916
    %v5935 = vpop.f32.mrf.mxu0
    %v5936 = vadd.f32 0.0, %v5935
    %5937 = vdwg.mxu0
    %v5938 = vadd.f32 %v5896, %v5936
    %v5939 = vld [vmem:[#allocation3 + $0x5] sm:$0x1]
    %v5940 = vld [vmem:[#allocation3 + $0xd] sm:$0x1]
    %s5941 = scalar_lea.vmem [#allocation6], 480
    %v5942 = vld [vmem:[%s5941] sm:$0xff]
    %v5943 = vld [vmem:[%s5941 + $0x8] sm:$0xff]
    %v5944 = vld [vmem:[%s5941 + $0x10] sm:$0xff]
    %v5945 = vld [vmem:[%s5941 + $0x18] sm:$0xff]
    %v5946 = vld [vmem:[%s5941 + $0x20] sm:$0xff]
    %v5947 = vld [vmem:[%s5941 + $0x28] sm:$0xff]
    %v5948 = vld [vmem:[%s5941 + $0x30] sm:$0xff]
    %v5949 = vld [vmem:[%s5941 + $0x38] sm:$0xff]
    %v5950 = vld [vmem:[%s5941 + $0x40] sm:$0xff]
    %v5951 = vld [vmem:[%s5941 + $0x48] sm:$0xff]
    %v5952 = vld [vmem:[%s5941 + $0x50] sm:$0xff]
    %v5953 = vld [vmem:[%s5941 + $0x58] sm:$0xff]
    %v5956 = vrot.slane %v5940, 7
    %v5957 = vsel %vm2856, %v5956, %v5939
    %v5958 = vsel %vm2821, %v5957, 0
    %5960 = vmatpush.msra.mxu0 0.0
    %5961 = vmatpush.msra.mxu0 0.0
    %5962 = vmatpush.msra.mxu0 0.0
    %5963 = vmatpush.msra.mxu0 0.0
    %5964 = vmatpush.msra.mxu0 %v5953
    %5965 = vmatpush.msra.mxu0 %v5952
    %5966 = vmatpush.msra.mxu0 %v5951
    %5967 = vmatpush.msra.mxu0 %v5950
    %5968 = vmatpush.msra.mxu0 %v5949
    %5969 = vmatpush.msra.mxu0 %v5948
    %5970 = vmatpush.msra.mxu0 %v5947
    %5971 = vmatpush.msra.mxu0 %v5946
    %5972 = vmatpush.msra.mxu0 %v5945
    %5973 = vmatpush.msra.mxu0 %v5944
    %5974 = vmatpush.msra.mxu0 %v5943
    %5975 = vmatpush.msra.mxu0 %v5942
    %5976 = vmatmul.f32.gmra.mxu0 %v5958
    %v5977 = vpop.f32.mrf.mxu0
    %v5978 = vadd.f32 0.0, %v5977
    %5979 = vdwg.mxu0
    %v5980 = vadd.f32 %v5938, %v5978
    %v5981 = vld [vmem:[#allocation3 + $0x6] sm:$0x1]
    %v5982 = vld [vmem:[#allocation3 + $0xe] sm:$0x1]
    %s5983 = scalar_lea.vmem [#allocation6], 576
    %v5984 = vld [vmem:[%s5983] sm:$0xff]
    %v5985 = vld [vmem:[%s5983 + $0x8] sm:$0xff]
    %v5986 = vld [vmem:[%s5983 + $0x10] sm:$0xff]
    %v5987 = vld [vmem:[%s5983 + $0x18] sm:$0xff]
    %v5988 = vld [vmem:[%s5983 + $0x20] sm:$0xff]
    %v5989 = vld [vmem:[%s5983 + $0x28] sm:$0xff]
    %v5990 = vld [vmem:[%s5983 + $0x30] sm:$0xff]
    %v5991 = vld [vmem:[%s5983 + $0x38] sm:$0xff]
    %v5992 = vld [vmem:[%s5983 + $0x40] sm:$0xff]
    %v5993 = vld [vmem:[%s5983 + $0x48] sm:$0xff]
    %v5994 = vld [vmem:[%s5983 + $0x50] sm:$0xff]
    %v5995 = vld [vmem:[%s5983 + $0x58] sm:$0xff]
    %v5998 = vrot.slane %v5982, 7
    %v5999 = vsel %vm2856, %v5998, %v5981
    %v6000 = vsel %vm2821, %v5999, 0
    %6002 = vmatpush.msra.mxu0 0.0
    %6003 = vmatpush.msra.mxu0 0.0
    %6004 = vmatpush.msra.mxu0 0.0
    %6005 = vmatpush.msra.mxu0 0.0
    %6006 = vmatpush.msra.mxu0 %v5995
    %6007 = vmatpush.msra.mxu0 %v5994
    %6008 = vmatpush.msra.mxu0 %v5993
    %6009 = vmatpush.msra.mxu0 %v5992
    %6010 = vmatpush.msra.mxu0 %v5991
    %6011 = vmatpush.msra.mxu0 %v5990
    %6012 = vmatpush.msra.mxu0 %v5989
    %6013 = vmatpush.msra.mxu0 %v5988
    %6014 = vmatpush.msra.mxu0 %v5987
    %6015 = vmatpush.msra.mxu0 %v5986
    %6016 = vmatpush.msra.mxu0 %v5985
    %6017 = vmatpush.msra.mxu0 %v5984
    %6018 = vmatmul.f32.gmra.mxu0 %v6000
    %v6019 = vpop.f32.mrf.mxu0
    %v6020 = vadd.f32 0.0, %v6019
    %6021 = vdwg.mxu0
    %v6022 = vadd.f32 %v5980, %v6020
    %v6023 = vld [vmem:[#allocation3 + $0x7] sm:$0x1]
    %v6024 = vld [vmem:[#allocation3 + $0xf] sm:$0x1]
    %s6025 = scalar_lea.vmem [#allocation6], 672
    %v6026 = vld [vmem:[%s6025] sm:$0xff]
    %v6027 = vld [vmem:[%s6025 + $0x8] sm:$0xff]
    %v6028 = vld [vmem:[%s6025 + $0x10] sm:$0xff]
    %v6029 = vld [vmem:[%s6025 + $0x18] sm:$0xff]
    %v6030 = vld [vmem:[%s6025 + $0x20] sm:$0xff]
    %v6031 = vld [vmem:[%s6025 + $0x28] sm:$0xff]
    %v6032 = vld [vmem:[%s6025 + $0x30] sm:$0xff]
    %v6033 = vld [vmem:[%s6025 + $0x38] sm:$0xff]
    %v6034 = vld [vmem:[%s6025 + $0x40] sm:$0xff]
    %v6035 = vld [vmem:[%s6025 + $0x48] sm:$0xff]
    %v6036 = vld [vmem:[%s6025 + $0x50] sm:$0xff]
    %v6037 = vld [vmem:[%s6025 + $0x58] sm:$0xff]
    %v6040 = vrot.slane %v6024, 7
    %v6041 = vsel %vm2856, %v6040, %v6023
    %v6042 = vsel %vm2821, %v6041, 0
    %6044 = vmatpush.msra.mxu0 0.0
    %6045 = vmatpush.msra.mxu0 0.0
    %6046 = vmatpush.msra.mxu0 0.0
    %6047 = vmatpush.msra.mxu0 0.0
    %6048 = vmatpush.msra.mxu0 %v6037
    %6049 = vmatpush.msra.mxu0 %v6036
    %6050 = vmatpush.msra.mxu0 %v6035
    %6051 = vmatpush.msra.mxu0 %v6034
    %6052 = vmatpush.msra.mxu0 %v6033
    %6053 = vmatpush.msra.mxu0 %v6032
    %6054 = vmatpush.msra.mxu0 %v6031
    %6055 = vmatpush.msra.mxu0 %v6030
    %6056 = vmatpush.msra.mxu0 %v6029
    %6057 = vmatpush.msra.mxu0 %v6028
    %6058 = vmatpush.msra.mxu0 %v6027
    %6059 = vmatpush.msra.mxu0 %v6026
    %6060 = vmatmul.f32.gmra.mxu0 %v6042
    %v6061 = vpop.f32.mrf.mxu0
    %v6062 = vadd.f32 0.0, %v6061
    %6063 = vdwg.mxu0
    %v6064 = vadd.f32 %v6022, %v6062
    %v6065 = vld [vmem:[%s0] sm:$0x3]
    %v6066 = vsub.f32 %v6065, %v3157
    %v6067 = vld [vmem:[%s11] sm:$0xff]
    %v6068 = vld [vmem:[%s11 + $0x8] sm:$0xff]
    %v6069 = vld [vmem:[%s11 + $0x10] sm:$0xff]
    %v6070 = vld [vmem:[%s11 + $0x18] sm:$0xff]
    %v6071 = vld [vmem:[%s11 + $0x20] sm:$0xff]
    %v6072 = vld [vmem:[%s11 + $0x28] sm:$0xff]
    %v6073 = vld [vmem:[%s11 + $0x30] sm:$0xff]
    %v6074 = vld [vmem:[%s11 + $0x38] sm:$0xff]
    %v6075 = vld [vmem:[%s11 + $0x40] sm:$0xff]
    %v6076 = vld [vmem:[%s11 + $0x48] sm:$0xff]
    %v6077 = vld [vmem:[%s11 + $0x50] sm:$0xff]
    %v6078 = vld [vmem:[%s11 + $0x58] sm:$0xff]
    %v6080 = vsel %vm2821, %v6066, 0
    %6082 = vmatpush.msra.mxu0 0.0
    %6083 = vmatpush.msra.mxu0 0.0
    %6084 = vmatpush.msra.mxu0 0.0
    %6085 = vmatpush.msra.mxu0 0.0
    %6086 = vmatpush.msra.mxu0 %v6078
    %6087 = vmatpush.msra.mxu0 %v6077
    %6088 = vmatpush.msra.mxu0 %v6076
    %6089 = vmatpush.msra.mxu0 %v6075
    %6090 = vmatpush.msra.mxu0 %v6074
    %6091 = vmatpush.msra.mxu0 %v6073
    %6092 = vmatpush.msra.mxu0 %v6072
    %6093 = vmatpush.msra.mxu0 %v6071
    %6094 = vmatpush.msra.mxu0 %v6070
    %6095 = vmatpush.msra.mxu0 %v6069
    %6096 = vmatpush.msra.mxu0 %v6068
    %6097 = vmatpush.msra.mxu0 %v6067
    %6098 = vmatmul.f32.gmra.mxu0 %v6080
    %v6099 = vpop.f32.mrf.mxu0
    %v6100 = vadd.f32 0.0, %v6099
    %6101 = vdwg.mxu0
    %v6102 = vsub.f32 %v6066, %v6100
    %v6103 = vld [vmem:[#allocation8] sm:$0xff]
    %v6104 = vld [vmem:[#allocation8 + $0x8] sm:$0xff]
    %v6105 = vld [vmem:[#allocation8 + $0x10] sm:$0xff]
    %v6106 = vld [vmem:[#allocation8 + $0x18] sm:$0xff]
    %v6107 = vld [vmem:[#allocation8 + $0x20] sm:$0xff]
    %v6108 = vld [vmem:[#allocation8 + $0x28] sm:$0xff]
    %v6109 = vld [vmem:[#allocation8 + $0x30] sm:$0xff]
    %v6110 = vld [vmem:[#allocation8 + $0x38] sm:$0xff]
    %v6111 = vld [vmem:[#allocation8 + $0x40] sm:$0xff]
    %v6112 = vld [vmem:[#allocation8 + $0x48] sm:$0xff]
    %v6113 = vld [vmem:[#allocation8 + $0x50] sm:$0xff]
    %v6114 = vld [vmem:[#allocation8 + $0x58] sm:$0xff]
    %v6115 = vld [vmem:[%s13] sm:$0x1]
    %v6117 = vperm.slane %v6115, 0
    %v6120 = vsel %vm2821, %v6100, 0
    %6122 = vmatpush.msra.mxu0 0.0
    %6123 = vmatpush.msra.mxu0 0.0
    %6124 = vmatpush.msra.mxu0 0.0
    %6125 = vmatpush.msra.mxu0 0.0
    %6126 = vmatpush.msra.mxu0 %v6114
    %6127 = vmatpush.msra.mxu0 %v6113
    %6128 = vmatpush.msra.mxu0 %v6112
    %6129 = vmatpush.msra.mxu0 %v6111
    %6130 = vmatpush.msra.mxu0 %v6110
    %6131 = vmatpush.msra.mxu0 %v6109
    %6132 = vmatpush.msra.mxu0 %v6108
    %6133 = vmatpush.msra.mxu0 %v6107
    %6134 = vmatpush.msra.mxu0 %v6106
    %6135 = vmatpush.msra.mxu0 %v6105
    %6136 = vmatpush.msra.mxu0 %v6104
    %6137 = vmatpush.msra.mxu0 %v6103
    %6138 = vmatmul.f32.gmra.mxu0 %v6120
    %v6139 = vpop.f32.mrf.mxu0
    %v6140 = vadd.f32 %v6117, %v6139
    %6141 = vdwg.mxu0
    %v6142 = vld [vmem:[#allocation9] sm:$0xff]
    %v6143 = vld [vmem:[#allocation9 + $0x8] sm:$0xff]
    %v6144 = vld [vmem:[#allocation9 + $0x10] sm:$0xff]
    %v6145 = vld [vmem:[#allocation9 + $0x18] sm:$0xff]
    %v6146 = vld [vmem:[#allocation9 + $0x20] sm:$0xff]
    %v6147 = vld [vmem:[#allocation9 + $0x28] sm:$0xff]
    %v6148 = vld [vmem:[#allocation9 + $0x30] sm:$0xff]
    %v6149 = vld [vmem:[#allocation9 + $0x38] sm:$0xff]
    %v6150 = vld [vmem:[#allocation9 + $0x40] sm:$0xff]
    %v6151 = vld [vmem:[#allocation9 + $0x48] sm:$0xff]
    %v6152 = vld [vmem:[#allocation9 + $0x50] sm:$0xff]
    %v6153 = vld [vmem:[#allocation9 + $0x58] sm:$0xff]
    %v6154 = vld [vmem:[%s15] sm:$0x1]
    %v6156 = vperm.slane %v6154, 0
    %6158 = vmatpush.msra.mxu0 0.0
    %6159 = vmatpush.msra.mxu0 0.0
    %6160 = vmatpush.msra.mxu0 0.0
    %6161 = vmatpush.msra.mxu0 0.0
    %6162 = vmatpush.msra.mxu0 %v6153
    %6163 = vmatpush.msra.mxu0 %v6152
    %6164 = vmatpush.msra.mxu0 %v6151
    %6165 = vmatpush.msra.mxu0 %v6150
    %6166 = vmatpush.msra.mxu0 %v6149
    %6167 = vmatpush.msra.mxu0 %v6148
    %6168 = vmatpush.msra.mxu0 %v6147
    %6169 = vmatpush.msra.mxu0 %v6146
    %6170 = vmatpush.msra.mxu0 %v6145
    %6171 = vmatpush.msra.mxu0 %v6144
    %6172 = vmatpush.msra.mxu0 %v6143
    %6173 = vmatpush.msra.mxu0 %v6142
    %6174 = vmatmul.f32.gmra.mxu0 %v6120
    %v6175 = vpop.f32.mrf.mxu0
    %v6176 = vadd.f32 %v6156, %v6175
    %6177 = vdwg.mxu0
    %v6178 = vxor.u32 %v6176, 2147483648
    %v6179 = vmul.f32 %v6178, 1.442695
    %v6180 = vpow.pop %v6179
    %v6181 = vadd.f32 %v6180, 1.0
    %v6182 = vrcp.pop %v6181
    %v6183 = vmul.f32 %v6181, %v6182
    %v6184 = vsub.f32 1.0, %v6183
    %v6185 = vmul.f32 %v6182, %v6184
    %v6186 = vadd.f32 %v6182, %v6185
    %vm6187 = vweird.f32 %v6181
    %vm6188 = vweird.f32 %v6182
    %vm6189 = vmor %vm6187, %vm6188
    %v6190 = vsel %vm6189, %v6182, %v6186
    %v6191 = vand.u32 2147483647, %v6181
    %vm6192 = vcmp.eq.f32.partialorder %v6191, 8.507059e+37
    %v6193 = vand.u32 %v6181, 2147483648
    %v6194 = vor.u32 1.1754944e-38, %v6193
    %v6195 = vsel %vm6192, %v6194, %v6190
    %v6196 = vmul.f32 1.0, %v6195
    %v6197 = vld [vmem:[#allocation11] sm:$0xff]
    %v6198 = vld [vmem:[#allocation11 + $0x8] sm:$0xff]
    %v6199 = vld [vmem:[#allocation11 + $0x10] sm:$0xff]
    %v6200 = vld [vmem:[#allocation11 + $0x18] sm:$0xff]
    %v6201 = vld [vmem:[#allocation11 + $0x20] sm:$0xff]
    %v6202 = vld [vmem:[#allocation11 + $0x28] sm:$0xff]
    %v6203 = vld [vmem:[#allocation11 + $0x30] sm:$0xff]
    %v6204 = vld [vmem:[#allocation11 + $0x38] sm:$0xff]
    %v6205 = vld [vmem:[#allocation11 + $0x40] sm:$0xff]
    %v6206 = vld [vmem:[#allocation11 + $0x48] sm:$0xff]
    %v6207 = vld [vmem:[#allocation11 + $0x50] sm:$0xff]
    %v6208 = vld [vmem:[#allocation11 + $0x58] sm:$0xff]
    %v6209 = vmul.f32 %v6100, %v6100
    %s6210 = scalar_lea.vmem [#allocation11], 96
    %v6211 = vld [vmem:[%s6210] sm:$0xff]
    %v6212 = vld [vmem:[%s6210 + $0x8] sm:$0xff]
    %v6213 = vld [vmem:[%s6210 + $0x10] sm:$0xff]
    %v6214 = vld [vmem:[%s6210 + $0x18] sm:$0xff]
    %v6215 = vld [vmem:[%s6210 + $0x20] sm:$0xff]
    %v6216 = vld [vmem:[%s6210 + $0x28] sm:$0xff]
    %v6217 = vld [vmem:[%s6210 + $0x30] sm:$0xff]
    %v6218 = vld [vmem:[%s6210 + $0x38] sm:$0xff]
    %v6219 = vld [vmem:[%s6210 + $0x40] sm:$0xff]
    %v6220 = vld [vmem:[%s6210 + $0x48] sm:$0xff]
    %v6221 = vld [vmem:[%s6210 + $0x50] sm:$0xff]
    %v6222 = vld [vmem:[%s6210 + $0x58] sm:$0xff]
    %v6224 = vsel %vm2821, %v6209, 0
    %6226 = vmatpush.msra.mxu0 0.0
    %6227 = vmatpush.msra.mxu0 0.0
    %6228 = vmatpush.msra.mxu0 0.0
    %6229 = vmatpush.msra.mxu0 0.0
    %6230 = vmatpush.msra.mxu0 %v6222
    %6231 = vmatpush.msra.mxu0 %v6221
    %6232 = vmatpush.msra.mxu0 %v6220
    %6233 = vmatpush.msra.mxu0 %v6219
    %6234 = vmatpush.msra.mxu0 %v6218
    %6235 = vmatpush.msra.mxu0 %v6217
    %6236 = vmatpush.msra.mxu0 %v6216
    %6237 = vmatpush.msra.mxu0 %v6215
    %6238 = vmatpush.msra.mxu0 %v6214
    %6239 = vmatpush.msra.mxu0 %v6213
    %6240 = vmatpush.msra.mxu0 %v6212
    %6241 = vmatpush.msra.mxu0 %v6211
    %6242 = vmatmul.f32.gmra.mxu0 %v6224
    %v6243 = vpop.f32.mrf.mxu0
    %v6244 = vadd.f32 0.0, %v6243
    %6245 = vdwg.mxu0
    %6246 = vmatpush.msra.mxu0 0.0
    %6247 = vmatpush.msra.mxu0 0.0
    %6248 = vmatpush.msra.mxu0 0.0
    %6249 = vmatpush.msra.mxu0 0.0
    %6250 = vmatpush.msra.mxu0 %v6208
    %6251 = vmatpush.msra.mxu0 %v6207
    %6252 = vmatpush.msra.mxu0 %v6206
    %6253 = vmatpush.msra.mxu0 %v6205
    %6254 = vmatpush.msra.mxu0 %v6204
    %6255 = vmatpush.msra.mxu0 %v6203
    %6256 = vmatpush.msra.mxu0 %v6202
    %6257 = vmatpush.msra.mxu0 %v6201
    %6258 = vmatpush.msra.mxu0 %v6200
    %6259 = vmatpush.msra.mxu0 %v6199
    %6260 = vmatpush.msra.mxu0 %v6198
    %6261 = vmatpush.msra.mxu0 %v6197
    %6262 = vmatmul.f32.gmra.mxu0 %v6120
    %v6263 = vpop.f32.mrf.mxu0
    %v6264 = vadd.f32 %v6244, %v6263
    %6265 = vdwg.mxu0
    %v6266 = vld [vmem:[%s17] sm:$0x1]
    %v6268 = vperm.slane %v6266, 0
    %v6270 = vadd.f32 %v6264, %v6268
    %v6271 = vmul.f32 %v6196, %v6270
    %v6272 = vsub.f32 1.0, %v6196
    %v6273 = vmul.f32 %v6272, %v6140
    %v6274 = vadd.f32 %v6271, %v6273
    %v6275 = vadd.f32 %v6274, %v6100
    %v6276 = vld [vmem:[#allocation12] sm:$0xff]
    %v6277 = vld [vmem:[#allocation12 + $0x8] sm:$0xff]
    %v6278 = vld [vmem:[#allocation12 + $0x10] sm:$0xff]
    %v6279 = vld [vmem:[#allocation12 + $0x18] sm:$0xff]
    %v6280 = vld [vmem:[#allocation12 + $0x20] sm:$0xff]
    %v6281 = vld [vmem:[#allocation12 + $0x28] sm:$0xff]
    %v6282 = vld [vmem:[#allocation12 + $0x30] sm:$0xff]
    %v6283 = vld [vmem:[#allocation12 + $0x38] sm:$0xff]
    %v6284 = vld [vmem:[#allocation12 + $0x40] sm:$0xff]
    %v6285 = vld [vmem:[#allocation12 + $0x48] sm:$0xff]
    %v6286 = vld [vmem:[#allocation12 + $0x50] sm:$0xff]
    %v6287 = vld [vmem:[#allocation12 + $0x58] sm:$0xff]
    %v6288 = vld [vmem:[%s19] sm:$0x1]
    %v6290 = vperm.slane %v6288, 0
    %v6293 = vsel %vm2821, %v6102, 0
    %6295 = vmatpush.msra.mxu0 0.0
    %6296 = vmatpush.msra.mxu0 0.0
    %6297 = vmatpush.msra.mxu0 0.0
    %6298 = vmatpush.msra.mxu0 0.0
    %6299 = vmatpush.msra.mxu0 %v6287
    %6300 = vmatpush.msra.mxu0 %v6286
    %6301 = vmatpush.msra.mxu0 %v6285
    %6302 = vmatpush.msra.mxu0 %v6284
    %6303 = vmatpush.msra.mxu0 %v6283
    %6304 = vmatpush.msra.mxu0 %v6282
    %6305 = vmatpush.msra.mxu0 %v6281
    %6306 = vmatpush.msra.mxu0 %v6280
    %6307 = vmatpush.msra.mxu0 %v6279
    %6308 = vmatpush.msra.mxu0 %v6278
    %6309 = vmatpush.msra.mxu0 %v6277
    %6310 = vmatpush.msra.mxu0 %v6276
    %6311 = vmatmul.f32.gmra.mxu0 %v6293
    %v6312 = vpop.f32.mrf.mxu0
    %v6313 = vadd.f32 %v6290, %v6312
    %6314 = vdwg.mxu0
    %v6315 = vtanh.pop %v6313
    %v6316 = vld [vmem:[#allocation14] sm:$0xff]
    %v6317 = vld [vmem:[#allocation14 + $0x8] sm:$0xff]
    %v6318 = vld [vmem:[#allocation14 + $0x10] sm:$0xff]
    %v6319 = vld [vmem:[#allocation14 + $0x18] sm:$0xff]
    %v6320 = vld [vmem:[#allocation14 + $0x20] sm:$0xff]
    %v6321 = vld [vmem:[#allocation14 + $0x28] sm:$0xff]
    %v6322 = vld [vmem:[#allocation14 + $0x30] sm:$0xff]
    %v6323 = vld [vmem:[#allocation14 + $0x38] sm:$0xff]
    %v6324 = vld [vmem:[#allocation14 + $0x40] sm:$0xff]
    %v6325 = vld [vmem:[#allocation14 + $0x48] sm:$0xff]
    %v6326 = vld [vmem:[#allocation14 + $0x50] sm:$0xff]
    %v6327 = vld [vmem:[#allocation14 + $0x58] sm:$0xff]
    %v6328 = vld [vmem:[%s21] sm:$0x1]
    %v6330 = vperm.slane %v6328, 0
    %6332 = vmatpush.msra.mxu0 0.0
    %6333 = vmatpush.msra.mxu0 0.0
    %6334 = vmatpush.msra.mxu0 0.0
    %6335 = vmatpush.msra.mxu0 0.0
    %6336 = vmatpush.msra.mxu0 %v6327
    %6337 = vmatpush.msra.mxu0 %v6326
    %6338 = vmatpush.msra.mxu0 %v6325
    %6339 = vmatpush.msra.mxu0 %v6324
    %6340 = vmatpush.msra.mxu0 %v6323
    %6341 = vmatpush.msra.mxu0 %v6322
    %6342 = vmatpush.msra.mxu0 %v6321
    %6343 = vmatpush.msra.mxu0 %v6320
    %6344 = vmatpush.msra.mxu0 %v6319
    %6345 = vmatpush.msra.mxu0 %v6318
    %6346 = vmatpush.msra.mxu0 %v6317
    %6347 = vmatpush.msra.mxu0 %v6316
    %6348 = vmatmul.f32.gmra.mxu0 %v6293
    %v6349 = vpop.f32.mrf.mxu0
    %v6350 = vadd.f32 %v6330, %v6349
    %6351 = vdwg.mxu0
    %v6352 = vxor.u32 %v6350, 2147483648
    %v6353 = vmul.f32 %v6352, 1.442695
    %v6354 = vpow.pop %v6353
    %v6355 = vadd.f32 %v6354, 1.0
    %v6356 = vrcp.pop %v6355
    %v6357 = vmul.f32 %v6355, %v6356
    %v6358 = vsub.f32 1.0, %v6357
    %v6359 = vmul.f32 %v6356, %v6358
    %v6360 = vadd.f32 %v6356, %v6359
    %vm6361 = vweird.f32 %v6355
    %vm6362 = vweird.f32 %v6356
    %vm6363 = vmor %vm6361, %vm6362
    %v6364 = vsel %vm6363, %v6356, %v6360
    %v6365 = vand.u32 2147483647, %v6355
    %vm6366 = vcmp.eq.f32.partialorder %v6365, 8.507059e+37
    %v6367 = vand.u32 %v6355, 2147483648
    %v6368 = vor.u32 1.1754944e-38, %v6367
    %v6369 = vsel %vm6366, %v6368, %v6364
    %v6370 = vmul.f32 1.0, %v6369
    %v6371 = vmul.f32 %v6370, %v6315
    %v6372 = vsub.f32 1.0, %v6370
    %v6373 = vmul.f32 %v6372, %v6102
    %v6374 = vadd.f32 %v6371, %v6373
    %v6375 = vld [vmem:[#allocation15] sm:$0xff]
    %v6376 = vld [vmem:[#allocation15 + $0x8] sm:$0xff]
    %v6377 = vld [vmem:[#allocation15 + $0x10] sm:$0xff]
    %v6378 = vld [vmem:[#allocation15 + $0x18] sm:$0xff]
    %v6379 = vld [vmem:[#allocation15 + $0x20] sm:$0xff]
    %v6380 = vld [vmem:[#allocation15 + $0x28] sm:$0xff]
    %v6381 = vld [vmem:[#allocation15 + $0x30] sm:$0xff]
    %v6382 = vld [vmem:[#allocation15 + $0x38] sm:$0xff]
    %v6383 = vld [vmem:[#allocation15 + $0x40] sm:$0xff]
    %v6384 = vld [vmem:[#allocation15 + $0x48] sm:$0xff]
    %v6385 = vld [vmem:[#allocation15 + $0x50] sm:$0xff]
    %v6386 = vld [vmem:[#allocation15 + $0x58] sm:$0xff]
    %v6387 = vld [vmem:[%s23] sm:$0x1]
    %v6389 = vperm.slane %v6387, 0
    %v6392 = vsel %vm2821, %v6374, 0
    %6394 = vmatpush.msra.mxu0 0.0
    %6395 = vmatpush.msra.mxu0 0.0
    %6396 = vmatpush.msra.mxu0 0.0
    %6397 = vmatpush.msra.mxu0 0.0
    %6398 = vmatpush.msra.mxu0 %v6386
    %6399 = vmatpush.msra.mxu0 %v6385
    %6400 = vmatpush.msra.mxu0 %v6384
    %6401 = vmatpush.msra.mxu0 %v6383
    %6402 = vmatpush.msra.mxu0 %v6382
    %6403 = vmatpush.msra.mxu0 %v6381
    %6404 = vmatpush.msra.mxu0 %v6380
    %6405 = vmatpush.msra.mxu0 %v6379
    %6406 = vmatpush.msra.mxu0 %v6378
    %6407 = vmatpush.msra.mxu0 %v6377
    %6408 = vmatpush.msra.mxu0 %v6376
    %6409 = vmatpush.msra.mxu0 %v6375
    %6410 = vmatmul.f32.gmra.mxu0 %v6392
    %v6411 = vpop.f32.mrf.mxu0
    %v6412 = vadd.f32 %v6389, %v6411
    %6413 = vdwg.mxu0
    %v6414 = vtanh.pop %v6412
    %v6415 = vld [vmem:[#allocation17] sm:$0xff]
    %v6416 = vld [vmem:[#allocation17 + $0x8] sm:$0xff]
    %v6417 = vld [vmem:[#allocation17 + $0x10] sm:$0xff]
    %v6418 = vld [vmem:[#allocation17 + $0x18] sm:$0xff]
    %v6419 = vld [vmem:[#allocation17 + $0x20] sm:$0xff]
    %v6420 = vld [vmem:[#allocation17 + $0x28] sm:$0xff]
    %v6421 = vld [vmem:[#allocation17 + $0x30] sm:$0xff]
    %v6422 = vld [vmem:[#allocation17 + $0x38] sm:$0xff]
    %v6423 = vld [vmem:[#allocation17 + $0x40] sm:$0xff]
    %v6424 = vld [vmem:[#allocation17 + $0x48] sm:$0xff]
    %v6425 = vld [vmem:[#allocation17 + $0x50] sm:$0xff]
    %v6426 = vld [vmem:[#allocation17 + $0x58] sm:$0xff]
    %v6427 = vld [vmem:[%s25] sm:$0x1]
    %v6429 = vperm.slane %v6427, 0
    %6431 = vmatpush.msra.mxu0 0.0
    %6432 = vmatpush.msra.mxu0 0.0
    %6433 = vmatpush.msra.mxu0 0.0
    %6434 = vmatpush.msra.mxu0 0.0
    %6435 = vmatpush.msra.mxu0 %v6426
    %6436 = vmatpush.msra.mxu0 %v6425
    %6437 = vmatpush.msra.mxu0 %v6424
    %6438 = vmatpush.msra.mxu0 %v6423
    %6439 = vmatpush.msra.mxu0 %v6422
    %6440 = vmatpush.msra.mxu0 %v6421
    %6441 = vmatpush.msra.mxu0 %v6420
    %6442 = vmatpush.msra.mxu0 %v6419
    %6443 = vmatpush.msra.mxu0 %v6418
    %6444 = vmatpush.msra.mxu0 %v6417
    %6445 = vmatpush.msra.mxu0 %v6416
    %6446 = vmatpush.msra.mxu0 %v6415
    %6447 = vmatmul.f32.gmra.mxu0 %v6392
    %v6448 = vpop.f32.mrf.mxu0
    %v6449 = vadd.f32 %v6429, %v6448
    %6450 = vdwg.mxu0
    %v6451 = vxor.u32 %v6449, 2147483648
    %v6452 = vmul.f32 %v6451, 1.442695
    %v6453 = vpow.pop %v6452
    %v6454 = vadd.f32 %v6453, 1.0
    %v6455 = vrcp.pop %v6454
    %v6456 = vmul.f32 %v6454, %v6455
    %v6457 = vsub.f32 1.0, %v6456
    %v6458 = vmul.f32 %v6455, %v6457
    %v6459 = vadd.f32 %v6455, %v6458
    %vm6460 = vweird.f32 %v6454
    %vm6461 = vweird.f32 %v6455
    %vm6462 = vmor %vm6460, %vm6461
    %v6463 = vsel %vm6462, %v6455, %v6459
    %v6464 = vand.u32 2147483647, %v6454
    %vm6465 = vcmp.eq.f32.partialorder %v6464, 8.507059e+37
    %v6466 = vand.u32 %v6454, 2147483648
    %v6467 = vor.u32 1.1754944e-38, %v6466
    %v6468 = vsel %vm6465, %v6467, %v6463
    %v6469 = vmul.f32 1.0, %v6468
    %v6470 = vmul.f32 %v6469, %v6414
    %v6471 = vsub.f32 1.0, %v6469
    %v6472 = vmul.f32 %v6471, %v6374
    %v6473 = vadd.f32 %v6470, %v6472
    %v6474 = vtanh.pop %v6473
    %v6475 = vadd.f32 %v6102, %v6474
    %s6476 = scalar_lea.vmem [#allocation12], 96
    %v6477 = vld [vmem:[%s6476] sm:$0xff]
    %v6478 = vld [vmem:[%s6476 + $0x8] sm:$0xff]
    %v6479 = vld [vmem:[%s6476 + $0x10] sm:$0xff]
    %v6480 = vld [vmem:[%s6476 + $0x18] sm:$0xff]
    %v6481 = vld [vmem:[%s6476 + $0x20] sm:$0xff]
    %v6482 = vld [vmem:[%s6476 + $0x28] sm:$0xff]
    %v6483 = vld [vmem:[%s6476 + $0x30] sm:$0xff]
    %v6484 = vld [vmem:[%s6476 + $0x38] sm:$0xff]
    %v6485 = vld [vmem:[%s6476 + $0x40] sm:$0xff]
    %v6486 = vld [vmem:[%s6476 + $0x48] sm:$0xff]
    %v6487 = vld [vmem:[%s6476 + $0x50] sm:$0xff]
    %v6488 = vld [vmem:[%s6476 + $0x58] sm:$0xff]
    %s6489 = scalar_lea.vmem %s19, 1
    %v6490 = vld [vmem:[%s6489] sm:$0x1]
    %v6492 = vperm.slane %v6490, 0
    %v6495 = vsel %vm2821, %v6475, 0
    %6497 = vmatpush.msra.mxu0 0.0
    %6498 = vmatpush.msra.mxu0 0.0
    %6499 = vmatpush.msra.mxu0 0.0
    %6500 = vmatpush.msra.mxu0 0.0
    %6501 = vmatpush.msra.mxu0 %v6488
    %6502 = vmatpush.msra.mxu0 %v6487
    %6503 = vmatpush.msra.mxu0 %v6486
    %6504 = vmatpush.msra.mxu0 %v6485
    %6505 = vmatpush.msra.mxu0 %v6484
    %6506 = vmatpush.msra.mxu0 %v6483
    %6507 = vmatpush.msra.mxu0 %v6482
    %6508 = vmatpush.msra.mxu0 %v6481
    %6509 = vmatpush.msra.mxu0 %v6480
    %6510 = vmatpush.msra.mxu0 %v6479
    %6511 = vmatpush.msra.mxu0 %v6478
    %6512 = vmatpush.msra.mxu0 %v6477
    %6513 = vmatmul.f32.gmra.mxu0 %v6495
    %v6514 = vpop.f32.mrf.mxu0
    %v6515 = vadd.f32 %v6492, %v6514
    %6516 = vdwg.mxu0
    %v6517 = vtanh.pop %v6515
    %s6518 = scalar_lea.vmem [#allocation14], 96
    %v6519 = vld [vmem:[%s6518] sm:$0xff]
    %v6520 = vld [vmem:[%s6518 + $0x8] sm:$0xff]
    %v6521 = vld [vmem:[%s6518 + $0x10] sm:$0xff]
    %v6522 = vld [vmem:[%s6518 + $0x18] sm:$0xff]
    %v6523 = vld [vmem:[%s6518 + $0x20] sm:$0xff]
    %v6524 = vld [vmem:[%s6518 + $0x28] sm:$0xff]
    %v6525 = vld [vmem:[%s6518 + $0x30] sm:$0xff]
    %v6526 = vld [vmem:[%s6518 + $0x38] sm:$0xff]
    %v6527 = vld [vmem:[%s6518 + $0x40] sm:$0xff]
    %v6528 = vld [vmem:[%s6518 + $0x48] sm:$0xff]
    %v6529 = vld [vmem:[%s6518 + $0x50] sm:$0xff]
    %v6530 = vld [vmem:[%s6518 + $0x58] sm:$0xff]
    %s6531 = scalar_lea.vmem %s21, 1
    %v6532 = vld [vmem:[%s6531] sm:$0x1]
    %v6534 = vperm.slane %v6532, 0
    %6536 = vmatpush.msra.mxu0 0.0
    %6537 = vmatpush.msra.mxu0 0.0
    %6538 = vmatpush.msra.mxu0 0.0
    %6539 = vmatpush.msra.mxu0 0.0
    %6540 = vmatpush.msra.mxu0 %v6530
    %6541 = vmatpush.msra.mxu0 %v6529
    %6542 = vmatpush.msra.mxu0 %v6528
    %6543 = vmatpush.msra.mxu0 %v6527
    %6544 = vmatpush.msra.mxu0 %v6526
    %6545 = vmatpush.msra.mxu0 %v6525
    %6546 = vmatpush.msra.mxu0 %v6524
    %6547 = vmatpush.msra.mxu0 %v6523
    %6548 = vmatpush.msra.mxu0 %v6522
    %6549 = vmatpush.msra.mxu0 %v6521
    %6550 = vmatpush.msra.mxu0 %v6520
    %6551 = vmatpush.msra.mxu0 %v6519
    %6552 = vmatmul.f32.gmra.mxu0 %v6495
    %v6553 = vpop.f32.mrf.mxu0
    %v6554 = vadd.f32 %v6534, %v6553
    %6555 = vdwg.mxu0
    %v6556 = vxor.u32 %v6554, 2147483648
    %v6557 = vmul.f32 %v6556, 1.442695
    %v6558 = vpow.pop %v6557
    %v6559 = vadd.f32 %v6558, 1.0
    %v6560 = vrcp.pop %v6559
    %v6561 = vmul.f32 %v6559, %v6560
    %v6562 = vsub.f32 1.0, %v6561
    %v6563 = vmul.f32 %v6560, %v6562
    %v6564 = vadd.f32 %v6560, %v6563
    %vm6565 = vweird.f32 %v6559
    %vm6566 = vweird.f32 %v6560
    %vm6567 = vmor %vm6565, %vm6566
    %v6568 = vsel %vm6567, %v6560, %v6564
    %v6569 = vand.u32 2147483647, %v6559
    %vm6570 = vcmp.eq.f32.partialorder %v6569, 8.507059e+37
    %v6571 = vand.u32 %v6559, 2147483648
    %v6572 = vor.u32 1.1754944e-38, %v6571
    %v6573 = vsel %vm6570, %v6572, %v6568
    %v6574 = vmul.f32 1.0, %v6573
    %v6575 = vmul.f32 %v6574, %v6517
    %v6576 = vsub.f32 1.0, %v6574
    %v6577 = vmul.f32 %v6576, %v6475
    %v6578 = vadd.f32 %v6575, %v6577
    %s6579 = scalar_lea.vmem [#allocation15], 96
    %v6580 = vld [vmem:[%s6579] sm:$0xff]
    %v6581 = vld [vmem:[%s6579 + $0x8] sm:$0xff]
    %v6582 = vld [vmem:[%s6579 + $0x10] sm:$0xff]
    %v6583 = vld [vmem:[%s6579 + $0x18] sm:$0xff]
    %v6584 = vld [vmem:[%s6579 + $0x20] sm:$0xff]
    %v6585 = vld [vmem:[%s6579 + $0x28] sm:$0xff]
    %v6586 = vld [vmem:[%s6579 + $0x30] sm:$0xff]
    %v6587 = vld [vmem:[%s6579 + $0x38] sm:$0xff]
    %v6588 = vld [vmem:[%s6579 + $0x40] sm:$0xff]
    %v6589 = vld [vmem:[%s6579 + $0x48] sm:$0xff]
    %v6590 = vld [vmem:[%s6579 + $0x50] sm:$0xff]
    %v6591 = vld [vmem:[%s6579 + $0x58] sm:$0xff]
    %s6592 = scalar_lea.vmem %s23, 1
    %v6593 = vld [vmem:[%s6592] sm:$0x1]
    %v6595 = vperm.slane %v6593, 0
    %v6598 = vsel %vm2821, %v6578, 0
    %6600 = vmatpush.msra.mxu0 0.0
    %6601 = vmatpush.msra.mxu0 0.0
    %6602 = vmatpush.msra.mxu0 0.0
    %6603 = vmatpush.msra.mxu0 0.0
    %6604 = vmatpush.msra.mxu0 %v6591
    %6605 = vmatpush.msra.mxu0 %v6590
    %6606 = vmatpush.msra.mxu0 %v6589
    %6607 = vmatpush.msra.mxu0 %v6588
    %6608 = vmatpush.msra.mxu0 %v6587
    %6609 = vmatpush.msra.mxu0 %v6586
    %6610 = vmatpush.msra.mxu0 %v6585
    %6611 = vmatpush.msra.mxu0 %v6584
    %6612 = vmatpush.msra.mxu0 %v6583
    %6613 = vmatpush.msra.mxu0 %v6582
    %6614 = vmatpush.msra.mxu0 %v6581
    %6615 = vmatpush.msra.mxu0 %v6580
    %6616 = vmatmul.f32.gmra.mxu0 %v6598
    %v6617 = vpop.f32.mrf.mxu0
    %v6618 = vadd.f32 %v6595, %v6617
    %6619 = vdwg.mxu0
    %v6620 = vtanh.pop %v6618
    %s6621 = scalar_lea.vmem [#allocation17], 96
    %v6622 = vld [vmem:[%s6621] sm:$0xff]
    %v6623 = vld [vmem:[%s6621 + $0x8] sm:$0xff]
    %v6624 = vld [vmem:[%s6621 + $0x10] sm:$0xff]
    %v6625 = vld [vmem:[%s6621 + $0x18] sm:$0xff]
    %v6626 = vld [vmem:[%s6621 + $0x20] sm:$0xff]
    %v6627 = vld [vmem:[%s6621 + $0x28] sm:$0xff]
    %v6628 = vld [vmem:[%s6621 + $0x30] sm:$0xff]
    %v6629 = vld [vmem:[%s6621 + $0x38] sm:$0xff]
    %v6630 = vld [vmem:[%s6621 + $0x40] sm:$0xff]
    %v6631 = vld [vmem:[%s6621 + $0x48] sm:$0xff]
    %v6632 = vld [vmem:[%s6621 + $0x50] sm:$0xff]
    %v6633 = vld [vmem:[%s6621 + $0x58] sm:$0xff]
    %s6634 = scalar_lea.vmem %s25, 1
    %v6635 = vld [vmem:[%s6634] sm:$0x1]
    %v6637 = vperm.slane %v6635, 0
    %6639 = vmatpush.msra.mxu0 0.0
    %6640 = vmatpush.msra.mxu0 0.0
    %6641 = vmatpush.msra.mxu0 0.0
    %6642 = vmatpush.msra.mxu0 0.0
    %6643 = vmatpush.msra.mxu0 %v6633
    %6644 = vmatpush.msra.mxu0 %v6632
    %6645 = vmatpush.msra.mxu0 %v6631
    %6646 = vmatpush.msra.mxu0 %v6630
    %6647 = vmatpush.msra.mxu0 %v6629
    %6648 = vmatpush.msra.mxu0 %v6628
    %6649 = vmatpush.msra.mxu0 %v6627
    %6650 = vmatpush.msra.mxu0 %v6626
    %6651 = vmatpush.msra.mxu0 %v6625
    %6652 = vmatpush.msra.mxu0 %v6624
    %6653 = vmatpush.msra.mxu0 %v6623
    %6654 = vmatpush.msra.mxu0 %v6622
    %6655 = vmatmul.f32.gmra.mxu0 %v6598
    %v6656 = vpop.f32.mrf.mxu0
    %v6657 = vadd.f32 %v6637, %v6656
    %6658 = vdwg.mxu0
    %v6659 = vxor.u32 %v6657, 2147483648
    %v6660 = vmul.f32 %v6659, 1.442695
    %v6661 = vpow.pop %v6660
    %v6662 = vadd.f32 %v6661, 1.0
    %v6663 = vrcp.pop %v6662
    %v6664 = vmul.f32 %v6662, %v6663
    %v6665 = vsub.f32 1.0, %v6664
    %v6666 = vmul.f32 %v6663, %v6665
    %v6667 = vadd.f32 %v6663, %v6666
    %vm6668 = vweird.f32 %v6662
    %vm6669 = vweird.f32 %v6663
    %vm6670 = vmor %vm6668, %vm6669
    %v6671 = vsel %vm6670, %v6663, %v6667
    %v6672 = vand.u32 2147483647, %v6662
    %vm6673 = vcmp.eq.f32.partialorder %v6672, 8.507059e+37
    %v6674 = vand.u32 %v6662, 2147483648
    %v6675 = vor.u32 1.1754944e-38, %v6674
    %v6676 = vsel %vm6673, %v6675, %v6671
    %v6677 = vmul.f32 1.0, %v6676
    %v6678 = vmul.f32 %v6677, %v6620
    %v6679 = vsub.f32 1.0, %v6677
    %v6680 = vmul.f32 %v6679, %v6578
    %v6681 = vadd.f32 %v6678, %v6680
    %v6682 = vtanh.pop %v6681
    %v6683 = vadd.f32 %v6475, %v6682
    %v6684 = vadd.f32 %v6275, %v6064
    %v6685 = vadd.f32 %v6684, %v6683
    %vm6686 = vcmask 779264
    %6687 = vst.msk [vmem:[%s26] sm:$0x3] %vm6686, %v6685
    // Predicated region
    $region142: #{_lambda_.1} parent=1 // pred_check
      _
    $region143: #{_lambda_.1} parent=1 // pred_check_branch
      %6689 = sbr.rel (0) target = $region145
    $region144: #{_lambda_.1} parent=1 // pred_region
      _
    $region145: #{_lambda_.1} parent=1 // pred_fallthru
      _
    // Predicated region
    $region146: #{_lambda_.1} parent=1 // pred_check
      _
    $region147: #{_lambda_.1} parent=1 // pred_check_branch
      %6691 = sbr.rel (0) target = $region149
    $region148: #{_lambda_.1} parent=1 // pred_region
      _
    $region149: #{_lambda_.1} parent=1 // pred_fallthru
      _
    %6692 = vsyncpa [#allocation5], 1
    %6693 = vsyncpa [#allocation7], 1
    %6694 = vsyncpa [#allocation10], 1
    %6695 = vsyncpa [#allocation13], 1
    %6696 = vsyncpa [#allocation16], 1

</llo_original>
